<compile_context>
chip_gen: v6e
topology: v6e:2x2x1
jax: 0.10.0
libtpu: 0.0.40
codegen_flags: <defaults>
</compile_context>

<pallas_src>
import functools

import jax
import jax.numpy as jnp
from jax import lax
from jax.experimental import pallas as pl
from jax.experimental.pallas import tpu as pltpu

_SQRT_HALF = 0.7071067811865476


def _erf_f32(x, approx_recip):
    # Abramowitz & Stegun 7.1.26 polynomial approximation, |err| <= 1.5e-7.
    a1, a2, a3, a4, a5 = 0.254829592, -0.284496736, 1.421413741, -1.453152027, 1.061405429
    p = 0.3275911
    ax = jnp.abs(x)
    t = pl.reciprocal(1.0 + p * ax, approx=approx_recip)   # EUP, not a VALU divide
    poly = ((((a5 * t + a4) * t + a3) * t + a2) * t + a1) * t
    y = 1.0 - poly * jnp.exp(-ax * ax)
    return jnp.where(x < 0.0, -y, y)


def _gelu_exact(x, approx_recip):
    # PyTorch nn.GELU() default: 0.5 * x * (1 + erf(x / sqrt(2)))
    return 0.5 * x * (1.0 + _erf_f32(x * _SQRT_HALF, approx_recip))


def _channel_layernorm(x, gamma, beta, eps=1e-6):
    # x: (C, M) channel-major; normalize over the channel axis (axis 0),
    # biased variance, eps inside sqrt -- matches the ConvNeXt-style LayerNorm.
    u = jnp.mean(x, axis=0, keepdims=True)
    d = x - u
    s = jnp.mean(d * d, axis=0, keepdims=True)
    inv = lax.rsqrt(s + eps)                 # EUP rsqrt; no full-width divide
    return d * inv * gamma + beta            # gamma/beta: (C, 1)


def _res_bottleneck_kernel(x_ref, cmask_ref, rmask_ref,
                           w1_ref, g1_ref, b1_ref,
                           w2_ref, g2_ref, b2_ref,
                           w3_ref, g3_ref, b3_ref,
                           o_ref, *, W, compute_dtype, approx_recip):
    Cin, HW = x_ref.shape
    Cb = w1_ref.shape[0]
    cd = compute_dtype

    # --- conv1 (1x1): (Cb, Cin) @ (Cin, HW) on the MXU -> LN -> GELU ---------
    h = jnp.dot(w1_ref[...], x_ref[...].astype(cd),
                preferred_element_type=jnp.float32)          # (Cb, HW) f32
    h = _gelu_exact(_channel_layernorm(h, g1_ref[...], b1_ref[...]), approx_recip)

    # --- conv2 (3x3, pad=1): masked lane-rolls, no padded scratch ------------
    # Column taps (c-1, c, c+1) built on the contiguous activation, masked with
    # a precomputed column-validity mask, then stacked to one K=3*Cb operand.
    h_cd = h.astype(cd)
    h_l = pltpu.roll(h_cd, shift=1, axis=1) * cmask_ref[0:1, :]        # value from column c-1
    h_r = pltpu.roll(h_cd, shift=HW - 1, axis=1) * cmask_ref[1:2, :]   # value from column c+1
    taps = jnp.concatenate([h_l, h_cd, h_r], axis=0)                   # (3*Cb, HW)

    # Row taps applied to the per-kh matmul outputs with masked +-W rolls.
    acc = jnp.dot(w2_ref[1], taps, preferred_element_type=jnp.float32)     # kh=1 (same row)
    z_t = jnp.dot(w2_ref[0], taps, preferred_element_type=jnp.float32)     # kh=0 (row r-1)
    acc = acc + pltpu.roll(z_t, shift=W, axis=1) * rmask_ref[0:1, :]
    z_b = jnp.dot(w2_ref[2], taps, preferred_element_type=jnp.float32)     # kh=2 (row r+1)
    acc = acc + pltpu.roll(z_b, shift=HW - W, axis=1) * rmask_ref[1:2, :]

    h2 = _gelu_exact(_channel_layernorm(acc, g2_ref[...], b2_ref[...]), approx_recip)

    # --- conv3 (1x1) -> LN -> residual add (x re-read, not held live) --------
    h3 = jnp.dot(w3_ref[...], h2.astype(cd),
                 preferred_element_type=jnp.float32)          # (Cout, HW) f32
    h3 = _channel_layernorm(h3, g3_ref[...], b3_ref[...])
    o_ref[...] = (x_ref[...] + h3).astype(o_ref.dtype)


def prepare_params(params, *, compute_dtype=jnp.bfloat16):
    """One-time weight re-layout / cast (hoist out of the per-call path)."""
    w1, w2, w3 = params["conv1_w"], params["conv2_w"], params["conv3_w"]
    Cb, Cin = w1.shape[0], w1.shape[1]
    Cout = w3.shape[0]
    # conv2 weight (O, I, KH, KW) -> (KH, O, KW*I): columns [kw*Cb:(kw+1)*Cb]
    # multiply the kw-th column tap in the stacked (3*Cb, HW) operand.
    w2s = jnp.transpose(jnp.asarray(w2), (2, 0, 3, 1)).reshape(3, Cb, 3 * Cb)
    return {
        "w1": jnp.asarray(w1).reshape(Cb, Cin).astype(compute_dtype),
        "w2": w2s.astype(compute_dtype),
        "w3": jnp.asarray(w3).reshape(Cout, Cb).astype(compute_dtype),
        "g1": jnp.asarray(params["norm1_w"]).reshape(Cb, 1).astype(jnp.float32),
        "b1": jnp.asarray(params["norm1_b"]).reshape(Cb, 1).astype(jnp.float32),
        "g2": jnp.asarray(params["norm2_w"]).reshape(Cb, 1).astype(jnp.float32),
        "b2": jnp.asarray(params["norm2_b"]).reshape(Cb, 1).astype(jnp.float32),
        "g3": jnp.asarray(params["norm3_w"]).reshape(Cout, 1).astype(jnp.float32),
        "b3": jnp.asarray(params["norm3_b"]).reshape(Cout, 1).astype(jnp.float32),
    }


def res_bottleneck_block_prepared(x, prepared):
    """ResBottleneckBlock forward. x: (B, Cin, H, W) f32 NCHW -> same shape."""
    B, Cin, H, W = x.shape
    Cb = prepared["w1"].shape[0]
    Cout = prepared["w3"].shape[0]
    assert Cin == Cout, "residual add requires in_channels == out_channels"
    cd = prepared["w1"].dtype
    approx_recip = bool(jnp.dtype(cd) != jnp.dtype(jnp.float32))
    HW = H * W

    # Channel-major flat-spatial view: bitcast of contiguous NCHW, no HBM pass.
    x2 = x.reshape(B, Cin, HW)

    # Boundary-validity masks (tiny; only depend on H, W).
    pix = jnp.arange(HW, dtype=jnp.int32)
    col = pix % W
    cmask = jnp.stack([col != 0, col != (W - 1)]).astype(cd)              # (2, HW)
    rmask = jnp.stack([pix >= W, pix < (H - 1) * W]).astype(jnp.float32)  # (2, HW)

    operands = (x2, cmask, rmask,
                prepared["w1"], prepared["g1"], prepared["b1"],
                prepared["w2"], prepared["g2"], prepared["b2"],
                prepared["w3"], prepared["g3"], prepared["b3"])

    flops = 2 * B * HW * (Cin * Cb + 9 * Cb * Cb + Cb * Cout)
    bytes_accessed = sum(int(a.size) * a.dtype.itemsize for a in operands)
    bytes_accessed += B * Cout * HW * x.dtype.itemsize

    # VMEM budget: double-buffered per-image in/out blocks + weights + a
    # generous bound on live intermediates.
    cd_sz = jnp.dtype(cd).itemsize
    vmem_need = (2 * (Cin + Cout) * HW * 4
                 + 2 * (Cb * Cin + 9 * Cb * Cb + Cout * Cb) * cd_sz
                 + HW * (5 * Cb * 4 + 6 * Cb * cd_sz + 2 * Cout * 4))
    vmem_limit = int(min(100 * 2 ** 20, max(32 * 2 ** 20, int(vmem_need * 1.25))))

    full2d = lambda b: (0, 0)
    full3d = lambda b: (0, 0, 0)

    out = pl.pallas_call(
        functools.partial(_res_bottleneck_kernel, W=W,
                          compute_dtype=cd, approx_recip=approx_recip),
        out_shape=jax.ShapeDtypeStruct((B, Cout, HW), x.dtype),
        grid_spec=pltpu.PrefetchScalarGridSpec(
            num_scalar_prefetch=0,
            grid=(B,),                                     # one image per grid step
            in_specs=[
                pl.BlockSpec((None, Cin, HW), lambda b: (b, 0, 0)),   # x (squeezed)
                pl.BlockSpec((2, HW), full2d),                        # column masks
                pl.BlockSpec((2, HW), full2d),                        # row masks
                pl.BlockSpec((Cb, Cin), full2d),                      # w1
                pl.BlockSpec((Cb, 1), full2d),                        # g1
                pl.BlockSpec((Cb, 1), full2d),                        # b1
                pl.BlockSpec((3, Cb, 3 * Cb), full3d),                # w2 (stacked taps)
                pl.BlockSpec((Cb, 1), full2d),                        # g2
                pl.BlockSpec((Cb, 1), full2d),                        # b2
                pl.BlockSpec((Cout, Cb), full2d),                     # w3
                pl.BlockSpec((Cout, 1), full2d),                      # g3
                pl.BlockSpec((Cout, 1), full2d),                      # b3
            ],
            out_specs=pl.BlockSpec((None, Cout, HW), lambda b: (b, 0, 0)),
        ),
        compiler_params=pltpu.CompilerParams(
            dimension_semantics=("parallel",),             # megacore-shard over batch
            vmem_limit_bytes=vmem_limit,
        ),
        cost_estimate=pl.CostEstimate(
            flops=flops,
            transcendentals=2 * B * HW * Cb,               # two GELUs
            bytes_accessed=bytes_accessed,
        ),
    )(*operands)

    return out.reshape(B, Cout, H, W)                      # bitcast back to NCHW


def res_bottleneck_block(x, params, *, compute_dtype=jnp.bfloat16):
    """Convenience wrapper (prefer calling prepare_params once and reusing)."""
    return res_bottleneck_block_prepared(x, prepare_params(params, compute_dtype=compute_dtype))


def _reference(x, params, eps=1e-6):
    """Plain-JAX port of the PyTorch ResBottleneckBlock forward (NCHW)."""
    dn = ("NCHW", "OIHW", "NCHW")
    hp = lax.Precision.HIGHEST

    def ln(y, w, b):
        u = jnp.mean(y, axis=1, keepdims=True)
        s = jnp.mean((y - u) ** 2, axis=1, keepdims=True)
        y = (y - u) / jnp.sqrt(s + eps)
        return w[None, :, None, None] * y + b[None, :, None, None]

    def gelu(y):  # exact erf-GELU (PyTorch nn.GELU default)
        return 0.5 * y * (1.0 + lax.erf(y * _SQRT_HALF))

    h = lax.conv_general_dilated(x, params["conv1_w"], (1, 1), "VALID",
                                 dimension_numbers=dn, precision=hp)
    h = gelu(ln(h, params["norm1_w"], params["norm1_b"]))
    h = lax.conv_general_dilated(h, params["conv2_w"], (1, 1), ((1, 1), (1, 1)),
                                 dimension_numbers=dn, precision=hp)
    h = gelu(ln(h, params["norm2_w"], params["norm2_b"]))
    h = lax.conv_general_dilated(h, params["conv3_w"], (1, 1), "VALID",
                                 dimension_numbers=dn, precision=hp)
    h = ln(h, params["norm3_w"], params["norm3_b"])
    return x + h


if __name__ == "__main__":
    # Channel widths are fixed by the module's assert (384 -> 192 -> 384);
    # keep batch / spatial small for the smoke test.
    B, Cin, H, W = 2, 384, 16, 16
    Cb, Cout = 192, 384

    keys = jax.random.split(jax.random.PRNGKey(0), 10)
    x = jax.random.normal(keys[0], (B, Cin, H, W), dtype=jnp.float32)
    params = {
        "conv1_w": 0.05 * jax.random.normal(keys[1], (Cb, Cin, 1, 1), jnp.float32),
        "norm1_w": 1.0 + 0.1 * jax.random.normal(keys[2], (Cb,), jnp.float32),
        "norm1_b": 0.1 * jax.random.normal(keys[3], (Cb,), jnp.float32),
        "conv2_w": 0.05 * jax.random.normal(keys[4], (Cb, Cb, 3, 3), jnp.float32),
        "norm2_w": 1.0 + 0.1 * jax.random.normal(keys[5], (Cb,), jnp.float32),
        "norm2_b": 0.1 * jax.random.normal(keys[6], (Cb,), jnp.float32),
        "conv3_w": 0.05 * jax.random.normal(keys[7], (Cout, Cb, 1, 1), jnp.float32),
        "norm3_w": 0.1 * jax.random.normal(keys[8], (Cout,), jnp.float32),
        "norm3_b": 0.1 * jax.random.normal(keys[9], (Cout,), jnp.float32),
    }

    y_ref = _reference(x, params)

    fwd = jax.jit(res_bottleneck_block_prepared)

    # Full-precision path: tight check against the PyTorch-equivalent reference
    # (tolerance covers MXU-pass / accumulation-order differences vs XLA conv).
    prep_f32 = prepare_params(params, compute_dtype=jnp.float32)
    y_f32 = jax.block_until_ready(fwd(x, prep_f32))
    assert y_f32.shape == (B, Cout, H, W), y_f32.shape
    assert jnp.allclose(y_f32, y_ref, atol=2e-2, rtol=2e-2), \
        float(jnp.max(jnp.abs(y_f32 - y_ref)))

    # Default bf16-MXU path (f32 accumulation, approx EUP reciprocal in GELU).
    prep_bf16 = prepare_params(params, compute_dtype=jnp.bfloat16)
    y_bf16 = jax.block_until_ready(fwd(x, prep_bf16))
    assert y_bf16.shape == (B, Cout, H, W), y_bf16.shape
    assert jnp.allclose(y_bf16, y_ref, atol=1e-1, rtol=1e-1), \
        float(jnp.max(jnp.abs(y_bf16 - y_ref)))

    print("KERNEL_OK")
</pallas_src>

<mosaic_0001>
module attributes {stable_mosaic.version = 11 : i64} {
  func.func @_res_bottleneck_kernel(%arg0: i32, %arg1: memref<1x384x256xf32, #tpu.memory_space<vmem>>, %arg2: memref<2x256xf32, #tpu.memory_space<vmem>>, %arg3: memref<2x256xf32, #tpu.memory_space<vmem>>, %arg4: memref<192x384xf32, #tpu.memory_space<vmem>>, %arg5: memref<192x1xf32, #tpu.memory_space<vmem>>, %arg6: memref<192x1xf32, #tpu.memory_space<vmem>>, %arg7: memref<3x192x576xf32, #tpu.memory_space<vmem>>, %arg8: memref<192x1xf32, #tpu.memory_space<vmem>>, %arg9: memref<192x1xf32, #tpu.memory_space<vmem>>, %arg10: memref<384x192xf32, #tpu.memory_space<vmem>>, %arg11: memref<384x1xf32, #tpu.memory_space<vmem>>, %arg12: memref<384x1xf32, #tpu.memory_space<vmem>>, %arg13: memref<1x384x256xf32, #tpu.memory_space<vmem>>) attributes {dimension_semantics = [#tpu.dimension_semantics<parallel>], iteration_bounds = array<i64: 2>, scalar_prefetch = 0 : i64, scratch_operands = 0 : i64, tpu.core_type = #tpu.core_type<tc>, window_params = [{transform_indices = @transform_0, window_bounds = array<i64: 1, 384, 256>}, {pipeline_mode = #tpu.pipeline_mode<synchronous>, transform_indices = @transform_1, window_bounds = array<i64: 2, 256>}, {pipeline_mode = #tpu.pipeline_mode<synchronous>, transform_indices = @transform_2, window_bounds = array<i64: 2, 256>}, {pipeline_mode = #tpu.pipeline_mode<synchronous>, transform_indices = @transform_3, window_bounds = array<i64: 192, 384>}, {pipeline_mode = #tpu.pipeline_mode<synchronous>, transform_indices = @transform_4, window_bounds = array<i64: 192, 1>}, {pipeline_mode = #tpu.pipeline_mode<synchronous>, transform_indices = @transform_5, window_bounds = array<i64: 192, 1>}, {pipeline_mode = #tpu.pipeline_mode<synchronous>, transform_indices = @transform_6, window_bounds = array<i64: 3, 192, 576>}, {pipeline_mode = #tpu.pipeline_mode<synchronous>, transform_indices = @transform_7, window_bounds = array<i64: 192, 1>}, {pipeline_mode = #tpu.pipeline_mode<synchronous>, transform_indices = @transform_8, window_bounds = array<i64: 192, 1>}, {pipeline_mode = #tpu.pipeline_mode<synchronous>, transform_indices = @transform_9, window_bounds = array<i64: 384, 192>}, {pipeline_mode = #tpu.pipeline_mode<synchronous>, transform_indices = @transform_10, window_bounds = array<i64: 384, 1>}, {pipeline_mode = #tpu.pipeline_mode<synchronous>, transform_indices = @transform_11, window_bounds = array<i64: 384, 1>}, {transform_indices = @transform_12, window_bounds = array<i64: 1, 384, 256>}]} {
    %c0 = arith.constant 0 : index
    %c0_0 = arith.constant 0 : index
    %0 = vector.load %arg4[%c0, %c0_0] : memref<192x384xf32, #tpu.memory_space<vmem>>, vector<192x384xf32>
    %c0_1 = arith.constant 0 : index
    %c0_2 = arith.constant 0 : index
    %c0_3 = arith.constant 0 : index
    %1 = vector.load %arg1[%c0_1, %c0_2, %c0_3] : memref<1x384x256xf32, #tpu.memory_space<vmem>>, vector<1x384x256xf32>
    %2 = vector.shape_cast %1 : vector<1x384x256xf32> to vector<384x256xf32>
    %cst = arith.constant dense<0.000000e+00> : vector<192x256xf32>
    %3 = tpu.matmul %0, %2, %cst {dimension_numbers = #tpu.dot_dimension_numbers<[1], [0], [0], [1], [0, 0, 1, 1], [], []>} : vector<192x384xf32>, vector<384x256xf32>, vector<192x256xf32> -> vector<192x256xf32>
    %c0_4 = arith.constant 0 : index
    %c0_5 = arith.constant 0 : index
    %4 = vector.load %arg5[%c0_4, %c0_5] : memref<192x1xf32, #tpu.memory_space<vmem>>, vector<192x1xf32>
    %c0_6 = arith.constant 0 : index
    %c0_7 = arith.constant 0 : index
    %5 = vector.load %arg6[%c0_6, %c0_7] : memref<192x1xf32, #tpu.memory_space<vmem>>, vector<192x1xf32>
    %cst_8 = arith.constant dense<0.000000e+00> : vector<256xf32>
    %6 = vector.multi_reduction <add>, %3, %cst_8 [0] : vector<192x256xf32> to vector<256xf32>
    %7 = vector.shape_cast %6 : vector<256xf32> to vector<1x256xf32>
    %cst_9 = arith.constant 1.920000e+02 : f32
    %8 = vector.broadcast %cst_9 : f32 to vector<1x256xf32>
    %9 = arith.divf %7, %8 : vector<1x256xf32>
    %10 = vector.broadcast %9 : vector<1x256xf32> to vector<192x256xf32>
    %11 = arith.subf %3, %10 : vector<192x256xf32>
    %12 = arith.mulf %11, %11 : vector<192x256xf32>
    %cst_10 = arith.constant dense<0.000000e+00> : vector<256xf32>
    %13 = vector.multi_reduction <add>, %12, %cst_10 [0] : vector<192x256xf32> to vector<256xf32>
    %14 = vector.shape_cast %13 : vector<256xf32> to vector<1x256xf32>
    %cst_11 = arith.constant 1.920000e+02 : f32
    %15 = vector.broadcast %cst_11 : f32 to vector<1x256xf32>
    %16 = arith.divf %14, %15 : vector<1x256xf32>
    %cst_12 = arith.constant 9.99999997E-7 : f32
    %17 = vector.broadcast %cst_12 : f32 to vector<1x256xf32>
    %18 = arith.addf %16, %17 : vector<1x256xf32>
    %19 = math.rsqrt %18 : vector<1x256xf32>
    %20 = vector.broadcast %19 : vector<1x256xf32> to vector<192x256xf32>
    %21 = arith.mulf %11, %20 : vector<192x256xf32>
    %22 = vector.broadcast %4 : vector<192x1xf32> to vector<192x256xf32>
    %23 = arith.mulf %21, %22 : vector<192x256xf32>
    %24 = vector.broadcast %5 : vector<192x1xf32> to vector<192x256xf32>
    %25 = arith.addf %23, %24 : vector<192x256xf32>
    %cst_13 = arith.constant 5.000000e-01 : f32
    %26 = vector.broadcast %cst_13 : f32 to vector<192x256xf32>
    %27 = arith.mulf %26, %25 : vector<192x256xf32>
    %cst_14 = arith.constant 0.707106769 : f32
    %28 = vector.broadcast %cst_14 : f32 to vector<192x256xf32>
    %29 = arith.mulf %25, %28 : vector<192x256xf32>
    %30 = math.absf %29 : vector<192x256xf32>
    %cst_15 = arith.constant 0.327591091 : f32
    %31 = vector.broadcast %cst_15 : f32 to vector<192x256xf32>
    %32 = arith.mulf %31, %30 : vector<192x256xf32>
    %cst_16 = arith.constant 1.000000e+00 : f32
    %33 = vector.broadcast %cst_16 : f32 to vector<192x256xf32>
    %34 = arith.addf %33, %32 : vector<192x256xf32>
    %35 = tpu.reciprocal %34 : vector<192x256xf32> -> vector<192x256xf32>
    %cst_17 = arith.constant 1.06140542 : f32
    %36 = vector.broadcast %cst_17 : f32 to vector<192x256xf32>
    %37 = arith.mulf %36, %35 : vector<192x256xf32>
    %cst_18 = arith.constant -1.45315206 : f32
    %38 = vector.broadcast %cst_18 : f32 to vector<192x256xf32>
    %39 = arith.addf %37, %38 : vector<192x256xf32>
    %40 = arith.mulf %39, %35 : vector<192x256xf32>
    %cst_19 = arith.constant 1.42141378 : f32
    %41 = vector.broadcast %cst_19 : f32 to vector<192x256xf32>
    %42 = arith.addf %40, %41 : vector<192x256xf32>
    %43 = arith.mulf %42, %35 : vector<192x256xf32>
    %cst_20 = arith.constant -0.284496725 : f32
    %44 = vector.broadcast %cst_20 : f32 to vector<192x256xf32>
    %45 = arith.addf %43, %44 : vector<192x256xf32>
    %46 = arith.mulf %45, %35 : vector<192x256xf32>
    %cst_21 = arith.constant 0.254829586 : f32
    %47 = vector.broadcast %cst_21 : f32 to vector<192x256xf32>
    %48 = arith.addf %46, %47 : vector<192x256xf32>
    %49 = arith.mulf %48, %35 : vector<192x256xf32>
    %cst_22 = arith.constant 0.000000e+00 : f32
    %50 = vector.broadcast %cst_22 : f32 to vector<192x256xf32>
    %51 = arith.subf %50, %30 : vector<192x256xf32>
    %52 = arith.mulf %51, %30 : vector<192x256xf32>
    %53 = math.exp %52 : vector<192x256xf32>
    %54 = arith.mulf %49, %53 : vector<192x256xf32>
    %cst_23 = arith.constant 1.000000e+00 : f32
    %55 = vector.broadcast %cst_23 : f32 to vector<192x256xf32>
    %56 = arith.subf %55, %54 : vector<192x256xf32>
    %cst_24 = arith.constant 0.000000e+00 : f32
    %57 = vector.broadcast %cst_24 : f32 to vector<192x256xf32>
    %58 = arith.cmpf olt, %29, %57 : vector<192x256xf32>
    %cst_25 = arith.constant 0.000000e+00 : f32
    %59 = vector.broadcast %cst_25 : f32 to vector<192x256xf32>
    %60 = arith.subf %59, %56 : vector<192x256xf32>
    %61 = arith.select %58, %60, %56 : vector<192x256xi1>, vector<192x256xf32>
    %cst_26 = arith.constant 1.000000e+00 : f32
    %62 = vector.broadcast %cst_26 : f32 to vector<192x256xf32>
    %63 = arith.addf %62, %61 : vector<192x256xf32>
    %64 = arith.mulf %27, %63 : vector<192x256xf32>
    %c1_i32 = arith.constant 1 : i32
    %65 = tpu.dynamic_rotate %64 by %c1_i32 dim 1 : vector<192x256xf32>, i32 -> vector<192x256xf32>
    %c0_27 = arith.constant 0 : index
    %c0_28 = arith.constant 0 : index
    %66 = vector.load %arg2[%c0_27, %c0_28] : memref<2x256xf32, #tpu.memory_space<vmem>>, vector<1x256xf32>
    %67 = vector.broadcast %66 : vector<1x256xf32> to vector<192x256xf32>
    %68 = arith.mulf %65, %67 : vector<192x256xf32>
    %c255_i32 = arith.constant 255 : i32
    %69 = tpu.dynamic_rotate %64 by %c255_i32 dim 1 : vector<192x256xf32>, i32 -> vector<192x256xf32>
    %c1 = arith.constant 1 : index
    %c0_29 = arith.constant 0 : index
    %70 = vector.load %arg2[%c1, %c0_29] : memref<2x256xf32, #tpu.memory_space<vmem>>, vector<1x256xf32>
    %71 = vector.broadcast %70 : vector<1x256xf32> to vector<192x256xf32>
    %72 = arith.mulf %69, %71 : vector<192x256xf32>
    %73 = tpu.concatenate %68, %64, %72 in 0 : vector<192x256xf32>, vector<192x256xf32>, vector<192x256xf32> -> vector<576x256xf32>
    %c1_30 = arith.constant 1 : index
    %c0_31 = arith.constant 0 : index
    %c0_32 = arith.constant 0 : index
    %74 = vector.load %arg7[%c1_30, %c0_31, %c0_32] : memref<3x192x576xf32, #tpu.memory_space<vmem>>, vector<1x192x576xf32>
    %75 = vector.shape_cast %74 : vector<1x192x576xf32> to vector<192x576xf32>
    %cst_33 = arith.constant dense<0.000000e+00> : vector<192x256xf32>
    %76 = tpu.matmul %75, %73, %cst_33 {dimension_numbers = #tpu.dot_dimension_numbers<[1], [0], [0], [1], [0, 0, 1, 1], [], []>} : vector<192x576xf32>, vector<576x256xf32>, vector<192x256xf32> -> vector<192x256xf32>
    %c0_34 = arith.constant 0 : index
    %c0_35 = arith.constant 0 : index
    %c0_36 = arith.constant 0 : index
    %77 = vector.load %arg7[%c0_34, %c0_35, %c0_36] : memref<3x192x576xf32, #tpu.memory_space<vmem>>, vector<1x192x576xf32>
    %78 = vector.shape_cast %77 : vector<1x192x576xf32> to vector<192x576xf32>
    %cst_37 = arith.constant dense<0.000000e+00> : vector<192x256xf32>
    %79 = tpu.matmul %78, %73, %cst_37 {dimension_numbers = #tpu.dot_dimension_numbers<[1], [0], [0], [1], [0, 0, 1, 1], [], []>} : vector<192x576xf32>, vector<576x256xf32>, vector<192x256xf32> -> vector<192x256xf32>
    %c16_i32 = arith.constant 16 : i32
    %80 = tpu.dynamic_rotate %79 by %c16_i32 dim 1 : vector<192x256xf32>, i32 -> vector<192x256xf32>
    %c0_38 = arith.constant 0 : index
    %c0_39 = arith.constant 0 : index
    %81 = vector.load %arg3[%c0_38, %c0_39] : memref<2x256xf32, #tpu.memory_space<vmem>>, vector<1x256xf32>
    %82 = vector.broadcast %81 : vector<1x256xf32> to vector<192x256xf32>
    %83 = arith.mulf %80, %82 : vector<192x256xf32>
    %84 = arith.addf %76, %83 : vector<192x256xf32>
    %c2 = arith.constant 2 : index
    %c0_40 = arith.constant 0 : index
    %c0_41 = arith.constant 0 : index
    %85 = vector.load %arg7[%c2, %c0_40, %c0_41] : memref<3x192x576xf32, #tpu.memory_space<vmem>>, vector<1x192x576xf32>
    %86 = vector.shape_cast %85 : vector<1x192x576xf32> to vector<192x576xf32>
    %cst_42 = arith.constant dense<0.000000e+00> : vector<192x256xf32>
    %87 = tpu.matmul %86, %73, %cst_42 {dimension_numbers = #tpu.dot_dimension_numbers<[1], [0], [0], [1], [0, 0, 1, 1], [], []>} : vector<192x576xf32>, vector<576x256xf32>, vector<192x256xf32> -> vector<192x256xf32>
    %c240_i32 = arith.constant 240 : i32
    %88 = tpu.dynamic_rotate %87 by %c240_i32 dim 1 : vector<192x256xf32>, i32 -> vector<192x256xf32>
    %c1_43 = arith.constant 1 : index
    %c0_44 = arith.constant 0 : index
    %89 = vector.load %arg3[%c1_43, %c0_44] : memref<2x256xf32, #tpu.memory_space<vmem>>, vector<1x256xf32>
    %90 = vector.broadcast %89 : vector<1x256xf32> to vector<192x256xf32>
    %91 = arith.mulf %88, %90 : vector<192x256xf32>
    %92 = arith.addf %84, %91 : vector<192x256xf32>
    %c0_45 = arith.constant 0 : index
    %c0_46 = arith.constant 0 : index
    %93 = vector.load %arg8[%c0_45, %c0_46] : memref<192x1xf32, #tpu.memory_space<vmem>>, vector<192x1xf32>
    %c0_47 = arith.constant 0 : index
    %c0_48 = arith.constant 0 : index
    %94 = vector.load %arg9[%c0_47, %c0_48] : memref<192x1xf32, #tpu.memory_space<vmem>>, vector<192x1xf32>
    %cst_49 = arith.constant dense<0.000000e+00> : vector<256xf32>
    %95 = vector.multi_reduction <add>, %92, %cst_49 [0] : vector<192x256xf32> to vector<256xf32>
    %96 = vector.shape_cast %95 : vector<256xf32> to vector<1x256xf32>
    %cst_50 = arith.constant 1.920000e+02 : f32
    %97 = vector.broadcast %cst_50 : f32 to vector<1x256xf32>
    %98 = arith.divf %96, %97 : vector<1x256xf32>
    %99 = vector.broadcast %98 : vector<1x256xf32> to vector<192x256xf32>
    %100 = arith.subf %92, %99 : vector<192x256xf32>
    %101 = arith.mulf %100, %100 : vector<192x256xf32>
    %cst_51 = arith.constant dense<0.000000e+00> : vector<256xf32>
    %102 = vector.multi_reduction <add>, %101, %cst_51 [0] : vector<192x256xf32> to vector<256xf32>
    %103 = vector.shape_cast %102 : vector<256xf32> to vector<1x256xf32>
    %cst_52 = arith.constant 1.920000e+02 : f32
    %104 = vector.broadcast %cst_52 : f32 to vector<1x256xf32>
    %105 = arith.divf %103, %104 : vector<1x256xf32>
    %cst_53 = arith.constant 9.99999997E-7 : f32
    %106 = vector.broadcast %cst_53 : f32 to vector<1x256xf32>
    %107 = arith.addf %105, %106 : vector<1x256xf32>
    %108 = math.rsqrt %107 : vector<1x256xf32>
    %109 = vector.broadcast %108 : vector<1x256xf32> to vector<192x256xf32>
    %110 = arith.mulf %100, %109 : vector<192x256xf32>
    %111 = vector.broadcast %93 : vector<192x1xf32> to vector<192x256xf32>
    %112 = arith.mulf %110, %111 : vector<192x256xf32>
    %113 = vector.broadcast %94 : vector<192x1xf32> to vector<192x256xf32>
    %114 = arith.addf %112, %113 : vector<192x256xf32>
    %cst_54 = arith.constant 5.000000e-01 : f32
    %115 = vector.broadcast %cst_54 : f32 to vector<192x256xf32>
    %116 = arith.mulf %115, %114 : vector<192x256xf32>
    %cst_55 = arith.constant 0.707106769 : f32
    %117 = vector.broadcast %cst_55 : f32 to vector<192x256xf32>
    %118 = arith.mulf %114, %117 : vector<192x256xf32>
    %119 = math.absf %118 : vector<192x256xf32>
    %cst_56 = arith.constant 0.327591091 : f32
    %120 = vector.broadcast %cst_56 : f32 to vector<192x256xf32>
    %121 = arith.mulf %120, %119 : vector<192x256xf32>
    %cst_57 = arith.constant 1.000000e+00 : f32
    %122 = vector.broadcast %cst_57 : f32 to vector<192x256xf32>
    %123 = arith.addf %122, %121 : vector<192x256xf32>
    %124 = tpu.reciprocal %123 : vector<192x256xf32> -> vector<192x256xf32>
    %cst_58 = arith.constant 1.06140542 : f32
    %125 = vector.broadcast %cst_58 : f32 to vector<192x256xf32>
    %126 = arith.mulf %125, %124 : vector<192x256xf32>
    %cst_59 = arith.constant -1.45315206 : f32
    %127 = vector.broadcast %cst_59 : f32 to vector<192x256xf32>
    %128 = arith.addf %126, %127 : vector<192x256xf32>
    %129 = arith.mulf %128, %124 : vector<192x256xf32>
    %cst_60 = arith.constant 1.42141378 : f32
    %130 = vector.broadcast %cst_60 : f32 to vector<192x256xf32>
    %131 = arith.addf %129, %130 : vector<192x256xf32>
    %132 = arith.mulf %131, %124 : vector<192x256xf32>
    %cst_61 = arith.constant -0.284496725 : f32
    %133 = vector.broadcast %cst_61 : f32 to vector<192x256xf32>
    %134 = arith.addf %132, %133 : vector<192x256xf32>
    %135 = arith.mulf %134, %124 : vector<192x256xf32>
    %cst_62 = arith.constant 0.254829586 : f32
    %136 = vector.broadcast %cst_62 : f32 to vector<192x256xf32>
    %137 = arith.addf %135, %136 : vector<192x256xf32>
    %138 = arith.mulf %137, %124 : vector<192x256xf32>
    %cst_63 = arith.constant 0.000000e+00 : f32
    %139 = vector.broadcast %cst_63 : f32 to vector<192x256xf32>
    %140 = arith.subf %139, %119 : vector<192x256xf32>
    %141 = arith.mulf %140, %119 : vector<192x256xf32>
    %142 = math.exp %141 : vector<192x256xf32>
    %143 = arith.mulf %138, %142 : vector<192x256xf32>
    %cst_64 = arith.constant 1.000000e+00 : f32
    %144 = vector.broadcast %cst_64 : f32 to vector<192x256xf32>
    %145 = arith.subf %144, %143 : vector<192x256xf32>
    %cst_65 = arith.constant 0.000000e+00 : f32
    %146 = vector.broadcast %cst_65 : f32 to vector<192x256xf32>
    %147 = arith.cmpf olt, %118, %146 : vector<192x256xf32>
    %cst_66 = arith.constant 0.000000e+00 : f32
    %148 = vector.broadcast %cst_66 : f32 to vector<192x256xf32>
    %149 = arith.subf %148, %145 : vector<192x256xf32>
    %150 = arith.select %147, %149, %145 : vector<192x256xi1>, vector<192x256xf32>
    %cst_67 = arith.constant 1.000000e+00 : f32
    %151 = vector.broadcast %cst_67 : f32 to vector<192x256xf32>
    %152 = arith.addf %151, %150 : vector<192x256xf32>
    %153 = arith.mulf %116, %152 : vector<192x256xf32>
    %c0_68 = arith.constant 0 : index
    %c0_69 = arith.constant 0 : index
    %154 = vector.load %arg10[%c0_68, %c0_69] : memref<384x192xf32, #tpu.memory_space<vmem>>, vector<384x192xf32>
    %cst_70 = arith.constant dense<0.000000e+00> : vector<384x256xf32>
    %155 = tpu.matmul %154, %153, %cst_70 {dimension_numbers = #tpu.dot_dimension_numbers<[1], [0], [0], [1], [0, 0, 1, 1], [], []>} : vector<384x192xf32>, vector<192x256xf32>, vector<384x256xf32> -> vector<384x256xf32>
    %c0_71 = arith.constant 0 : index
    %c0_72 = arith.constant 0 : index
    %156 = vector.load %arg11[%c0_71, %c0_72] : memref<384x1xf32, #tpu.memory_space<vmem>>, vector<384x1xf32>
    %c0_73 = arith.constant 0 : index
    %c0_74 = arith.constant 0 : index
    %157 = vector.load %arg12[%c0_73, %c0_74] : memref<384x1xf32, #tpu.memory_space<vmem>>, vector<384x1xf32>
    %cst_75 = arith.constant dense<0.000000e+00> : vector<256xf32>
    %158 = vector.multi_reduction <add>, %155, %cst_75 [0] : vector<384x256xf32> to vector<256xf32>
    %159 = vector.shape_cast %158 : vector<256xf32> to vector<1x256xf32>
    %cst_76 = arith.constant 3.840000e+02 : f32
    %160 = vector.broadcast %cst_76 : f32 to vector<1x256xf32>
    %161 = arith.divf %159, %160 : vector<1x256xf32>
    %162 = vector.broadcast %161 : vector<1x256xf32> to vector<384x256xf32>
    %163 = arith.subf %155, %162 : vector<384x256xf32>
    %164 = arith.mulf %163, %163 : vector<384x256xf32>
    %cst_77 = arith.constant dense<0.000000e+00> : vector<256xf32>
    %165 = vector.multi_reduction <add>, %164, %cst_77 [0] : vector<384x256xf32> to vector<256xf32>
    %166 = vector.shape_cast %165 : vector<256xf32> to vector<1x256xf32>
    %cst_78 = arith.constant 3.840000e+02 : f32
    %167 = vector.broadcast %cst_78 : f32 to vector<1x256xf32>
    %168 = arith.divf %166, %167 : vector<1x256xf32>
    %cst_79 = arith.constant 9.99999997E-7 : f32
    %169 = vector.broadcast %cst_79 : f32 to vector<1x256xf32>
    %170 = arith.addf %168, %169 : vector<1x256xf32>
    %171 = math.rsqrt %170 : vector<1x256xf32>
    %172 = vector.broadcast %171 : vector<1x256xf32> to vector<384x256xf32>
    %173 = arith.mulf %163, %172 : vector<384x256xf32>
    %174 = vector.broadcast %156 : vector<384x1xf32> to vector<384x256xf32>
    %175 = arith.mulf %173, %174 : vector<384x256xf32>
    %176 = vector.broadcast %157 : vector<384x1xf32> to vector<384x256xf32>
    %177 = arith.addf %175, %176 : vector<384x256xf32>
    %c0_80 = arith.constant 0 : index
    %c0_81 = arith.constant 0 : index
    %c0_82 = arith.constant 0 : index
    %178 = vector.load %arg1[%c0_80, %c0_81, %c0_82] : memref<1x384x256xf32, #tpu.memory_space<vmem>>, vector<1x384x256xf32>
    %179 = vector.shape_cast %178 : vector<1x384x256xf32> to vector<384x256xf32>
    %180 = arith.addf %179, %177 : vector<384x256xf32>
    %c0_83 = arith.constant 0 : index
    %c0_84 = arith.constant 0 : index
    %c0_85 = arith.constant 0 : index
    %181 = vector.load %arg13[%c0_83, %c0_84, %c0_85] : memref<1x384x256xf32, #tpu.memory_space<vmem>>, vector<1x384x256xf32>
    %182 = vector.shape_cast %181 : vector<1x384x256xf32> to vector<384x256xf32>
    %183 = vector.shape_cast %180 : vector<384x256xf32> to vector<1x384x256xf32>
    tpu.vector_store %arg13[%c0_83, %c0_84, %c0_85], %183 {strides = array<i32>} : memref<1x384x256xf32, #tpu.memory_space<vmem>>, vector<1x384x256xf32>,
    return
  }
  func.func @transform_0(%arg0: i32) -> (i32, i32, i32) {
    %c0_i32 = arith.constant 0 : i32
    %c0_i32_0 = arith.constant 0 : i32
    %c0_i32_1 = arith.constant 0 : i32
    return %arg0, %c0_i32, %c0_i32_0 : i32, i32, i32
  }
  func.func @transform_1(%arg0: i32) -> (i32, i32) {
    %c0_i32 = arith.constant 0 : i32
    %c0_i32_0 = arith.constant 0 : i32
    %c0_i32_1 = arith.constant 0 : i32
    return %c0_i32, %c0_i32_0 : i32, i32
  }
  func.func @transform_2(%arg0: i32) -> (i32, i32) {
    %c0_i32 = arith.constant 0 : i32
    %c0_i32_0 = arith.constant 0 : i32
    %c0_i32_1 = arith.constant 0 : i32
    return %c0_i32, %c0_i32_0 : i32, i32
  }
  func.func @transform_3(%arg0: i32) -> (i32, i32) {
    %c0_i32 = arith.constant 0 : i32
    %c0_i32_0 = arith.constant 0 : i32
    %c0_i32_1 = arith.constant 0 : i32
    return %c0_i32, %c0_i32_0 : i32, i32
  }
  func.func @transform_4(%arg0: i32) -> (i32, i32) {
    %c0_i32 = arith.constant 0 : i32
    %c0_i32_0 = arith.constant 0 : i32
    %c0_i32_1 = arith.constant 0 : i32
    return %c0_i32, %c0_i32_0 : i32, i32
  }
  func.func @transform_5(%arg0: i32) -> (i32, i32) {
    %c0_i32 = arith.constant 0 : i32
    %c0_i32_0 = arith.constant 0 : i32
    %c0_i32_1 = arith.constant 0 : i32
    return %c0_i32, %c0_i32_0 : i32, i32
  }
  func.func @transform_6(%arg0: i32) -> (i32, i32, i32) {
    %c0_i32 = arith.constant 0 : i32
    %c0_i32_0 = arith.constant 0 : i32
    %c0_i32_1 = arith.constant 0 : i32
    %c0_i32_2 = arith.constant 0 : i32
    return %c0_i32, %c0_i32_0, %c0_i32_1 : i32, i32, i32
  }
  func.func @transform_7(%arg0: i32) -> (i32, i32) {
    %c0_i32 = arith.constant 0 : i32
    %c0_i32_0 = arith.constant 0 : i32
    %c0_i32_1 = arith.constant 0 : i32
    return %c0_i32, %c0_i32_0 : i32, i32
  }
  func.func @transform_8(%arg0: i32) -> (i32, i32) {
    %c0_i32 = arith.constant 0 : i32
    %c0_i32_0 = arith.constant 0 : i32
    %c0_i32_1 = arith.constant 0 : i32
    return %c0_i32, %c0_i32_0 : i32, i32
  }
  func.func @transform_9(%arg0: i32) -> (i32, i32) {
    %c0_i32 = arith.constant 0 : i32
    %c0_i32_0 = arith.constant 0 : i32
    %c0_i32_1 = arith.constant 0 : i32
    return %c0_i32, %c0_i32_0 : i32, i32
  }
  func.func @transform_10(%arg0: i32) -> (i32, i32) {
    %c0_i32 = arith.constant 0 : i32
    %c0_i32_0 = arith.constant 0 : i32
    %c0_i32_1 = arith.constant 0 : i32
    return %c0_i32, %c0_i32_0 : i32, i32
  }
  func.func @transform_11(%arg0: i32) -> (i32, i32) {
    %c0_i32 = arith.constant 0 : i32
    %c0_i32_0 = arith.constant 0 : i32
    %c0_i32_1 = arith.constant 0 : i32
    return %c0_i32, %c0_i32_0 : i32, i32
  }
  func.func @transform_12(%arg0: i32) -> (i32, i32, i32) {
    %c0_i32 = arith.constant 0 : i32
    %c0_i32_0 = arith.constant 0 : i32
    %c0_i32_1 = arith.constant 0 : i32
    return %arg0, %c0_i32, %c0_i32_0 : i32, i32, i32
  }
}

</mosaic_0001>

<llo_original>
// kernel: res_bottleneck_block_prepared.1
$region0: #{res_bottleneck_block_prepared.1}
  #allocation0 [shape = 'u32[]', space=smem, size = 0x4, offset = 0x4, fixed_abs, tag = 'smem constant byte address 0x4 - core index']
  #allocation1 [shape = 'u32[144,128]{1,0:T(1,128)}', space=vmem, size = 0x12000, scoped, tag = 'internal scratch']
  %s0 = inlined_call_operand.vmem [shape: f32[2,384,256], index: 0, kind: input, shape index: {}]
  %s1 = inlined_call_operand.vmem [shape: f32[2,256], index: 1, kind: input, shape index: {}]
  %s2 = inlined_call_operand.vmem [shape: f32[2,256], index: 2, kind: input, shape index: {}]
  %s3 = inlined_call_operand.vmem [shape: f32[192,384], index: 3, kind: input, shape index: {}]
  %s4 = inlined_call_operand.vmem [shape: f32[192,1], index: 4, kind: input, shape index: {}]
  %s5 = inlined_call_operand.vmem [shape: f32[192,1], index: 5, kind: input, shape index: {}]
  %s6 = inlined_call_operand.vmem [shape: f32[3,192,576], index: 6, kind: input, shape index: {}]
  %s7 = inlined_call_operand.vmem [shape: f32[192,1], index: 7, kind: input, shape index: {}]
  %s8 = inlined_call_operand.vmem [shape: f32[192,1], index: 8, kind: input, shape index: {}]
  %s9 = inlined_call_operand.vmem [shape: f32[384,192], index: 9, kind: input, shape index: {}]
  %s10 = inlined_call_operand.vmem [shape: f32[384,1], index: 10, kind: input, shape index: {}]
  %s11 = inlined_call_operand.vmem [shape: f32[384,1], index: 11, kind: input, shape index: {}]
  %s12 = inlined_call_operand.vmem [shape: f32[2,384,256], index: 12, kind: output, shape index: {}]
  %s13 = sld [smem:[#allocation0]]
  $region81: #{res_bottleneck_block_prepared.1} parent=0
    _
  %s15 = ssub.s32 1, %s13
  %s16 = scalar_select 0, %s15, %s13
  loop: start=0, step=1, limit=4
  $region2: #{res_bottleneck_block_prepared.1} parent=0 // loop_pre_header
    _
  $region3: #{res_bottleneck_block_prepared.1} parent=0 // loop_header
    %s18 = sphi 0, %s22
    %p19 = scmp.ge.s32.totalorder %s18, 4
    %s28 = sphi 0, %s30
    %s31 = sphi 0, %s28
    %s32 = sphi 0, %s31
    %s48 = sphi 0, %s32
    %s52 = sphi 0, %s52
    %s54 = sphi 0, %s52
    %s55 = sphi 0, %s54
    %s69 = sphi 0, %s55
    %s73 = sphi 0, %s73
    %s75 = sphi 0, %s73
    %s76 = sphi 0, %s75
    %s90 = sphi 0, %s76
    %s94 = sphi 0, %s94
    %s96 = sphi 0, %s94
    %s97 = sphi 0, %s96
    %s111 = sphi 0, %s97
    %s115 = sphi 0, %s115
    %s117 = sphi 0, %s115
    %s118 = sphi 0, %s117
    %s132 = sphi 0, %s118
    %s136 = sphi 0, %s136
    %s138 = sphi 0, %s136
    %s139 = sphi 0, %s138
    %s153 = sphi 0, %s139
    %s157 = sphi 0, %s157
    %s159 = sphi 0, %s157
    %s160 = sphi 0, %s159
    %s174 = sphi 0, %s160
    %s178 = sphi 0, %s178
    %s180 = sphi 0, %s178
    %s181 = sphi 0, %s180
    %s195 = sphi 0, %s181
    %s199 = sphi 0, %s199
    %s201 = sphi 0, %s199
    %s202 = sphi 0, %s201
    %s216 = sphi 0, %s202
    %s220 = sphi 0, %s220
    %s222 = sphi 0, %s220
    %s223 = sphi 0, %s222
    %s237 = sphi 0, %s223
    %s241 = sphi 0, %s241
    %s243 = sphi 0, %s241
    %s244 = sphi 0, %s243
    %s258 = sphi 0, %s244
    %s262 = sphi 0, %s262
    %s264 = sphi 0, %s262
    %s265 = sphi 0, %s264
    %s279 = sphi 0, %s265
    %s285 = sphi 0, %s287
    %s288 = sphi 0, %s285
    %s289 = sphi 0, %s288
    %s305 = sphi 0, %s289
  $region4: #{res_bottleneck_block_prepared.1} parent=0 // loop_header_branch
    %21 = sbr.rel (%p19) target = $region8
  $region5: #{res_bottleneck_block_prepared.1} parent=0 // loop_body
    %s23 = ssub.s32 %s18, 1
    %s24 = ssub.s32 %s18, 2
    %s25 = sadd.s32 %s18, 1
    %s26 = ssub.s32 %s18, %s25
    %p27 = scmp.eq.s32.totalorder %s26, 0
    %s29 = sadd.s32 %s28, 1
    %s30 = scalar_select %p27, %s28, %s29
    %p33 = pneg %p27
    %p34 = scmp.eq.s32.totalorder %s18, 1
    %p35 = por %p33, %p34
    %p36 = scmp.ne.s32.totalorder %s28, %s31
    %p37 = scmp.eq.s32.totalorder %s18, 0
    %p38 = por %p36, %p37
    %p39 = scmp.ne.s32.totalorder %s28, %s31
    %p40 = scmp.eq.s32.totalorder %s23, 1
    %p41 = por %p39, %p40
    %p42 = scmp.ne.s32.totalorder %s31, %s32
    %p43 = scmp.eq.s32.totalorder %s23, 0
    %p44 = por %p42, %p43
    %p45 = scmp.ne.s32.totalorder %s31, %s32
    %p46 = scmp.eq.s32.totalorder %s24, 1
    %p47 = por %p45, %p46
    %p49 = scmp.ne.s32.totalorder %s32, %s48
    %p50 = scmp.eq.s32.totalorder %s24, 0
    %p51 = por %p49, %p50
    %s53 = sadd.s32 %s52, 1
    %p56 = scmp.eq.s32.totalorder %s18, 1
    %p57 = scmp.ne.s32.totalorder %s52, %s54
    %p58 = scmp.eq.s32.totalorder %s18, 0
    %p59 = por %p57, %p58
    %p60 = scmp.ne.s32.totalorder %s52, %s54
    %p61 = scmp.eq.s32.totalorder %s23, 1
    %p62 = por %p60, %p61
    %p63 = scmp.ne.s32.totalorder %s54, %s55
    %p64 = scmp.eq.s32.totalorder %s23, 0
    %p65 = por %p63, %p64
    %p66 = scmp.ne.s32.totalorder %s54, %s55
    %p67 = scmp.eq.s32.totalorder %s24, 1
    %p68 = por %p66, %p67
    %p70 = scmp.ne.s32.totalorder %s55, %s69
    %p71 = scmp.eq.s32.totalorder %s24, 0
    %p72 = por %p70, %p71
    %s74 = sadd.s32 %s73, 1
    %p77 = scmp.eq.s32.totalorder %s18, 1
    %p78 = scmp.ne.s32.totalorder %s73, %s75
    %p79 = scmp.eq.s32.totalorder %s18, 0
    %p80 = por %p78, %p79
    %p81 = scmp.ne.s32.totalorder %s73, %s75
    %p82 = scmp.eq.s32.totalorder %s23, 1
    %p83 = por %p81, %p82
    %p84 = scmp.ne.s32.totalorder %s75, %s76
    %p85 = scmp.eq.s32.totalorder %s23, 0
    %p86 = por %p84, %p85
    %p87 = scmp.ne.s32.totalorder %s75, %s76
    %p88 = scmp.eq.s32.totalorder %s24, 1
    %p89 = por %p87, %p88
    %p91 = scmp.ne.s32.totalorder %s76, %s90
    %p92 = scmp.eq.s32.totalorder %s24, 0
    %p93 = por %p91, %p92
    %s95 = sadd.s32 %s94, 1
    %p98 = scmp.eq.s32.totalorder %s18, 1
    %p99 = scmp.ne.s32.totalorder %s94, %s96
    %p100 = scmp.eq.s32.totalorder %s18, 0
    %p101 = por %p99, %p100
    %p102 = scmp.ne.s32.totalorder %s94, %s96
    %p103 = scmp.eq.s32.totalorder %s23, 1
    %p104 = por %p102, %p103
    %p105 = scmp.ne.s32.totalorder %s96, %s97
    %p106 = scmp.eq.s32.totalorder %s23, 0
    %p107 = por %p105, %p106
    %p108 = scmp.ne.s32.totalorder %s96, %s97
    %p109 = scmp.eq.s32.totalorder %s24, 1
    %p110 = por %p108, %p109
    %p112 = scmp.ne.s32.totalorder %s97, %s111
    %p113 = scmp.eq.s32.totalorder %s24, 0
    %p114 = por %p112, %p113
    %s116 = sadd.s32 %s115, 1
    %p119 = scmp.eq.s32.totalorder %s18, 1
    %p120 = scmp.ne.s32.totalorder %s115, %s117
    %p121 = scmp.eq.s32.totalorder %s18, 0
    %p122 = por %p120, %p121
    %p123 = scmp.ne.s32.totalorder %s115, %s117
    %p124 = scmp.eq.s32.totalorder %s23, 1
    %p125 = por %p123, %p124
    %p126 = scmp.ne.s32.totalorder %s117, %s118
    %p127 = scmp.eq.s32.totalorder %s23, 0
    %p128 = por %p126, %p127
    %p129 = scmp.ne.s32.totalorder %s117, %s118
    %p130 = scmp.eq.s32.totalorder %s24, 1
    %p131 = por %p129, %p130
    %p133 = scmp.ne.s32.totalorder %s118, %s132
    %p134 = scmp.eq.s32.totalorder %s24, 0
    %p135 = por %p133, %p134
    %s137 = sadd.s32 %s136, 1
    %p140 = scmp.eq.s32.totalorder %s18, 1
    %p141 = scmp.ne.s32.totalorder %s136, %s138
    %p142 = scmp.eq.s32.totalorder %s18, 0
    %p143 = por %p141, %p142
    %p144 = scmp.ne.s32.totalorder %s136, %s138
    %p145 = scmp.eq.s32.totalorder %s23, 1
    %p146 = por %p144, %p145
    %p147 = scmp.ne.s32.totalorder %s138, %s139
    %p148 = scmp.eq.s32.totalorder %s23, 0
    %p149 = por %p147, %p148
    %p150 = scmp.ne.s32.totalorder %s138, %s139
    %p151 = scmp.eq.s32.totalorder %s24, 1
    %p152 = por %p150, %p151
    %p154 = scmp.ne.s32.totalorder %s139, %s153
    %p155 = scmp.eq.s32.totalorder %s24, 0
    %p156 = por %p154, %p155
    %s158 = sadd.s32 %s157, 1
    %p161 = scmp.eq.s32.totalorder %s18, 1
    %p162 = scmp.ne.s32.totalorder %s157, %s159
    %p163 = scmp.eq.s32.totalorder %s18, 0
    %p164 = por %p162, %p163
    %p165 = scmp.ne.s32.totalorder %s157, %s159
    %p166 = scmp.eq.s32.totalorder %s23, 1
    %p167 = por %p165, %p166
    %p168 = scmp.ne.s32.totalorder %s159, %s160
    %p169 = scmp.eq.s32.totalorder %s23, 0
    %p170 = por %p168, %p169
    %p171 = scmp.ne.s32.totalorder %s159, %s160
    %p172 = scmp.eq.s32.totalorder %s24, 1
    %p173 = por %p171, %p172
    %p175 = scmp.ne.s32.totalorder %s160, %s174
    %p176 = scmp.eq.s32.totalorder %s24, 0
    %p177 = por %p175, %p176
    %s179 = sadd.s32 %s178, 1
    %p182 = scmp.eq.s32.totalorder %s18, 1
    %p183 = scmp.ne.s32.totalorder %s178, %s180
    %p184 = scmp.eq.s32.totalorder %s18, 0
    %p185 = por %p183, %p184
    %p186 = scmp.ne.s32.totalorder %s178, %s180
    %p187 = scmp.eq.s32.totalorder %s23, 1
    %p188 = por %p186, %p187
    %p189 = scmp.ne.s32.totalorder %s180, %s181
    %p190 = scmp.eq.s32.totalorder %s23, 0
    %p191 = por %p189, %p190
    %p192 = scmp.ne.s32.totalorder %s180, %s181
    %p193 = scmp.eq.s32.totalorder %s24, 1
    %p194 = por %p192, %p193
    %p196 = scmp.ne.s32.totalorder %s181, %s195
    %p197 = scmp.eq.s32.totalorder %s24, 0
    %p198 = por %p196, %p197
    %s200 = sadd.s32 %s199, 1
    %p203 = scmp.eq.s32.totalorder %s18, 1
    %p204 = scmp.ne.s32.totalorder %s199, %s201
    %p205 = scmp.eq.s32.totalorder %s18, 0
    %p206 = por %p204, %p205
    %p207 = scmp.ne.s32.totalorder %s199, %s201
    %p208 = scmp.eq.s32.totalorder %s23, 1
    %p209 = por %p207, %p208
    %p210 = scmp.ne.s32.totalorder %s201, %s202
    %p211 = scmp.eq.s32.totalorder %s23, 0
    %p212 = por %p210, %p211
    %p213 = scmp.ne.s32.totalorder %s201, %s202
    %p214 = scmp.eq.s32.totalorder %s24, 1
    %p215 = por %p213, %p214
    %p217 = scmp.ne.s32.totalorder %s202, %s216
    %p218 = scmp.eq.s32.totalorder %s24, 0
    %p219 = por %p217, %p218
    %s221 = sadd.s32 %s220, 1
    %p224 = scmp.eq.s32.totalorder %s18, 1
    %p225 = scmp.ne.s32.totalorder %s220, %s222
    %p226 = scmp.eq.s32.totalorder %s18, 0
    %p227 = por %p225, %p226
    %p228 = scmp.ne.s32.totalorder %s220, %s222
    %p229 = scmp.eq.s32.totalorder %s23, 1
    %p230 = por %p228, %p229
    %p231 = scmp.ne.s32.totalorder %s222, %s223
    %p232 = scmp.eq.s32.totalorder %s23, 0
    %p233 = por %p231, %p232
    %p234 = scmp.ne.s32.totalorder %s222, %s223
    %p235 = scmp.eq.s32.totalorder %s24, 1
    %p236 = por %p234, %p235
    %p238 = scmp.ne.s32.totalorder %s223, %s237
    %p239 = scmp.eq.s32.totalorder %s24, 0
    %p240 = por %p238, %p239
    %s242 = sadd.s32 %s241, 1
    %p245 = scmp.eq.s32.totalorder %s18, 1
    %p246 = scmp.ne.s32.totalorder %s241, %s243
    %p247 = scmp.eq.s32.totalorder %s18, 0
    %p248 = por %p246, %p247
    %p249 = scmp.ne.s32.totalorder %s241, %s243
    %p250 = scmp.eq.s32.totalorder %s23, 1
    %p251 = por %p249, %p250
    %p252 = scmp.ne.s32.totalorder %s243, %s244
    %p253 = scmp.eq.s32.totalorder %s23, 0
    %p254 = por %p252, %p253
    %p255 = scmp.ne.s32.totalorder %s243, %s244
    %p256 = scmp.eq.s32.totalorder %s24, 1
    %p257 = por %p255, %p256
    %p259 = scmp.ne.s32.totalorder %s244, %s258
    %p260 = scmp.eq.s32.totalorder %s24, 0
    %p261 = por %p259, %p260
    %s263 = sadd.s32 %s262, 1
    %p266 = scmp.eq.s32.totalorder %s18, 1
    %p267 = scmp.ne.s32.totalorder %s262, %s264
    %p268 = scmp.eq.s32.totalorder %s18, 0
    %p269 = por %p267, %p268
    %p270 = scmp.ne.s32.totalorder %s262, %s264
    %p271 = scmp.eq.s32.totalorder %s23, 1
    %p272 = por %p270, %p271
    %p273 = scmp.ne.s32.totalorder %s264, %s265
    %p274 = scmp.eq.s32.totalorder %s23, 0
    %p275 = por %p273, %p274
    %p276 = scmp.ne.s32.totalorder %s264, %s265
    %p277 = scmp.eq.s32.totalorder %s24, 1
    %p278 = por %p276, %p277
    %p280 = scmp.ne.s32.totalorder %s265, %s279
    %p281 = scmp.eq.s32.totalorder %s24, 0
    %p282 = por %p280, %p281
    %s283 = ssub.s32 %s18, %s25
    %p284 = scmp.eq.s32.totalorder %s283, 0
    %s286 = sadd.s32 %s285, 1
    %s287 = scalar_select %p284, %s285, %s286
    %p290 = pneg %p284
    %p291 = scmp.eq.s32.totalorder %s18, 1
    %p292 = por %p290, %p291
    %p293 = scmp.ne.s32.totalorder %s285, %s288
    %p294 = scmp.eq.s32.totalorder %s18, 0
    %p295 = por %p293, %p294
    %p296 = scmp.ne.s32.totalorder %s285, %s288
    %p297 = scmp.eq.s32.totalorder %s23, 1
    %p298 = por %p296, %p297
    %p299 = scmp.ne.s32.totalorder %s288, %s289
    %p300 = scmp.eq.s32.totalorder %s23, 0
    %p301 = por %p299, %p300
    %p302 = scmp.ne.s32.totalorder %s288, %s289
    %p303 = scmp.eq.s32.totalorder %s24, 1
    %p304 = por %p302, %p303
    %p306 = scmp.ne.s32.totalorder %s289, %s305
    %p307 = scmp.eq.s32.totalorder %s24, 0
    %p308 = por %p306, %p307
    %p309 = scmp.le.s32.totalorder 1, %s18
    %p310 = scmp.lt.s32.totalorder %s18, 3
    %p311 = pnand %p309, %p310
    %p312 = pneg %p311
    // Predicated region
    $region9: #{res_bottleneck_block_prepared.1} parent=5 // pred_check
      _
    $region10: #{res_bottleneck_block_prepared.1} parent=5 // pred_check_branch
      %314 = sbr.rel (%p311) target = $region12
    $region11: #{res_bottleneck_block_prepared.1} parent=5 // pred_region
      %s315 = ssub.s32 %s18, 1
      // Predicated region
      $region13: #{res_bottleneck_block_prepared.1} parent=11 // pred_check
        %p316 = pneg %p65
      $region14: #{res_bottleneck_block_prepared.1} parent=11 // pred_check_branch
        %318 = sbr.rel (%p316) target = $region16
      $region15: #{res_bottleneck_block_prepared.1} parent=11 // pred_region
        _
      $region16: #{res_bottleneck_block_prepared.1} parent=11 // pred_fallthru
        _
      // Predicated region
      $region17: #{res_bottleneck_block_prepared.1} parent=11 // pred_check
        %p319 = pneg %p86
      $region18: #{res_bottleneck_block_prepared.1} parent=11 // pred_check_branch
        %321 = sbr.rel (%p319) target = $region20
      $region19: #{res_bottleneck_block_prepared.1} parent=11 // pred_region
        _
      $region20: #{res_bottleneck_block_prepared.1} parent=11 // pred_fallthru
        _
      // Predicated region
      $region21: #{res_bottleneck_block_prepared.1} parent=11 // pred_check
        %p322 = pneg %p107
      $region22: #{res_bottleneck_block_prepared.1} parent=11 // pred_check_branch
        %324 = sbr.rel (%p322) target = $region24
      $region23: #{res_bottleneck_block_prepared.1} parent=11 // pred_region
        _
      $region24: #{res_bottleneck_block_prepared.1} parent=11 // pred_fallthru
        _
      // Predicated region
      $region25: #{res_bottleneck_block_prepared.1} parent=11 // pred_check
        %p325 = pneg %p128
      $region26: #{res_bottleneck_block_prepared.1} parent=11 // pred_check_branch
        %327 = sbr.rel (%p325) target = $region28
      $region27: #{res_bottleneck_block_prepared.1} parent=11 // pred_region
        _
      $region28: #{res_bottleneck_block_prepared.1} parent=11 // pred_fallthru
        _
      // Predicated region
      $region29: #{res_bottleneck_block_prepared.1} parent=11 // pred_check
        %p328 = pneg %p149
      $region30: #{res_bottleneck_block_prepared.1} parent=11 // pred_check_branch
        %330 = sbr.rel (%p328) target = $region32
      $region31: #{res_bottleneck_block_prepared.1} parent=11 // pred_region
        _
      $region32: #{res_bottleneck_block_prepared.1} parent=11 // pred_fallthru
        _
      // Predicated region
      $region33: #{res_bottleneck_block_prepared.1} parent=11 // pred_check
        %p331 = pneg %p170
      $region34: #{res_bottleneck_block_prepared.1} parent=11 // pred_check_branch
        %333 = sbr.rel (%p331) target = $region36
      $region35: #{res_bottleneck_block_prepared.1} parent=11 // pred_region
        _
      $region36: #{res_bottleneck_block_prepared.1} parent=11 // pred_fallthru
        _
      // Predicated region
      $region37: #{res_bottleneck_block_prepared.1} parent=11 // pred_check
        %p334 = pneg %p191
      $region38: #{res_bottleneck_block_prepared.1} parent=11 // pred_check_branch
        %336 = sbr.rel (%p334) target = $region40
      $region39: #{res_bottleneck_block_prepared.1} parent=11 // pred_region
        _
      $region40: #{res_bottleneck_block_prepared.1} parent=11 // pred_fallthru
        _
      // Predicated region
      $region41: #{res_bottleneck_block_prepared.1} parent=11 // pred_check
        %p337 = pneg %p212
      $region42: #{res_bottleneck_block_prepared.1} parent=11 // pred_check_branch
        %339 = sbr.rel (%p337) target = $region44
      $region43: #{res_bottleneck_block_prepared.1} parent=11 // pred_region
        _
      $region44: #{res_bottleneck_block_prepared.1} parent=11 // pred_fallthru
        _
      // Predicated region
      $region45: #{res_bottleneck_block_prepared.1} parent=11 // pred_check
        %p340 = pneg %p233
      $region46: #{res_bottleneck_block_prepared.1} parent=11 // pred_check_branch
        %342 = sbr.rel (%p340) target = $region48
      $region47: #{res_bottleneck_block_prepared.1} parent=11 // pred_region
        _
      $region48: #{res_bottleneck_block_prepared.1} parent=11 // pred_fallthru
        _
      // Predicated region
      $region49: #{res_bottleneck_block_prepared.1} parent=11 // pred_check
        %p343 = pneg %p254
      $region50: #{res_bottleneck_block_prepared.1} parent=11 // pred_check_branch
        %345 = sbr.rel (%p343) target = $region52
      $region51: #{res_bottleneck_block_prepared.1} parent=11 // pred_region
        _
      $region52: #{res_bottleneck_block_prepared.1} parent=11 // pred_fallthru
        _
      // Predicated region
      $region53: #{res_bottleneck_block_prepared.1} parent=11 // pred_check
        %p346 = pneg %p275
      $region54: #{res_bottleneck_block_prepared.1} parent=11 // pred_check_branch
        %348 = sbr.rel (%p346) target = $region56
      $region55: #{res_bottleneck_block_prepared.1} parent=11 // pred_region
        _
      $region56: #{res_bottleneck_block_prepared.1} parent=11 // pred_fallthru
        _
    $region12: #{res_bottleneck_block_prepared.1} parent=5 // pred_fallthru
      _
    %p349 = scmp.lt.s32.totalorder %s18, 2
    // Predicated region
    $region57: #{res_bottleneck_block_prepared.1} parent=5 // pred_check
      %p350 = pneg %p349
    $region58: #{res_bottleneck_block_prepared.1} parent=5 // pred_check_branch
      %352 = sbr.rel (%p350) target = $region60
    $region59: #{res_bottleneck_block_prepared.1} parent=5 // pred_region
      // Predicated region
      $region61: #{res_bottleneck_block_prepared.1} parent=59 // pred_check
        %p353 = pneg %p38
      $region62: #{res_bottleneck_block_prepared.1} parent=59 // pred_check_branch
        %355 = sbr.rel (%p353) target = $region64
      $region63: #{res_bottleneck_block_prepared.1} parent=59 // pred_region
        %p356 = scmp.lt.s32.totalorder %s18, 1
        %s357 = scalar_select %p356, %s18, 1
        %s358 = smul.addr %s357, 96
        %s359 = smul.addr %s358, 8
        %s360 = scalar_lea.vmem %s0, %s359
      $region64: #{res_bottleneck_block_prepared.1} parent=59 // pred_fallthru
        _
    $region60: #{res_bottleneck_block_prepared.1} parent=5 // pred_fallthru
      _
    %p361 = scmp.le.s32.totalorder 1, %s18
    %p362 = scmp.lt.s32.totalorder %s18, 3
    %p363 = pnand %p361, %p362
    %p364 = pneg %p363
    // Predicated region
    $region65: #{res_bottleneck_block_prepared.1} parent=5 // pred_check
      _
    $region66: #{res_bottleneck_block_prepared.1} parent=5 // pred_check_branch
      %366 = sbr.rel (%p363) target = $region68
    $region67: #{res_bottleneck_block_prepared.1} parent=5 // pred_region
      %s367 = ssub.s32 %s18, 1
      %p368 = scmp.lt.s32.totalorder %s23, 1
      %s369 = scalar_select %p368, %s23, 1
      %s370 = smul.addr %s369, 96
      %s371 = smul.addr %s370, 8
      %s372 = scalar_lea.vmem %s0, %s371
      %p373 = pneg %p44
      %p374 = pneg %p41
      %p375 = pneg %p65
      %p376 = pneg %p62
      %p377 = pneg %p86
      %p378 = pneg %p83
      %p379 = pneg %p107
      %p380 = pneg %p104
      %p381 = pneg %p128
      %p382 = pneg %p125
      %p383 = pneg %p149
      %p384 = pneg %p146
      %p385 = pneg %p170
      %p386 = pneg %p167
      %p387 = pneg %p191
      %p388 = pneg %p188
      %p389 = pneg %p212
      %p390 = pneg %p209
      %p391 = pneg %p233
      %p392 = pneg %p230
      %p393 = pneg %p254
      %p394 = pneg %p251
      %p395 = pneg %p275
      %p396 = pneg %p272
      %p397 = pneg %p301
      %p398 = pneg %p298
      %p399 = scmp.lt.s32.totalorder %s23, 1
      %s400 = scalar_select %p399, %s23, 1
      %s401 = smul.addr %s400, 96
      %s402 = smul.addr %s401, 8
      %s403 = scalar_lea.vmem %s12, %s402
      %p404 = scmp.lt.s32.totalorder %s23, 1
      %s405 = scalar_select %p404, %s23, 1
      %s406 = smul.addr %s405, 96
      %s407 = smul.addr %s406, 8
      %s408 = scalar_lea.vmem %s0, %s407
      %p409 = scmp.lt.s32.totalorder %s23, 1
      %s410 = scalar_select %p409, %s23, 1
      %s411 = smul.addr %s410, 96
      %s412 = smul.addr %s411, 8
      %s413 = scalar_lea.vmem %s12, %s412
      %v414 = vld [vmem:[%s3] sm:$0xff]
      %v415 = vld [vmem:[%s3 + $0x8] sm:$0xff]
      %v416 = vld [vmem:[%s3 + $0x10] sm:$0xff]
      %v417 = vld [vmem:[%s3 + $0x18] sm:$0xff]
      %v418 = vld [vmem:[%s3 + $0x20] sm:$0xff]
      %v419 = vld [vmem:[%s3 + $0x28] sm:$0xff]
      %v420 = vld [vmem:[%s3 + $0x30] sm:$0xff]
      %v421 = vld [vmem:[%s3 + $0x38] sm:$0xff]
      %v422 = vld [vmem:[%s3 + $0x40] sm:$0xff]
      %v423 = vld [vmem:[%s3 + $0x48] sm:$0xff]
      %v424 = vld [vmem:[%s3 + $0x50] sm:$0xff]
      %v425 = vld [vmem:[%s3 + $0x58] sm:$0xff]
      %v426 = vld [vmem:[%s3 + $0x60] sm:$0xff]
      %v427 = vld [vmem:[%s3 + $0x68] sm:$0xff]
      %v428 = vld [vmem:[%s3 + $0x70] sm:$0xff]
      %v429 = vld [vmem:[%s3 + $0x78] sm:$0xff]
      %v430 = vld [vmem:[%s3 + $0x80] sm:$0xff]
      %v431 = vld [vmem:[%s3 + $0x88] sm:$0xff]
      %v432 = vld [vmem:[%s3 + $0x90] sm:$0xff]
      %v433 = vld [vmem:[%s3 + $0x98] sm:$0xff]
      %v434 = vld [vmem:[%s3 + $0xa0] sm:$0xff]
      %v435 = vld [vmem:[%s3 + $0xa8] sm:$0xff]
      %v436 = vld [vmem:[%s3 + $0xb0] sm:$0xff]
      %v437 = vld [vmem:[%s3 + $0xb8] sm:$0xff]
      %v438 = vld [vmem:[%s3 + $0xc0] sm:$0xff]
      %v439 = vld [vmem:[%s3 + $0xc8] sm:$0xff]
      %v440 = vld [vmem:[%s3 + $0xd0] sm:$0xff]
      %v441 = vld [vmem:[%s3 + $0xd8] sm:$0xff]
      %v442 = vld [vmem:[%s3 + $0xe0] sm:$0xff]
      %v443 = vld [vmem:[%s3 + $0xe8] sm:$0xff]
      %v444 = vld [vmem:[%s3 + $0xf0] sm:$0xff]
      %v445 = vld [vmem:[%s3 + $0xf8] sm:$0xff]
      %v446 = vld [vmem:[%s3 + $0x100] sm:$0xff]
      %v447 = vld [vmem:[%s3 + $0x108] sm:$0xff]
      %v448 = vld [vmem:[%s3 + $0x110] sm:$0xff]
      %v449 = vld [vmem:[%s3 + $0x118] sm:$0xff]
      %v450 = vld [vmem:[%s3 + $0x120] sm:$0xff]
      %v451 = vld [vmem:[%s3 + $0x128] sm:$0xff]
      %v452 = vld [vmem:[%s3 + $0x130] sm:$0xff]
      %v453 = vld [vmem:[%s3 + $0x138] sm:$0xff]
      %v454 = vld [vmem:[%s3 + $0x140] sm:$0xff]
      %v455 = vld [vmem:[%s3 + $0x148] sm:$0xff]
      %v456 = vld [vmem:[%s3 + $0x150] sm:$0xff]
      %v457 = vld [vmem:[%s3 + $0x158] sm:$0xff]
      %v458 = vld [vmem:[%s3 + $0x160] sm:$0xff]
      %v459 = vld [vmem:[%s3 + $0x168] sm:$0xff]
      %v460 = vld [vmem:[%s3 + $0x170] sm:$0xff]
      %v461 = vld [vmem:[%s3 + $0x178] sm:$0xff]
      %v462 = vld [vmem:[%s3 + $0x180] sm:$0xff]
      %v463 = vld [vmem:[%s3 + $0x188] sm:$0xff]
      %v464 = vld [vmem:[%s3 + $0x190] sm:$0xff]
      %v465 = vld [vmem:[%s3 + $0x198] sm:$0xff]
      %v466 = vld [vmem:[%s3 + $0x1a0] sm:$0xff]
      %v467 = vld [vmem:[%s3 + $0x1a8] sm:$0xff]
      %v468 = vld [vmem:[%s3 + $0x1b0] sm:$0xff]
      %v469 = vld [vmem:[%s3 + $0x1b8] sm:$0xff]
      %v470 = vld [vmem:[%s3 + $0x1c0] sm:$0xff]
      %v471 = vld [vmem:[%s3 + $0x1c8] sm:$0xff]
      %v472 = vld [vmem:[%s3 + $0x1d0] sm:$0xff]
      %v473 = vld [vmem:[%s3 + $0x1d8] sm:$0xff]
      %v474 = vld [vmem:[%s3 + $0x1e0] sm:$0xff]
      %v475 = vld [vmem:[%s3 + $0x1e8] sm:$0xff]
      %v476 = vld [vmem:[%s3 + $0x1f0] sm:$0xff]
      %v477 = vld [vmem:[%s3 + $0x1f8] sm:$0xff]
      %v478 = vld [vmem:[%s3 + $0x200] sm:$0xff]
      %v479 = vld [vmem:[%s3 + $0x208] sm:$0xff]
      %v480 = vld [vmem:[%s3 + $0x210] sm:$0xff]
      %v481 = vld [vmem:[%s3 + $0x218] sm:$0xff]
      %v482 = vld [vmem:[%s3 + $0x220] sm:$0xff]
      %v483 = vld [vmem:[%s3 + $0x228] sm:$0xff]
      %v484 = vld [vmem:[%s3 + $0x230] sm:$0xff]
      %v485 = vld [vmem:[%s3 + $0x238] sm:$0xff]
      %v486 = vld [vmem:[%s408] sm:$0xff]
      %v487 = vld [vmem:[%s408 + $0x8] sm:$0xff]
      %v488 = vld [vmem:[%s408 + $0x10] sm:$0xff]
      %v489 = vld [vmem:[%s408 + $0x18] sm:$0xff]
      %v490 = vld [vmem:[%s408 + $0x20] sm:$0xff]
      %v491 = vld [vmem:[%s408 + $0x28] sm:$0xff]
      %v492 = vld [vmem:[%s408 + $0x30] sm:$0xff]
      %v493 = vld [vmem:[%s408 + $0x38] sm:$0xff]
      %v494 = vld [vmem:[%s408 + $0x40] sm:$0xff]
      %v495 = vld [vmem:[%s408 + $0x48] sm:$0xff]
      %v496 = vld [vmem:[%s408 + $0x50] sm:$0xff]
      %v497 = vld [vmem:[%s408 + $0x58] sm:$0xff]
      %v498 = vld [vmem:[%s408 + $0x60] sm:$0xff]
      %v499 = vld [vmem:[%s408 + $0x68] sm:$0xff]
      %v500 = vld [vmem:[%s408 + $0x70] sm:$0xff]
      %v501 = vld [vmem:[%s408 + $0x78] sm:$0xff]
      %v502 = vld [vmem:[%s408 + $0x80] sm:$0xff]
      %v503 = vld [vmem:[%s408 + $0x88] sm:$0xff]
      %v504 = vld [vmem:[%s408 + $0x90] sm:$0xff]
      %v505 = vld [vmem:[%s408 + $0x98] sm:$0xff]
      %v506 = vld [vmem:[%s408 + $0xa0] sm:$0xff]
      %v507 = vld [vmem:[%s408 + $0xa8] sm:$0xff]
      %v508 = vld [vmem:[%s408 + $0xb0] sm:$0xff]
      %v509 = vld [vmem:[%s408 + $0xb8] sm:$0xff]
      %v510 = vld [vmem:[%s408 + $0xc0] sm:$0xff]
      %v511 = vld [vmem:[%s408 + $0xc8] sm:$0xff]
      %v512 = vld [vmem:[%s408 + $0xd0] sm:$0xff]
      %v513 = vld [vmem:[%s408 + $0xd8] sm:$0xff]
      %v514 = vld [vmem:[%s408 + $0xe0] sm:$0xff]
      %v515 = vld [vmem:[%s408 + $0xe8] sm:$0xff]
      %v516 = vld [vmem:[%s408 + $0xf0] sm:$0xff]
      %v517 = vld [vmem:[%s408 + $0xf8] sm:$0xff]
      %v518 = vld [vmem:[%s408 + $0x100] sm:$0xff]
      %v519 = vld [vmem:[%s408 + $0x108] sm:$0xff]
      %v520 = vld [vmem:[%s408 + $0x110] sm:$0xff]
      %v521 = vld [vmem:[%s408 + $0x118] sm:$0xff]
      %v522 = vld [vmem:[%s408 + $0x120] sm:$0xff]
      %v523 = vld [vmem:[%s408 + $0x128] sm:$0xff]
      %v524 = vld [vmem:[%s408 + $0x130] sm:$0xff]
      %v525 = vld [vmem:[%s408 + $0x138] sm:$0xff]
      %v526 = vld [vmem:[%s408 + $0x140] sm:$0xff]
      %v527 = vld [vmem:[%s408 + $0x148] sm:$0xff]
      %v528 = vld [vmem:[%s408 + $0x150] sm:$0xff]
      %v529 = vld [vmem:[%s408 + $0x158] sm:$0xff]
      %v530 = vld [vmem:[%s408 + $0x160] sm:$0xff]
      %v531 = vld [vmem:[%s408 + $0x168] sm:$0xff]
      %v532 = vld [vmem:[%s408 + $0x170] sm:$0xff]
      %v533 = vld [vmem:[%s408 + $0x178] sm:$0xff]
      %v534 = vld [vmem:[%s408 + $0x180] sm:$0xff]
      %v535 = vld [vmem:[%s408 + $0x188] sm:$0xff]
      %v536 = vld [vmem:[%s408 + $0x190] sm:$0xff]
      %v537 = vld [vmem:[%s408 + $0x198] sm:$0xff]
      %v538 = vld [vmem:[%s408 + $0x1a0] sm:$0xff]
      %v539 = vld [vmem:[%s408 + $0x1a8] sm:$0xff]
      %v540 = vld [vmem:[%s408 + $0x1b0] sm:$0xff]
      %v541 = vld [vmem:[%s408 + $0x1b8] sm:$0xff]
      %v542 = vld [vmem:[%s408 + $0x1c0] sm:$0xff]
      %v543 = vld [vmem:[%s408 + $0x1c8] sm:$0xff]
      %v544 = vld [vmem:[%s408 + $0x1d0] sm:$0xff]
      %v545 = vld [vmem:[%s408 + $0x1d8] sm:$0xff]
      %v546 = vld [vmem:[%s408 + $0x1e0] sm:$0xff]
      %v547 = vld [vmem:[%s408 + $0x1e8] sm:$0xff]
      %v548 = vld [vmem:[%s408 + $0x1f0] sm:$0xff]
      %v549 = vld [vmem:[%s408 + $0x1f8] sm:$0xff]
      %v550 = vld [vmem:[%s408 + $0x200] sm:$0xff]
      %v551 = vld [vmem:[%s408 + $0x208] sm:$0xff]
      %v552 = vld [vmem:[%s408 + $0x210] sm:$0xff]
      %v553 = vld [vmem:[%s408 + $0x218] sm:$0xff]
      %v554 = vld [vmem:[%s408 + $0x220] sm:$0xff]
      %v555 = vld [vmem:[%s408 + $0x228] sm:$0xff]
      %v556 = vld [vmem:[%s408 + $0x230] sm:$0xff]
      %v557 = vld [vmem:[%s408 + $0x238] sm:$0xff]
      %v558 = vld [vmem:[%s408 + $0x240] sm:$0xff]
      %v559 = vld [vmem:[%s408 + $0x248] sm:$0xff]
      %v560 = vld [vmem:[%s408 + $0x250] sm:$0xff]
      %v561 = vld [vmem:[%s408 + $0x258] sm:$0xff]
      %v562 = vld [vmem:[%s408 + $0x260] sm:$0xff]
      %v563 = vld [vmem:[%s408 + $0x268] sm:$0xff]
      %v564 = vld [vmem:[%s408 + $0x270] sm:$0xff]
      %v565 = vld [vmem:[%s408 + $0x278] sm:$0xff]
      %v566 = vld [vmem:[%s408 + $0x280] sm:$0xff]
      %v567 = vld [vmem:[%s408 + $0x288] sm:$0xff]
      %v568 = vld [vmem:[%s408 + $0x290] sm:$0xff]
      %v569 = vld [vmem:[%s408 + $0x298] sm:$0xff]
      %v570 = vld [vmem:[%s408 + $0x2a0] sm:$0xff]
      %v571 = vld [vmem:[%s408 + $0x2a8] sm:$0xff]
      %v572 = vld [vmem:[%s408 + $0x2b0] sm:$0xff]
      %v573 = vld [vmem:[%s408 + $0x2b8] sm:$0xff]
      %v574 = vld [vmem:[%s408 + $0x2c0] sm:$0xff]
      %v575 = vld [vmem:[%s408 + $0x2c8] sm:$0xff]
      %v576 = vld [vmem:[%s408 + $0x2d0] sm:$0xff]
      %v577 = vld [vmem:[%s408 + $0x2d8] sm:$0xff]
      %v578 = vld [vmem:[%s408 + $0x2e0] sm:$0xff]
      %v579 = vld [vmem:[%s408 + $0x2e8] sm:$0xff]
      %v580 = vld [vmem:[%s408 + $0x2f0] sm:$0xff]
      %v581 = vld [vmem:[%s408 + $0x2f8] sm:$0xff]
      %582 = vmatprep.subr.mxu0 %v517
      %583 = vmatpush1.msra.mxu0 %v516
      %584 = vmatprep.subr.mxu0 %v515
      %585 = vmatpush1.msra.mxu0 %v514
      %586 = vmatprep.subr.mxu0 %v513
      %587 = vmatpush1.msra.mxu0 %v512
      %588 = vmatprep.subr.mxu0 %v511
      %589 = vmatpush1.msra.mxu0 %v510
      %590 = vmatprep.subr.mxu0 %v509
      %591 = vmatpush1.msra.mxu0 %v508
      %592 = vmatprep.subr.mxu0 %v507
      %593 = vmatpush1.msra.mxu0 %v506
      %594 = vmatprep.subr.mxu0 %v505
      %595 = vmatpush1.msra.mxu0 %v504
      %596 = vmatprep.subr.mxu0 %v503
      %597 = vmatpush1.msra.mxu0 %v502
      %598 = vmatprep.subr.mxu0 %v501
      %599 = vmatpush1.msra.mxu0 %v500
      %600 = vmatprep.subr.mxu0 %v499
      %601 = vmatpush1.msra.mxu0 %v498
      %602 = vmatprep.subr.mxu0 %v497
      %603 = vmatpush1.msra.mxu0 %v496
      %604 = vmatprep.subr.mxu0 %v495
      %605 = vmatpush1.msra.mxu0 %v494
      %606 = vmatprep.subr.mxu0 %v493
      %607 = vmatpush1.msra.mxu0 %v492
      %608 = vmatprep.subr.mxu0 %v491
      %609 = vmatpush1.msra.mxu0 %v490
      %610 = vmatprep.subr.mxu0 %v489
      %611 = vmatpush1.msra.mxu0 %v488
      %612 = vmatprep.subr.mxu0 %v487
      %613 = vmatpush1.msra.mxu0 %v486
      %614 = vmatprep.subr.mxu0 %v549
      %615 = vmatpush2.msra.mxu0 %v548
      %616 = vmatprep.subr.mxu0 %v547
      %617 = vmatpush2.msra.mxu0 %v546
      %618 = vmatprep.subr.mxu0 %v545
      %619 = vmatpush2.msra.mxu0 %v544
      %620 = vmatprep.subr.mxu0 %v543
      %621 = vmatpush2.msra.mxu0 %v542
      %622 = vmatprep.subr.mxu0 %v541
      %623 = vmatpush2.msra.mxu0 %v540
      %624 = vmatprep.subr.mxu0 %v539
      %625 = vmatpush2.msra.mxu0 %v538
      %626 = vmatprep.subr.mxu0 %v537
      %627 = vmatpush2.msra.mxu0 %v536
      %628 = vmatprep.subr.mxu0 %v535
      %629 = vmatpush2.msra.mxu0 %v534
      %630 = vmatprep.subr.mxu0 %v533
      %631 = vmatpush2.msra.mxu0 %v532
      %632 = vmatprep.subr.mxu0 %v531
      %633 = vmatpush2.msra.mxu0 %v530
      %634 = vmatprep.subr.mxu0 %v529
      %635 = vmatpush2.msra.mxu0 %v528
      %636 = vmatprep.subr.mxu0 %v527
      %637 = vmatpush2.msra.mxu0 %v526
      %638 = vmatprep.subr.mxu0 %v525
      %639 = vmatpush2.msra.mxu0 %v524
      %640 = vmatprep.subr.mxu0 %v523
      %641 = vmatpush2.msra.mxu0 %v522
      %642 = vmatprep.subr.mxu0 %v521
      %643 = vmatpush2.msra.mxu0 %v520
      %644 = vmatprep.subr.mxu0 %v519
      %645 = vmatpush2.msra.mxu0 %v518
      %646 = vmatprep.mubr.f32.mxu0 %v415
      %647 = vmatmul.mubr.f32.gmra.mxu0 %v414
      %v648 = vpop.f32.mrf.mxu0
      %v649 = vadd.f32 0.0, %v648
      %v650 = vpop.f32.mrf.mxu0
      %v651 = vadd.f32 0.0, %v650
      %652 = vmatprep.mubr.f32.mxu0 %v418
      %653 = vmatmul.mubr.f32.gmra.mxu0 %v417
      %v654 = vpop.f32.mrf.mxu0
      %v655 = vadd.f32 0.0, %v654
      %v656 = vpop.f32.mrf.mxu0
      %v657 = vadd.f32 0.0, %v656
      %658 = vmatprep.mubr.f32.mxu0 %v421
      %659 = vmatmul.mubr.f32.gmra.mxu0 %v420
      %v660 = vpop.f32.mrf.mxu0
      %v661 = vadd.f32 0.0, %v660
      %v662 = vpop.f32.mrf.mxu0
      %v663 = vadd.f32 0.0, %v662
      %664 = vmatprep.mubr.f32.mxu0 %v424
      %665 = vmatmul.mubr.f32.gmra.mxu0 %v423
      %v666 = vpop.f32.mrf.mxu0
      %v667 = vadd.f32 0.0, %v666
      %v668 = vpop.f32.mrf.mxu0
      %v669 = vadd.f32 0.0, %v668
      %670 = vmatprep.mubr.f32.mxu0 %v427
      %671 = vmatmul.mubr.f32.gmra.mxu0 %v426
      %v672 = vpop.f32.mrf.mxu0
      %v673 = vadd.f32 0.0, %v672
      %v674 = vpop.f32.mrf.mxu0
      %v675 = vadd.f32 0.0, %v674
      %676 = vmatprep.mubr.f32.mxu0 %v430
      %677 = vmatmul.mubr.f32.gmra.mxu0 %v429
      %v678 = vpop.f32.mrf.mxu0
      %v679 = vadd.f32 0.0, %v678
      %v680 = vpop.f32.mrf.mxu0
      %v681 = vadd.f32 0.0, %v680
      %682 = vmatprep.mubr.f32.mxu0 %v433
      %683 = vmatmul.mubr.f32.gmra.mxu0 %v432
      %v684 = vpop.f32.mrf.mxu0
      %v685 = vadd.f32 0.0, %v684
      %v686 = vpop.f32.mrf.mxu0
      %v687 = vadd.f32 0.0, %v686
      %688 = vmatprep.mubr.f32.mxu0 %v436
      %689 = vmatmul.mubr.f32.gmra.mxu0 %v435
      %v690 = vpop.f32.mrf.mxu0
      %v691 = vadd.f32 0.0, %v690
      %v692 = vpop.f32.mrf.mxu0
      %v693 = vadd.f32 0.0, %v692
      %694 = vmatprep.mubr.f32.mxu0 %v439
      %695 = vmatmul.mubr.f32.gmra.mxu0 %v438
      %v696 = vpop.f32.mrf.mxu0
      %v697 = vadd.f32 0.0, %v696
      %v698 = vpop.f32.mrf.mxu0
      %v699 = vadd.f32 0.0, %v698
      %700 = vmatprep.mubr.f32.mxu0 %v442
      %701 = vmatmul.mubr.f32.gmra.mxu0 %v441
      %v702 = vpop.f32.mrf.mxu0
      %v703 = vadd.f32 0.0, %v702
      %v704 = vpop.f32.mrf.mxu0
      %v705 = vadd.f32 0.0, %v704
      %706 = vmatprep.mubr.f32.mxu0 %v445
      %707 = vmatmul.mubr.f32.gmra.mxu0 %v444
      %v708 = vpop.f32.mrf.mxu0
      %v709 = vadd.f32 0.0, %v708
      %v710 = vpop.f32.mrf.mxu0
      %v711 = vadd.f32 0.0, %v710
      %712 = vmatprep.mubr.f32.mxu0 %v448
      %713 = vmatmul.mubr.f32.gmra.mxu0 %v447
      %v714 = vpop.f32.mrf.mxu0
      %v715 = vadd.f32 0.0, %v714
      %v716 = vpop.f32.mrf.mxu0
      %v717 = vadd.f32 0.0, %v716
      %718 = vmatprep.mubr.f32.mxu0 %v451
      %719 = vmatmul.mubr.f32.gmra.mxu0 %v450
      %v720 = vpop.f32.mrf.mxu0
      %v721 = vadd.f32 0.0, %v720
      %v722 = vpop.f32.mrf.mxu0
      %v723 = vadd.f32 0.0, %v722
      %724 = vmatprep.mubr.f32.mxu0 %v454
      %725 = vmatmul.mubr.f32.gmra.mxu0 %v453
      %v726 = vpop.f32.mrf.mxu0
      %v727 = vadd.f32 0.0, %v726
      %v728 = vpop.f32.mrf.mxu0
      %v729 = vadd.f32 0.0, %v728
      %730 = vmatprep.mubr.f32.mxu0 %v457
      %731 = vmatmul.mubr.f32.gmra.mxu0 %v456
      %v732 = vpop.f32.mrf.mxu0
      %v733 = vadd.f32 0.0, %v732
      %v734 = vpop.f32.mrf.mxu0
      %v735 = vadd.f32 0.0, %v734
      %736 = vmatprep.mubr.f32.mxu0 %v460
      %737 = vmatmul.mubr.f32.gmra.mxu0 %v459
      %v738 = vpop.f32.mrf.mxu0
      %v739 = vadd.f32 0.0, %v738
      %v740 = vpop.f32.mrf.mxu0
      %v741 = vadd.f32 0.0, %v740
      %742 = vmatprep.mubr.f32.mxu0 %v463
      %743 = vmatmul.mubr.f32.gmra.mxu0 %v462
      %v744 = vpop.f32.mrf.mxu0
      %v745 = vadd.f32 0.0, %v744
      %v746 = vpop.f32.mrf.mxu0
      %v747 = vadd.f32 0.0, %v746
      %748 = vmatprep.mubr.f32.mxu0 %v466
      %749 = vmatmul.mubr.f32.gmra.mxu0 %v465
      %v750 = vpop.f32.mrf.mxu0
      %v751 = vadd.f32 0.0, %v750
      %v752 = vpop.f32.mrf.mxu0
      %v753 = vadd.f32 0.0, %v752
      %754 = vmatprep.mubr.f32.mxu0 %v469
      %755 = vmatmul.mubr.f32.gmra.mxu0 %v468
      %v756 = vpop.f32.mrf.mxu0
      %v757 = vadd.f32 0.0, %v756
      %v758 = vpop.f32.mrf.mxu0
      %v759 = vadd.f32 0.0, %v758
      %760 = vmatprep.mubr.f32.mxu0 %v472
      %761 = vmatmul.mubr.f32.gmra.mxu0 %v471
      %v762 = vpop.f32.mrf.mxu0
      %v763 = vadd.f32 0.0, %v762
      %v764 = vpop.f32.mrf.mxu0
      %v765 = vadd.f32 0.0, %v764
      %766 = vmatprep.mubr.f32.mxu0 %v475
      %767 = vmatmul.mubr.f32.gmra.mxu0 %v474
      %v768 = vpop.f32.mrf.mxu0
      %v769 = vadd.f32 0.0, %v768
      %v770 = vpop.f32.mrf.mxu0
      %v771 = vadd.f32 0.0, %v770
      %772 = vmatprep.mubr.f32.mxu0 %v478
      %773 = vmatmul.mubr.f32.gmra.mxu0 %v477
      %v774 = vpop.f32.mrf.mxu0
      %v775 = vadd.f32 0.0, %v774
      %v776 = vpop.f32.mrf.mxu0
      %v777 = vadd.f32 0.0, %v776
      %778 = vmatprep.mubr.f32.mxu0 %v481
      %779 = vmatmul.mubr.f32.gmra.mxu0 %v480
      %v780 = vpop.f32.mrf.mxu0
      %v781 = vadd.f32 0.0, %v780
      %v782 = vpop.f32.mrf.mxu0
      %v783 = vadd.f32 0.0, %v782
      %784 = vmatprep.mubr.f32.mxu0 %v484
      %785 = vmatmul.mubr.f32.gmra.mxu0 %v483
      %v786 = vpop.f32.mrf.mxu0
      %v787 = vadd.f32 0.0, %v786
      %v788 = vpop.f32.mrf.mxu0
      %v789 = vadd.f32 0.0, %v788
      %790 = vdwg.mxu0
      %791 = vmatprep.subr.mxu0 %v581
      %792 = vmatpush1.msra.mxu0 %v580
      %793 = vmatprep.subr.mxu0 %v579
      %794 = vmatpush1.msra.mxu0 %v578
      %795 = vmatprep.subr.mxu0 %v577
      %796 = vmatpush1.msra.mxu0 %v576
      %797 = vmatprep.subr.mxu0 %v575
      %798 = vmatpush1.msra.mxu0 %v574
      %799 = vmatprep.subr.mxu0 %v573
      %800 = vmatpush1.msra.mxu0 %v572
      %801 = vmatprep.subr.mxu0 %v571
      %802 = vmatpush1.msra.mxu0 %v570
      %803 = vmatprep.subr.mxu0 %v569
      %804 = vmatpush1.msra.mxu0 %v568
      %805 = vmatprep.subr.mxu0 %v567
      %806 = vmatpush1.msra.mxu0 %v566
      %807 = vmatprep.subr.mxu0 %v565
      %808 = vmatpush1.msra.mxu0 %v564
      %809 = vmatprep.subr.mxu0 %v563
      %810 = vmatpush1.msra.mxu0 %v562
      %811 = vmatprep.subr.mxu0 %v561
      %812 = vmatpush1.msra.mxu0 %v560
      %813 = vmatprep.subr.mxu0 %v559
      %814 = vmatpush1.msra.mxu0 %v558
      %815 = vmatprep.subr.mxu0 %v557
      %816 = vmatpush1.msra.mxu0 %v556
      %817 = vmatprep.subr.mxu0 %v555
      %818 = vmatpush1.msra.mxu0 %v554
      %819 = vmatprep.subr.mxu0 %v553
      %820 = vmatpush1.msra.mxu0 %v552
      %821 = vmatprep.subr.mxu0 %v551
      %822 = vmatpush1.msra.mxu0 %v550
      %823 = vmatprep.subr.mxu0 0.0
      %824 = vmatpush2.msra.mxu0 0.0
      %825 = vmatprep.subr.mxu0 0.0
      %826 = vmatpush2.msra.mxu0 0.0
      %827 = vmatprep.subr.mxu0 0.0
      %828 = vmatpush2.msra.mxu0 0.0
      %829 = vmatprep.subr.mxu0 0.0
      %830 = vmatpush2.msra.mxu0 0.0
      %831 = vmatprep.subr.mxu0 0.0
      %832 = vmatpush2.msra.mxu0 0.0
      %833 = vmatprep.subr.mxu0 0.0
      %834 = vmatpush2.msra.mxu0 0.0
      %835 = vmatprep.subr.mxu0 0.0
      %836 = vmatpush2.msra.mxu0 0.0
      %837 = vmatprep.subr.mxu0 0.0
      %838 = vmatpush2.msra.mxu0 0.0
      %839 = vmatprep.subr.mxu0 0.0
      %840 = vmatpush2.msra.mxu0 0.0
      %841 = vmatprep.subr.mxu0 0.0
      %842 = vmatpush2.msra.mxu0 0.0
      %843 = vmatprep.subr.mxu0 0.0
      %844 = vmatpush2.msra.mxu0 0.0
      %845 = vmatprep.subr.mxu0 0.0
      %846 = vmatpush2.msra.mxu0 0.0
      %847 = vmatprep.subr.mxu0 0.0
      %848 = vmatpush2.msra.mxu0 0.0
      %849 = vmatprep.subr.mxu0 0.0
      %850 = vmatpush2.msra.mxu0 0.0
      %851 = vmatprep.subr.mxu0 0.0
      %852 = vmatpush2.msra.mxu0 0.0
      %853 = vmatprep.subr.mxu0 0.0
      %854 = vmatpush2.msra.mxu0 0.0
      %855 = vmatprep.mubr.f32.mxu0 0.0
      %856 = vmatmul.mubr.f32.gmra.mxu0 %v416
      %v857 = vpop.f32.mrf.mxu0
      %v858 = vadd.f32 %v649, %v857
      %v859 = vpop.f32.mrf.mxu0
      %v860 = vadd.f32 %v651, %v859
      %861 = vmatprep.mubr.f32.mxu0 0.0
      %862 = vmatmul.mubr.f32.gmra.mxu0 %v419
      %v863 = vpop.f32.mrf.mxu0
      %v864 = vadd.f32 %v655, %v863
      %v865 = vpop.f32.mrf.mxu0
      %v866 = vadd.f32 %v657, %v865
      %867 = vmatprep.mubr.f32.mxu0 0.0
      %868 = vmatmul.mubr.f32.gmra.mxu0 %v422
      %v869 = vpop.f32.mrf.mxu0
      %v870 = vadd.f32 %v661, %v869
      %v871 = vpop.f32.mrf.mxu0
      %v872 = vadd.f32 %v663, %v871
      %873 = vmatprep.mubr.f32.mxu0 0.0
      %874 = vmatmul.mubr.f32.gmra.mxu0 %v425
      %v875 = vpop.f32.mrf.mxu0
      %v876 = vadd.f32 %v667, %v875
      %v877 = vpop.f32.mrf.mxu0
      %v878 = vadd.f32 %v669, %v877
      %879 = vmatprep.mubr.f32.mxu0 0.0
      %880 = vmatmul.mubr.f32.gmra.mxu0 %v428
      %v881 = vpop.f32.mrf.mxu0
      %v882 = vadd.f32 %v673, %v881
      %v883 = vpop.f32.mrf.mxu0
      %v884 = vadd.f32 %v675, %v883
      %885 = vmatprep.mubr.f32.mxu0 0.0
      %886 = vmatmul.mubr.f32.gmra.mxu0 %v431
      %v887 = vpop.f32.mrf.mxu0
      %v888 = vadd.f32 %v679, %v887
      %v889 = vpop.f32.mrf.mxu0
      %v890 = vadd.f32 %v681, %v889
      %891 = vmatprep.mubr.f32.mxu0 0.0
      %892 = vmatmul.mubr.f32.gmra.mxu0 %v434
      %v893 = vpop.f32.mrf.mxu0
      %v894 = vadd.f32 %v685, %v893
      %v895 = vpop.f32.mrf.mxu0
      %v896 = vadd.f32 %v687, %v895
      %897 = vmatprep.mubr.f32.mxu0 0.0
      %898 = vmatmul.mubr.f32.gmra.mxu0 %v437
      %v899 = vpop.f32.mrf.mxu0
      %v900 = vadd.f32 %v691, %v899
      %v901 = vpop.f32.mrf.mxu0
      %v902 = vadd.f32 %v693, %v901
      %903 = vmatprep.mubr.f32.mxu0 0.0
      %904 = vmatmul.mubr.f32.gmra.mxu0 %v440
      %v905 = vpop.f32.mrf.mxu0
      %v906 = vadd.f32 %v697, %v905
      %v907 = vpop.f32.mrf.mxu0
      %v908 = vadd.f32 %v699, %v907
      %909 = vmatprep.mubr.f32.mxu0 0.0
      %910 = vmatmul.mubr.f32.gmra.mxu0 %v443
      %v911 = vpop.f32.mrf.mxu0
      %v912 = vadd.f32 %v703, %v911
      %v913 = vpop.f32.mrf.mxu0
      %v914 = vadd.f32 %v705, %v913
      %915 = vmatprep.mubr.f32.mxu0 0.0
      %916 = vmatmul.mubr.f32.gmra.mxu0 %v446
      %v917 = vpop.f32.mrf.mxu0
      %v918 = vadd.f32 %v709, %v917
      %v919 = vpop.f32.mrf.mxu0
      %v920 = vadd.f32 %v711, %v919
      %921 = vmatprep.mubr.f32.mxu0 0.0
      %922 = vmatmul.mubr.f32.gmra.mxu0 %v449
      %v923 = vpop.f32.mrf.mxu0
      %v924 = vadd.f32 %v715, %v923
      %v925 = vpop.f32.mrf.mxu0
      %v926 = vadd.f32 %v717, %v925
      %927 = vmatprep.mubr.f32.mxu0 0.0
      %928 = vmatmul.mubr.f32.gmra.mxu0 %v452
      %v929 = vpop.f32.mrf.mxu0
      %v930 = vadd.f32 %v721, %v929
      %v931 = vpop.f32.mrf.mxu0
      %v932 = vadd.f32 %v723, %v931
      %933 = vmatprep.mubr.f32.mxu0 0.0
      %934 = vmatmul.mubr.f32.gmra.mxu0 %v455
      %v935 = vpop.f32.mrf.mxu0
      %v936 = vadd.f32 %v727, %v935
      %v937 = vpop.f32.mrf.mxu0
      %v938 = vadd.f32 %v729, %v937
      %939 = vmatprep.mubr.f32.mxu0 0.0
      %940 = vmatmul.mubr.f32.gmra.mxu0 %v458
      %v941 = vpop.f32.mrf.mxu0
      %v942 = vadd.f32 %v733, %v941
      %v943 = vpop.f32.mrf.mxu0
      %v944 = vadd.f32 %v735, %v943
      %945 = vmatprep.mubr.f32.mxu0 0.0
      %946 = vmatmul.mubr.f32.gmra.mxu0 %v461
      %v947 = vpop.f32.mrf.mxu0
      %v948 = vadd.f32 %v739, %v947
      %v949 = vpop.f32.mrf.mxu0
      %v950 = vadd.f32 %v741, %v949
      %951 = vmatprep.mubr.f32.mxu0 0.0
      %952 = vmatmul.mubr.f32.gmra.mxu0 %v464
      %v953 = vpop.f32.mrf.mxu0
      %v954 = vadd.f32 %v745, %v953
      %v955 = vpop.f32.mrf.mxu0
      %v956 = vadd.f32 %v747, %v955
      %957 = vmatprep.mubr.f32.mxu0 0.0
      %958 = vmatmul.mubr.f32.gmra.mxu0 %v467
      %v959 = vpop.f32.mrf.mxu0
      %v960 = vadd.f32 %v751, %v959
      %v961 = vpop.f32.mrf.mxu0
      %v962 = vadd.f32 %v753, %v961
      %963 = vmatprep.mubr.f32.mxu0 0.0
      %964 = vmatmul.mubr.f32.gmra.mxu0 %v470
      %v965 = vpop.f32.mrf.mxu0
      %v966 = vadd.f32 %v757, %v965
      %v967 = vpop.f32.mrf.mxu0
      %v968 = vadd.f32 %v759, %v967
      %969 = vmatprep.mubr.f32.mxu0 0.0
      %970 = vmatmul.mubr.f32.gmra.mxu0 %v473
      %v971 = vpop.f32.mrf.mxu0
      %v972 = vadd.f32 %v763, %v971
      %v973 = vpop.f32.mrf.mxu0
      %v974 = vadd.f32 %v765, %v973
      %975 = vmatprep.mubr.f32.mxu0 0.0
      %976 = vmatmul.mubr.f32.gmra.mxu0 %v476
      %v977 = vpop.f32.mrf.mxu0
      %v978 = vadd.f32 %v769, %v977
      %v979 = vpop.f32.mrf.mxu0
      %v980 = vadd.f32 %v771, %v979
      %981 = vmatprep.mubr.f32.mxu0 0.0
      %982 = vmatmul.mubr.f32.gmra.mxu0 %v479
      %v983 = vpop.f32.mrf.mxu0
      %v984 = vadd.f32 %v775, %v983
      %v985 = vpop.f32.mrf.mxu0
      %v986 = vadd.f32 %v777, %v985
      %987 = vmatprep.mubr.f32.mxu0 0.0
      %988 = vmatmul.mubr.f32.gmra.mxu0 %v482
      %v989 = vpop.f32.mrf.mxu0
      %v990 = vadd.f32 %v781, %v989
      %v991 = vpop.f32.mrf.mxu0
      %v992 = vadd.f32 %v783, %v991
      %993 = vmatprep.mubr.f32.mxu0 0.0
      %994 = vmatmul.mubr.f32.gmra.mxu0 %v485
      %v995 = vpop.f32.mrf.mxu0
      %v996 = vadd.f32 %v787, %v995
      %v997 = vpop.f32.mrf.mxu0
      %v998 = vadd.f32 %v789, %v997
      %999 = vdwg.mxu0
      %v1000 = vld [vmem:[%s4] sm:$0xff]
      %v1001 = vld [vmem:[%s4 + $0x8] sm:$0xff]
      %v1002 = vld [vmem:[%s4 + $0x10] sm:$0xff]
      %v1003 = vld [vmem:[%s4 + $0x18] sm:$0xff]
      %v1004 = vld [vmem:[%s4 + $0x20] sm:$0xff]
      %v1005 = vld [vmem:[%s4 + $0x28] sm:$0xff]
      %v1006 = vld [vmem:[%s4 + $0x30] sm:$0xff]
      %v1007 = vld [vmem:[%s4 + $0x38] sm:$0xff]
      %v1008 = vld [vmem:[%s4 + $0x40] sm:$0xff]
      %v1009 = vld [vmem:[%s4 + $0x48] sm:$0xff]
      %v1010 = vld [vmem:[%s4 + $0x50] sm:$0xff]
      %v1011 = vld [vmem:[%s4 + $0x58] sm:$0xff]
      %v1012 = vld [vmem:[%s4 + $0x60] sm:$0xff]
      %v1013 = vld [vmem:[%s4 + $0x68] sm:$0xff]
      %v1014 = vld [vmem:[%s4 + $0x70] sm:$0xff]
      %v1015 = vld [vmem:[%s4 + $0x78] sm:$0xff]
      %v1016 = vld [vmem:[%s4 + $0x80] sm:$0xff]
      %v1017 = vld [vmem:[%s4 + $0x88] sm:$0xff]
      %v1018 = vld [vmem:[%s4 + $0x90] sm:$0xff]
      %v1019 = vld [vmem:[%s4 + $0x98] sm:$0xff]
      %v1020 = vld [vmem:[%s4 + $0xa0] sm:$0xff]
      %v1021 = vld [vmem:[%s4 + $0xa8] sm:$0xff]
      %v1022 = vld [vmem:[%s4 + $0xb0] sm:$0xff]
      %v1023 = vld [vmem:[%s4 + $0xb8] sm:$0xff]
      %v1024 = vld [vmem:[%s5] sm:$0xff]
      %v1025 = vld [vmem:[%s5 + $0x8] sm:$0xff]
      %v1026 = vld [vmem:[%s5 + $0x10] sm:$0xff]
      %v1027 = vld [vmem:[%s5 + $0x18] sm:$0xff]
      %v1028 = vld [vmem:[%s5 + $0x20] sm:$0xff]
      %v1029 = vld [vmem:[%s5 + $0x28] sm:$0xff]
      %v1030 = vld [vmem:[%s5 + $0x30] sm:$0xff]
      %v1031 = vld [vmem:[%s5 + $0x38] sm:$0xff]
      %v1032 = vld [vmem:[%s5 + $0x40] sm:$0xff]
      %v1033 = vld [vmem:[%s5 + $0x48] sm:$0xff]
      %v1034 = vld [vmem:[%s5 + $0x50] sm:$0xff]
      %v1035 = vld [vmem:[%s5 + $0x58] sm:$0xff]
      %v1036 = vld [vmem:[%s5 + $0x60] sm:$0xff]
      %v1037 = vld [vmem:[%s5 + $0x68] sm:$0xff]
      %v1038 = vld [vmem:[%s5 + $0x70] sm:$0xff]
      %v1039 = vld [vmem:[%s5 + $0x78] sm:$0xff]
      %v1040 = vld [vmem:[%s5 + $0x80] sm:$0xff]
      %v1041 = vld [vmem:[%s5 + $0x88] sm:$0xff]
      %v1042 = vld [vmem:[%s5 + $0x90] sm:$0xff]
      %v1043 = vld [vmem:[%s5 + $0x98] sm:$0xff]
      %v1044 = vld [vmem:[%s5 + $0xa0] sm:$0xff]
      %v1045 = vld [vmem:[%s5 + $0xa8] sm:$0xff]
      %v1046 = vld [vmem:[%s5 + $0xb0] sm:$0xff]
      %v1047 = vld [vmem:[%s5 + $0xb8] sm:$0xff]
      %v1048 = vadd.f32 %v858, %v864
      %v1049 = vadd.f32 %v1048, %v870
      %v1050 = vadd.f32 %v1049, %v876
      %v1051 = vadd.f32 %v1050, %v882
      %v1052 = vadd.f32 %v1051, %v888
      %v1053 = vadd.f32 %v1052, %v894
      %v1054 = vadd.f32 %v1053, %v900
      %v1055 = vadd.f32 %v1054, %v906
      %v1056 = vadd.f32 %v1055, %v912
      %v1057 = vadd.f32 %v1056, %v918
      %v1058 = vadd.f32 %v1057, %v924
      %v1059 = vadd.f32 %v1058, %v930
      %v1060 = vadd.f32 %v1059, %v936
      %v1061 = vadd.f32 %v1060, %v942
      %v1062 = vadd.f32 %v1061, %v948
      %v1063 = vadd.f32 %v1062, %v954
      %v1064 = vadd.f32 %v1063, %v960
      %v1065 = vadd.f32 %v1064, %v966
      %v1066 = vadd.f32 %v1065, %v972
      %v1067 = vadd.f32 %v1066, %v978
      %v1068 = vadd.f32 %v1067, %v984
      %v1069 = vadd.f32 %v1068, %v990
      %v1070 = vadd.f32 %v1069, %v996
      %v1071 = vrot.slane %v1070, 4
      %v1072 = vadd.f32 %v1070, %v1071
      %v1073 = vrot.slane %v1072, 2
      %v1074 = vadd.f32 %v1072, %v1073
      %v1075 = vrot.slane %v1074, 1
      %v1076 = vadd.f32 %v1074, %v1075
      %v1077 = vadd.f32 %v860, %v866
      %v1078 = vadd.f32 %v1077, %v872
      %v1079 = vadd.f32 %v1078, %v878
      %v1080 = vadd.f32 %v1079, %v884
      %v1081 = vadd.f32 %v1080, %v890
      %v1082 = vadd.f32 %v1081, %v896
      %v1083 = vadd.f32 %v1082, %v902
      %v1084 = vadd.f32 %v1083, %v908
      %v1085 = vadd.f32 %v1084, %v914
      %v1086 = vadd.f32 %v1085, %v920
      %v1087 = vadd.f32 %v1086, %v926
      %v1088 = vadd.f32 %v1087, %v932
      %v1089 = vadd.f32 %v1088, %v938
      %v1090 = vadd.f32 %v1089, %v944
      %v1091 = vadd.f32 %v1090, %v950
      %v1092 = vadd.f32 %v1091, %v956
      %v1093 = vadd.f32 %v1092, %v962
      %v1094 = vadd.f32 %v1093, %v968
      %v1095 = vadd.f32 %v1094, %v974
      %v1096 = vadd.f32 %v1095, %v980
      %v1097 = vadd.f32 %v1096, %v986
      %v1098 = vadd.f32 %v1097, %v992
      %v1099 = vadd.f32 %v1098, %v998
      %v1100 = vrot.slane %v1099, 4
      %v1101 = vadd.f32 %v1099, %v1100
      %v1102 = vrot.slane %v1101, 2
      %v1103 = vadd.f32 %v1101, %v1102
      %v1104 = vrot.slane %v1103, 1
      %v1105 = vadd.f32 %v1103, %v1104
      %v1106 = vrcp.pop 192.0
      %v1107 = vmul.f32 %v1076, %v1106
      %v1108 = vmul.f32 %v1105, %v1106
      %v1109 = vsub.f32 %v858, %v1107
      %v1110 = vsub.f32 %v860, %v1108
      %v1111 = vsub.f32 %v864, %v1107
      %v1112 = vsub.f32 %v866, %v1108
      %v1113 = vsub.f32 %v870, %v1107
      %v1114 = vsub.f32 %v872, %v1108
      %v1115 = vsub.f32 %v876, %v1107
      %v1116 = vsub.f32 %v878, %v1108
      %v1117 = vsub.f32 %v882, %v1107
      %v1118 = vsub.f32 %v884, %v1108
      %v1119 = vsub.f32 %v888, %v1107
      %v1120 = vsub.f32 %v890, %v1108
      %v1121 = vsub.f32 %v894, %v1107
      %v1122 = vsub.f32 %v896, %v1108
      %v1123 = vsub.f32 %v900, %v1107
      %v1124 = vsub.f32 %v902, %v1108
      %v1125 = vsub.f32 %v906, %v1107
      %v1126 = vsub.f32 %v908, %v1108
      %v1127 = vsub.f32 %v912, %v1107
      %v1128 = vsub.f32 %v914, %v1108
      %v1129 = vsub.f32 %v918, %v1107
      %v1130 = vsub.f32 %v920, %v1108
      %v1131 = vsub.f32 %v924, %v1107
      %v1132 = vsub.f32 %v926, %v1108
      %v1133 = vsub.f32 %v930, %v1107
      %v1134 = vsub.f32 %v932, %v1108
      %v1135 = vsub.f32 %v936, %v1107
      %v1136 = vsub.f32 %v938, %v1108
      %v1137 = vsub.f32 %v942, %v1107
      %v1138 = vsub.f32 %v944, %v1108
      %v1139 = vsub.f32 %v948, %v1107
      %v1140 = vsub.f32 %v950, %v1108
      %v1141 = vsub.f32 %v954, %v1107
      %v1142 = vsub.f32 %v956, %v1108
      %v1143 = vsub.f32 %v960, %v1107
      %v1144 = vsub.f32 %v962, %v1108
      %v1145 = vsub.f32 %v966, %v1107
      %v1146 = vsub.f32 %v968, %v1108
      %v1147 = vsub.f32 %v972, %v1107
      %v1148 = vsub.f32 %v974, %v1108
      %v1149 = vsub.f32 %v978, %v1107
      %v1150 = vsub.f32 %v980, %v1108
      %v1151 = vsub.f32 %v984, %v1107
      %v1152 = vsub.f32 %v986, %v1108
      %v1153 = vsub.f32 %v990, %v1107
      %v1154 = vsub.f32 %v992, %v1108
      %v1155 = vsub.f32 %v996, %v1107
      %v1156 = vsub.f32 %v998, %v1108
      %v1157 = vmul.f32 %v1109, %v1109
      %v1158 = vmul.f32 %v1110, %v1110
      %v1159 = vmul.f32 %v1111, %v1111
      %v1160 = vmul.f32 %v1112, %v1112
      %v1161 = vmul.f32 %v1113, %v1113
      %v1162 = vmul.f32 %v1114, %v1114
      %v1163 = vmul.f32 %v1115, %v1115
      %v1164 = vmul.f32 %v1116, %v1116
      %v1165 = vmul.f32 %v1117, %v1117
      %v1166 = vmul.f32 %v1118, %v1118
      %v1167 = vmul.f32 %v1119, %v1119
      %v1168 = vmul.f32 %v1120, %v1120
      %v1169 = vmul.f32 %v1121, %v1121
      %v1170 = vmul.f32 %v1122, %v1122
      %v1171 = vmul.f32 %v1123, %v1123
      %v1172 = vmul.f32 %v1124, %v1124
      %v1173 = vmul.f32 %v1125, %v1125
      %v1174 = vmul.f32 %v1126, %v1126
      %v1175 = vmul.f32 %v1127, %v1127
      %v1176 = vmul.f32 %v1128, %v1128
      %v1177 = vmul.f32 %v1129, %v1129
      %v1178 = vmul.f32 %v1130, %v1130
      %v1179 = vmul.f32 %v1131, %v1131
      %v1180 = vmul.f32 %v1132, %v1132
      %v1181 = vmul.f32 %v1133, %v1133
      %v1182 = vmul.f32 %v1134, %v1134
      %v1183 = vmul.f32 %v1135, %v1135
      %v1184 = vmul.f32 %v1136, %v1136
      %v1185 = vmul.f32 %v1137, %v1137
      %v1186 = vmul.f32 %v1138, %v1138
      %v1187 = vmul.f32 %v1139, %v1139
      %v1188 = vmul.f32 %v1140, %v1140
      %v1189 = vmul.f32 %v1141, %v1141
      %v1190 = vmul.f32 %v1142, %v1142
      %v1191 = vmul.f32 %v1143, %v1143
      %v1192 = vmul.f32 %v1144, %v1144
      %v1193 = vmul.f32 %v1145, %v1145
      %v1194 = vmul.f32 %v1146, %v1146
      %v1195 = vmul.f32 %v1147, %v1147
      %v1196 = vmul.f32 %v1148, %v1148
      %v1197 = vmul.f32 %v1149, %v1149
      %v1198 = vmul.f32 %v1150, %v1150
      %v1199 = vmul.f32 %v1151, %v1151
      %v1200 = vmul.f32 %v1152, %v1152
      %v1201 = vmul.f32 %v1153, %v1153
      %v1202 = vmul.f32 %v1154, %v1154
      %v1203 = vmul.f32 %v1155, %v1155
      %v1204 = vmul.f32 %v1156, %v1156
      %v1205 = vadd.f32 %v1157, %v1159
      %v1206 = vadd.f32 %v1205, %v1161
      %v1207 = vadd.f32 %v1206, %v1163
      %v1208 = vadd.f32 %v1207, %v1165
      %v1209 = vadd.f32 %v1208, %v1167
      %v1210 = vadd.f32 %v1209, %v1169
      %v1211 = vadd.f32 %v1210, %v1171
      %v1212 = vadd.f32 %v1211, %v1173
      %v1213 = vadd.f32 %v1212, %v1175
      %v1214 = vadd.f32 %v1213, %v1177
      %v1215 = vadd.f32 %v1214, %v1179
      %v1216 = vadd.f32 %v1215, %v1181
      %v1217 = vadd.f32 %v1216, %v1183
      %v1218 = vadd.f32 %v1217, %v1185
      %v1219 = vadd.f32 %v1218, %v1187
      %v1220 = vadd.f32 %v1219, %v1189
      %v1221 = vadd.f32 %v1220, %v1191
      %v1222 = vadd.f32 %v1221, %v1193
      %v1223 = vadd.f32 %v1222, %v1195
      %v1224 = vadd.f32 %v1223, %v1197
      %v1225 = vadd.f32 %v1224, %v1199
      %v1226 = vadd.f32 %v1225, %v1201
      %v1227 = vadd.f32 %v1226, %v1203
      %v1228 = vrot.slane %v1227, 4
      %v1229 = vadd.f32 %v1227, %v1228
      %v1230 = vrot.slane %v1229, 2
      %v1231 = vadd.f32 %v1229, %v1230
      %v1232 = vrot.slane %v1231, 1
      %v1233 = vadd.f32 %v1231, %v1232
      %v1234 = vadd.f32 %v1158, %v1160
      %v1235 = vadd.f32 %v1234, %v1162
      %v1236 = vadd.f32 %v1235, %v1164
      %v1237 = vadd.f32 %v1236, %v1166
      %v1238 = vadd.f32 %v1237, %v1168
      %v1239 = vadd.f32 %v1238, %v1170
      %v1240 = vadd.f32 %v1239, %v1172
      %v1241 = vadd.f32 %v1240, %v1174
      %v1242 = vadd.f32 %v1241, %v1176
      %v1243 = vadd.f32 %v1242, %v1178
      %v1244 = vadd.f32 %v1243, %v1180
      %v1245 = vadd.f32 %v1244, %v1182
      %v1246 = vadd.f32 %v1245, %v1184
      %v1247 = vadd.f32 %v1246, %v1186
      %v1248 = vadd.f32 %v1247, %v1188
      %v1249 = vadd.f32 %v1248, %v1190
      %v1250 = vadd.f32 %v1249, %v1192
      %v1251 = vadd.f32 %v1250, %v1194
      %v1252 = vadd.f32 %v1251, %v1196
      %v1253 = vadd.f32 %v1252, %v1198
      %v1254 = vadd.f32 %v1253, %v1200
      %v1255 = vadd.f32 %v1254, %v1202
      %v1256 = vadd.f32 %v1255, %v1204
      %v1257 = vrot.slane %v1256, 4
      %v1258 = vadd.f32 %v1256, %v1257
      %v1259 = vrot.slane %v1258, 2
      %v1260 = vadd.f32 %v1258, %v1259
      %v1261 = vrot.slane %v1260, 1
      %v1262 = vadd.f32 %v1260, %v1261
      %v1263 = vmul.f32 %v1233, %v1106
      %v1264 = vmul.f32 %v1262, %v1106
      %v1265 = vadd.f32 %v1263, 1e-06
      %v1266 = vadd.f32 %v1264, 1e-06
      %v1267 = vrsqrt.pop %v1265
      %v1268 = vrsqrt.pop %v1266
      %v1269 = vmul.f32 %v1109, %v1267
      %v1270 = vmul.f32 %v1110, %v1268
      %v1271 = vmul.f32 %v1111, %v1267
      %v1272 = vmul.f32 %v1112, %v1268
      %v1273 = vmul.f32 %v1113, %v1267
      %v1274 = vmul.f32 %v1114, %v1268
      %v1275 = vmul.f32 %v1115, %v1267
      %v1276 = vmul.f32 %v1116, %v1268
      %v1277 = vmul.f32 %v1117, %v1267
      %v1278 = vmul.f32 %v1118, %v1268
      %v1279 = vmul.f32 %v1119, %v1267
      %v1280 = vmul.f32 %v1120, %v1268
      %v1281 = vmul.f32 %v1121, %v1267
      %v1282 = vmul.f32 %v1122, %v1268
      %v1283 = vmul.f32 %v1123, %v1267
      %v1284 = vmul.f32 %v1124, %v1268
      %v1285 = vmul.f32 %v1125, %v1267
      %v1286 = vmul.f32 %v1126, %v1268
      %v1287 = vmul.f32 %v1127, %v1267
      %v1288 = vmul.f32 %v1128, %v1268
      %v1289 = vmul.f32 %v1129, %v1267
      %v1290 = vmul.f32 %v1130, %v1268
      %v1291 = vmul.f32 %v1131, %v1267
      %v1292 = vmul.f32 %v1132, %v1268
      %v1293 = vmul.f32 %v1133, %v1267
      %v1294 = vmul.f32 %v1134, %v1268
      %v1295 = vmul.f32 %v1135, %v1267
      %v1296 = vmul.f32 %v1136, %v1268
      %v1297 = vmul.f32 %v1137, %v1267
      %v1298 = vmul.f32 %v1138, %v1268
      %v1299 = vmul.f32 %v1139, %v1267
      %v1300 = vmul.f32 %v1140, %v1268
      %v1301 = vmul.f32 %v1141, %v1267
      %v1302 = vmul.f32 %v1142, %v1268
      %v1303 = vmul.f32 %v1143, %v1267
      %v1304 = vmul.f32 %v1144, %v1268
      %v1305 = vmul.f32 %v1145, %v1267
      %v1306 = vmul.f32 %v1146, %v1268
      %v1307 = vmul.f32 %v1147, %v1267
      %v1308 = vmul.f32 %v1148, %v1268
      %v1309 = vmul.f32 %v1149, %v1267
      %v1310 = vmul.f32 %v1150, %v1268
      %v1311 = vmul.f32 %v1151, %v1267
      %v1312 = vmul.f32 %v1152, %v1268
      %v1313 = vmul.f32 %v1153, %v1267
      %v1314 = vmul.f32 %v1154, %v1268
      %v1315 = vmul.f32 %v1155, %v1267
      %v1316 = vmul.f32 %v1156, %v1268
      %1318 = vset.pattern.permute.xlu0 0
      %1319 = vperm.xlu0 %1318, %v1000
      %v1320 = vpop.permute.xlu0 %1319
      %1323 = vset.pattern.permute.xlu0 0
      %1324 = vperm.xlu0 %1323, %v1001
      %v1325 = vpop.permute.xlu0 %1324
      %1328 = vset.pattern.permute.xlu0 0
      %1329 = vperm.xlu0 %1328, %v1002
      %v1330 = vpop.permute.xlu0 %1329
      %1333 = vset.pattern.permute.xlu0 0
      %1334 = vperm.xlu0 %1333, %v1003
      %v1335 = vpop.permute.xlu0 %1334
      %1338 = vset.pattern.permute.xlu0 0
      %1339 = vperm.xlu0 %1338, %v1004
      %v1340 = vpop.permute.xlu0 %1339
      %1343 = vset.pattern.permute.xlu0 0
      %1344 = vperm.xlu0 %1343, %v1005
      %v1345 = vpop.permute.xlu0 %1344
      %1348 = vset.pattern.permute.xlu0 0
      %1349 = vperm.xlu0 %1348, %v1006
      %v1350 = vpop.permute.xlu0 %1349
      %1353 = vset.pattern.permute.xlu0 0
      %1354 = vperm.xlu0 %1353, %v1007
      %v1355 = vpop.permute.xlu0 %1354
      %1358 = vset.pattern.permute.xlu0 0
      %1359 = vperm.xlu0 %1358, %v1008
      %v1360 = vpop.permute.xlu0 %1359
      %1363 = vset.pattern.permute.xlu0 0
      %1364 = vperm.xlu0 %1363, %v1009
      %v1365 = vpop.permute.xlu0 %1364
      %1368 = vset.pattern.permute.xlu0 0
      %1369 = vperm.xlu0 %1368, %v1010
      %v1370 = vpop.permute.xlu0 %1369
      %1373 = vset.pattern.permute.xlu0 0
      %1374 = vperm.xlu0 %1373, %v1011
      %v1375 = vpop.permute.xlu0 %1374
      %1378 = vset.pattern.permute.xlu0 0
      %1379 = vperm.xlu0 %1378, %v1012
      %v1380 = vpop.permute.xlu0 %1379
      %1383 = vset.pattern.permute.xlu0 0
      %1384 = vperm.xlu0 %1383, %v1013
      %v1385 = vpop.permute.xlu0 %1384
      %1388 = vset.pattern.permute.xlu0 0
      %1389 = vperm.xlu0 %1388, %v1014
      %v1390 = vpop.permute.xlu0 %1389
      %1393 = vset.pattern.permute.xlu0 0
      %1394 = vperm.xlu0 %1393, %v1015
      %v1395 = vpop.permute.xlu0 %1394
      %1398 = vset.pattern.permute.xlu0 0
      %1399 = vperm.xlu0 %1398, %v1016
      %v1400 = vpop.permute.xlu0 %1399
      %1403 = vset.pattern.permute.xlu0 0
      %1404 = vperm.xlu0 %1403, %v1017
      %v1405 = vpop.permute.xlu0 %1404
      %1408 = vset.pattern.permute.xlu0 0
      %1409 = vperm.xlu0 %1408, %v1018
      %v1410 = vpop.permute.xlu0 %1409
      %1413 = vset.pattern.permute.xlu0 0
      %1414 = vperm.xlu0 %1413, %v1019
      %v1415 = vpop.permute.xlu0 %1414
      %1418 = vset.pattern.permute.xlu0 0
      %1419 = vperm.xlu0 %1418, %v1020
      %v1420 = vpop.permute.xlu0 %1419
      %1423 = vset.pattern.permute.xlu0 0
      %1424 = vperm.xlu0 %1423, %v1021
      %v1425 = vpop.permute.xlu0 %1424
      %1428 = vset.pattern.permute.xlu0 0
      %1429 = vperm.xlu0 %1428, %v1022
      %v1430 = vpop.permute.xlu0 %1429
      %1433 = vset.pattern.permute.xlu0 0
      %1434 = vperm.xlu0 %1433, %v1023
      %v1435 = vpop.permute.xlu0 %1434
      %v1437 = vmul.f32 %v1269, %v1320
      %v1438 = vmul.f32 %v1270, %v1320
      %v1439 = vmul.f32 %v1271, %v1325
      %v1440 = vmul.f32 %v1272, %v1325
      %v1441 = vmul.f32 %v1273, %v1330
      %v1442 = vmul.f32 %v1274, %v1330
      %v1443 = vmul.f32 %v1275, %v1335
      %v1444 = vmul.f32 %v1276, %v1335
      %v1445 = vmul.f32 %v1277, %v1340
      %v1446 = vmul.f32 %v1278, %v1340
      %v1447 = vmul.f32 %v1279, %v1345
      %v1448 = vmul.f32 %v1280, %v1345
      %v1449 = vmul.f32 %v1281, %v1350
      %v1450 = vmul.f32 %v1282, %v1350
      %v1451 = vmul.f32 %v1283, %v1355
      %v1452 = vmul.f32 %v1284, %v1355
      %v1453 = vmul.f32 %v1285, %v1360
      %v1454 = vmul.f32 %v1286, %v1360
      %v1455 = vmul.f32 %v1287, %v1365
      %v1456 = vmul.f32 %v1288, %v1365
      %v1457 = vmul.f32 %v1289, %v1370
      %v1458 = vmul.f32 %v1290, %v1370
      %v1459 = vmul.f32 %v1291, %v1375
      %v1460 = vmul.f32 %v1292, %v1375
      %v1461 = vmul.f32 %v1293, %v1380
      %v1462 = vmul.f32 %v1294, %v1380
      %v1463 = vmul.f32 %v1295, %v1385
      %v1464 = vmul.f32 %v1296, %v1385
      %v1465 = vmul.f32 %v1297, %v1390
      %v1466 = vmul.f32 %v1298, %v1390
      %v1467 = vmul.f32 %v1299, %v1395
      %v1468 = vmul.f32 %v1300, %v1395
      %v1469 = vmul.f32 %v1301, %v1400
      %v1470 = vmul.f32 %v1302, %v1400
      %v1471 = vmul.f32 %v1303, %v1405
      %v1472 = vmul.f32 %v1304, %v1405
      %v1473 = vmul.f32 %v1305, %v1410
      %v1474 = vmul.f32 %v1306, %v1410
      %v1475 = vmul.f32 %v1307, %v1415
      %v1476 = vmul.f32 %v1308, %v1415
      %v1477 = vmul.f32 %v1309, %v1420
      %v1478 = vmul.f32 %v1310, %v1420
      %v1479 = vmul.f32 %v1311, %v1425
      %v1480 = vmul.f32 %v1312, %v1425
      %v1481 = vmul.f32 %v1313, %v1430
      %v1482 = vmul.f32 %v1314, %v1430
      %v1483 = vmul.f32 %v1315, %v1435
      %v1484 = vmul.f32 %v1316, %v1435
      %1486 = vset.pattern.permute.xlu0 0
      %1487 = vperm.xlu0 %1486, %v1024
      %v1488 = vpop.permute.xlu0 %1487
      %1491 = vset.pattern.permute.xlu0 0
      %1492 = vperm.xlu0 %1491, %v1025
      %v1493 = vpop.permute.xlu0 %1492
      %1496 = vset.pattern.permute.xlu0 0
      %1497 = vperm.xlu0 %1496, %v1026
      %v1498 = vpop.permute.xlu0 %1497
      %1501 = vset.pattern.permute.xlu0 0
      %1502 = vperm.xlu0 %1501, %v1027
      %v1503 = vpop.permute.xlu0 %1502
      %1506 = vset.pattern.permute.xlu0 0
      %1507 = vperm.xlu0 %1506, %v1028
      %v1508 = vpop.permute.xlu0 %1507
      %1511 = vset.pattern.permute.xlu0 0
      %1512 = vperm.xlu0 %1511, %v1029
      %v1513 = vpop.permute.xlu0 %1512
      %1516 = vset.pattern.permute.xlu0 0
      %1517 = vperm.xlu0 %1516, %v1030
      %v1518 = vpop.permute.xlu0 %1517
      %1521 = vset.pattern.permute.xlu0 0
      %1522 = vperm.xlu0 %1521, %v1031
      %v1523 = vpop.permute.xlu0 %1522
      %1526 = vset.pattern.permute.xlu0 0
      %1527 = vperm.xlu0 %1526, %v1032
      %v1528 = vpop.permute.xlu0 %1527
      %1531 = vset.pattern.permute.xlu0 0
      %1532 = vperm.xlu0 %1531, %v1033
      %v1533 = vpop.permute.xlu0 %1532
      %1536 = vset.pattern.permute.xlu0 0
      %1537 = vperm.xlu0 %1536, %v1034
      %v1538 = vpop.permute.xlu0 %1537
      %1541 = vset.pattern.permute.xlu0 0
      %1542 = vperm.xlu0 %1541, %v1035
      %v1543 = vpop.permute.xlu0 %1542
      %1546 = vset.pattern.permute.xlu0 0
      %1547 = vperm.xlu0 %1546, %v1036
      %v1548 = vpop.permute.xlu0 %1547
      %1551 = vset.pattern.permute.xlu0 0
      %1552 = vperm.xlu0 %1551, %v1037
      %v1553 = vpop.permute.xlu0 %1552
      %1556 = vset.pattern.permute.xlu0 0
      %1557 = vperm.xlu0 %1556, %v1038
      %v1558 = vpop.permute.xlu0 %1557
      %1561 = vset.pattern.permute.xlu0 0
      %1562 = vperm.xlu0 %1561, %v1039
      %v1563 = vpop.permute.xlu0 %1562
      %1566 = vset.pattern.permute.xlu0 0
      %1567 = vperm.xlu0 %1566, %v1040
      %v1568 = vpop.permute.xlu0 %1567
      %1571 = vset.pattern.permute.xlu0 0
      %1572 = vperm.xlu0 %1571, %v1041
      %v1573 = vpop.permute.xlu0 %1572
      %1576 = vset.pattern.permute.xlu0 0
      %1577 = vperm.xlu0 %1576, %v1042
      %v1578 = vpop.permute.xlu0 %1577
      %1581 = vset.pattern.permute.xlu0 0
      %1582 = vperm.xlu0 %1581, %v1043
      %v1583 = vpop.permute.xlu0 %1582
      %1586 = vset.pattern.permute.xlu0 0
      %1587 = vperm.xlu0 %1586, %v1044
      %v1588 = vpop.permute.xlu0 %1587
      %1591 = vset.pattern.permute.xlu0 0
      %1592 = vperm.xlu0 %1591, %v1045
      %v1593 = vpop.permute.xlu0 %1592
      %1596 = vset.pattern.permute.xlu0 0
      %1597 = vperm.xlu0 %1596, %v1046
      %v1598 = vpop.permute.xlu0 %1597
      %1601 = vset.pattern.permute.xlu0 0
      %1602 = vperm.xlu0 %1601, %v1047
      %v1603 = vpop.permute.xlu0 %1602
      %v1605 = vadd.f32 %v1437, %v1488
      %v1606 = vadd.f32 %v1438, %v1488
      %v1607 = vadd.f32 %v1439, %v1493
      %v1608 = vadd.f32 %v1440, %v1493
      %v1609 = vadd.f32 %v1441, %v1498
      %v1610 = vadd.f32 %v1442, %v1498
      %v1611 = vadd.f32 %v1443, %v1503
      %v1612 = vadd.f32 %v1444, %v1503
      %v1613 = vadd.f32 %v1445, %v1508
      %v1614 = vadd.f32 %v1446, %v1508
      %v1615 = vadd.f32 %v1447, %v1513
      %v1616 = vadd.f32 %v1448, %v1513
      %v1617 = vadd.f32 %v1449, %v1518
      %v1618 = vadd.f32 %v1450, %v1518
      %v1619 = vadd.f32 %v1451, %v1523
      %v1620 = vadd.f32 %v1452, %v1523
      %v1621 = vadd.f32 %v1453, %v1528
      %v1622 = vadd.f32 %v1454, %v1528
      %v1623 = vadd.f32 %v1455, %v1533
      %v1624 = vadd.f32 %v1456, %v1533
      %v1625 = vadd.f32 %v1457, %v1538
      %v1626 = vadd.f32 %v1458, %v1538
      %v1627 = vadd.f32 %v1459, %v1543
      %v1628 = vadd.f32 %v1460, %v1543
      %v1629 = vadd.f32 %v1461, %v1548
      %v1630 = vadd.f32 %v1462, %v1548
      %v1631 = vadd.f32 %v1463, %v1553
      %v1632 = vadd.f32 %v1464, %v1553
      %v1633 = vadd.f32 %v1465, %v1558
      %v1634 = vadd.f32 %v1466, %v1558
      %v1635 = vadd.f32 %v1467, %v1563
      %v1636 = vadd.f32 %v1468, %v1563
      %v1637 = vadd.f32 %v1469, %v1568
      %v1638 = vadd.f32 %v1470, %v1568
      %v1639 = vadd.f32 %v1471, %v1573
      %v1640 = vadd.f32 %v1472, %v1573
      %v1641 = vadd.f32 %v1473, %v1578
      %v1642 = vadd.f32 %v1474, %v1578
      %v1643 = vadd.f32 %v1475, %v1583
      %v1644 = vadd.f32 %v1476, %v1583
      %v1645 = vadd.f32 %v1477, %v1588
      %v1646 = vadd.f32 %v1478, %v1588
      %v1647 = vadd.f32 %v1479, %v1593
      %v1648 = vadd.f32 %v1480, %v1593
      %v1649 = vadd.f32 %v1481, %v1598
      %v1650 = vadd.f32 %v1482, %v1598
      %v1651 = vadd.f32 %v1483, %v1603
      %v1652 = vadd.f32 %v1484, %v1603
      %v1653 = vmul.f32 %v1605, 0.5
      %v1654 = vmul.f32 %v1606, 0.5
      %v1655 = vmul.f32 %v1607, 0.5
      %v1656 = vmul.f32 %v1608, 0.5
      %v1657 = vmul.f32 %v1609, 0.5
      %v1658 = vmul.f32 %v1610, 0.5
      %v1659 = vmul.f32 %v1611, 0.5
      %v1660 = vmul.f32 %v1612, 0.5
      %v1661 = vmul.f32 %v1613, 0.5
      %v1662 = vmul.f32 %v1614, 0.5
      %v1663 = vmul.f32 %v1615, 0.5
      %v1664 = vmul.f32 %v1616, 0.5
      %v1665 = vmul.f32 %v1617, 0.5
      %v1666 = vmul.f32 %v1618, 0.5
      %v1667 = vmul.f32 %v1619, 0.5
      %v1668 = vmul.f32 %v1620, 0.5
      %v1669 = vmul.f32 %v1621, 0.5
      %v1670 = vmul.f32 %v1622, 0.5
      %v1671 = vmul.f32 %v1623, 0.5
      %v1672 = vmul.f32 %v1624, 0.5
      %v1673 = vmul.f32 %v1625, 0.5
      %v1674 = vmul.f32 %v1626, 0.5
      %v1675 = vmul.f32 %v1627, 0.5
      %v1676 = vmul.f32 %v1628, 0.5
      %v1677 = vmul.f32 %v1629, 0.5
      %v1678 = vmul.f32 %v1630, 0.5
      %v1679 = vmul.f32 %v1631, 0.5
      %v1680 = vmul.f32 %v1632, 0.5
      %v1681 = vmul.f32 %v1633, 0.5
      %v1682 = vmul.f32 %v1634, 0.5
      %v1683 = vmul.f32 %v1635, 0.5
      %v1684 = vmul.f32 %v1636, 0.5
      %v1685 = vmul.f32 %v1637, 0.5
      %v1686 = vmul.f32 %v1638, 0.5
      %v1687 = vmul.f32 %v1639, 0.5
      %v1688 = vmul.f32 %v1640, 0.5
      %v1689 = vmul.f32 %v1641, 0.5
      %v1690 = vmul.f32 %v1642, 0.5
      %v1691 = vmul.f32 %v1643, 0.5
      %v1692 = vmul.f32 %v1644, 0.5
      %v1693 = vmul.f32 %v1645, 0.5
      %v1694 = vmul.f32 %v1646, 0.5
      %v1695 = vmul.f32 %v1647, 0.5
      %v1696 = vmul.f32 %v1648, 0.5
      %v1697 = vmul.f32 %v1649, 0.5
      %v1698 = vmul.f32 %v1650, 0.5
      %v1699 = vmul.f32 %v1651, 0.5
      %v1700 = vmul.f32 %v1652, 0.5
      %v1701 = vmul.f32 %v1605, 0.70710677
      %v1702 = vmul.f32 %v1606, 0.70710677
      %v1703 = vmul.f32 %v1607, 0.70710677
      %v1704 = vmul.f32 %v1608, 0.70710677
      %v1705 = vmul.f32 %v1609, 0.70710677
      %v1706 = vmul.f32 %v1610, 0.70710677
      %v1707 = vmul.f32 %v1611, 0.70710677
      %v1708 = vmul.f32 %v1612, 0.70710677
      %v1709 = vmul.f32 %v1613, 0.70710677
      %v1710 = vmul.f32 %v1614, 0.70710677
      %v1711 = vmul.f32 %v1615, 0.70710677
      %v1712 = vmul.f32 %v1616, 0.70710677
      %v1713 = vmul.f32 %v1617, 0.70710677
      %v1714 = vmul.f32 %v1618, 0.70710677
      %v1715 = vmul.f32 %v1619, 0.70710677
      %v1716 = vmul.f32 %v1620, 0.70710677
      %v1717 = vmul.f32 %v1621, 0.70710677
      %v1718 = vmul.f32 %v1622, 0.70710677
      %v1719 = vmul.f32 %v1623, 0.70710677
      %v1720 = vmul.f32 %v1624, 0.70710677
      %v1721 = vmul.f32 %v1625, 0.70710677
      %v1722 = vmul.f32 %v1626, 0.70710677
      %v1723 = vmul.f32 %v1627, 0.70710677
      %v1724 = vmul.f32 %v1628, 0.70710677
      %v1725 = vmul.f32 %v1629, 0.70710677
      %v1726 = vmul.f32 %v1630, 0.70710677
      %v1727 = vmul.f32 %v1631, 0.70710677
      %v1728 = vmul.f32 %v1632, 0.70710677
      %v1729 = vmul.f32 %v1633, 0.70710677
      %v1730 = vmul.f32 %v1634, 0.70710677
      %v1731 = vmul.f32 %v1635, 0.70710677
      %v1732 = vmul.f32 %v1636, 0.70710677
      %v1733 = vmul.f32 %v1637, 0.70710677
      %v1734 = vmul.f32 %v1638, 0.70710677
      %v1735 = vmul.f32 %v1639, 0.70710677
      %v1736 = vmul.f32 %v1640, 0.70710677
      %v1737 = vmul.f32 %v1641, 0.70710677
      %v1738 = vmul.f32 %v1642, 0.70710677
      %v1739 = vmul.f32 %v1643, 0.70710677
      %v1740 = vmul.f32 %v1644, 0.70710677
      %v1741 = vmul.f32 %v1645, 0.70710677
      %v1742 = vmul.f32 %v1646, 0.70710677
      %v1743 = vmul.f32 %v1647, 0.70710677
      %v1744 = vmul.f32 %v1648, 0.70710677
      %v1745 = vmul.f32 %v1649, 0.70710677
      %v1746 = vmul.f32 %v1650, 0.70710677
      %v1747 = vmul.f32 %v1651, 0.70710677
      %v1748 = vmul.f32 %v1652, 0.70710677
      %v1749 = vand.u32 2147483647, %v1701
      %v1750 = vand.u32 2147483647, %v1702
      %v1751 = vand.u32 2147483647, %v1703
      %v1752 = vand.u32 2147483647, %v1704
      %v1753 = vand.u32 2147483647, %v1705
      %v1754 = vand.u32 2147483647, %v1706
      %v1755 = vand.u32 2147483647, %v1707
      %v1756 = vand.u32 2147483647, %v1708
      %v1757 = vand.u32 2147483647, %v1709
      %v1758 = vand.u32 2147483647, %v1710
      %v1759 = vand.u32 2147483647, %v1711
      %v1760 = vand.u32 2147483647, %v1712
      %v1761 = vand.u32 2147483647, %v1713
      %v1762 = vand.u32 2147483647, %v1714
      %v1763 = vand.u32 2147483647, %v1715
      %v1764 = vand.u32 2147483647, %v1716
      %v1765 = vand.u32 2147483647, %v1717
      %v1766 = vand.u32 2147483647, %v1718
      %v1767 = vand.u32 2147483647, %v1719
      %v1768 = vand.u32 2147483647, %v1720
      %v1769 = vand.u32 2147483647, %v1721
      %v1770 = vand.u32 2147483647, %v1722
      %v1771 = vand.u32 2147483647, %v1723
      %v1772 = vand.u32 2147483647, %v1724
      %v1773 = vand.u32 2147483647, %v1725
      %v1774 = vand.u32 2147483647, %v1726
      %v1775 = vand.u32 2147483647, %v1727
      %v1776 = vand.u32 2147483647, %v1728
      %v1777 = vand.u32 2147483647, %v1729
      %v1778 = vand.u32 2147483647, %v1730
      %v1779 = vand.u32 2147483647, %v1731
      %v1780 = vand.u32 2147483647, %v1732
      %v1781 = vand.u32 2147483647, %v1733
      %v1782 = vand.u32 2147483647, %v1734
      %v1783 = vand.u32 2147483647, %v1735
      %v1784 = vand.u32 2147483647, %v1736
      %v1785 = vand.u32 2147483647, %v1737
      %v1786 = vand.u32 2147483647, %v1738
      %v1787 = vand.u32 2147483647, %v1739
      %v1788 = vand.u32 2147483647, %v1740
      %v1789 = vand.u32 2147483647, %v1741
      %v1790 = vand.u32 2147483647, %v1742
      %v1791 = vand.u32 2147483647, %v1743
      %v1792 = vand.u32 2147483647, %v1744
      %v1793 = vand.u32 2147483647, %v1745
      %v1794 = vand.u32 2147483647, %v1746
      %v1795 = vand.u32 2147483647, %v1747
      %v1796 = vand.u32 2147483647, %v1748
      %v1797 = vmul.f32 %v1749, 0.3275911
      %v1798 = vmul.f32 %v1750, 0.3275911
      %v1799 = vmul.f32 %v1751, 0.3275911
      %v1800 = vmul.f32 %v1752, 0.3275911
      %v1801 = vmul.f32 %v1753, 0.3275911
      %v1802 = vmul.f32 %v1754, 0.3275911
      %v1803 = vmul.f32 %v1755, 0.3275911
      %v1804 = vmul.f32 %v1756, 0.3275911
      %v1805 = vmul.f32 %v1757, 0.3275911
      %v1806 = vmul.f32 %v1758, 0.3275911
      %v1807 = vmul.f32 %v1759, 0.3275911
      %v1808 = vmul.f32 %v1760, 0.3275911
      %v1809 = vmul.f32 %v1761, 0.3275911
      %v1810 = vmul.f32 %v1762, 0.3275911
      %v1811 = vmul.f32 %v1763, 0.3275911
      %v1812 = vmul.f32 %v1764, 0.3275911
      %v1813 = vmul.f32 %v1765, 0.3275911
      %v1814 = vmul.f32 %v1766, 0.3275911
      %v1815 = vmul.f32 %v1767, 0.3275911
      %v1816 = vmul.f32 %v1768, 0.3275911
      %v1817 = vmul.f32 %v1769, 0.3275911
      %v1818 = vmul.f32 %v1770, 0.3275911
      %v1819 = vmul.f32 %v1771, 0.3275911
      %v1820 = vmul.f32 %v1772, 0.3275911
      %v1821 = vmul.f32 %v1773, 0.3275911
      %v1822 = vmul.f32 %v1774, 0.3275911
      %v1823 = vmul.f32 %v1775, 0.3275911
      %v1824 = vmul.f32 %v1776, 0.3275911
      %v1825 = vmul.f32 %v1777, 0.3275911
      %v1826 = vmul.f32 %v1778, 0.3275911
      %v1827 = vmul.f32 %v1779, 0.3275911
      %v1828 = vmul.f32 %v1780, 0.3275911
      %v1829 = vmul.f32 %v1781, 0.3275911
      %v1830 = vmul.f32 %v1782, 0.3275911
      %v1831 = vmul.f32 %v1783, 0.3275911
      %v1832 = vmul.f32 %v1784, 0.3275911
      %v1833 = vmul.f32 %v1785, 0.3275911
      %v1834 = vmul.f32 %v1786, 0.3275911
      %v1835 = vmul.f32 %v1787, 0.3275911
      %v1836 = vmul.f32 %v1788, 0.3275911
      %v1837 = vmul.f32 %v1789, 0.3275911
      %v1838 = vmul.f32 %v1790, 0.3275911
      %v1839 = vmul.f32 %v1791, 0.3275911
      %v1840 = vmul.f32 %v1792, 0.3275911
      %v1841 = vmul.f32 %v1793, 0.3275911
      %v1842 = vmul.f32 %v1794, 0.3275911
      %v1843 = vmul.f32 %v1795, 0.3275911
      %v1844 = vmul.f32 %v1796, 0.3275911
      %v1845 = vadd.f32 %v1797, 1.0
      %v1846 = vadd.f32 %v1798, 1.0
      %v1847 = vadd.f32 %v1799, 1.0
      %v1848 = vadd.f32 %v1800, 1.0
      %v1849 = vadd.f32 %v1801, 1.0
      %v1850 = vadd.f32 %v1802, 1.0
      %v1851 = vadd.f32 %v1803, 1.0
      %v1852 = vadd.f32 %v1804, 1.0
      %v1853 = vadd.f32 %v1805, 1.0
      %v1854 = vadd.f32 %v1806, 1.0
      %v1855 = vadd.f32 %v1807, 1.0
      %v1856 = vadd.f32 %v1808, 1.0
      %v1857 = vadd.f32 %v1809, 1.0
      %v1858 = vadd.f32 %v1810, 1.0
      %v1859 = vadd.f32 %v1811, 1.0
      %v1860 = vadd.f32 %v1812, 1.0
      %v1861 = vadd.f32 %v1813, 1.0
      %v1862 = vadd.f32 %v1814, 1.0
      %v1863 = vadd.f32 %v1815, 1.0
      %v1864 = vadd.f32 %v1816, 1.0
      %v1865 = vadd.f32 %v1817, 1.0
      %v1866 = vadd.f32 %v1818, 1.0
      %v1867 = vadd.f32 %v1819, 1.0
      %v1868 = vadd.f32 %v1820, 1.0
      %v1869 = vadd.f32 %v1821, 1.0
      %v1870 = vadd.f32 %v1822, 1.0
      %v1871 = vadd.f32 %v1823, 1.0
      %v1872 = vadd.f32 %v1824, 1.0
      %v1873 = vadd.f32 %v1825, 1.0
      %v1874 = vadd.f32 %v1826, 1.0
      %v1875 = vadd.f32 %v1827, 1.0
      %v1876 = vadd.f32 %v1828, 1.0
      %v1877 = vadd.f32 %v1829, 1.0
      %v1878 = vadd.f32 %v1830, 1.0
      %v1879 = vadd.f32 %v1831, 1.0
      %v1880 = vadd.f32 %v1832, 1.0
      %v1881 = vadd.f32 %v1833, 1.0
      %v1882 = vadd.f32 %v1834, 1.0
      %v1883 = vadd.f32 %v1835, 1.0
      %v1884 = vadd.f32 %v1836, 1.0
      %v1885 = vadd.f32 %v1837, 1.0
      %v1886 = vadd.f32 %v1838, 1.0
      %v1887 = vadd.f32 %v1839, 1.0
      %v1888 = vadd.f32 %v1840, 1.0
      %v1889 = vadd.f32 %v1841, 1.0
      %v1890 = vadd.f32 %v1842, 1.0
      %v1891 = vadd.f32 %v1843, 1.0
      %v1892 = vadd.f32 %v1844, 1.0
      %v1893 = vrcp.pop %v1845
      %v1894 = vrcp.pop %v1846
      %v1895 = vrcp.pop %v1847
      %v1896 = vrcp.pop %v1848
      %v1897 = vrcp.pop %v1849
      %v1898 = vrcp.pop %v1850
      %v1899 = vrcp.pop %v1851
      %v1900 = vrcp.pop %v1852
      %v1901 = vrcp.pop %v1853
      %v1902 = vrcp.pop %v1854
      %v1903 = vrcp.pop %v1855
      %v1904 = vrcp.pop %v1856
      %v1905 = vrcp.pop %v1857
      %v1906 = vrcp.pop %v1858
      %v1907 = vrcp.pop %v1859
      %v1908 = vrcp.pop %v1860
      %v1909 = vrcp.pop %v1861
      %v1910 = vrcp.pop %v1862
      %v1911 = vrcp.pop %v1863
      %v1912 = vrcp.pop %v1864
      %v1913 = vrcp.pop %v1865
      %v1914 = vrcp.pop %v1866
      %v1915 = vrcp.pop %v1867
      %v1916 = vrcp.pop %v1868
      %v1917 = vrcp.pop %v1869
      %v1918 = vrcp.pop %v1870
      %v1919 = vrcp.pop %v1871
      %v1920 = vrcp.pop %v1872
      %v1921 = vrcp.pop %v1873
      %v1922 = vrcp.pop %v1874
      %v1923 = vrcp.pop %v1875
      %v1924 = vrcp.pop %v1876
      %v1925 = vrcp.pop %v1877
      %v1926 = vrcp.pop %v1878
      %v1927 = vrcp.pop %v1879
      %v1928 = vrcp.pop %v1880
      %v1929 = vrcp.pop %v1881
      %v1930 = vrcp.pop %v1882
      %v1931 = vrcp.pop %v1883
      %v1932 = vrcp.pop %v1884
      %v1933 = vrcp.pop %v1885
      %v1934 = vrcp.pop %v1886
      %v1935 = vrcp.pop %v1887
      %v1936 = vrcp.pop %v1888
      %v1937 = vrcp.pop %v1889
      %v1938 = vrcp.pop %v1890
      %v1939 = vrcp.pop %v1891
      %v1940 = vrcp.pop %v1892
      %v1941 = vmul.f32 %v1893, 1.0614054
      %v1942 = vmul.f32 %v1894, 1.0614054
      %v1943 = vmul.f32 %v1895, 1.0614054
      %v1944 = vmul.f32 %v1896, 1.0614054
      %v1945 = vmul.f32 %v1897, 1.0614054
      %v1946 = vmul.f32 %v1898, 1.0614054
      %v1947 = vmul.f32 %v1899, 1.0614054
      %v1948 = vmul.f32 %v1900, 1.0614054
      %v1949 = vmul.f32 %v1901, 1.0614054
      %v1950 = vmul.f32 %v1902, 1.0614054
      %v1951 = vmul.f32 %v1903, 1.0614054
      %v1952 = vmul.f32 %v1904, 1.0614054
      %v1953 = vmul.f32 %v1905, 1.0614054
      %v1954 = vmul.f32 %v1906, 1.0614054
      %v1955 = vmul.f32 %v1907, 1.0614054
      %v1956 = vmul.f32 %v1908, 1.0614054
      %v1957 = vmul.f32 %v1909, 1.0614054
      %v1958 = vmul.f32 %v1910, 1.0614054
      %v1959 = vmul.f32 %v1911, 1.0614054
      %v1960 = vmul.f32 %v1912, 1.0614054
      %v1961 = vmul.f32 %v1913, 1.0614054
      %v1962 = vmul.f32 %v1914, 1.0614054
      %v1963 = vmul.f32 %v1915, 1.0614054
      %v1964 = vmul.f32 %v1916, 1.0614054
      %v1965 = vmul.f32 %v1917, 1.0614054
      %v1966 = vmul.f32 %v1918, 1.0614054
      %v1967 = vmul.f32 %v1919, 1.0614054
      %v1968 = vmul.f32 %v1920, 1.0614054
      %v1969 = vmul.f32 %v1921, 1.0614054
      %v1970 = vmul.f32 %v1922, 1.0614054
      %v1971 = vmul.f32 %v1923, 1.0614054
      %v1972 = vmul.f32 %v1924, 1.0614054
      %v1973 = vmul.f32 %v1925, 1.0614054
      %v1974 = vmul.f32 %v1926, 1.0614054
      %v1975 = vmul.f32 %v1927, 1.0614054
      %v1976 = vmul.f32 %v1928, 1.0614054
      %v1977 = vmul.f32 %v1929, 1.0614054
      %v1978 = vmul.f32 %v1930, 1.0614054
      %v1979 = vmul.f32 %v1931, 1.0614054
      %v1980 = vmul.f32 %v1932, 1.0614054
      %v1981 = vmul.f32 %v1933, 1.0614054
      %v1982 = vmul.f32 %v1934, 1.0614054
      %v1983 = vmul.f32 %v1935, 1.0614054
      %v1984 = vmul.f32 %v1936, 1.0614054
      %v1985 = vmul.f32 %v1937, 1.0614054
      %v1986 = vmul.f32 %v1938, 1.0614054
      %v1987 = vmul.f32 %v1939, 1.0614054
      %v1988 = vmul.f32 %v1940, 1.0614054
      %v1989 = vadd.f32 %v1941, -1.4531521
      %v1990 = vadd.f32 %v1942, -1.4531521
      %v1991 = vadd.f32 %v1943, -1.4531521
      %v1992 = vadd.f32 %v1944, -1.4531521
      %v1993 = vadd.f32 %v1945, -1.4531521
      %v1994 = vadd.f32 %v1946, -1.4531521
      %v1995 = vadd.f32 %v1947, -1.4531521
      %v1996 = vadd.f32 %v1948, -1.4531521
      %v1997 = vadd.f32 %v1949, -1.4531521
      %v1998 = vadd.f32 %v1950, -1.4531521
      %v1999 = vadd.f32 %v1951, -1.4531521
      %v2000 = vadd.f32 %v1952, -1.4531521
      %v2001 = vadd.f32 %v1953, -1.4531521
      %v2002 = vadd.f32 %v1954, -1.4531521
      %v2003 = vadd.f32 %v1955, -1.4531521
      %v2004 = vadd.f32 %v1956, -1.4531521
      %v2005 = vadd.f32 %v1957, -1.4531521
      %v2006 = vadd.f32 %v1958, -1.4531521
      %v2007 = vadd.f32 %v1959, -1.4531521
      %v2008 = vadd.f32 %v1960, -1.4531521
      %v2009 = vadd.f32 %v1961, -1.4531521
      %v2010 = vadd.f32 %v1962, -1.4531521
      %v2011 = vadd.f32 %v1963, -1.4531521
      %v2012 = vadd.f32 %v1964, -1.4531521
      %v2013 = vadd.f32 %v1965, -1.4531521
      %v2014 = vadd.f32 %v1966, -1.4531521
      %v2015 = vadd.f32 %v1967, -1.4531521
      %v2016 = vadd.f32 %v1968, -1.4531521
      %v2017 = vadd.f32 %v1969, -1.4531521
      %v2018 = vadd.f32 %v1970, -1.4531521
      %v2019 = vadd.f32 %v1971, -1.4531521
      %v2020 = vadd.f32 %v1972, -1.4531521
      %v2021 = vadd.f32 %v1973, -1.4531521
      %v2022 = vadd.f32 %v1974, -1.4531521
      %v2023 = vadd.f32 %v1975, -1.4531521
      %v2024 = vadd.f32 %v1976, -1.4531521
      %v2025 = vadd.f32 %v1977, -1.4531521
      %v2026 = vadd.f32 %v1978, -1.4531521
      %v2027 = vadd.f32 %v1979, -1.4531521
      %v2028 = vadd.f32 %v1980, -1.4531521
      %v2029 = vadd.f32 %v1981, -1.4531521
      %v2030 = vadd.f32 %v1982, -1.4531521
      %v2031 = vadd.f32 %v1983, -1.4531521
      %v2032 = vadd.f32 %v1984, -1.4531521
      %v2033 = vadd.f32 %v1985, -1.4531521
      %v2034 = vadd.f32 %v1986, -1.4531521
      %v2035 = vadd.f32 %v1987, -1.4531521
      %v2036 = vadd.f32 %v1988, -1.4531521
      %v2037 = vmul.f32 %v1989, %v1893
      %v2038 = vmul.f32 %v1990, %v1894
      %v2039 = vmul.f32 %v1991, %v1895
      %v2040 = vmul.f32 %v1992, %v1896
      %v2041 = vmul.f32 %v1993, %v1897
      %v2042 = vmul.f32 %v1994, %v1898
      %v2043 = vmul.f32 %v1995, %v1899
      %v2044 = vmul.f32 %v1996, %v1900
      %v2045 = vmul.f32 %v1997, %v1901
      %v2046 = vmul.f32 %v1998, %v1902
      %v2047 = vmul.f32 %v1999, %v1903
      %v2048 = vmul.f32 %v2000, %v1904
      %v2049 = vmul.f32 %v2001, %v1905
      %v2050 = vmul.f32 %v2002, %v1906
      %v2051 = vmul.f32 %v2003, %v1907
      %v2052 = vmul.f32 %v2004, %v1908
      %v2053 = vmul.f32 %v2005, %v1909
      %v2054 = vmul.f32 %v2006, %v1910
      %v2055 = vmul.f32 %v2007, %v1911
      %v2056 = vmul.f32 %v2008, %v1912
      %v2057 = vmul.f32 %v2009, %v1913
      %v2058 = vmul.f32 %v2010, %v1914
      %v2059 = vmul.f32 %v2011, %v1915
      %v2060 = vmul.f32 %v2012, %v1916
      %v2061 = vmul.f32 %v2013, %v1917
      %v2062 = vmul.f32 %v2014, %v1918
      %v2063 = vmul.f32 %v2015, %v1919
      %v2064 = vmul.f32 %v2016, %v1920
      %v2065 = vmul.f32 %v2017, %v1921
      %v2066 = vmul.f32 %v2018, %v1922
      %v2067 = vmul.f32 %v2019, %v1923
      %v2068 = vmul.f32 %v2020, %v1924
      %v2069 = vmul.f32 %v2021, %v1925
      %v2070 = vmul.f32 %v2022, %v1926
      %v2071 = vmul.f32 %v2023, %v1927
      %v2072 = vmul.f32 %v2024, %v1928
      %v2073 = vmul.f32 %v2025, %v1929
      %v2074 = vmul.f32 %v2026, %v1930
      %v2075 = vmul.f32 %v2027, %v1931
      %v2076 = vmul.f32 %v2028, %v1932
      %v2077 = vmul.f32 %v2029, %v1933
      %v2078 = vmul.f32 %v2030, %v1934
      %v2079 = vmul.f32 %v2031, %v1935
      %v2080 = vmul.f32 %v2032, %v1936
      %v2081 = vmul.f32 %v2033, %v1937
      %v2082 = vmul.f32 %v2034, %v1938
      %v2083 = vmul.f32 %v2035, %v1939
      %v2084 = vmul.f32 %v2036, %v1940
      %v2085 = vadd.f32 %v2037, 1.4214138
      %v2086 = vadd.f32 %v2038, 1.4214138
      %v2087 = vadd.f32 %v2039, 1.4214138
      %v2088 = vadd.f32 %v2040, 1.4214138
      %v2089 = vadd.f32 %v2041, 1.4214138
      %v2090 = vadd.f32 %v2042, 1.4214138
      %v2091 = vadd.f32 %v2043, 1.4214138
      %v2092 = vadd.f32 %v2044, 1.4214138
      %v2093 = vadd.f32 %v2045, 1.4214138
      %v2094 = vadd.f32 %v2046, 1.4214138
      %v2095 = vadd.f32 %v2047, 1.4214138
      %v2096 = vadd.f32 %v2048, 1.4214138
      %v2097 = vadd.f32 %v2049, 1.4214138
      %v2098 = vadd.f32 %v2050, 1.4214138
      %v2099 = vadd.f32 %v2051, 1.4214138
      %v2100 = vadd.f32 %v2052, 1.4214138
      %v2101 = vadd.f32 %v2053, 1.4214138
      %v2102 = vadd.f32 %v2054, 1.4214138
      %v2103 = vadd.f32 %v2055, 1.4214138
      %v2104 = vadd.f32 %v2056, 1.4214138
      %v2105 = vadd.f32 %v2057, 1.4214138
      %v2106 = vadd.f32 %v2058, 1.4214138
      %v2107 = vadd.f32 %v2059, 1.4214138
      %v2108 = vadd.f32 %v2060, 1.4214138
      %v2109 = vadd.f32 %v2061, 1.4214138
      %v2110 = vadd.f32 %v2062, 1.4214138
      %v2111 = vadd.f32 %v2063, 1.4214138
      %v2112 = vadd.f32 %v2064, 1.4214138
      %v2113 = vadd.f32 %v2065, 1.4214138
      %v2114 = vadd.f32 %v2066, 1.4214138
      %v2115 = vadd.f32 %v2067, 1.4214138
      %v2116 = vadd.f32 %v2068, 1.4214138
      %v2117 = vadd.f32 %v2069, 1.4214138
      %v2118 = vadd.f32 %v2070, 1.4214138
      %v2119 = vadd.f32 %v2071, 1.4214138
      %v2120 = vadd.f32 %v2072, 1.4214138
      %v2121 = vadd.f32 %v2073, 1.4214138
      %v2122 = vadd.f32 %v2074, 1.4214138
      %v2123 = vadd.f32 %v2075, 1.4214138
      %v2124 = vadd.f32 %v2076, 1.4214138
      %v2125 = vadd.f32 %v2077, 1.4214138
      %v2126 = vadd.f32 %v2078, 1.4214138
      %v2127 = vadd.f32 %v2079, 1.4214138
      %v2128 = vadd.f32 %v2080, 1.4214138
      %v2129 = vadd.f32 %v2081, 1.4214138
      %v2130 = vadd.f32 %v2082, 1.4214138
      %v2131 = vadd.f32 %v2083, 1.4214138
      %v2132 = vadd.f32 %v2084, 1.4214138
      %v2133 = vmul.f32 %v2085, %v1893
      %v2134 = vmul.f32 %v2086, %v1894
      %v2135 = vmul.f32 %v2087, %v1895
      %v2136 = vmul.f32 %v2088, %v1896
      %v2137 = vmul.f32 %v2089, %v1897
      %v2138 = vmul.f32 %v2090, %v1898
      %v2139 = vmul.f32 %v2091, %v1899
      %v2140 = vmul.f32 %v2092, %v1900
      %v2141 = vmul.f32 %v2093, %v1901
      %v2142 = vmul.f32 %v2094, %v1902
      %v2143 = vmul.f32 %v2095, %v1903
      %v2144 = vmul.f32 %v2096, %v1904
      %v2145 = vmul.f32 %v2097, %v1905
      %v2146 = vmul.f32 %v2098, %v1906
      %v2147 = vmul.f32 %v2099, %v1907
      %v2148 = vmul.f32 %v2100, %v1908
      %v2149 = vmul.f32 %v2101, %v1909
      %v2150 = vmul.f32 %v2102, %v1910
      %v2151 = vmul.f32 %v2103, %v1911
      %v2152 = vmul.f32 %v2104, %v1912
      %v2153 = vmul.f32 %v2105, %v1913
      %v2154 = vmul.f32 %v2106, %v1914
      %v2155 = vmul.f32 %v2107, %v1915
      %v2156 = vmul.f32 %v2108, %v1916
      %v2157 = vmul.f32 %v2109, %v1917
      %v2158 = vmul.f32 %v2110, %v1918
      %v2159 = vmul.f32 %v2111, %v1919
      %v2160 = vmul.f32 %v2112, %v1920
      %v2161 = vmul.f32 %v2113, %v1921
      %v2162 = vmul.f32 %v2114, %v1922
      %v2163 = vmul.f32 %v2115, %v1923
      %v2164 = vmul.f32 %v2116, %v1924
      %v2165 = vmul.f32 %v2117, %v1925
      %v2166 = vmul.f32 %v2118, %v1926
      %v2167 = vmul.f32 %v2119, %v1927
      %v2168 = vmul.f32 %v2120, %v1928
      %v2169 = vmul.f32 %v2121, %v1929
      %v2170 = vmul.f32 %v2122, %v1930
      %v2171 = vmul.f32 %v2123, %v1931
      %v2172 = vmul.f32 %v2124, %v1932
      %v2173 = vmul.f32 %v2125, %v1933
      %v2174 = vmul.f32 %v2126, %v1934
      %v2175 = vmul.f32 %v2127, %v1935
      %v2176 = vmul.f32 %v2128, %v1936
      %v2177 = vmul.f32 %v2129, %v1937
      %v2178 = vmul.f32 %v2130, %v1938
      %v2179 = vmul.f32 %v2131, %v1939
      %v2180 = vmul.f32 %v2132, %v1940
      %v2181 = vadd.f32 %v2133, -0.28449672
      %v2182 = vadd.f32 %v2134, -0.28449672
      %v2183 = vadd.f32 %v2135, -0.28449672
      %v2184 = vadd.f32 %v2136, -0.28449672
      %v2185 = vadd.f32 %v2137, -0.28449672
      %v2186 = vadd.f32 %v2138, -0.28449672
      %v2187 = vadd.f32 %v2139, -0.28449672
      %v2188 = vadd.f32 %v2140, -0.28449672
      %v2189 = vadd.f32 %v2141, -0.28449672
      %v2190 = vadd.f32 %v2142, -0.28449672
      %v2191 = vadd.f32 %v2143, -0.28449672
      %v2192 = vadd.f32 %v2144, -0.28449672
      %v2193 = vadd.f32 %v2145, -0.28449672
      %v2194 = vadd.f32 %v2146, -0.28449672
      %v2195 = vadd.f32 %v2147, -0.28449672
      %v2196 = vadd.f32 %v2148, -0.28449672
      %v2197 = vadd.f32 %v2149, -0.28449672
      %v2198 = vadd.f32 %v2150, -0.28449672
      %v2199 = vadd.f32 %v2151, -0.28449672
      %v2200 = vadd.f32 %v2152, -0.28449672
      %v2201 = vadd.f32 %v2153, -0.28449672
      %v2202 = vadd.f32 %v2154, -0.28449672
      %v2203 = vadd.f32 %v2155, -0.28449672
      %v2204 = vadd.f32 %v2156, -0.28449672
      %v2205 = vadd.f32 %v2157, -0.28449672
      %v2206 = vadd.f32 %v2158, -0.28449672
      %v2207 = vadd.f32 %v2159, -0.28449672
      %v2208 = vadd.f32 %v2160, -0.28449672
      %v2209 = vadd.f32 %v2161, -0.28449672
      %v2210 = vadd.f32 %v2162, -0.28449672
      %v2211 = vadd.f32 %v2163, -0.28449672
      %v2212 = vadd.f32 %v2164, -0.28449672
      %v2213 = vadd.f32 %v2165, -0.28449672
      %v2214 = vadd.f32 %v2166, -0.28449672
      %v2215 = vadd.f32 %v2167, -0.28449672
      %v2216 = vadd.f32 %v2168, -0.28449672
      %v2217 = vadd.f32 %v2169, -0.28449672
      %v2218 = vadd.f32 %v2170, -0.28449672
      %v2219 = vadd.f32 %v2171, -0.28449672
      %v2220 = vadd.f32 %v2172, -0.28449672
      %v2221 = vadd.f32 %v2173, -0.28449672
      %v2222 = vadd.f32 %v2174, -0.28449672
      %v2223 = vadd.f32 %v2175, -0.28449672
      %v2224 = vadd.f32 %v2176, -0.28449672
      %v2225 = vadd.f32 %v2177, -0.28449672
      %v2226 = vadd.f32 %v2178, -0.28449672
      %v2227 = vadd.f32 %v2179, -0.28449672
      %v2228 = vadd.f32 %v2180, -0.28449672
      %v2229 = vmul.f32 %v2181, %v1893
      %v2230 = vmul.f32 %v2182, %v1894
      %v2231 = vmul.f32 %v2183, %v1895
      %v2232 = vmul.f32 %v2184, %v1896
      %v2233 = vmul.f32 %v2185, %v1897
      %v2234 = vmul.f32 %v2186, %v1898
      %v2235 = vmul.f32 %v2187, %v1899
      %v2236 = vmul.f32 %v2188, %v1900
      %v2237 = vmul.f32 %v2189, %v1901
      %v2238 = vmul.f32 %v2190, %v1902
      %v2239 = vmul.f32 %v2191, %v1903
      %v2240 = vmul.f32 %v2192, %v1904
      %v2241 = vmul.f32 %v2193, %v1905
      %v2242 = vmul.f32 %v2194, %v1906
      %v2243 = vmul.f32 %v2195, %v1907
      %v2244 = vmul.f32 %v2196, %v1908
      %v2245 = vmul.f32 %v2197, %v1909
      %v2246 = vmul.f32 %v2198, %v1910
      %v2247 = vmul.f32 %v2199, %v1911
      %v2248 = vmul.f32 %v2200, %v1912
      %v2249 = vmul.f32 %v2201, %v1913
      %v2250 = vmul.f32 %v2202, %v1914
      %v2251 = vmul.f32 %v2203, %v1915
      %v2252 = vmul.f32 %v2204, %v1916
      %v2253 = vmul.f32 %v2205, %v1917
      %v2254 = vmul.f32 %v2206, %v1918
      %v2255 = vmul.f32 %v2207, %v1919
      %v2256 = vmul.f32 %v2208, %v1920
      %v2257 = vmul.f32 %v2209, %v1921
      %v2258 = vmul.f32 %v2210, %v1922
      %v2259 = vmul.f32 %v2211, %v1923
      %v2260 = vmul.f32 %v2212, %v1924
      %v2261 = vmul.f32 %v2213, %v1925
      %v2262 = vmul.f32 %v2214, %v1926
      %v2263 = vmul.f32 %v2215, %v1927
      %v2264 = vmul.f32 %v2216, %v1928
      %v2265 = vmul.f32 %v2217, %v1929
      %v2266 = vmul.f32 %v2218, %v1930
      %v2267 = vmul.f32 %v2219, %v1931
      %v2268 = vmul.f32 %v2220, %v1932
      %v2269 = vmul.f32 %v2221, %v1933
      %v2270 = vmul.f32 %v2222, %v1934
      %v2271 = vmul.f32 %v2223, %v1935
      %v2272 = vmul.f32 %v2224, %v1936
      %v2273 = vmul.f32 %v2225, %v1937
      %v2274 = vmul.f32 %v2226, %v1938
      %v2275 = vmul.f32 %v2227, %v1939
      %v2276 = vmul.f32 %v2228, %v1940
      %v2277 = vadd.f32 %v2229, 0.2548296
      %v2278 = vadd.f32 %v2230, 0.2548296
      %v2279 = vadd.f32 %v2231, 0.2548296
      %v2280 = vadd.f32 %v2232, 0.2548296
      %v2281 = vadd.f32 %v2233, 0.2548296
      %v2282 = vadd.f32 %v2234, 0.2548296
      %v2283 = vadd.f32 %v2235, 0.2548296
      %v2284 = vadd.f32 %v2236, 0.2548296
      %v2285 = vadd.f32 %v2237, 0.2548296
      %v2286 = vadd.f32 %v2238, 0.2548296
      %v2287 = vadd.f32 %v2239, 0.2548296
      %v2288 = vadd.f32 %v2240, 0.2548296
      %v2289 = vadd.f32 %v2241, 0.2548296
      %v2290 = vadd.f32 %v2242, 0.2548296
      %v2291 = vadd.f32 %v2243, 0.2548296
      %v2292 = vadd.f32 %v2244, 0.2548296
      %v2293 = vadd.f32 %v2245, 0.2548296
      %v2294 = vadd.f32 %v2246, 0.2548296
      %v2295 = vadd.f32 %v2247, 0.2548296
      %v2296 = vadd.f32 %v2248, 0.2548296
      %v2297 = vadd.f32 %v2249, 0.2548296
      %v2298 = vadd.f32 %v2250, 0.2548296
      %v2299 = vadd.f32 %v2251, 0.2548296
      %v2300 = vadd.f32 %v2252, 0.2548296
      %v2301 = vadd.f32 %v2253, 0.2548296
      %v2302 = vadd.f32 %v2254, 0.2548296
      %v2303 = vadd.f32 %v2255, 0.2548296
      %v2304 = vadd.f32 %v2256, 0.2548296
      %v2305 = vadd.f32 %v2257, 0.2548296
      %v2306 = vadd.f32 %v2258, 0.2548296
      %v2307 = vadd.f32 %v2259, 0.2548296
      %v2308 = vadd.f32 %v2260, 0.2548296
      %v2309 = vadd.f32 %v2261, 0.2548296
      %v2310 = vadd.f32 %v2262, 0.2548296
      %v2311 = vadd.f32 %v2263, 0.2548296
      %v2312 = vadd.f32 %v2264, 0.2548296
      %v2313 = vadd.f32 %v2265, 0.2548296
      %v2314 = vadd.f32 %v2266, 0.2548296
      %v2315 = vadd.f32 %v2267, 0.2548296
      %v2316 = vadd.f32 %v2268, 0.2548296
      %v2317 = vadd.f32 %v2269, 0.2548296
      %v2318 = vadd.f32 %v2270, 0.2548296
      %v2319 = vadd.f32 %v2271, 0.2548296
      %v2320 = vadd.f32 %v2272, 0.2548296
      %v2321 = vadd.f32 %v2273, 0.2548296
      %v2322 = vadd.f32 %v2274, 0.2548296
      %v2323 = vadd.f32 %v2275, 0.2548296
      %v2324 = vadd.f32 %v2276, 0.2548296
      %v2325 = vmul.f32 %v2277, %v1893
      %v2326 = vmul.f32 %v2278, %v1894
      %v2327 = vmul.f32 %v2279, %v1895
      %v2328 = vmul.f32 %v2280, %v1896
      %v2329 = vmul.f32 %v2281, %v1897
      %v2330 = vmul.f32 %v2282, %v1898
      %v2331 = vmul.f32 %v2283, %v1899
      %v2332 = vmul.f32 %v2284, %v1900
      %v2333 = vmul.f32 %v2285, %v1901
      %v2334 = vmul.f32 %v2286, %v1902
      %v2335 = vmul.f32 %v2287, %v1903
      %v2336 = vmul.f32 %v2288, %v1904
      %v2337 = vmul.f32 %v2289, %v1905
      %v2338 = vmul.f32 %v2290, %v1906
      %v2339 = vmul.f32 %v2291, %v1907
      %v2340 = vmul.f32 %v2292, %v1908
      %v2341 = vmul.f32 %v2293, %v1909
      %v2342 = vmul.f32 %v2294, %v1910
      %v2343 = vmul.f32 %v2295, %v1911
      %v2344 = vmul.f32 %v2296, %v1912
      %v2345 = vmul.f32 %v2297, %v1913
      %v2346 = vmul.f32 %v2298, %v1914
      %v2347 = vmul.f32 %v2299, %v1915
      %v2348 = vmul.f32 %v2300, %v1916
      %v2349 = vmul.f32 %v2301, %v1917
      %v2350 = vmul.f32 %v2302, %v1918
      %v2351 = vmul.f32 %v2303, %v1919
      %v2352 = vmul.f32 %v2304, %v1920
      %v2353 = vmul.f32 %v2305, %v1921
      %v2354 = vmul.f32 %v2306, %v1922
      %v2355 = vmul.f32 %v2307, %v1923
      %v2356 = vmul.f32 %v2308, %v1924
      %v2357 = vmul.f32 %v2309, %v1925
      %v2358 = vmul.f32 %v2310, %v1926
      %v2359 = vmul.f32 %v2311, %v1927
      %v2360 = vmul.f32 %v2312, %v1928
      %v2361 = vmul.f32 %v2313, %v1929
      %v2362 = vmul.f32 %v2314, %v1930
      %v2363 = vmul.f32 %v2315, %v1931
      %v2364 = vmul.f32 %v2316, %v1932
      %v2365 = vmul.f32 %v2317, %v1933
      %v2366 = vmul.f32 %v2318, %v1934
      %v2367 = vmul.f32 %v2319, %v1935
      %v2368 = vmul.f32 %v2320, %v1936
      %v2369 = vmul.f32 %v2321, %v1937
      %v2370 = vmul.f32 %v2322, %v1938
      %v2371 = vmul.f32 %v2323, %v1939
      %v2372 = vmul.f32 %v2324, %v1940
      %v2373 = vsub.f32 0.0, %v1749
      %v2374 = vsub.f32 0.0, %v1750
      %v2375 = vsub.f32 0.0, %v1751
      %v2376 = vsub.f32 0.0, %v1752
      %v2377 = vsub.f32 0.0, %v1753
      %v2378 = vsub.f32 0.0, %v1754
      %v2379 = vsub.f32 0.0, %v1755
      %v2380 = vsub.f32 0.0, %v1756
      %v2381 = vsub.f32 0.0, %v1757
      %v2382 = vsub.f32 0.0, %v1758
      %v2383 = vsub.f32 0.0, %v1759
      %v2384 = vsub.f32 0.0, %v1760
      %v2385 = vsub.f32 0.0, %v1761
      %v2386 = vsub.f32 0.0, %v1762
      %v2387 = vsub.f32 0.0, %v1763
      %v2388 = vsub.f32 0.0, %v1764
      %v2389 = vsub.f32 0.0, %v1765
      %v2390 = vsub.f32 0.0, %v1766
      %v2391 = vsub.f32 0.0, %v1767
      %v2392 = vsub.f32 0.0, %v1768
      %v2393 = vsub.f32 0.0, %v1769
      %v2394 = vsub.f32 0.0, %v1770
      %v2395 = vsub.f32 0.0, %v1771
      %v2396 = vsub.f32 0.0, %v1772
      %v2397 = vsub.f32 0.0, %v1773
      %v2398 = vsub.f32 0.0, %v1774
      %v2399 = vsub.f32 0.0, %v1775
      %v2400 = vsub.f32 0.0, %v1776
      %v2401 = vsub.f32 0.0, %v1777
      %v2402 = vsub.f32 0.0, %v1778
      %v2403 = vsub.f32 0.0, %v1779
      %v2404 = vsub.f32 0.0, %v1780
      %v2405 = vsub.f32 0.0, %v1781
      %v2406 = vsub.f32 0.0, %v1782
      %v2407 = vsub.f32 0.0, %v1783
      %v2408 = vsub.f32 0.0, %v1784
      %v2409 = vsub.f32 0.0, %v1785
      %v2410 = vsub.f32 0.0, %v1786
      %v2411 = vsub.f32 0.0, %v1787
      %v2412 = vsub.f32 0.0, %v1788
      %v2413 = vsub.f32 0.0, %v1789
      %v2414 = vsub.f32 0.0, %v1790
      %v2415 = vsub.f32 0.0, %v1791
      %v2416 = vsub.f32 0.0, %v1792
      %v2417 = vsub.f32 0.0, %v1793
      %v2418 = vsub.f32 0.0, %v1794
      %v2419 = vsub.f32 0.0, %v1795
      %v2420 = vsub.f32 0.0, %v1796
      %v2421 = vmul.f32 %v2373, %v1749
      %v2422 = vmul.f32 %v2374, %v1750
      %v2423 = vmul.f32 %v2375, %v1751
      %v2424 = vmul.f32 %v2376, %v1752
      %v2425 = vmul.f32 %v2377, %v1753
      %v2426 = vmul.f32 %v2378, %v1754
      %v2427 = vmul.f32 %v2379, %v1755
      %v2428 = vmul.f32 %v2380, %v1756
      %v2429 = vmul.f32 %v2381, %v1757
      %v2430 = vmul.f32 %v2382, %v1758
      %v2431 = vmul.f32 %v2383, %v1759
      %v2432 = vmul.f32 %v2384, %v1760
      %v2433 = vmul.f32 %v2385, %v1761
      %v2434 = vmul.f32 %v2386, %v1762
      %v2435 = vmul.f32 %v2387, %v1763
      %v2436 = vmul.f32 %v2388, %v1764
      %v2437 = vmul.f32 %v2389, %v1765
      %v2438 = vmul.f32 %v2390, %v1766
      %v2439 = vmul.f32 %v2391, %v1767
      %v2440 = vmul.f32 %v2392, %v1768
      %v2441 = vmul.f32 %v2393, %v1769
      %v2442 = vmul.f32 %v2394, %v1770
      %v2443 = vmul.f32 %v2395, %v1771
      %v2444 = vmul.f32 %v2396, %v1772
      %v2445 = vmul.f32 %v2397, %v1773
      %v2446 = vmul.f32 %v2398, %v1774
      %v2447 = vmul.f32 %v2399, %v1775
      %v2448 = vmul.f32 %v2400, %v1776
      %v2449 = vmul.f32 %v2401, %v1777
      %v2450 = vmul.f32 %v2402, %v1778
      %v2451 = vmul.f32 %v2403, %v1779
      %v2452 = vmul.f32 %v2404, %v1780
      %v2453 = vmul.f32 %v2405, %v1781
      %v2454 = vmul.f32 %v2406, %v1782
      %v2455 = vmul.f32 %v2407, %v1783
      %v2456 = vmul.f32 %v2408, %v1784
      %v2457 = vmul.f32 %v2409, %v1785
      %v2458 = vmul.f32 %v2410, %v1786
      %v2459 = vmul.f32 %v2411, %v1787
      %v2460 = vmul.f32 %v2412, %v1788
      %v2461 = vmul.f32 %v2413, %v1789
      %v2462 = vmul.f32 %v2414, %v1790
      %v2463 = vmul.f32 %v2415, %v1791
      %v2464 = vmul.f32 %v2416, %v1792
      %v2465 = vmul.f32 %v2417, %v1793
      %v2466 = vmul.f32 %v2418, %v1794
      %v2467 = vmul.f32 %v2419, %v1795
      %v2468 = vmul.f32 %v2420, %v1796
      %v2469 = vmul.f32 %v2421, 1.442695
      %v2470 = vpow.pop %v2469
      %v2471 = vmul.f32 %v2422, 1.442695
      %v2472 = vpow.pop %v2471
      %v2473 = vmul.f32 %v2423, 1.442695
      %v2474 = vpow.pop %v2473
      %v2475 = vmul.f32 %v2424, 1.442695
      %v2476 = vpow.pop %v2475
      %v2477 = vmul.f32 %v2425, 1.442695
      %v2478 = vpow.pop %v2477
      %v2479 = vmul.f32 %v2426, 1.442695
      %v2480 = vpow.pop %v2479
      %v2481 = vmul.f32 %v2427, 1.442695
      %v2482 = vpow.pop %v2481
      %v2483 = vmul.f32 %v2428, 1.442695
      %v2484 = vpow.pop %v2483
      %v2485 = vmul.f32 %v2429, 1.442695
      %v2486 = vpow.pop %v2485
      %v2487 = vmul.f32 %v2430, 1.442695
      %v2488 = vpow.pop %v2487
      %v2489 = vmul.f32 %v2431, 1.442695
      %v2490 = vpow.pop %v2489
      %v2491 = vmul.f32 %v2432, 1.442695
      %v2492 = vpow.pop %v2491
      %v2493 = vmul.f32 %v2433, 1.442695
      %v2494 = vpow.pop %v2493
      %v2495 = vmul.f32 %v2434, 1.442695
      %v2496 = vpow.pop %v2495
      %v2497 = vmul.f32 %v2435, 1.442695
      %v2498 = vpow.pop %v2497
      %v2499 = vmul.f32 %v2436, 1.442695
      %v2500 = vpow.pop %v2499
      %v2501 = vmul.f32 %v2437, 1.442695
      %v2502 = vpow.pop %v2501
      %v2503 = vmul.f32 %v2438, 1.442695
      %v2504 = vpow.pop %v2503
      %v2505 = vmul.f32 %v2439, 1.442695
      %v2506 = vpow.pop %v2505
      %v2507 = vmul.f32 %v2440, 1.442695
      %v2508 = vpow.pop %v2507
      %v2509 = vmul.f32 %v2441, 1.442695
      %v2510 = vpow.pop %v2509
      %v2511 = vmul.f32 %v2442, 1.442695
      %v2512 = vpow.pop %v2511
      %v2513 = vmul.f32 %v2443, 1.442695
      %v2514 = vpow.pop %v2513
      %v2515 = vmul.f32 %v2444, 1.442695
      %v2516 = vpow.pop %v2515
      %v2517 = vmul.f32 %v2445, 1.442695
      %v2518 = vpow.pop %v2517
      %v2519 = vmul.f32 %v2446, 1.442695
      %v2520 = vpow.pop %v2519
      %v2521 = vmul.f32 %v2447, 1.442695
      %v2522 = vpow.pop %v2521
      %v2523 = vmul.f32 %v2448, 1.442695
      %v2524 = vpow.pop %v2523
      %v2525 = vmul.f32 %v2449, 1.442695
      %v2526 = vpow.pop %v2525
      %v2527 = vmul.f32 %v2450, 1.442695
      %v2528 = vpow.pop %v2527
      %v2529 = vmul.f32 %v2451, 1.442695
      %v2530 = vpow.pop %v2529
      %v2531 = vmul.f32 %v2452, 1.442695
      %v2532 = vpow.pop %v2531
      %v2533 = vmul.f32 %v2453, 1.442695
      %v2534 = vpow.pop %v2533
      %v2535 = vmul.f32 %v2454, 1.442695
      %v2536 = vpow.pop %v2535
      %v2537 = vmul.f32 %v2455, 1.442695
      %v2538 = vpow.pop %v2537
      %v2539 = vmul.f32 %v2456, 1.442695
      %v2540 = vpow.pop %v2539
      %v2541 = vmul.f32 %v2457, 1.442695
      %v2542 = vpow.pop %v2541
      %v2543 = vmul.f32 %v2458, 1.442695
      %v2544 = vpow.pop %v2543
      %v2545 = vmul.f32 %v2459, 1.442695
      %v2546 = vpow.pop %v2545
      %v2547 = vmul.f32 %v2460, 1.442695
      %v2548 = vpow.pop %v2547
      %v2549 = vmul.f32 %v2461, 1.442695
      %v2550 = vpow.pop %v2549
      %v2551 = vmul.f32 %v2462, 1.442695
      %v2552 = vpow.pop %v2551
      %v2553 = vmul.f32 %v2463, 1.442695
      %v2554 = vpow.pop %v2553
      %v2555 = vmul.f32 %v2464, 1.442695
      %v2556 = vpow.pop %v2555
      %v2557 = vmul.f32 %v2465, 1.442695
      %v2558 = vpow.pop %v2557
      %v2559 = vmul.f32 %v2466, 1.442695
      %v2560 = vpow.pop %v2559
      %v2561 = vmul.f32 %v2467, 1.442695
      %v2562 = vpow.pop %v2561
      %v2563 = vmul.f32 %v2468, 1.442695
      %v2564 = vpow.pop %v2563
      %v2565 = vmul.f32 %v2325, %v2470
      %v2566 = vmul.f32 %v2326, %v2472
      %v2567 = vmul.f32 %v2327, %v2474
      %v2568 = vmul.f32 %v2328, %v2476
      %v2569 = vmul.f32 %v2329, %v2478
      %v2570 = vmul.f32 %v2330, %v2480
      %v2571 = vmul.f32 %v2331, %v2482
      %v2572 = vmul.f32 %v2332, %v2484
      %v2573 = vmul.f32 %v2333, %v2486
      %v2574 = vmul.f32 %v2334, %v2488
      %v2575 = vmul.f32 %v2335, %v2490
      %v2576 = vmul.f32 %v2336, %v2492
      %v2577 = vmul.f32 %v2337, %v2494
      %v2578 = vmul.f32 %v2338, %v2496
      %v2579 = vmul.f32 %v2339, %v2498
      %v2580 = vmul.f32 %v2340, %v2500
      %v2581 = vmul.f32 %v2341, %v2502
      %v2582 = vmul.f32 %v2342, %v2504
      %v2583 = vmul.f32 %v2343, %v2506
      %v2584 = vmul.f32 %v2344, %v2508
      %v2585 = vmul.f32 %v2345, %v2510
      %v2586 = vmul.f32 %v2346, %v2512
      %v2587 = vmul.f32 %v2347, %v2514
      %v2588 = vmul.f32 %v2348, %v2516
      %v2589 = vmul.f32 %v2349, %v2518
      %v2590 = vmul.f32 %v2350, %v2520
      %v2591 = vmul.f32 %v2351, %v2522
      %v2592 = vmul.f32 %v2352, %v2524
      %v2593 = vmul.f32 %v2353, %v2526
      %v2594 = vmul.f32 %v2354, %v2528
      %v2595 = vmul.f32 %v2355, %v2530
      %v2596 = vmul.f32 %v2356, %v2532
      %v2597 = vmul.f32 %v2357, %v2534
      %v2598 = vmul.f32 %v2358, %v2536
      %v2599 = vmul.f32 %v2359, %v2538
      %v2600 = vmul.f32 %v2360, %v2540
      %v2601 = vmul.f32 %v2361, %v2542
      %v2602 = vmul.f32 %v2362, %v2544
      %v2603 = vmul.f32 %v2363, %v2546
      %v2604 = vmul.f32 %v2364, %v2548
      %v2605 = vmul.f32 %v2365, %v2550
      %v2606 = vmul.f32 %v2366, %v2552
      %v2607 = vmul.f32 %v2367, %v2554
      %v2608 = vmul.f32 %v2368, %v2556
      %v2609 = vmul.f32 %v2369, %v2558
      %v2610 = vmul.f32 %v2370, %v2560
      %v2611 = vmul.f32 %v2371, %v2562
      %v2612 = vmul.f32 %v2372, %v2564
      %v2613 = vsub.f32 1.0, %v2565
      %v2614 = vsub.f32 1.0, %v2566
      %v2615 = vsub.f32 1.0, %v2567
      %v2616 = vsub.f32 1.0, %v2568
      %v2617 = vsub.f32 1.0, %v2569
      %v2618 = vsub.f32 1.0, %v2570
      %v2619 = vsub.f32 1.0, %v2571
      %v2620 = vsub.f32 1.0, %v2572
      %v2621 = vsub.f32 1.0, %v2573
      %v2622 = vsub.f32 1.0, %v2574
      %v2623 = vsub.f32 1.0, %v2575
      %v2624 = vsub.f32 1.0, %v2576
      %v2625 = vsub.f32 1.0, %v2577
      %v2626 = vsub.f32 1.0, %v2578
      %v2627 = vsub.f32 1.0, %v2579
      %v2628 = vsub.f32 1.0, %v2580
      %v2629 = vsub.f32 1.0, %v2581
      %v2630 = vsub.f32 1.0, %v2582
      %v2631 = vsub.f32 1.0, %v2583
      %v2632 = vsub.f32 1.0, %v2584
      %v2633 = vsub.f32 1.0, %v2585
      %v2634 = vsub.f32 1.0, %v2586
      %v2635 = vsub.f32 1.0, %v2587
      %v2636 = vsub.f32 1.0, %v2588
      %v2637 = vsub.f32 1.0, %v2589
      %v2638 = vsub.f32 1.0, %v2590
      %v2639 = vsub.f32 1.0, %v2591
      %v2640 = vsub.f32 1.0, %v2592
      %v2641 = vsub.f32 1.0, %v2593
      %v2642 = vsub.f32 1.0, %v2594
      %v2643 = vsub.f32 1.0, %v2595
      %v2644 = vsub.f32 1.0, %v2596
      %v2645 = vsub.f32 1.0, %v2597
      %v2646 = vsub.f32 1.0, %v2598
      %v2647 = vsub.f32 1.0, %v2599
      %v2648 = vsub.f32 1.0, %v2600
      %v2649 = vsub.f32 1.0, %v2601
      %v2650 = vsub.f32 1.0, %v2602
      %v2651 = vsub.f32 1.0, %v2603
      %v2652 = vsub.f32 1.0, %v2604
      %v2653 = vsub.f32 1.0, %v2605
      %v2654 = vsub.f32 1.0, %v2606
      %v2655 = vsub.f32 1.0, %v2607
      %v2656 = vsub.f32 1.0, %v2608
      %v2657 = vsub.f32 1.0, %v2609
      %v2658 = vsub.f32 1.0, %v2610
      %v2659 = vsub.f32 1.0, %v2611
      %v2660 = vsub.f32 1.0, %v2612
      %vm2661 = vcmp.lt.f32.partialorder %v1701, 0.0
      %vm2662 = vcmp.lt.f32.partialorder %v1702, 0.0
      %vm2663 = vcmp.lt.f32.partialorder %v1703, 0.0
      %vm2664 = vcmp.lt.f32.partialorder %v1704, 0.0
      %vm2665 = vcmp.lt.f32.partialorder %v1705, 0.0
      %vm2666 = vcmp.lt.f32.partialorder %v1706, 0.0
      %vm2667 = vcmp.lt.f32.partialorder %v1707, 0.0
      %vm2668 = vcmp.lt.f32.partialorder %v1708, 0.0
      %vm2669 = vcmp.lt.f32.partialorder %v1709, 0.0
      %vm2670 = vcmp.lt.f32.partialorder %v1710, 0.0
      %vm2671 = vcmp.lt.f32.partialorder %v1711, 0.0
      %vm2672 = vcmp.lt.f32.partialorder %v1712, 0.0
      %vm2673 = vcmp.lt.f32.partialorder %v1713, 0.0
      %vm2674 = vcmp.lt.f32.partialorder %v1714, 0.0
      %vm2675 = vcmp.lt.f32.partialorder %v1715, 0.0
      %vm2676 = vcmp.lt.f32.partialorder %v1716, 0.0
      %vm2677 = vcmp.lt.f32.partialorder %v1717, 0.0
      %vm2678 = vcmp.lt.f32.partialorder %v1718, 0.0
      %vm2679 = vcmp.lt.f32.partialorder %v1719, 0.0
      %vm2680 = vcmp.lt.f32.partialorder %v1720, 0.0
      %vm2681 = vcmp.lt.f32.partialorder %v1721, 0.0
      %vm2682 = vcmp.lt.f32.partialorder %v1722, 0.0
      %vm2683 = vcmp.lt.f32.partialorder %v1723, 0.0
      %vm2684 = vcmp.lt.f32.partialorder %v1724, 0.0
      %vm2685 = vcmp.lt.f32.partialorder %v1725, 0.0
      %vm2686 = vcmp.lt.f32.partialorder %v1726, 0.0
      %vm2687 = vcmp.lt.f32.partialorder %v1727, 0.0
      %vm2688 = vcmp.lt.f32.partialorder %v1728, 0.0
      %vm2689 = vcmp.lt.f32.partialorder %v1729, 0.0
      %vm2690 = vcmp.lt.f32.partialorder %v1730, 0.0
      %vm2691 = vcmp.lt.f32.partialorder %v1731, 0.0
      %vm2692 = vcmp.lt.f32.partialorder %v1732, 0.0
      %vm2693 = vcmp.lt.f32.partialorder %v1733, 0.0
      %vm2694 = vcmp.lt.f32.partialorder %v1734, 0.0
      %vm2695 = vcmp.lt.f32.partialorder %v1735, 0.0
      %vm2696 = vcmp.lt.f32.partialorder %v1736, 0.0
      %vm2697 = vcmp.lt.f32.partialorder %v1737, 0.0
      %vm2698 = vcmp.lt.f32.partialorder %v1738, 0.0
      %vm2699 = vcmp.lt.f32.partialorder %v1739, 0.0
      %vm2700 = vcmp.lt.f32.partialorder %v1740, 0.0
      %vm2701 = vcmp.lt.f32.partialorder %v1741, 0.0
      %vm2702 = vcmp.lt.f32.partialorder %v1742, 0.0
      %vm2703 = vcmp.lt.f32.partialorder %v1743, 0.0
      %vm2704 = vcmp.lt.f32.partialorder %v1744, 0.0
      %vm2705 = vcmp.lt.f32.partialorder %v1745, 0.0
      %vm2706 = vcmp.lt.f32.partialorder %v1746, 0.0
      %vm2707 = vcmp.lt.f32.partialorder %v1747, 0.0
      %vm2708 = vcmp.lt.f32.partialorder %v1748, 0.0
      %v2709 = vsub.f32 0.0, %v2613
      %v2710 = vsub.f32 0.0, %v2614
      %v2711 = vsub.f32 0.0, %v2615
      %v2712 = vsub.f32 0.0, %v2616
      %v2713 = vsub.f32 0.0, %v2617
      %v2714 = vsub.f32 0.0, %v2618
      %v2715 = vsub.f32 0.0, %v2619
      %v2716 = vsub.f32 0.0, %v2620
      %v2717 = vsub.f32 0.0, %v2621
      %v2718 = vsub.f32 0.0, %v2622
      %v2719 = vsub.f32 0.0, %v2623
      %v2720 = vsub.f32 0.0, %v2624
      %v2721 = vsub.f32 0.0, %v2625
      %v2722 = vsub.f32 0.0, %v2626
      %v2723 = vsub.f32 0.0, %v2627
      %v2724 = vsub.f32 0.0, %v2628
      %v2725 = vsub.f32 0.0, %v2629
      %v2726 = vsub.f32 0.0, %v2630
      %v2727 = vsub.f32 0.0, %v2631
      %v2728 = vsub.f32 0.0, %v2632
      %v2729 = vsub.f32 0.0, %v2633
      %v2730 = vsub.f32 0.0, %v2634
      %v2731 = vsub.f32 0.0, %v2635
      %v2732 = vsub.f32 0.0, %v2636
      %v2733 = vsub.f32 0.0, %v2637
      %v2734 = vsub.f32 0.0, %v2638
      %v2735 = vsub.f32 0.0, %v2639
      %v2736 = vsub.f32 0.0, %v2640
      %v2737 = vsub.f32 0.0, %v2641
      %v2738 = vsub.f32 0.0, %v2642
      %v2739 = vsub.f32 0.0, %v2643
      %v2740 = vsub.f32 0.0, %v2644
      %v2741 = vsub.f32 0.0, %v2645
      %v2742 = vsub.f32 0.0, %v2646
      %v2743 = vsub.f32 0.0, %v2647
      %v2744 = vsub.f32 0.0, %v2648
      %v2745 = vsub.f32 0.0, %v2649
      %v2746 = vsub.f32 0.0, %v2650
      %v2747 = vsub.f32 0.0, %v2651
      %v2748 = vsub.f32 0.0, %v2652
      %v2749 = vsub.f32 0.0, %v2653
      %v2750 = vsub.f32 0.0, %v2654
      %v2751 = vsub.f32 0.0, %v2655
      %v2752 = vsub.f32 0.0, %v2656
      %v2753 = vsub.f32 0.0, %v2657
      %v2754 = vsub.f32 0.0, %v2658
      %v2755 = vsub.f32 0.0, %v2659
      %v2756 = vsub.f32 0.0, %v2660
      %v2757 = vsel %vm2661, %v2709, %v2613
      %v2758 = vsel %vm2662, %v2710, %v2614
      %v2759 = vsel %vm2663, %v2711, %v2615
      %v2760 = vsel %vm2664, %v2712, %v2616
      %v2761 = vsel %vm2665, %v2713, %v2617
      %v2762 = vsel %vm2666, %v2714, %v2618
      %v2763 = vsel %vm2667, %v2715, %v2619
      %v2764 = vsel %vm2668, %v2716, %v2620
      %v2765 = vsel %vm2669, %v2717, %v2621
      %v2766 = vsel %vm2670, %v2718, %v2622
      %v2767 = vsel %vm2671, %v2719, %v2623
      %v2768 = vsel %vm2672, %v2720, %v2624
      %v2769 = vsel %vm2673, %v2721, %v2625
      %v2770 = vsel %vm2674, %v2722, %v2626
      %v2771 = vsel %vm2675, %v2723, %v2627
      %v2772 = vsel %vm2676, %v2724, %v2628
      %v2773 = vsel %vm2677, %v2725, %v2629
      %v2774 = vsel %vm2678, %v2726, %v2630
      %v2775 = vsel %vm2679, %v2727, %v2631
      %v2776 = vsel %vm2680, %v2728, %v2632
      %v2777 = vsel %vm2681, %v2729, %v2633
      %v2778 = vsel %vm2682, %v2730, %v2634
      %v2779 = vsel %vm2683, %v2731, %v2635
      %v2780 = vsel %vm2684, %v2732, %v2636
      %v2781 = vsel %vm2685, %v2733, %v2637
      %v2782 = vsel %vm2686, %v2734, %v2638
      %v2783 = vsel %vm2687, %v2735, %v2639
      %v2784 = vsel %vm2688, %v2736, %v2640
      %v2785 = vsel %vm2689, %v2737, %v2641
      %v2786 = vsel %vm2690, %v2738, %v2642
      %v2787 = vsel %vm2691, %v2739, %v2643
      %v2788 = vsel %vm2692, %v2740, %v2644
      %v2789 = vsel %vm2693, %v2741, %v2645
      %v2790 = vsel %vm2694, %v2742, %v2646
      %v2791 = vsel %vm2695, %v2743, %v2647
      %v2792 = vsel %vm2696, %v2744, %v2648
      %v2793 = vsel %vm2697, %v2745, %v2649
      %v2794 = vsel %vm2698, %v2746, %v2650
      %v2795 = vsel %vm2699, %v2747, %v2651
      %v2796 = vsel %vm2700, %v2748, %v2652
      %v2797 = vsel %vm2701, %v2749, %v2653
      %v2798 = vsel %vm2702, %v2750, %v2654
      %v2799 = vsel %vm2703, %v2751, %v2655
      %v2800 = vsel %vm2704, %v2752, %v2656
      %v2801 = vsel %vm2705, %v2753, %v2657
      %v2802 = vsel %vm2706, %v2754, %v2658
      %v2803 = vsel %vm2707, %v2755, %v2659
      %v2804 = vsel %vm2708, %v2756, %v2660
      %v2805 = vadd.f32 %v2757, 1.0
      %v2806 = vadd.f32 %v2758, 1.0
      %v2807 = vadd.f32 %v2759, 1.0
      %v2808 = vadd.f32 %v2760, 1.0
      %v2809 = vadd.f32 %v2761, 1.0
      %v2810 = vadd.f32 %v2762, 1.0
      %v2811 = vadd.f32 %v2763, 1.0
      %v2812 = vadd.f32 %v2764, 1.0
      %v2813 = vadd.f32 %v2765, 1.0
      %v2814 = vadd.f32 %v2766, 1.0
      %v2815 = vadd.f32 %v2767, 1.0
      %v2816 = vadd.f32 %v2768, 1.0
      %v2817 = vadd.f32 %v2769, 1.0
      %v2818 = vadd.f32 %v2770, 1.0
      %v2819 = vadd.f32 %v2771, 1.0
      %v2820 = vadd.f32 %v2772, 1.0
      %v2821 = vadd.f32 %v2773, 1.0
      %v2822 = vadd.f32 %v2774, 1.0
      %v2823 = vadd.f32 %v2775, 1.0
      %v2824 = vadd.f32 %v2776, 1.0
      %v2825 = vadd.f32 %v2777, 1.0
      %v2826 = vadd.f32 %v2778, 1.0
      %v2827 = vadd.f32 %v2779, 1.0
      %v2828 = vadd.f32 %v2780, 1.0
      %v2829 = vadd.f32 %v2781, 1.0
      %v2830 = vadd.f32 %v2782, 1.0
      %v2831 = vadd.f32 %v2783, 1.0
      %v2832 = vadd.f32 %v2784, 1.0
      %v2833 = vadd.f32 %v2785, 1.0
      %v2834 = vadd.f32 %v2786, 1.0
      %v2835 = vadd.f32 %v2787, 1.0
      %v2836 = vadd.f32 %v2788, 1.0
      %v2837 = vadd.f32 %v2789, 1.0
      %v2838 = vadd.f32 %v2790, 1.0
      %v2839 = vadd.f32 %v2791, 1.0
      %v2840 = vadd.f32 %v2792, 1.0
      %v2841 = vadd.f32 %v2793, 1.0
      %v2842 = vadd.f32 %v2794, 1.0
      %v2843 = vadd.f32 %v2795, 1.0
      %v2844 = vadd.f32 %v2796, 1.0
      %v2845 = vadd.f32 %v2797, 1.0
      %v2846 = vadd.f32 %v2798, 1.0
      %v2847 = vadd.f32 %v2799, 1.0
      %v2848 = vadd.f32 %v2800, 1.0
      %v2849 = vadd.f32 %v2801, 1.0
      %v2850 = vadd.f32 %v2802, 1.0
      %v2851 = vadd.f32 %v2803, 1.0
      %v2852 = vadd.f32 %v2804, 1.0
      %v2853 = vmul.f32 %v1653, %v2805
      %v2854 = vmul.f32 %v1654, %v2806
      %v2855 = vmul.f32 %v1655, %v2807
      %v2856 = vmul.f32 %v1656, %v2808
      %v2857 = vmul.f32 %v1657, %v2809
      %v2858 = vmul.f32 %v1658, %v2810
      %v2859 = vmul.f32 %v1659, %v2811
      %v2860 = vmul.f32 %v1660, %v2812
      %v2861 = vmul.f32 %v1661, %v2813
      %v2862 = vmul.f32 %v1662, %v2814
      %v2863 = vmul.f32 %v1663, %v2815
      %v2864 = vmul.f32 %v1664, %v2816
      %v2865 = vmul.f32 %v1665, %v2817
      %v2866 = vmul.f32 %v1666, %v2818
      %v2867 = vmul.f32 %v1667, %v2819
      %v2868 = vmul.f32 %v1668, %v2820
      %v2869 = vmul.f32 %v1669, %v2821
      %v2870 = vmul.f32 %v1670, %v2822
      %v2871 = vmul.f32 %v1671, %v2823
      %v2872 = vmul.f32 %v1672, %v2824
      %v2873 = vmul.f32 %v1673, %v2825
      %v2874 = vmul.f32 %v1674, %v2826
      %v2875 = vmul.f32 %v1675, %v2827
      %v2876 = vmul.f32 %v1676, %v2828
      %v2877 = vmul.f32 %v1677, %v2829
      %v2878 = vmul.f32 %v1678, %v2830
      %v2879 = vmul.f32 %v1679, %v2831
      %v2880 = vmul.f32 %v1680, %v2832
      %v2881 = vmul.f32 %v1681, %v2833
      %v2882 = vmul.f32 %v1682, %v2834
      %v2883 = vmul.f32 %v1683, %v2835
      %v2884 = vmul.f32 %v1684, %v2836
      %v2885 = vmul.f32 %v1685, %v2837
      %v2886 = vmul.f32 %v1686, %v2838
      %v2887 = vmul.f32 %v1687, %v2839
      %v2888 = vmul.f32 %v1688, %v2840
      %v2889 = vmul.f32 %v1689, %v2841
      %v2890 = vmul.f32 %v1690, %v2842
      %v2891 = vmul.f32 %v1691, %v2843
      %v2892 = vmul.f32 %v1692, %v2844
      %v2893 = vmul.f32 %v1693, %v2845
      %v2894 = vmul.f32 %v1694, %v2846
      %v2895 = vmul.f32 %v1695, %v2847
      %v2896 = vmul.f32 %v1696, %v2848
      %v2897 = vmul.f32 %v1697, %v2849
      %v2898 = vmul.f32 %v1698, %v2850
      %v2899 = vmul.f32 %v1699, %v2851
      %v2900 = vmul.f32 %v1700, %v2852
      %2901 = vrot.lane.b32.xlu0 %v2853, 1
      %v2902 = vpop.permute.xlu0 %2901
      %2903 = vrot.lane.b32.xlu0 %v2855, 1
      %v2904 = vpop.permute.xlu0 %2903
      %2905 = vrot.lane.b32.xlu0 %v2857, 1
      %v2906 = vpop.permute.xlu0 %2905
      %2907 = vrot.lane.b32.xlu0 %v2859, 1
      %v2908 = vpop.permute.xlu0 %2907
      %2909 = vrot.lane.b32.xlu0 %v2861, 1
      %v2910 = vpop.permute.xlu0 %2909
      %2911 = vrot.lane.b32.xlu0 %v2863, 1
      %v2912 = vpop.permute.xlu0 %2911
      %2913 = vrot.lane.b32.xlu0 %v2865, 1
      %v2914 = vpop.permute.xlu0 %2913
      %2915 = vrot.lane.b32.xlu0 %v2867, 1
      %v2916 = vpop.permute.xlu0 %2915
      %2917 = vrot.lane.b32.xlu0 %v2869, 1
      %v2918 = vpop.permute.xlu0 %2917
      %2919 = vrot.lane.b32.xlu0 %v2871, 1
      %v2920 = vpop.permute.xlu0 %2919
      %2921 = vrot.lane.b32.xlu0 %v2873, 1
      %v2922 = vpop.permute.xlu0 %2921
      %2923 = vrot.lane.b32.xlu0 %v2875, 1
      %v2924 = vpop.permute.xlu0 %2923
      %2925 = vrot.lane.b32.xlu0 %v2877, 1
      %v2926 = vpop.permute.xlu0 %2925
      %2927 = vrot.lane.b32.xlu0 %v2879, 1
      %v2928 = vpop.permute.xlu0 %2927
      %2929 = vrot.lane.b32.xlu0 %v2881, 1
      %v2930 = vpop.permute.xlu0 %2929
      %2931 = vrot.lane.b32.xlu0 %v2883, 1
      %v2932 = vpop.permute.xlu0 %2931
      %2933 = vrot.lane.b32.xlu0 %v2885, 1
      %v2934 = vpop.permute.xlu0 %2933
      %2935 = vrot.lane.b32.xlu0 %v2887, 1
      %v2936 = vpop.permute.xlu0 %2935
      %2937 = vrot.lane.b32.xlu0 %v2889, 1
      %v2938 = vpop.permute.xlu0 %2937
      %2939 = vrot.lane.b32.xlu0 %v2891, 1
      %v2940 = vpop.permute.xlu0 %2939
      %2941 = vrot.lane.b32.xlu0 %v2893, 1
      %v2942 = vpop.permute.xlu0 %2941
      %2943 = vrot.lane.b32.xlu0 %v2895, 1
      %v2944 = vpop.permute.xlu0 %2943
      %2945 = vrot.lane.b32.xlu0 %v2897, 1
      %v2946 = vpop.permute.xlu0 %2945
      %2947 = vrot.lane.b32.xlu0 %v2899, 1
      %v2948 = vpop.permute.xlu0 %2947
      %2949 = vrot.lane.b32.xlu0 %v2854, 1
      %v2950 = vpop.permute.xlu0 %2949
      %2951 = vrot.lane.b32.xlu0 %v2856, 1
      %v2952 = vpop.permute.xlu0 %2951
      %2953 = vrot.lane.b32.xlu0 %v2858, 1
      %v2954 = vpop.permute.xlu0 %2953
      %2955 = vrot.lane.b32.xlu0 %v2860, 1
      %v2956 = vpop.permute.xlu0 %2955
      %2957 = vrot.lane.b32.xlu0 %v2862, 1
      %v2958 = vpop.permute.xlu0 %2957
      %2959 = vrot.lane.b32.xlu0 %v2864, 1
      %v2960 = vpop.permute.xlu0 %2959
      %2961 = vrot.lane.b32.xlu0 %v2866, 1
      %v2962 = vpop.permute.xlu0 %2961
      %2963 = vrot.lane.b32.xlu0 %v2868, 1
      %v2964 = vpop.permute.xlu0 %2963
      %2965 = vrot.lane.b32.xlu0 %v2870, 1
      %v2966 = vpop.permute.xlu0 %2965
      %2967 = vrot.lane.b32.xlu0 %v2872, 1
      %v2968 = vpop.permute.xlu0 %2967
      %2969 = vrot.lane.b32.xlu0 %v2874, 1
      %v2970 = vpop.permute.xlu0 %2969
      %2971 = vrot.lane.b32.xlu0 %v2876, 1
      %v2972 = vpop.permute.xlu0 %2971
      %2973 = vrot.lane.b32.xlu0 %v2878, 1
      %v2974 = vpop.permute.xlu0 %2973
      %2975 = vrot.lane.b32.xlu0 %v2880, 1
      %v2976 = vpop.permute.xlu0 %2975
      %2977 = vrot.lane.b32.xlu0 %v2882, 1
      %v2978 = vpop.permute.xlu0 %2977
      %2979 = vrot.lane.b32.xlu0 %v2884, 1
      %v2980 = vpop.permute.xlu0 %2979
      %2981 = vrot.lane.b32.xlu0 %v2886, 1
      %v2982 = vpop.permute.xlu0 %2981
      %2983 = vrot.lane.b32.xlu0 %v2888, 1
      %v2984 = vpop.permute.xlu0 %2983
      %2985 = vrot.lane.b32.xlu0 %v2890, 1
      %v2986 = vpop.permute.xlu0 %2985
      %2987 = vrot.lane.b32.xlu0 %v2892, 1
      %v2988 = vpop.permute.xlu0 %2987
      %2989 = vrot.lane.b32.xlu0 %v2894, 1
      %v2990 = vpop.permute.xlu0 %2989
      %2991 = vrot.lane.b32.xlu0 %v2896, 1
      %v2992 = vpop.permute.xlu0 %2991
      %2993 = vrot.lane.b32.xlu0 %v2898, 1
      %v2994 = vpop.permute.xlu0 %2993
      %2995 = vrot.lane.b32.xlu0 %v2900, 1
      %v2996 = vpop.permute.xlu0 %2995
      %v2997 = vlaneseq
      %v2998 = vand.u32 %v2997, 127
      %vm2999 = vcmp.lt.s32.totalorder %v2998, 1
      %v3000 = vsel %vm2999, %v2902, %v2950
      %v3001 = vsel %vm2999, %v2904, %v2952
      %v3002 = vsel %vm2999, %v2906, %v2954
      %v3003 = vsel %vm2999, %v2908, %v2956
      %v3004 = vsel %vm2999, %v2910, %v2958
      %v3005 = vsel %vm2999, %v2912, %v2960
      %v3006 = vsel %vm2999, %v2914, %v2962
      %v3007 = vsel %vm2999, %v2916, %v2964
      %v3008 = vsel %vm2999, %v2918, %v2966
      %v3009 = vsel %vm2999, %v2920, %v2968
      %v3010 = vsel %vm2999, %v2922, %v2970
      %v3011 = vsel %vm2999, %v2924, %v2972
      %v3012 = vsel %vm2999, %v2926, %v2974
      %v3013 = vsel %vm2999, %v2928, %v2976
      %v3014 = vsel %vm2999, %v2930, %v2978
      %v3015 = vsel %vm2999, %v2932, %v2980
      %v3016 = vsel %vm2999, %v2934, %v2982
      %v3017 = vsel %vm2999, %v2936, %v2984
      %v3018 = vsel %vm2999, %v2938, %v2986
      %v3019 = vsel %vm2999, %v2940, %v2988
      %v3020 = vsel %vm2999, %v2942, %v2990
      %v3021 = vsel %vm2999, %v2944, %v2992
      %v3022 = vsel %vm2999, %v2946, %v2994
      %v3023 = vsel %vm2999, %v2948, %v2996
      %v3024 = vsel %vm2999, %v2950, %v2902
      %v3025 = vsel %vm2999, %v2952, %v2904
      %v3026 = vsel %vm2999, %v2954, %v2906
      %v3027 = vsel %vm2999, %v2956, %v2908
      %v3028 = vsel %vm2999, %v2958, %v2910
      %v3029 = vsel %vm2999, %v2960, %v2912
      %v3030 = vsel %vm2999, %v2962, %v2914
      %v3031 = vsel %vm2999, %v2964, %v2916
      %v3032 = vsel %vm2999, %v2966, %v2918
      %v3033 = vsel %vm2999, %v2968, %v2920
      %v3034 = vsel %vm2999, %v2970, %v2922
      %v3035 = vsel %vm2999, %v2972, %v2924
      %v3036 = vsel %vm2999, %v2974, %v2926
      %v3037 = vsel %vm2999, %v2976, %v2928
      %v3038 = vsel %vm2999, %v2978, %v2930
      %v3039 = vsel %vm2999, %v2980, %v2932
      %v3040 = vsel %vm2999, %v2982, %v2934
      %v3041 = vsel %vm2999, %v2984, %v2936
      %v3042 = vsel %vm2999, %v2986, %v2938
      %v3043 = vsel %vm2999, %v2988, %v2940
      %v3044 = vsel %vm2999, %v2990, %v2942
      %v3045 = vsel %vm2999, %v2992, %v2944
      %v3046 = vsel %vm2999, %v2994, %v2946
      %v3047 = vsel %vm2999, %v2996, %v2948
      %v3048 = vld [vmem:[%s1] ss:$2 sm:$0x3]
      %v3050 = vlaneseq
      %v3051 = vshrl.u32 %v3050, 7
      %v3052 = vsub.s32 0, %v3051
      %v3053 = vrot.slane %v3048, %v3052
      %v3054 = vlaneseq
      %v3055 = vshrl.u32 %v3054, 7
      %v3056 = vsub.s32 1, %v3055
      %v3057 = vrot.slane %v3048, %v3056
      %v3060 = vmul.f32 %v3024, %v3053
      %v3061 = vmul.f32 %v3000, %v3057
      %v3062 = vmul.f32 %v3025, %v3053
      %v3063 = vmul.f32 %v3001, %v3057
      %v3064 = vmul.f32 %v3026, %v3053
      %v3065 = vmul.f32 %v3002, %v3057
      %v3066 = vmul.f32 %v3027, %v3053
      %v3067 = vmul.f32 %v3003, %v3057
      %v3068 = vmul.f32 %v3028, %v3053
      %v3069 = vmul.f32 %v3004, %v3057
      %v3070 = vmul.f32 %v3029, %v3053
      %v3071 = vmul.f32 %v3005, %v3057
      %v3072 = vmul.f32 %v3030, %v3053
      %v3073 = vmul.f32 %v3006, %v3057
      %v3074 = vmul.f32 %v3031, %v3053
      %v3075 = vmul.f32 %v3007, %v3057
      %v3076 = vmul.f32 %v3032, %v3053
      %v3077 = vmul.f32 %v3008, %v3057
      %v3078 = vmul.f32 %v3033, %v3053
      %v3079 = vmul.f32 %v3009, %v3057
      %v3080 = vmul.f32 %v3034, %v3053
      %v3081 = vmul.f32 %v3010, %v3057
      %v3082 = vmul.f32 %v3035, %v3053
      %v3083 = vmul.f32 %v3011, %v3057
      %v3084 = vmul.f32 %v3036, %v3053
      %v3085 = vmul.f32 %v3012, %v3057
      %v3086 = vmul.f32 %v3037, %v3053
      %v3087 = vmul.f32 %v3013, %v3057
      %v3088 = vmul.f32 %v3038, %v3053
      %v3089 = vmul.f32 %v3014, %v3057
      %v3090 = vmul.f32 %v3039, %v3053
      %v3091 = vmul.f32 %v3015, %v3057
      %v3092 = vmul.f32 %v3040, %v3053
      %v3093 = vmul.f32 %v3016, %v3057
      %v3094 = vmul.f32 %v3041, %v3053
      %v3095 = vmul.f32 %v3017, %v3057
      %v3096 = vmul.f32 %v3042, %v3053
      %v3097 = vmul.f32 %v3018, %v3057
      %v3098 = vmul.f32 %v3043, %v3053
      %v3099 = vmul.f32 %v3019, %v3057
      %v3100 = vmul.f32 %v3044, %v3053
      %v3101 = vmul.f32 %v3020, %v3057
      %v3102 = vmul.f32 %v3045, %v3053
      %v3103 = vmul.f32 %v3021, %v3057
      %v3104 = vmul.f32 %v3046, %v3053
      %v3105 = vmul.f32 %v3022, %v3057
      %v3106 = vmul.f32 %v3047, %v3053
      %v3107 = vmul.f32 %v3023, %v3057
      %3108 = vrot.lane.b32.xlu0 %v2853, 127
      %v3109 = vpop.permute.xlu0 %3108
      %3110 = vrot.lane.b32.xlu0 %v2855, 127
      %v3111 = vpop.permute.xlu0 %3110
      %3112 = vrot.lane.b32.xlu0 %v2857, 127
      %v3113 = vpop.permute.xlu0 %3112
      %3114 = vrot.lane.b32.xlu0 %v2859, 127
      %v3115 = vpop.permute.xlu0 %3114
      %3116 = vrot.lane.b32.xlu0 %v2861, 127
      %v3117 = vpop.permute.xlu0 %3116
      %3118 = vrot.lane.b32.xlu0 %v2863, 127
      %v3119 = vpop.permute.xlu0 %3118
      %3120 = vrot.lane.b32.xlu0 %v2865, 127
      %v3121 = vpop.permute.xlu0 %3120
      %3122 = vrot.lane.b32.xlu0 %v2867, 127
      %v3123 = vpop.permute.xlu0 %3122
      %3124 = vrot.lane.b32.xlu0 %v2869, 127
      %v3125 = vpop.permute.xlu0 %3124
      %3126 = vrot.lane.b32.xlu0 %v2871, 127
      %v3127 = vpop.permute.xlu0 %3126
      %3128 = vrot.lane.b32.xlu0 %v2873, 127
      %v3129 = vpop.permute.xlu0 %3128
      %3130 = vrot.lane.b32.xlu0 %v2875, 127
      %v3131 = vpop.permute.xlu0 %3130
      %3132 = vrot.lane.b32.xlu0 %v2877, 127
      %v3133 = vpop.permute.xlu0 %3132
      %3134 = vrot.lane.b32.xlu0 %v2879, 127
      %v3135 = vpop.permute.xlu0 %3134
      %3136 = vrot.lane.b32.xlu0 %v2881, 127
      %v3137 = vpop.permute.xlu0 %3136
      %3138 = vrot.lane.b32.xlu0 %v2883, 127
      %v3139 = vpop.permute.xlu0 %3138
      %3140 = vrot.lane.b32.xlu0 %v2885, 127
      %v3141 = vpop.permute.xlu0 %3140
      %3142 = vrot.lane.b32.xlu0 %v2887, 127
      %v3143 = vpop.permute.xlu0 %3142
      %3144 = vrot.lane.b32.xlu0 %v2889, 127
      %v3145 = vpop.permute.xlu0 %3144
      %3146 = vrot.lane.b32.xlu0 %v2891, 127
      %v3147 = vpop.permute.xlu0 %3146
      %3148 = vrot.lane.b32.xlu0 %v2893, 127
      %v3149 = vpop.permute.xlu0 %3148
      %3150 = vrot.lane.b32.xlu0 %v2895, 127
      %v3151 = vpop.permute.xlu0 %3150
      %3152 = vrot.lane.b32.xlu0 %v2897, 127
      %v3153 = vpop.permute.xlu0 %3152
      %3154 = vrot.lane.b32.xlu0 %v2899, 127
      %v3155 = vpop.permute.xlu0 %3154
      %3156 = vrot.lane.b32.xlu0 %v2854, 127
      %v3157 = vpop.permute.xlu0 %3156
      %3158 = vrot.lane.b32.xlu0 %v2856, 127
      %v3159 = vpop.permute.xlu0 %3158
      %3160 = vrot.lane.b32.xlu0 %v2858, 127
      %v3161 = vpop.permute.xlu0 %3160
      %3162 = vrot.lane.b32.xlu0 %v2860, 127
      %v3163 = vpop.permute.xlu0 %3162
      %3164 = vrot.lane.b32.xlu0 %v2862, 127
      %v3165 = vpop.permute.xlu0 %3164
      %3166 = vrot.lane.b32.xlu0 %v2864, 127
      %v3167 = vpop.permute.xlu0 %3166
      %3168 = vrot.lane.b32.xlu0 %v2866, 127
      %v3169 = vpop.permute.xlu0 %3168
      %3170 = vrot.lane.b32.xlu0 %v2868, 127
      %v3171 = vpop.permute.xlu0 %3170
      %3172 = vrot.lane.b32.xlu0 %v2870, 127
      %v3173 = vpop.permute.xlu0 %3172
      %3174 = vrot.lane.b32.xlu0 %v2872, 127
      %v3175 = vpop.permute.xlu0 %3174
      %3176 = vrot.lane.b32.xlu0 %v2874, 127
      %v3177 = vpop.permute.xlu0 %3176
      %3178 = vrot.lane.b32.xlu0 %v2876, 127
      %v3179 = vpop.permute.xlu0 %3178
      %3180 = vrot.lane.b32.xlu0 %v2878, 127
      %v3181 = vpop.permute.xlu0 %3180
      %3182 = vrot.lane.b32.xlu0 %v2880, 127
      %v3183 = vpop.permute.xlu0 %3182
      %3184 = vrot.lane.b32.xlu0 %v2882, 127
      %v3185 = vpop.permute.xlu0 %3184
      %3186 = vrot.lane.b32.xlu0 %v2884, 127
      %v3187 = vpop.permute.xlu0 %3186
      %3188 = vrot.lane.b32.xlu0 %v2886, 127
      %v3189 = vpop.permute.xlu0 %3188
      %3190 = vrot.lane.b32.xlu0 %v2888, 127
      %v3191 = vpop.permute.xlu0 %3190
      %3192 = vrot.lane.b32.xlu0 %v2890, 127
      %v3193 = vpop.permute.xlu0 %3192
      %3194 = vrot.lane.b32.xlu0 %v2892, 127
      %v3195 = vpop.permute.xlu0 %3194
      %3196 = vrot.lane.b32.xlu0 %v2894, 127
      %v3197 = vpop.permute.xlu0 %3196
      %3198 = vrot.lane.b32.xlu0 %v2896, 127
      %v3199 = vpop.permute.xlu0 %3198
      %3200 = vrot.lane.b32.xlu0 %v2898, 127
      %v3201 = vpop.permute.xlu0 %3200
      %3202 = vrot.lane.b32.xlu0 %v2900, 127
      %v3203 = vpop.permute.xlu0 %3202
      %vm3204 = vcmp.lt.s32.totalorder %v2998, 127
      %v3205 = vsel %vm3204, %v3109, %v3157
      %v3206 = vsel %vm3204, %v3111, %v3159
      %v3207 = vsel %vm3204, %v3113, %v3161
      %v3208 = vsel %vm3204, %v3115, %v3163
      %v3209 = vsel %vm3204, %v3117, %v3165
      %v3210 = vsel %vm3204, %v3119, %v3167
      %v3211 = vsel %vm3204, %v3121, %v3169
      %v3212 = vsel %vm3204, %v3123, %v3171
      %v3213 = vsel %vm3204, %v3125, %v3173
      %v3214 = vsel %vm3204, %v3127, %v3175
      %v3215 = vsel %vm3204, %v3129, %v3177
      %v3216 = vsel %vm3204, %v3131, %v3179
      %v3217 = vsel %vm3204, %v3133, %v3181
      %v3218 = vsel %vm3204, %v3135, %v3183
      %v3219 = vsel %vm3204, %v3137, %v3185
      %v3220 = vsel %vm3204, %v3139, %v3187
      %v3221 = vsel %vm3204, %v3141, %v3189
      %v3222 = vsel %vm3204, %v3143, %v3191
      %v3223 = vsel %vm3204, %v3145, %v3193
      %v3224 = vsel %vm3204, %v3147, %v3195
      %v3225 = vsel %vm3204, %v3149, %v3197
      %v3226 = vsel %vm3204, %v3151, %v3199
      %v3227 = vsel %vm3204, %v3153, %v3201
      %v3228 = vsel %vm3204, %v3155, %v3203
      %v3229 = vsel %vm3204, %v3157, %v3109
      %v3230 = vsel %vm3204, %v3159, %v3111
      %v3231 = vsel %vm3204, %v3161, %v3113
      %v3232 = vsel %vm3204, %v3163, %v3115
      %v3233 = vsel %vm3204, %v3165, %v3117
      %v3234 = vsel %vm3204, %v3167, %v3119
      %v3235 = vsel %vm3204, %v3169, %v3121
      %v3236 = vsel %vm3204, %v3171, %v3123
      %v3237 = vsel %vm3204, %v3173, %v3125
      %v3238 = vsel %vm3204, %v3175, %v3127
      %v3239 = vsel %vm3204, %v3177, %v3129
      %v3240 = vsel %vm3204, %v3179, %v3131
      %v3241 = vsel %vm3204, %v3181, %v3133
      %v3242 = vsel %vm3204, %v3183, %v3135
      %v3243 = vsel %vm3204, %v3185, %v3137
      %v3244 = vsel %vm3204, %v3187, %v3139
      %v3245 = vsel %vm3204, %v3189, %v3141
      %v3246 = vsel %vm3204, %v3191, %v3143
      %v3247 = vsel %vm3204, %v3193, %v3145
      %v3248 = vsel %vm3204, %v3195, %v3147
      %v3249 = vsel %vm3204, %v3197, %v3149
      %v3250 = vsel %vm3204, %v3199, %v3151
      %v3251 = vsel %vm3204, %v3201, %v3153
      %v3252 = vsel %vm3204, %v3203, %v3155
      %s3253 = scalar_lea.vmem %s1, 1
      %v3254 = vld [vmem:[%s3253] ss:$2 sm:$0x3]
      %v3256 = vlaneseq
      %v3257 = vshrl.u32 %v3256, 7
      %v3258 = vsub.s32 0, %v3257
      %v3259 = vrot.slane %v3254, %v3258
      %v3260 = vlaneseq
      %v3261 = vshrl.u32 %v3260, 7
      %v3262 = vsub.s32 1, %v3261
      %v3263 = vrot.slane %v3254, %v3262
      %v3266 = vmul.f32 %v3205, %v3259
      %v3267 = vmul.f32 %v3229, %v3263
      %v3268 = vmul.f32 %v3206, %v3259
      %v3269 = vmul.f32 %v3230, %v3263
      %v3270 = vmul.f32 %v3207, %v3259
      %v3271 = vmul.f32 %v3231, %v3263
      %v3272 = vmul.f32 %v3208, %v3259
      %v3273 = vmul.f32 %v3232, %v3263
      %v3274 = vmul.f32 %v3209, %v3259
      %v3275 = vmul.f32 %v3233, %v3263
      %v3276 = vmul.f32 %v3210, %v3259
      %v3277 = vmul.f32 %v3234, %v3263
      %v3278 = vmul.f32 %v3211, %v3259
      %v3279 = vmul.f32 %v3235, %v3263
      %v3280 = vmul.f32 %v3212, %v3259
      %v3281 = vmul.f32 %v3236, %v3263
      %v3282 = vmul.f32 %v3213, %v3259
      %v3283 = vmul.f32 %v3237, %v3263
      %v3284 = vmul.f32 %v3214, %v3259
      %v3285 = vmul.f32 %v3238, %v3263
      %v3286 = vmul.f32 %v3215, %v3259
      %v3287 = vmul.f32 %v3239, %v3263
      %v3288 = vmul.f32 %v3216, %v3259
      %v3289 = vmul.f32 %v3240, %v3263
      %v3290 = vmul.f32 %v3217, %v3259
      %v3291 = vmul.f32 %v3241, %v3263
      %v3292 = vmul.f32 %v3218, %v3259
      %v3293 = vmul.f32 %v3242, %v3263
      %v3294 = vmul.f32 %v3219, %v3259
      %v3295 = vmul.f32 %v3243, %v3263
      %v3296 = vmul.f32 %v3220, %v3259
      %v3297 = vmul.f32 %v3244, %v3263
      %v3298 = vmul.f32 %v3221, %v3259
      %v3299 = vmul.f32 %v3245, %v3263
      %v3300 = vmul.f32 %v3222, %v3259
      %v3301 = vmul.f32 %v3246, %v3263
      %v3302 = vmul.f32 %v3223, %v3259
      %v3303 = vmul.f32 %v3247, %v3263
      %v3304 = vmul.f32 %v3224, %v3259
      %v3305 = vmul.f32 %v3248, %v3263
      %v3306 = vmul.f32 %v3225, %v3259
      %v3307 = vmul.f32 %v3249, %v3263
      %v3308 = vmul.f32 %v3226, %v3259
      %v3309 = vmul.f32 %v3250, %v3263
      %v3310 = vmul.f32 %v3227, %v3259
      %v3311 = vmul.f32 %v3251, %v3263
      %v3312 = vmul.f32 %v3228, %v3259
      %v3313 = vmul.f32 %v3252, %v3263
      %s3314 = scalar_lea.vmem %s6, 960
      %v3315 = vld [vmem:[%s3314] sm:$0xff]
      %v3316 = vld [vmem:[%s3314 + $0x8] sm:$0xff]
      %v3317 = vld [vmem:[%s3314 + $0x10] sm:$0xff]
      %v3318 = vld [vmem:[%s3314 + $0x18] sm:$0xff]
      %v3319 = vld [vmem:[%s3314 + $0x20] sm:$0xff]
      %v3320 = vld [vmem:[%s3314 + $0x28] sm:$0xff]
      %v3321 = vld [vmem:[%s3314 + $0x30] sm:$0xff]
      %v3322 = vld [vmem:[%s3314 + $0x38] sm:$0xff]
      %v3323 = vld [vmem:[%s3314 + $0x40] sm:$0xff]
      %v3324 = vld [vmem:[%s3314 + $0x48] sm:$0xff]
      %v3325 = vld [vmem:[%s3314 + $0x50] sm:$0xff]
      %v3326 = vld [vmem:[%s3314 + $0x58] sm:$0xff]
      %v3327 = vld [vmem:[%s3314 + $0x60] sm:$0xff]
      %v3328 = vld [vmem:[%s3314 + $0x68] sm:$0xff]
      %v3329 = vld [vmem:[%s3314 + $0x70] sm:$0xff]
      %v3330 = vld [vmem:[%s3314 + $0x78] sm:$0xff]
      %v3331 = vld [vmem:[%s3314 + $0x80] sm:$0xff]
      %v3332 = vld [vmem:[%s3314 + $0x88] sm:$0xff]
      %v3333 = vld [vmem:[%s3314 + $0x90] sm:$0xff]
      %v3334 = vld [vmem:[%s3314 + $0x98] sm:$0xff]
      %v3335 = vld [vmem:[%s3314 + $0xa0] sm:$0xff]
      %v3336 = vld [vmem:[%s3314 + $0xa8] sm:$0xff]
      %v3337 = vld [vmem:[%s3314 + $0xb0] sm:$0xff]
      %v3338 = vld [vmem:[%s3314 + $0xb8] sm:$0xff]
      %v3339 = vld [vmem:[%s3314 + $0xc0] sm:$0xff]
      %v3340 = vld [vmem:[%s3314 + $0xc8] sm:$0xff]
      %v3341 = vld [vmem:[%s3314 + $0xd0] sm:$0xff]
      %v3342 = vld [vmem:[%s3314 + $0xd8] sm:$0xff]
      %v3343 = vld [vmem:[%s3314 + $0xe0] sm:$0xff]
      %v3344 = vld [vmem:[%s3314 + $0xe8] sm:$0xff]
      %v3345 = vld [vmem:[%s3314 + $0xf0] sm:$0xff]
      %v3346 = vld [vmem:[%s3314 + $0xf8] sm:$0xff]
      %v3347 = vld [vmem:[%s3314 + $0x100] sm:$0xff]
      %v3348 = vld [vmem:[%s3314 + $0x108] sm:$0xff]
      %v3349 = vld [vmem:[%s3314 + $0x110] sm:$0xff]
      %v3350 = vld [vmem:[%s3314 + $0x118] sm:$0xff]
      %v3351 = vld [vmem:[%s3314 + $0x120] sm:$0xff]
      %v3352 = vld [vmem:[%s3314 + $0x128] sm:$0xff]
      %v3353 = vld [vmem:[%s3314 + $0x130] sm:$0xff]
      %v3354 = vld [vmem:[%s3314 + $0x138] sm:$0xff]
      %v3355 = vld [vmem:[%s3314 + $0x140] sm:$0xff]
      %v3356 = vld [vmem:[%s3314 + $0x148] sm:$0xff]
      %v3357 = vld [vmem:[%s3314 + $0x150] sm:$0xff]
      %v3358 = vld [vmem:[%s3314 + $0x158] sm:$0xff]
      %v3359 = vld [vmem:[%s3314 + $0x160] sm:$0xff]
      %v3360 = vld [vmem:[%s3314 + $0x168] sm:$0xff]
      %v3361 = vld [vmem:[%s3314 + $0x170] sm:$0xff]
      %v3362 = vld [vmem:[%s3314 + $0x178] sm:$0xff]
      %v3363 = vld [vmem:[%s3314 + $0x180] sm:$0xff]
      %v3364 = vld [vmem:[%s3314 + $0x188] sm:$0xff]
      %v3365 = vld [vmem:[%s3314 + $0x190] sm:$0xff]
      %v3366 = vld [vmem:[%s3314 + $0x198] sm:$0xff]
      %v3367 = vld [vmem:[%s3314 + $0x1a0] sm:$0xff]
      %v3368 = vld [vmem:[%s3314 + $0x1a8] sm:$0xff]
      %v3369 = vld [vmem:[%s3314 + $0x1b0] sm:$0xff]
      %v3370 = vld [vmem:[%s3314 + $0x1b8] sm:$0xff]
      %v3371 = vld [vmem:[%s3314 + $0x1c0] sm:$0xff]
      %v3372 = vld [vmem:[%s3314 + $0x1c8] sm:$0xff]
      %v3373 = vld [vmem:[%s3314 + $0x1d0] sm:$0xff]
      %v3374 = vld [vmem:[%s3314 + $0x1d8] sm:$0xff]
      %v3375 = vld [vmem:[%s3314 + $0x1e0] sm:$0xff]
      %v3376 = vld [vmem:[%s3314 + $0x1e8] sm:$0xff]
      %v3377 = vld [vmem:[%s3314 + $0x1f0] sm:$0xff]
      %v3378 = vld [vmem:[%s3314 + $0x1f8] sm:$0xff]
      %v3379 = vld [vmem:[%s3314 + $0x200] sm:$0xff]
      %v3380 = vld [vmem:[%s3314 + $0x208] sm:$0xff]
      %v3381 = vld [vmem:[%s3314 + $0x210] sm:$0xff]
      %v3382 = vld [vmem:[%s3314 + $0x218] sm:$0xff]
      %v3383 = vld [vmem:[%s3314 + $0x220] sm:$0xff]
      %v3384 = vld [vmem:[%s3314 + $0x228] sm:$0xff]
      %v3385 = vld [vmem:[%s3314 + $0x230] sm:$0xff]
      %v3386 = vld [vmem:[%s3314 + $0x238] sm:$0xff]
      %v3387 = vld [vmem:[%s3314 + $0x240] sm:$0xff]
      %v3388 = vld [vmem:[%s3314 + $0x248] sm:$0xff]
      %v3389 = vld [vmem:[%s3314 + $0x250] sm:$0xff]
      %v3390 = vld [vmem:[%s3314 + $0x258] sm:$0xff]
      %v3391 = vld [vmem:[%s3314 + $0x260] sm:$0xff]
      %v3392 = vld [vmem:[%s3314 + $0x268] sm:$0xff]
      %v3393 = vld [vmem:[%s3314 + $0x270] sm:$0xff]
      %v3394 = vld [vmem:[%s3314 + $0x278] sm:$0xff]
      %v3395 = vld [vmem:[%s3314 + $0x280] sm:$0xff]
      %v3396 = vld [vmem:[%s3314 + $0x288] sm:$0xff]
      %v3397 = vld [vmem:[%s3314 + $0x290] sm:$0xff]
      %v3398 = vld [vmem:[%s3314 + $0x298] sm:$0xff]
      %v3399 = vld [vmem:[%s3314 + $0x2a0] sm:$0xff]
      %v3400 = vld [vmem:[%s3314 + $0x2a8] sm:$0xff]
      %v3401 = vld [vmem:[%s3314 + $0x2b0] sm:$0xff]
      %v3402 = vld [vmem:[%s3314 + $0x2b8] sm:$0xff]
      %v3403 = vld [vmem:[%s3314 + $0x2c0] sm:$0xff]
      %v3404 = vld [vmem:[%s3314 + $0x2c8] sm:$0xff]
      %v3405 = vld [vmem:[%s3314 + $0x2d0] sm:$0xff]
      %v3406 = vld [vmem:[%s3314 + $0x2d8] sm:$0xff]
      %v3407 = vld [vmem:[%s3314 + $0x2e0] sm:$0xff]
      %v3408 = vld [vmem:[%s3314 + $0x2e8] sm:$0xff]
      %v3409 = vld [vmem:[%s3314 + $0x2f0] sm:$0xff]
      %v3410 = vld [vmem:[%s3314 + $0x2f8] sm:$0xff]
      %v3411 = vld [vmem:[%s3314 + $0x300] sm:$0xff]
      %v3412 = vld [vmem:[%s3314 + $0x308] sm:$0xff]
      %v3413 = vld [vmem:[%s3314 + $0x310] sm:$0xff]
      %v3414 = vld [vmem:[%s3314 + $0x318] sm:$0xff]
      %v3415 = vld [vmem:[%s3314 + $0x320] sm:$0xff]
      %v3416 = vld [vmem:[%s3314 + $0x328] sm:$0xff]
      %v3417 = vld [vmem:[%s3314 + $0x330] sm:$0xff]
      %v3418 = vld [vmem:[%s3314 + $0x338] sm:$0xff]
      %v3419 = vld [vmem:[%s3314 + $0x340] sm:$0xff]
      %v3420 = vld [vmem:[%s3314 + $0x348] sm:$0xff]
      %v3421 = vld [vmem:[%s3314 + $0x350] sm:$0xff]
      %v3422 = vld [vmem:[%s3314 + $0x358] sm:$0xff]
      %v3423 = vld [vmem:[%s3314 + $0x360] sm:$0xff]
      %v3424 = vld [vmem:[%s3314 + $0x368] sm:$0xff]
      %v3425 = vld [vmem:[%s3314 + $0x370] sm:$0xff]
      %v3426 = vld [vmem:[%s3314 + $0x378] sm:$0xff]
      %v3427 = vld [vmem:[%s3314 + $0x380] sm:$0xff]
      %v3428 = vld [vmem:[%s3314 + $0x388] sm:$0xff]
      %v3429 = vld [vmem:[%s3314 + $0x390] sm:$0xff]
      %v3430 = vld [vmem:[%s3314 + $0x398] sm:$0xff]
      %v3431 = vld [vmem:[%s3314 + $0x3a0] sm:$0xff]
      %v3432 = vld [vmem:[%s3314 + $0x3a8] sm:$0xff]
      %v3433 = vld [vmem:[%s3314 + $0x3b0] sm:$0xff]
      %v3434 = vld [vmem:[%s3314 + $0x3b8] sm:$0xff]
      %v3435 = vld [vmem:[%s6] sm:$0xff]
      %v3436 = vld [vmem:[%s6 + $0x8] sm:$0xff]
      %v3437 = vld [vmem:[%s6 + $0x10] sm:$0xff]
      %v3438 = vld [vmem:[%s6 + $0x18] sm:$0xff]
      %v3439 = vld [vmem:[%s6 + $0x20] sm:$0xff]
      %v3440 = vld [vmem:[%s6 + $0x28] sm:$0xff]
      %v3441 = vld [vmem:[%s6 + $0x30] sm:$0xff]
      %v3442 = vld [vmem:[%s6 + $0x38] sm:$0xff]
      %v3443 = vld [vmem:[%s6 + $0x40] sm:$0xff]
      %v3444 = vld [vmem:[%s6 + $0x48] sm:$0xff]
      %v3445 = vld [vmem:[%s6 + $0x50] sm:$0xff]
      %v3446 = vld [vmem:[%s6 + $0x58] sm:$0xff]
      %v3447 = vld [vmem:[%s6 + $0x60] sm:$0xff]
      %v3448 = vld [vmem:[%s6 + $0x68] sm:$0xff]
      %v3449 = vld [vmem:[%s6 + $0x70] sm:$0xff]
      %v3450 = vld [vmem:[%s6 + $0x78] sm:$0xff]
      %v3451 = vld [vmem:[%s6 + $0x80] sm:$0xff]
      %v3452 = vld [vmem:[%s6 + $0x88] sm:$0xff]
      %v3453 = vld [vmem:[%s6 + $0x90] sm:$0xff]
      %v3454 = vld [vmem:[%s6 + $0x98] sm:$0xff]
      %v3455 = vld [vmem:[%s6 + $0xa0] sm:$0xff]
      %v3456 = vld [vmem:[%s6 + $0xa8] sm:$0xff]
      %v3457 = vld [vmem:[%s6 + $0xb0] sm:$0xff]
      %v3458 = vld [vmem:[%s6 + $0xb8] sm:$0xff]
      %v3459 = vld [vmem:[%s6 + $0xc0] sm:$0xff]
      %v3460 = vld [vmem:[%s6 + $0xc8] sm:$0xff]
      %v3461 = vld [vmem:[%s6 + $0xd0] sm:$0xff]
      %v3462 = vld [vmem:[%s6 + $0xd8] sm:$0xff]
      %v3463 = vld [vmem:[%s6 + $0xe0] sm:$0xff]
      %v3464 = vld [vmem:[%s6 + $0xe8] sm:$0xff]
      %v3465 = vld [vmem:[%s6 + $0xf0] sm:$0xff]
      %v3466 = vld [vmem:[%s6 + $0xf8] sm:$0xff]
      %v3467 = vld [vmem:[%s6 + $0x100] sm:$0xff]
      %v3468 = vld [vmem:[%s6 + $0x108] sm:$0xff]
      %v3469 = vld [vmem:[%s6 + $0x110] sm:$0xff]
      %v3470 = vld [vmem:[%s6 + $0x118] sm:$0xff]
      %v3471 = vld [vmem:[%s6 + $0x120] sm:$0xff]
      %v3472 = vld [vmem:[%s6 + $0x128] sm:$0xff]
      %v3473 = vld [vmem:[%s6 + $0x130] sm:$0xff]
      %v3474 = vld [vmem:[%s6 + $0x138] sm:$0xff]
      %v3475 = vld [vmem:[%s6 + $0x140] sm:$0xff]
      %v3476 = vld [vmem:[%s6 + $0x148] sm:$0xff]
      %v3477 = vld [vmem:[%s6 + $0x150] sm:$0xff]
      %v3478 = vld [vmem:[%s6 + $0x158] sm:$0xff]
      %v3479 = vld [vmem:[%s6 + $0x160] sm:$0xff]
      %v3480 = vld [vmem:[%s6 + $0x168] sm:$0xff]
      %v3481 = vld [vmem:[%s6 + $0x170] sm:$0xff]
      %v3482 = vld [vmem:[%s6 + $0x178] sm:$0xff]
      %v3483 = vld [vmem:[%s6 + $0x180] sm:$0xff]
      %v3484 = vld [vmem:[%s6 + $0x188] sm:$0xff]
      %v3485 = vld [vmem:[%s6 + $0x190] sm:$0xff]
      %v3486 = vld [vmem:[%s6 + $0x198] sm:$0xff]
      %v3487 = vld [vmem:[%s6 + $0x1a0] sm:$0xff]
      %v3488 = vld [vmem:[%s6 + $0x1a8] sm:$0xff]
      %v3489 = vld [vmem:[%s6 + $0x1b0] sm:$0xff]
      %v3490 = vld [vmem:[%s6 + $0x1b8] sm:$0xff]
      %v3491 = vld [vmem:[%s6 + $0x1c0] sm:$0xff]
      %v3492 = vld [vmem:[%s6 + $0x1c8] sm:$0xff]
      %v3493 = vld [vmem:[%s6 + $0x1d0] sm:$0xff]
      %v3494 = vld [vmem:[%s6 + $0x1d8] sm:$0xff]
      %v3495 = vld [vmem:[%s6 + $0x1e0] sm:$0xff]
      %v3496 = vld [vmem:[%s6 + $0x1e8] sm:$0xff]
      %v3497 = vld [vmem:[%s6 + $0x1f0] sm:$0xff]
      %v3498 = vld [vmem:[%s6 + $0x1f8] sm:$0xff]
      %v3499 = vld [vmem:[%s6 + $0x200] sm:$0xff]
      %v3500 = vld [vmem:[%s6 + $0x208] sm:$0xff]
      %v3501 = vld [vmem:[%s6 + $0x210] sm:$0xff]
      %v3502 = vld [vmem:[%s6 + $0x218] sm:$0xff]
      %v3503 = vld [vmem:[%s6 + $0x220] sm:$0xff]
      %v3504 = vld [vmem:[%s6 + $0x228] sm:$0xff]
      %v3505 = vld [vmem:[%s6 + $0x230] sm:$0xff]
      %v3506 = vld [vmem:[%s6 + $0x238] sm:$0xff]
      %v3507 = vld [vmem:[%s6 + $0x240] sm:$0xff]
      %v3508 = vld [vmem:[%s6 + $0x248] sm:$0xff]
      %v3509 = vld [vmem:[%s6 + $0x250] sm:$0xff]
      %v3510 = vld [vmem:[%s6 + $0x258] sm:$0xff]
      %v3511 = vld [vmem:[%s6 + $0x260] sm:$0xff]
      %v3512 = vld [vmem:[%s6 + $0x268] sm:$0xff]
      %v3513 = vld [vmem:[%s6 + $0x270] sm:$0xff]
      %v3514 = vld [vmem:[%s6 + $0x278] sm:$0xff]
      %v3515 = vld [vmem:[%s6 + $0x280] sm:$0xff]
      %v3516 = vld [vmem:[%s6 + $0x288] sm:$0xff]
      %v3517 = vld [vmem:[%s6 + $0x290] sm:$0xff]
      %v3518 = vld [vmem:[%s6 + $0x298] sm:$0xff]
      %v3519 = vld [vmem:[%s6 + $0x2a0] sm:$0xff]
      %v3520 = vld [vmem:[%s6 + $0x2a8] sm:$0xff]
      %v3521 = vld [vmem:[%s6 + $0x2b0] sm:$0xff]
      %v3522 = vld [vmem:[%s6 + $0x2b8] sm:$0xff]
      %v3523 = vld [vmem:[%s6 + $0x2c0] sm:$0xff]
      %v3524 = vld [vmem:[%s6 + $0x2c8] sm:$0xff]
      %v3525 = vld [vmem:[%s6 + $0x2d0] sm:$0xff]
      %v3526 = vld [vmem:[%s6 + $0x2d8] sm:$0xff]
      %v3527 = vld [vmem:[%s6 + $0x2e0] sm:$0xff]
      %v3528 = vld [vmem:[%s6 + $0x2e8] sm:$0xff]
      %v3529 = vld [vmem:[%s6 + $0x2f0] sm:$0xff]
      %v3530 = vld [vmem:[%s6 + $0x2f8] sm:$0xff]
      %v3531 = vld [vmem:[%s6 + $0x300] sm:$0xff]
      %v3532 = vld [vmem:[%s6 + $0x308] sm:$0xff]
      %v3533 = vld [vmem:[%s6 + $0x310] sm:$0xff]
      %v3534 = vld [vmem:[%s6 + $0x318] sm:$0xff]
      %v3535 = vld [vmem:[%s6 + $0x320] sm:$0xff]
      %v3536 = vld [vmem:[%s6 + $0x328] sm:$0xff]
      %v3537 = vld [vmem:[%s6 + $0x330] sm:$0xff]
      %v3538 = vld [vmem:[%s6 + $0x338] sm:$0xff]
      %v3539 = vld [vmem:[%s6 + $0x340] sm:$0xff]
      %v3540 = vld [vmem:[%s6 + $0x348] sm:$0xff]
      %v3541 = vld [vmem:[%s6 + $0x350] sm:$0xff]
      %v3542 = vld [vmem:[%s6 + $0x358] sm:$0xff]
      %v3543 = vld [vmem:[%s6 + $0x360] sm:$0xff]
      %v3544 = vld [vmem:[%s6 + $0x368] sm:$0xff]
      %v3545 = vld [vmem:[%s6 + $0x370] sm:$0xff]
      %v3546 = vld [vmem:[%s6 + $0x378] sm:$0xff]
      %v3547 = vld [vmem:[%s6 + $0x380] sm:$0xff]
      %v3548 = vld [vmem:[%s6 + $0x388] sm:$0xff]
      %v3549 = vld [vmem:[%s6 + $0x390] sm:$0xff]
      %v3550 = vld [vmem:[%s6 + $0x398] sm:$0xff]
      %v3551 = vld [vmem:[%s6 + $0x3a0] sm:$0xff]
      %v3552 = vld [vmem:[%s6 + $0x3a8] sm:$0xff]
      %v3553 = vld [vmem:[%s6 + $0x3b0] sm:$0xff]
      %v3554 = vld [vmem:[%s6 + $0x3b8] sm:$0xff]
      %vm3555 = vcmask 523264
      %v3557 = vsel %vm3555, %v3439, 0
      %v3560 = vsel %vm3555, %v3444, 0
      %v3563 = vsel %vm3555, %v3449, 0
      %v3566 = vsel %vm3555, %v3454, 0
      %v3569 = vsel %vm3555, %v3459, 0
      %v3572 = vsel %vm3555, %v3464, 0
      %v3575 = vsel %vm3555, %v3469, 0
      %v3578 = vsel %vm3555, %v3474, 0
      %v3581 = vsel %vm3555, %v3479, 0
      %v3584 = vsel %vm3555, %v3484, 0
      %v3587 = vsel %vm3555, %v3489, 0
      %v3590 = vsel %vm3555, %v3494, 0
      %v3593 = vsel %vm3555, %v3499, 0
      %v3596 = vsel %vm3555, %v3504, 0
      %v3599 = vsel %vm3555, %v3509, 0
      %v3602 = vsel %vm3555, %v3514, 0
      %v3605 = vsel %vm3555, %v3519, 0
      %v3608 = vsel %vm3555, %v3524, 0
      %v3611 = vsel %vm3555, %v3529, 0
      %v3614 = vsel %vm3555, %v3534, 0
      %v3617 = vsel %vm3555, %v3539, 0
      %v3620 = vsel %vm3555, %v3544, 0
      %v3623 = vsel %vm3555, %v3549, 0
      %v3626 = vsel %vm3555, %v3554, 0
      %3628 = vmatprep.subr.mxu0 %v3091
      %3629 = vmatpush1.msra.mxu0 %v3090
      %3630 = vmatprep.subr.mxu0 %v3089
      %3631 = vmatpush1.msra.mxu0 %v3088
      %3632 = vmatprep.subr.mxu0 %v3087
      %3633 = vmatpush1.msra.mxu0 %v3086
      %3634 = vmatprep.subr.mxu0 %v3085
      %3635 = vmatpush1.msra.mxu0 %v3084
      %3636 = vmatprep.subr.mxu0 %v3083
      %3637 = vmatpush1.msra.mxu0 %v3082
      %3638 = vmatprep.subr.mxu0 %v3081
      %3639 = vmatpush1.msra.mxu0 %v3080
      %3640 = vmatprep.subr.mxu0 %v3079
      %3641 = vmatpush1.msra.mxu0 %v3078
      %3642 = vmatprep.subr.mxu0 %v3077
      %3643 = vmatpush1.msra.mxu0 %v3076
      %3644 = vmatprep.subr.mxu0 %v3075
      %3645 = vmatpush1.msra.mxu0 %v3074
      %3646 = vmatprep.subr.mxu0 %v3073
      %3647 = vmatpush1.msra.mxu0 %v3072
      %3648 = vmatprep.subr.mxu0 %v3071
      %3649 = vmatpush1.msra.mxu0 %v3070
      %3650 = vmatprep.subr.mxu0 %v3069
      %3651 = vmatpush1.msra.mxu0 %v3068
      %3652 = vmatprep.subr.mxu0 %v3067
      %3653 = vmatpush1.msra.mxu0 %v3066
      %3654 = vmatprep.subr.mxu0 %v3065
      %3655 = vmatpush1.msra.mxu0 %v3064
      %3656 = vmatprep.subr.mxu0 %v3063
      %3657 = vmatpush1.msra.mxu0 %v3062
      %3658 = vmatprep.subr.mxu0 %v3061
      %3659 = vmatpush1.msra.mxu0 %v3060
      %3660 = vmatprep.subr.mxu0 %v2868
      %3661 = vmatpush2.msra.mxu0 %v2867
      %3662 = vmatprep.subr.mxu0 %v2866
      %3663 = vmatpush2.msra.mxu0 %v2865
      %3664 = vmatprep.subr.mxu0 %v2864
      %3665 = vmatpush2.msra.mxu0 %v2863
      %3666 = vmatprep.subr.mxu0 %v2862
      %3667 = vmatpush2.msra.mxu0 %v2861
      %3668 = vmatprep.subr.mxu0 %v2860
      %3669 = vmatpush2.msra.mxu0 %v2859
      %3670 = vmatprep.subr.mxu0 %v2858
      %3671 = vmatpush2.msra.mxu0 %v2857
      %3672 = vmatprep.subr.mxu0 %v2856
      %3673 = vmatpush2.msra.mxu0 %v2855
      %3674 = vmatprep.subr.mxu0 %v2854
      %3675 = vmatpush2.msra.mxu0 %v2853
      %3676 = vmatprep.subr.mxu0 %v3107
      %3677 = vmatpush2.msra.mxu0 %v3106
      %3678 = vmatprep.subr.mxu0 %v3105
      %3679 = vmatpush2.msra.mxu0 %v3104
      %3680 = vmatprep.subr.mxu0 %v3103
      %3681 = vmatpush2.msra.mxu0 %v3102
      %3682 = vmatprep.subr.mxu0 %v3101
      %3683 = vmatpush2.msra.mxu0 %v3100
      %3684 = vmatprep.subr.mxu0 %v3099
      %3685 = vmatpush2.msra.mxu0 %v3098
      %3686 = vmatprep.subr.mxu0 %v3097
      %3687 = vmatpush2.msra.mxu0 %v3096
      %3688 = vmatprep.subr.mxu0 %v3095
      %3689 = vmatpush2.msra.mxu0 %v3094
      %3690 = vmatprep.subr.mxu0 %v3093
      %3691 = vmatpush2.msra.mxu0 %v3092
      %3692 = vmatprep.mubr.f32.mxu0 %v3436
      %3693 = vmatmul.mubr.f32.gmra.mxu0 %v3435
      %v3694 = vpop.f32.mrf.mxu0
      %v3695 = vadd.f32 0.0, %v3694
      %v3696 = vpop.f32.mrf.mxu0
      %v3697 = vadd.f32 0.0, %v3696
      %3698 = vmatprep.mubr.f32.mxu0 %v3441
      %3699 = vmatmul.mubr.f32.gmra.mxu0 %v3440
      %v3700 = vpop.f32.mrf.mxu0
      %v3701 = vadd.f32 0.0, %v3700
      %v3702 = vpop.f32.mrf.mxu0
      %v3703 = vadd.f32 0.0, %v3702
      %3704 = vmatprep.mubr.f32.mxu0 %v3446
      %3705 = vmatmul.mubr.f32.gmra.mxu0 %v3445
      %v3706 = vpop.f32.mrf.mxu0
      %v3707 = vadd.f32 0.0, %v3706
      %v3708 = vpop.f32.mrf.mxu0
      %v3709 = vadd.f32 0.0, %v3708
      %3710 = vmatprep.mubr.f32.mxu0 %v3451
      %3711 = vmatmul.mubr.f32.gmra.mxu0 %v3450
      %v3712 = vpop.f32.mrf.mxu0
      %v3713 = vadd.f32 0.0, %v3712
      %v3714 = vpop.f32.mrf.mxu0
      %v3715 = vadd.f32 0.0, %v3714
      %3716 = vmatprep.mubr.f32.mxu0 %v3456
      %3717 = vmatmul.mubr.f32.gmra.mxu0 %v3455
      %v3718 = vpop.f32.mrf.mxu0
      %v3719 = vadd.f32 0.0, %v3718
      %v3720 = vpop.f32.mrf.mxu0
      %v3721 = vadd.f32 0.0, %v3720
      %3722 = vmatprep.mubr.f32.mxu0 %v3461
      %3723 = vmatmul.mubr.f32.gmra.mxu0 %v3460
      %v3724 = vpop.f32.mrf.mxu0
      %v3725 = vadd.f32 0.0, %v3724
      %v3726 = vpop.f32.mrf.mxu0
      %v3727 = vadd.f32 0.0, %v3726
      %3728 = vmatprep.mubr.f32.mxu0 %v3466
      %3729 = vmatmul.mubr.f32.gmra.mxu0 %v3465
      %v3730 = vpop.f32.mrf.mxu0
      %v3731 = vadd.f32 0.0, %v3730
      %v3732 = vpop.f32.mrf.mxu0
      %v3733 = vadd.f32 0.0, %v3732
      %3734 = vmatprep.mubr.f32.mxu0 %v3471
      %3735 = vmatmul.mubr.f32.gmra.mxu0 %v3470
      %v3736 = vpop.f32.mrf.mxu0
      %v3737 = vadd.f32 0.0, %v3736
      %v3738 = vpop.f32.mrf.mxu0
      %v3739 = vadd.f32 0.0, %v3738
      %3740 = vmatprep.mubr.f32.mxu0 %v3476
      %3741 = vmatmul.mubr.f32.gmra.mxu0 %v3475
      %v3742 = vpop.f32.mrf.mxu0
      %v3743 = vadd.f32 0.0, %v3742
      %v3744 = vpop.f32.mrf.mxu0
      %v3745 = vadd.f32 0.0, %v3744
      %3746 = vmatprep.mubr.f32.mxu0 %v3481
      %3747 = vmatmul.mubr.f32.gmra.mxu0 %v3480
      %v3748 = vpop.f32.mrf.mxu0
      %v3749 = vadd.f32 0.0, %v3748
      %v3750 = vpop.f32.mrf.mxu0
      %v3751 = vadd.f32 0.0, %v3750
      %3752 = vmatprep.mubr.f32.mxu0 %v3486
      %3753 = vmatmul.mubr.f32.gmra.mxu0 %v3485
      %v3754 = vpop.f32.mrf.mxu0
      %v3755 = vadd.f32 0.0, %v3754
      %v3756 = vpop.f32.mrf.mxu0
      %v3757 = vadd.f32 0.0, %v3756
      %3758 = vmatprep.mubr.f32.mxu0 %v3491
      %3759 = vmatmul.mubr.f32.gmra.mxu0 %v3490
      %v3760 = vpop.f32.mrf.mxu0
      %v3761 = vadd.f32 0.0, %v3760
      %v3762 = vpop.f32.mrf.mxu0
      %v3763 = vadd.f32 0.0, %v3762
      %3764 = vmatprep.mubr.f32.mxu0 %v3496
      %3765 = vmatmul.mubr.f32.gmra.mxu0 %v3495
      %v3766 = vpop.f32.mrf.mxu0
      %v3767 = vadd.f32 0.0, %v3766
      %v3768 = vpop.f32.mrf.mxu0
      %v3769 = vadd.f32 0.0, %v3768
      %3770 = vmatprep.mubr.f32.mxu0 %v3501
      %3771 = vmatmul.mubr.f32.gmra.mxu0 %v3500
      %v3772 = vpop.f32.mrf.mxu0
      %v3773 = vadd.f32 0.0, %v3772
      %v3774 = vpop.f32.mrf.mxu0
      %v3775 = vadd.f32 0.0, %v3774
      %3776 = vmatprep.mubr.f32.mxu0 %v3506
      %3777 = vmatmul.mubr.f32.gmra.mxu0 %v3505
      %v3778 = vpop.f32.mrf.mxu0
      %v3779 = vadd.f32 0.0, %v3778
      %v3780 = vpop.f32.mrf.mxu0
      %v3781 = vadd.f32 0.0, %v3780
      %3782 = vmatprep.mubr.f32.mxu0 %v3511
      %3783 = vmatmul.mubr.f32.gmra.mxu0 %v3510
      %v3784 = vpop.f32.mrf.mxu0
      %v3785 = vadd.f32 0.0, %v3784
      %v3786 = vpop.f32.mrf.mxu0
      %v3787 = vadd.f32 0.0, %v3786
      %3788 = vmatprep.mubr.f32.mxu0 %v3516
      %3789 = vmatmul.mubr.f32.gmra.mxu0 %v3515
      %v3790 = vpop.f32.mrf.mxu0
      %v3791 = vadd.f32 0.0, %v3790
      %v3792 = vpop.f32.mrf.mxu0
      %v3793 = vadd.f32 0.0, %v3792
      %3794 = vmatprep.mubr.f32.mxu0 %v3521
      %3795 = vmatmul.mubr.f32.gmra.mxu0 %v3520
      %v3796 = vpop.f32.mrf.mxu0
      %v3797 = vadd.f32 0.0, %v3796
      %v3798 = vpop.f32.mrf.mxu0
      %v3799 = vadd.f32 0.0, %v3798
      %3800 = vmatprep.mubr.f32.mxu0 %v3526
      %3801 = vmatmul.mubr.f32.gmra.mxu0 %v3525
      %v3802 = vpop.f32.mrf.mxu0
      %v3803 = vadd.f32 0.0, %v3802
      %v3804 = vpop.f32.mrf.mxu0
      %v3805 = vadd.f32 0.0, %v3804
      %3806 = vmatprep.mubr.f32.mxu0 %v3531
      %3807 = vmatmul.mubr.f32.gmra.mxu0 %v3530
      %v3808 = vpop.f32.mrf.mxu0
      %v3809 = vadd.f32 0.0, %v3808
      %v3810 = vpop.f32.mrf.mxu0
      %v3811 = vadd.f32 0.0, %v3810
      %3812 = vmatprep.mubr.f32.mxu0 %v3536
      %3813 = vmatmul.mubr.f32.gmra.mxu0 %v3535
      %v3814 = vpop.f32.mrf.mxu0
      %v3815 = vadd.f32 0.0, %v3814
      %v3816 = vpop.f32.mrf.mxu0
      %v3817 = vadd.f32 0.0, %v3816
      %3818 = vmatprep.mubr.f32.mxu0 %v3541
      %3819 = vmatmul.mubr.f32.gmra.mxu0 %v3540
      %v3820 = vpop.f32.mrf.mxu0
      %v3821 = vadd.f32 0.0, %v3820
      %v3822 = vpop.f32.mrf.mxu0
      %v3823 = vadd.f32 0.0, %v3822
      %3824 = vmatprep.mubr.f32.mxu0 %v3546
      %3825 = vmatmul.mubr.f32.gmra.mxu0 %v3545
      %v3826 = vpop.f32.mrf.mxu0
      %v3827 = vadd.f32 0.0, %v3826
      %v3828 = vpop.f32.mrf.mxu0
      %v3829 = vadd.f32 0.0, %v3828
      %3830 = vmatprep.mubr.f32.mxu0 %v3551
      %3831 = vmatmul.mubr.f32.gmra.mxu0 %v3550
      %v3832 = vpop.f32.mrf.mxu0
      %v3833 = vadd.f32 0.0, %v3832
      %v3834 = vpop.f32.mrf.mxu0
      %v3835 = vadd.f32 0.0, %v3834
      %3836 = vdwg.mxu0
      %3837 = vmatprep.subr.mxu0 %v2900
      %3838 = vmatpush1.msra.mxu0 %v2899
      %3839 = vmatprep.subr.mxu0 %v2898
      %3840 = vmatpush1.msra.mxu0 %v2897
      %3841 = vmatprep.subr.mxu0 %v2896
      %3842 = vmatpush1.msra.mxu0 %v2895
      %3843 = vmatprep.subr.mxu0 %v2894
      %3844 = vmatpush1.msra.mxu0 %v2893
      %3845 = vmatprep.subr.mxu0 %v2892
      %3846 = vmatpush1.msra.mxu0 %v2891
      %3847 = vmatprep.subr.mxu0 %v2890
      %3848 = vmatpush1.msra.mxu0 %v2889
      %3849 = vmatprep.subr.mxu0 %v2888
      %3850 = vmatpush1.msra.mxu0 %v2887
      %3851 = vmatprep.subr.mxu0 %v2886
      %3852 = vmatpush1.msra.mxu0 %v2885
      %3853 = vmatprep.subr.mxu0 %v2884
      %3854 = vmatpush1.msra.mxu0 %v2883
      %3855 = vmatprep.subr.mxu0 %v2882
      %3856 = vmatpush1.msra.mxu0 %v2881
      %3857 = vmatprep.subr.mxu0 %v2880
      %3858 = vmatpush1.msra.mxu0 %v2879
      %3859 = vmatprep.subr.mxu0 %v2878
      %3860 = vmatpush1.msra.mxu0 %v2877
      %3861 = vmatprep.subr.mxu0 %v2876
      %3862 = vmatpush1.msra.mxu0 %v2875
      %3863 = vmatprep.subr.mxu0 %v2874
      %3864 = vmatpush1.msra.mxu0 %v2873
      %3865 = vmatprep.subr.mxu0 %v2872
      %3866 = vmatpush1.msra.mxu0 %v2871
      %3867 = vmatprep.subr.mxu0 %v2870
      %3868 = vmatpush1.msra.mxu0 %v2869
      %3869 = vmatprep.subr.mxu0 %v3297
      %3870 = vmatpush2.msra.mxu0 %v3296
      %3871 = vmatprep.subr.mxu0 %v3295
      %3872 = vmatpush2.msra.mxu0 %v3294
      %3873 = vmatprep.subr.mxu0 %v3293
      %3874 = vmatpush2.msra.mxu0 %v3292
      %3875 = vmatprep.subr.mxu0 %v3291
      %3876 = vmatpush2.msra.mxu0 %v3290
      %3877 = vmatprep.subr.mxu0 %v3289
      %3878 = vmatpush2.msra.mxu0 %v3288
      %3879 = vmatprep.subr.mxu0 %v3287
      %3880 = vmatpush2.msra.mxu0 %v3286
      %3881 = vmatprep.subr.mxu0 %v3285
      %3882 = vmatpush2.msra.mxu0 %v3284
      %3883 = vmatprep.subr.mxu0 %v3283
      %3884 = vmatpush2.msra.mxu0 %v3282
      %3885 = vmatprep.subr.mxu0 %v3281
      %3886 = vmatpush2.msra.mxu0 %v3280
      %3887 = vmatprep.subr.mxu0 %v3279
      %3888 = vmatpush2.msra.mxu0 %v3278
      %3889 = vmatprep.subr.mxu0 %v3277
      %3890 = vmatpush2.msra.mxu0 %v3276
      %3891 = vmatprep.subr.mxu0 %v3275
      %3892 = vmatpush2.msra.mxu0 %v3274
      %3893 = vmatprep.subr.mxu0 %v3273
      %3894 = vmatpush2.msra.mxu0 %v3272
      %3895 = vmatprep.subr.mxu0 %v3271
      %3896 = vmatpush2.msra.mxu0 %v3270
      %3897 = vmatprep.subr.mxu0 %v3269
      %3898 = vmatpush2.msra.mxu0 %v3268
      %3899 = vmatprep.subr.mxu0 %v3267
      %3900 = vmatpush2.msra.mxu0 %v3266
      %3901 = vmatprep.mubr.f32.mxu0 %v3438
      %3902 = vmatmul.mubr.f32.gmra.mxu0 %v3437
      %v3903 = vpop.f32.mrf.mxu0
      %v3904 = vadd.f32 %v3695, %v3903
      %v3905 = vpop.f32.mrf.mxu0
      %v3906 = vadd.f32 %v3697, %v3905
      %3907 = vmatprep.mubr.f32.mxu0 %v3443
      %3908 = vmatmul.mubr.f32.gmra.mxu0 %v3442
      %v3909 = vpop.f32.mrf.mxu0
      %v3910 = vadd.f32 %v3701, %v3909
      %v3911 = vpop.f32.mrf.mxu0
      %v3912 = vadd.f32 %v3703, %v3911
      %3913 = vmatprep.mubr.f32.mxu0 %v3448
      %3914 = vmatmul.mubr.f32.gmra.mxu0 %v3447
      %v3915 = vpop.f32.mrf.mxu0
      %v3916 = vadd.f32 %v3707, %v3915
      %v3917 = vpop.f32.mrf.mxu0
      %v3918 = vadd.f32 %v3709, %v3917
      %3919 = vmatprep.mubr.f32.mxu0 %v3453
      %3920 = vmatmul.mubr.f32.gmra.mxu0 %v3452
      %v3921 = vpop.f32.mrf.mxu0
      %v3922 = vadd.f32 %v3713, %v3921
      %v3923 = vpop.f32.mrf.mxu0
      %v3924 = vadd.f32 %v3715, %v3923
      %3925 = vmatprep.mubr.f32.mxu0 %v3458
      %3926 = vmatmul.mubr.f32.gmra.mxu0 %v3457
      %v3927 = vpop.f32.mrf.mxu0
      %v3928 = vadd.f32 %v3719, %v3927
      %v3929 = vpop.f32.mrf.mxu0
      %v3930 = vadd.f32 %v3721, %v3929
      %3931 = vmatprep.mubr.f32.mxu0 %v3463
      %3932 = vmatmul.mubr.f32.gmra.mxu0 %v3462
      %v3933 = vpop.f32.mrf.mxu0
      %v3934 = vadd.f32 %v3725, %v3933
      %v3935 = vpop.f32.mrf.mxu0
      %v3936 = vadd.f32 %v3727, %v3935
      %3937 = vmatprep.mubr.f32.mxu0 %v3468
      %3938 = vmatmul.mubr.f32.gmra.mxu0 %v3467
      %v3939 = vpop.f32.mrf.mxu0
      %v3940 = vadd.f32 %v3731, %v3939
      %v3941 = vpop.f32.mrf.mxu0
      %v3942 = vadd.f32 %v3733, %v3941
      %3943 = vmatprep.mubr.f32.mxu0 %v3473
      %3944 = vmatmul.mubr.f32.gmra.mxu0 %v3472
      %v3945 = vpop.f32.mrf.mxu0
      %v3946 = vadd.f32 %v3737, %v3945
      %v3947 = vpop.f32.mrf.mxu0
      %v3948 = vadd.f32 %v3739, %v3947
      %3949 = vmatprep.mubr.f32.mxu0 %v3478
      %3950 = vmatmul.mubr.f32.gmra.mxu0 %v3477
      %v3951 = vpop.f32.mrf.mxu0
      %v3952 = vadd.f32 %v3743, %v3951
      %v3953 = vpop.f32.mrf.mxu0
      %v3954 = vadd.f32 %v3745, %v3953
      %3955 = vmatprep.mubr.f32.mxu0 %v3483
      %3956 = vmatmul.mubr.f32.gmra.mxu0 %v3482
      %v3957 = vpop.f32.mrf.mxu0
      %v3958 = vadd.f32 %v3749, %v3957
      %v3959 = vpop.f32.mrf.mxu0
      %v3960 = vadd.f32 %v3751, %v3959
      %3961 = vmatprep.mubr.f32.mxu0 %v3488
      %3962 = vmatmul.mubr.f32.gmra.mxu0 %v3487
      %v3963 = vpop.f32.mrf.mxu0
      %v3964 = vadd.f32 %v3755, %v3963
      %v3965 = vpop.f32.mrf.mxu0
      %v3966 = vadd.f32 %v3757, %v3965
      %3967 = vmatprep.mubr.f32.mxu0 %v3493
      %3968 = vmatmul.mubr.f32.gmra.mxu0 %v3492
      %v3969 = vpop.f32.mrf.mxu0
      %v3970 = vadd.f32 %v3761, %v3969
      %v3971 = vpop.f32.mrf.mxu0
      %v3972 = vadd.f32 %v3763, %v3971
      %3973 = vmatprep.mubr.f32.mxu0 %v3498
      %3974 = vmatmul.mubr.f32.gmra.mxu0 %v3497
      %v3975 = vpop.f32.mrf.mxu0
      %v3976 = vadd.f32 %v3767, %v3975
      %v3977 = vpop.f32.mrf.mxu0
      %v3978 = vadd.f32 %v3769, %v3977
      %3979 = vmatprep.mubr.f32.mxu0 %v3503
      %3980 = vmatmul.mubr.f32.gmra.mxu0 %v3502
      %v3981 = vpop.f32.mrf.mxu0
      %v3982 = vadd.f32 %v3773, %v3981
      %v3983 = vpop.f32.mrf.mxu0
      %v3984 = vadd.f32 %v3775, %v3983
      %3985 = vmatprep.mubr.f32.mxu0 %v3508
      %3986 = vmatmul.mubr.f32.gmra.mxu0 %v3507
      %v3987 = vpop.f32.mrf.mxu0
      %v3988 = vadd.f32 %v3779, %v3987
      %v3989 = vpop.f32.mrf.mxu0
      %v3990 = vadd.f32 %v3781, %v3989
      %3991 = vmatprep.mubr.f32.mxu0 %v3513
      %3992 = vmatmul.mubr.f32.gmra.mxu0 %v3512
      %v3993 = vpop.f32.mrf.mxu0
      %v3994 = vadd.f32 %v3785, %v3993
      %v3995 = vpop.f32.mrf.mxu0
      %v3996 = vadd.f32 %v3787, %v3995
      %3997 = vmatprep.mubr.f32.mxu0 %v3518
      %3998 = vmatmul.mubr.f32.gmra.mxu0 %v3517
      %v3999 = vpop.f32.mrf.mxu0
      %v4000 = vadd.f32 %v3791, %v3999
      %v4001 = vpop.f32.mrf.mxu0
      %v4002 = vadd.f32 %v3793, %v4001
      %4003 = vmatprep.mubr.f32.mxu0 %v3523
      %4004 = vmatmul.mubr.f32.gmra.mxu0 %v3522
      %v4005 = vpop.f32.mrf.mxu0
      %v4006 = vadd.f32 %v3797, %v4005
      %v4007 = vpop.f32.mrf.mxu0
      %v4008 = vadd.f32 %v3799, %v4007
      %4009 = vmatprep.mubr.f32.mxu0 %v3528
      %4010 = vmatmul.mubr.f32.gmra.mxu0 %v3527
      %v4011 = vpop.f32.mrf.mxu0
      %v4012 = vadd.f32 %v3803, %v4011
      %v4013 = vpop.f32.mrf.mxu0
      %v4014 = vadd.f32 %v3805, %v4013
      %4015 = vmatprep.mubr.f32.mxu0 %v3533
      %4016 = vmatmul.mubr.f32.gmra.mxu0 %v3532
      %v4017 = vpop.f32.mrf.mxu0
      %v4018 = vadd.f32 %v3809, %v4017
      %v4019 = vpop.f32.mrf.mxu0
      %v4020 = vadd.f32 %v3811, %v4019
      %4021 = vmatprep.mubr.f32.mxu0 %v3538
      %4022 = vmatmul.mubr.f32.gmra.mxu0 %v3537
      %v4023 = vpop.f32.mrf.mxu0
      %v4024 = vadd.f32 %v3815, %v4023
      %v4025 = vpop.f32.mrf.mxu0
      %v4026 = vadd.f32 %v3817, %v4025
      %4027 = vmatprep.mubr.f32.mxu0 %v3543
      %4028 = vmatmul.mubr.f32.gmra.mxu0 %v3542
      %v4029 = vpop.f32.mrf.mxu0
      %v4030 = vadd.f32 %v3821, %v4029
      %v4031 = vpop.f32.mrf.mxu0
      %v4032 = vadd.f32 %v3823, %v4031
      %4033 = vmatprep.mubr.f32.mxu0 %v3548
      %4034 = vmatmul.mubr.f32.gmra.mxu0 %v3547
      %v4035 = vpop.f32.mrf.mxu0
      %v4036 = vadd.f32 %v3827, %v4035
      %v4037 = vpop.f32.mrf.mxu0
      %v4038 = vadd.f32 %v3829, %v4037
      %4039 = vmatprep.mubr.f32.mxu0 %v3553
      %4040 = vmatmul.mubr.f32.gmra.mxu0 %v3552
      %v4041 = vpop.f32.mrf.mxu0
      %v4042 = vadd.f32 %v3833, %v4041
      %v4043 = vpop.f32.mrf.mxu0
      %v4044 = vadd.f32 %v3835, %v4043
      %4045 = vdwg.mxu0
      %4046 = vmatprep.subr.mxu0 0.0
      %4047 = vmatpush1.msra.mxu0 0.0
      %4048 = vmatprep.subr.mxu0 0.0
      %4049 = vmatpush1.msra.mxu0 0.0
      %4050 = vmatprep.subr.mxu0 0.0
      %4051 = vmatpush1.msra.mxu0 0.0
      %4052 = vmatprep.subr.mxu0 0.0
      %4053 = vmatpush1.msra.mxu0 0.0
      %4054 = vmatprep.subr.mxu0 0.0
      %4055 = vmatpush1.msra.mxu0 0.0
      %4056 = vmatprep.subr.mxu0 0.0
      %4057 = vmatpush1.msra.mxu0 0.0
      %4058 = vmatprep.subr.mxu0 0.0
      %4059 = vmatpush1.msra.mxu0 0.0
      %4060 = vmatprep.subr.mxu0 0.0
      %4061 = vmatpush1.msra.mxu0 0.0
      %4062 = vmatprep.subr.mxu0 %v3313
      %4063 = vmatpush1.msra.mxu0 %v3312
      %4064 = vmatprep.subr.mxu0 %v3311
      %4065 = vmatpush1.msra.mxu0 %v3310
      %4066 = vmatprep.subr.mxu0 %v3309
      %4067 = vmatpush1.msra.mxu0 %v3308
      %4068 = vmatprep.subr.mxu0 %v3307
      %4069 = vmatpush1.msra.mxu0 %v3306
      %4070 = vmatprep.subr.mxu0 %v3305
      %4071 = vmatpush1.msra.mxu0 %v3304
      %4072 = vmatprep.subr.mxu0 %v3303
      %4073 = vmatpush1.msra.mxu0 %v3302
      %4074 = vmatprep.subr.mxu0 %v3301
      %4075 = vmatpush1.msra.mxu0 %v3300
      %4076 = vmatprep.subr.mxu0 %v3299
      %4077 = vmatpush1.msra.mxu0 %v3298
      %4078 = vmatprep.subr.mxu0 0.0
      %4079 = vmatpush2.msra.mxu0 0.0
      %4080 = vmatprep.subr.mxu0 0.0
      %4081 = vmatpush2.msra.mxu0 0.0
      %4082 = vmatprep.subr.mxu0 0.0
      %4083 = vmatpush2.msra.mxu0 0.0
      %4084 = vmatprep.subr.mxu0 0.0
      %4085 = vmatpush2.msra.mxu0 0.0
      %4086 = vmatprep.subr.mxu0 0.0
      %4087 = vmatpush2.msra.mxu0 0.0
      %4088 = vmatprep.subr.mxu0 0.0
      %4089 = vmatpush2.msra.mxu0 0.0
      %4090 = vmatprep.subr.mxu0 0.0
      %4091 = vmatpush2.msra.mxu0 0.0
      %4092 = vmatprep.subr.mxu0 0.0
      %4093 = vmatpush2.msra.mxu0 0.0
      %4094 = vmatprep.subr.mxu0 0.0
      %4095 = vmatpush2.msra.mxu0 0.0
      %4096 = vmatprep.subr.mxu0 0.0
      %4097 = vmatpush2.msra.mxu0 0.0
      %4098 = vmatprep.subr.mxu0 0.0
      %4099 = vmatpush2.msra.mxu0 0.0
      %4100 = vmatprep.subr.mxu0 0.0
      %4101 = vmatpush2.msra.mxu0 0.0
      %4102 = vmatprep.subr.mxu0 0.0
      %4103 = vmatpush2.msra.mxu0 0.0
      %4104 = vmatprep.subr.mxu0 0.0
      %4105 = vmatpush2.msra.mxu0 0.0
      %4106 = vmatprep.subr.mxu0 0.0
      %4107 = vmatpush2.msra.mxu0 0.0
      %4108 = vmatprep.subr.mxu0 0.0
      %4109 = vmatpush2.msra.mxu0 0.0
      %4110 = vmatprep.mubr.f32.mxu0 0.0
      %4111 = vmatmul.mubr.f32.gmra.mxu0 %v3557
      %v4112 = vpop.f32.mrf.mxu0
      %v4113 = vadd.f32 %v3904, %v4112
      %v4114 = vpop.f32.mrf.mxu0
      %v4115 = vadd.f32 %v3906, %v4114
      %4116 = vmatprep.mubr.f32.mxu0 0.0
      %4117 = vmatmul.mubr.f32.gmra.mxu0 %v3560
      %v4118 = vpop.f32.mrf.mxu0
      %v4119 = vadd.f32 %v3910, %v4118
      %v4120 = vpop.f32.mrf.mxu0
      %v4121 = vadd.f32 %v3912, %v4120
      %4122 = vmatprep.mubr.f32.mxu0 0.0
      %4123 = vmatmul.mubr.f32.gmra.mxu0 %v3563
      %v4124 = vpop.f32.mrf.mxu0
      %v4125 = vadd.f32 %v3916, %v4124
      %v4126 = vpop.f32.mrf.mxu0
      %v4127 = vadd.f32 %v3918, %v4126
      %4128 = vmatprep.mubr.f32.mxu0 0.0
      %4129 = vmatmul.mubr.f32.gmra.mxu0 %v3566
      %v4130 = vpop.f32.mrf.mxu0
      %v4131 = vadd.f32 %v3922, %v4130
      %v4132 = vpop.f32.mrf.mxu0
      %v4133 = vadd.f32 %v3924, %v4132
      %4134 = vmatprep.mubr.f32.mxu0 0.0
      %4135 = vmatmul.mubr.f32.gmra.mxu0 %v3569
      %v4136 = vpop.f32.mrf.mxu0
      %v4137 = vadd.f32 %v3928, %v4136
      %v4138 = vpop.f32.mrf.mxu0
      %v4139 = vadd.f32 %v3930, %v4138
      %4140 = vmatprep.mubr.f32.mxu0 0.0
      %4141 = vmatmul.mubr.f32.gmra.mxu0 %v3572
      %v4142 = vpop.f32.mrf.mxu0
      %v4143 = vadd.f32 %v3934, %v4142
      %v4144 = vpop.f32.mrf.mxu0
      %v4145 = vadd.f32 %v3936, %v4144
      %4146 = vmatprep.mubr.f32.mxu0 0.0
      %4147 = vmatmul.mubr.f32.gmra.mxu0 %v3575
      %v4148 = vpop.f32.mrf.mxu0
      %v4149 = vadd.f32 %v3940, %v4148
      %v4150 = vpop.f32.mrf.mxu0
      %v4151 = vadd.f32 %v3942, %v4150
      %4152 = vmatprep.mubr.f32.mxu0 0.0
      %4153 = vmatmul.mubr.f32.gmra.mxu0 %v3578
      %v4154 = vpop.f32.mrf.mxu0
      %v4155 = vadd.f32 %v3946, %v4154
      %v4156 = vpop.f32.mrf.mxu0
      %v4157 = vadd.f32 %v3948, %v4156
      %4158 = vmatprep.mubr.f32.mxu0 0.0
      %4159 = vmatmul.mubr.f32.gmra.mxu0 %v3581
      %v4160 = vpop.f32.mrf.mxu0
      %v4161 = vadd.f32 %v3952, %v4160
      %v4162 = vpop.f32.mrf.mxu0
      %v4163 = vadd.f32 %v3954, %v4162
      %4164 = vmatprep.mubr.f32.mxu0 0.0
      %4165 = vmatmul.mubr.f32.gmra.mxu0 %v3584
      %v4166 = vpop.f32.mrf.mxu0
      %v4167 = vadd.f32 %v3958, %v4166
      %v4168 = vpop.f32.mrf.mxu0
      %v4169 = vadd.f32 %v3960, %v4168
      %4170 = vmatprep.mubr.f32.mxu0 0.0
      %4171 = vmatmul.mubr.f32.gmra.mxu0 %v3587
      %v4172 = vpop.f32.mrf.mxu0
      %v4173 = vadd.f32 %v3964, %v4172
      %v4174 = vpop.f32.mrf.mxu0
      %v4175 = vadd.f32 %v3966, %v4174
      %4176 = vmatprep.mubr.f32.mxu0 0.0
      %4177 = vmatmul.mubr.f32.gmra.mxu0 %v3590
      %v4178 = vpop.f32.mrf.mxu0
      %v4179 = vadd.f32 %v3970, %v4178
      %v4180 = vpop.f32.mrf.mxu0
      %v4181 = vadd.f32 %v3972, %v4180
      %4182 = vmatprep.mubr.f32.mxu0 0.0
      %4183 = vmatmul.mubr.f32.gmra.mxu0 %v3593
      %v4184 = vpop.f32.mrf.mxu0
      %v4185 = vadd.f32 %v3976, %v4184
      %v4186 = vpop.f32.mrf.mxu0
      %v4187 = vadd.f32 %v3978, %v4186
      %4188 = vmatprep.mubr.f32.mxu0 0.0
      %4189 = vmatmul.mubr.f32.gmra.mxu0 %v3596
      %v4190 = vpop.f32.mrf.mxu0
      %v4191 = vadd.f32 %v3982, %v4190
      %v4192 = vpop.f32.mrf.mxu0
      %v4193 = vadd.f32 %v3984, %v4192
      %4194 = vmatprep.mubr.f32.mxu0 0.0
      %4195 = vmatmul.mubr.f32.gmra.mxu0 %v3599
      %v4196 = vpop.f32.mrf.mxu0
      %v4197 = vadd.f32 %v3988, %v4196
      %v4198 = vpop.f32.mrf.mxu0
      %v4199 = vadd.f32 %v3990, %v4198
      %4200 = vmatprep.mubr.f32.mxu0 0.0
      %4201 = vmatmul.mubr.f32.gmra.mxu0 %v3602
      %v4202 = vpop.f32.mrf.mxu0
      %v4203 = vadd.f32 %v3994, %v4202
      %v4204 = vpop.f32.mrf.mxu0
      %v4205 = vadd.f32 %v3996, %v4204
      %4206 = vmatprep.mubr.f32.mxu0 0.0
      %4207 = vmatmul.mubr.f32.gmra.mxu0 %v3605
      %v4208 = vpop.f32.mrf.mxu0
      %v4209 = vadd.f32 %v4000, %v4208
      %v4210 = vpop.f32.mrf.mxu0
      %v4211 = vadd.f32 %v4002, %v4210
      %4212 = vmatprep.mubr.f32.mxu0 0.0
      %4213 = vmatmul.mubr.f32.gmra.mxu0 %v3608
      %v4214 = vpop.f32.mrf.mxu0
      %v4215 = vadd.f32 %v4006, %v4214
      %v4216 = vpop.f32.mrf.mxu0
      %v4217 = vadd.f32 %v4008, %v4216
      %4218 = vmatprep.mubr.f32.mxu0 0.0
      %4219 = vmatmul.mubr.f32.gmra.mxu0 %v3611
      %v4220 = vpop.f32.mrf.mxu0
      %v4221 = vadd.f32 %v4012, %v4220
      %v4222 = vpop.f32.mrf.mxu0
      %v4223 = vadd.f32 %v4014, %v4222
      %4224 = vmatprep.mubr.f32.mxu0 0.0
      %4225 = vmatmul.mubr.f32.gmra.mxu0 %v3614
      %v4226 = vpop.f32.mrf.mxu0
      %v4227 = vadd.f32 %v4018, %v4226
      %v4228 = vpop.f32.mrf.mxu0
      %v4229 = vadd.f32 %v4020, %v4228
      %4230 = vmatprep.mubr.f32.mxu0 0.0
      %4231 = vmatmul.mubr.f32.gmra.mxu0 %v3617
      %v4232 = vpop.f32.mrf.mxu0
      %v4233 = vadd.f32 %v4024, %v4232
      %v4234 = vpop.f32.mrf.mxu0
      %v4235 = vadd.f32 %v4026, %v4234
      %4236 = vmatprep.mubr.f32.mxu0 0.0
      %4237 = vmatmul.mubr.f32.gmra.mxu0 %v3620
      %v4238 = vpop.f32.mrf.mxu0
      %v4239 = vadd.f32 %v4030, %v4238
      %v4240 = vpop.f32.mrf.mxu0
      %v4241 = vadd.f32 %v4032, %v4240
      %4242 = vmatprep.mubr.f32.mxu0 0.0
      %4243 = vmatmul.mubr.f32.gmra.mxu0 %v3623
      %v4244 = vpop.f32.mrf.mxu0
      %v4245 = vadd.f32 %v4036, %v4244
      %v4246 = vpop.f32.mrf.mxu0
      %v4247 = vadd.f32 %v4038, %v4246
      %4248 = vmatprep.mubr.f32.mxu0 0.0
      %4249 = vmatmul.mubr.f32.gmra.mxu0 %v3626
      %v4250 = vpop.f32.mrf.mxu0
      %v4251 = vadd.f32 %v4042, %v4250
      %v4252 = vpop.f32.mrf.mxu0
      %v4253 = vadd.f32 %v4044, %v4252
      %4254 = vdwg.mxu0
      %4255 = vrot.lane.b32.xlu0 %v4113, 16
      %v4256 = vpop.permute.xlu0 %4255
      %4257 = vrot.lane.b32.xlu0 %v4119, 16
      %v4258 = vpop.permute.xlu0 %4257
      %4259 = vrot.lane.b32.xlu0 %v4125, 16
      %v4260 = vpop.permute.xlu0 %4259
      %4261 = vrot.lane.b32.xlu0 %v4131, 16
      %v4262 = vpop.permute.xlu0 %4261
      %4263 = vrot.lane.b32.xlu0 %v4137, 16
      %v4264 = vpop.permute.xlu0 %4263
      %4265 = vrot.lane.b32.xlu0 %v4143, 16
      %v4266 = vpop.permute.xlu0 %4265
      %4267 = vrot.lane.b32.xlu0 %v4149, 16
      %v4268 = vpop.permute.xlu0 %4267
      %4269 = vrot.lane.b32.xlu0 %v4155, 16
      %v4270 = vpop.permute.xlu0 %4269
      %4271 = vrot.lane.b32.xlu0 %v4161, 16
      %v4272 = vpop.permute.xlu0 %4271
      %4273 = vrot.lane.b32.xlu0 %v4167, 16
      %v4274 = vpop.permute.xlu0 %4273
      %4275 = vrot.lane.b32.xlu0 %v4173, 16
      %v4276 = vpop.permute.xlu0 %4275
      %4277 = vrot.lane.b32.xlu0 %v4179, 16
      %v4278 = vpop.permute.xlu0 %4277
      %4279 = vrot.lane.b32.xlu0 %v4185, 16
      %v4280 = vpop.permute.xlu0 %4279
      %4281 = vrot.lane.b32.xlu0 %v4191, 16
      %v4282 = vpop.permute.xlu0 %4281
      %4283 = vrot.lane.b32.xlu0 %v4197, 16
      %v4284 = vpop.permute.xlu0 %4283
      %4285 = vrot.lane.b32.xlu0 %v4203, 16
      %v4286 = vpop.permute.xlu0 %4285
      %4287 = vrot.lane.b32.xlu0 %v4209, 16
      %v4288 = vpop.permute.xlu0 %4287
      %4289 = vrot.lane.b32.xlu0 %v4215, 16
      %v4290 = vpop.permute.xlu0 %4289
      %4291 = vrot.lane.b32.xlu0 %v4221, 16
      %v4292 = vpop.permute.xlu0 %4291
      %4293 = vrot.lane.b32.xlu0 %v4227, 16
      %v4294 = vpop.permute.xlu0 %4293
      %4295 = vrot.lane.b32.xlu0 %v4233, 16
      %v4296 = vpop.permute.xlu0 %4295
      %4297 = vrot.lane.b32.xlu0 %v4239, 16
      %v4298 = vpop.permute.xlu0 %4297
      %4299 = vrot.lane.b32.xlu0 %v4245, 16
      %v4300 = vpop.permute.xlu0 %4299
      %4301 = vrot.lane.b32.xlu0 %v4251, 16
      %v4302 = vpop.permute.xlu0 %4301
      %4303 = vrot.lane.b32.xlu0 %v4115, 16
      %v4304 = vpop.permute.xlu0 %4303
      %4305 = vrot.lane.b32.xlu0 %v4121, 16
      %v4306 = vpop.permute.xlu0 %4305
      %4307 = vrot.lane.b32.xlu0 %v4127, 16
      %v4308 = vpop.permute.xlu0 %4307
      %4309 = vrot.lane.b32.xlu0 %v4133, 16
      %v4310 = vpop.permute.xlu0 %4309
      %4311 = vrot.lane.b32.xlu0 %v4139, 16
      %v4312 = vpop.permute.xlu0 %4311
      %4313 = vrot.lane.b32.xlu0 %v4145, 16
      %v4314 = vpop.permute.xlu0 %4313
      %4315 = vrot.lane.b32.xlu0 %v4151, 16
      %v4316 = vpop.permute.xlu0 %4315
      %4317 = vrot.lane.b32.xlu0 %v4157, 16
      %v4318 = vpop.permute.xlu0 %4317
      %4319 = vrot.lane.b32.xlu0 %v4163, 16
      %v4320 = vpop.permute.xlu0 %4319
      %4321 = vrot.lane.b32.xlu0 %v4169, 16
      %v4322 = vpop.permute.xlu0 %4321
      %4323 = vrot.lane.b32.xlu0 %v4175, 16
      %v4324 = vpop.permute.xlu0 %4323
      %4325 = vrot.lane.b32.xlu0 %v4181, 16
      %v4326 = vpop.permute.xlu0 %4325
      %4327 = vrot.lane.b32.xlu0 %v4187, 16
      %v4328 = vpop.permute.xlu0 %4327
      %4329 = vrot.lane.b32.xlu0 %v4193, 16
      %v4330 = vpop.permute.xlu0 %4329
      %4331 = vrot.lane.b32.xlu0 %v4199, 16
      %v4332 = vpop.permute.xlu0 %4331
      %4333 = vrot.lane.b32.xlu0 %v4205, 16
      %v4334 = vpop.permute.xlu0 %4333
      %4335 = vrot.lane.b32.xlu0 %v4211, 16
      %v4336 = vpop.permute.xlu0 %4335
      %4337 = vrot.lane.b32.xlu0 %v4217, 16
      %v4338 = vpop.permute.xlu0 %4337
      %4339 = vrot.lane.b32.xlu0 %v4223, 16
      %v4340 = vpop.permute.xlu0 %4339
      %4341 = vrot.lane.b32.xlu0 %v4229, 16
      %v4342 = vpop.permute.xlu0 %4341
      %4343 = vrot.lane.b32.xlu0 %v4235, 16
      %v4344 = vpop.permute.xlu0 %4343
      %4345 = vrot.lane.b32.xlu0 %v4241, 16
      %v4346 = vpop.permute.xlu0 %4345
      %4347 = vrot.lane.b32.xlu0 %v4247, 16
      %v4348 = vpop.permute.xlu0 %4347
      %4349 = vrot.lane.b32.xlu0 %v4253, 16
      %v4350 = vpop.permute.xlu0 %4349
      %vm4351 = vcmp.lt.s32.totalorder %v2998, 16
      %v4352 = vsel %vm4351, %v4256, %v4304
      %v4353 = vsel %vm4351, %v4258, %v4306
      %v4354 = vsel %vm4351, %v4260, %v4308
      %v4355 = vsel %vm4351, %v4262, %v4310
      %v4356 = vsel %vm4351, %v4264, %v4312
      %v4357 = vsel %vm4351, %v4266, %v4314
      %v4358 = vsel %vm4351, %v4268, %v4316
      %v4359 = vsel %vm4351, %v4270, %v4318
      %v4360 = vsel %vm4351, %v4272, %v4320
      %v4361 = vsel %vm4351, %v4274, %v4322
      %v4362 = vsel %vm4351, %v4276, %v4324
      %v4363 = vsel %vm4351, %v4278, %v4326
      %v4364 = vsel %vm4351, %v4280, %v4328
      %v4365 = vsel %vm4351, %v4282, %v4330
      %v4366 = vsel %vm4351, %v4284, %v4332
      %v4367 = vsel %vm4351, %v4286, %v4334
      %v4368 = vsel %vm4351, %v4288, %v4336
      %v4369 = vsel %vm4351, %v4290, %v4338
      %v4370 = vsel %vm4351, %v4292, %v4340
      %v4371 = vsel %vm4351, %v4294, %v4342
      %v4372 = vsel %vm4351, %v4296, %v4344
      %v4373 = vsel %vm4351, %v4298, %v4346
      %v4374 = vsel %vm4351, %v4300, %v4348
      %v4375 = vsel %vm4351, %v4302, %v4350
      %v4376 = vsel %vm4351, %v4304, %v4256
      %v4377 = vsel %vm4351, %v4306, %v4258
      %v4378 = vsel %vm4351, %v4308, %v4260
      %v4379 = vsel %vm4351, %v4310, %v4262
      %v4380 = vsel %vm4351, %v4312, %v4264
      %v4381 = vsel %vm4351, %v4314, %v4266
      %v4382 = vsel %vm4351, %v4316, %v4268
      %v4383 = vsel %vm4351, %v4318, %v4270
      %v4384 = vsel %vm4351, %v4320, %v4272
      %v4385 = vsel %vm4351, %v4322, %v4274
      %v4386 = vsel %vm4351, %v4324, %v4276
      %v4387 = vsel %vm4351, %v4326, %v4278
      %v4388 = vsel %vm4351, %v4328, %v4280
      %v4389 = vsel %vm4351, %v4330, %v4282
      %v4390 = vsel %vm4351, %v4332, %v4284
      %v4391 = vsel %vm4351, %v4334, %v4286
      %v4392 = vsel %vm4351, %v4336, %v4288
      %v4393 = vsel %vm4351, %v4338, %v4290
      %v4394 = vsel %vm4351, %v4340, %v4292
      %v4395 = vsel %vm4351, %v4342, %v4294
      %v4396 = vsel %vm4351, %v4344, %v4296
      %v4397 = vsel %vm4351, %v4346, %v4298
      %v4398 = vsel %vm4351, %v4348, %v4300
      %v4399 = vsel %vm4351, %v4350, %v4302
      %v4400 = vld [vmem:[%s2] ss:$2 sm:$0x3]
      %v4402 = vlaneseq
      %v4403 = vshrl.u32 %v4402, 7
      %v4404 = vsub.s32 0, %v4403
      %v4405 = vrot.slane %v4400, %v4404
      %v4406 = vlaneseq
      %v4407 = vshrl.u32 %v4406, 7
      %v4408 = vsub.s32 1, %v4407
      %v4409 = vrot.slane %v4400, %v4408
      %v4412 = vmul.f32 %v4376, %v4405
      %v4413 = vmul.f32 %v4352, %v4409
      %v4414 = vmul.f32 %v4377, %v4405
      %v4415 = vmul.f32 %v4353, %v4409
      %v4416 = vmul.f32 %v4378, %v4405
      %v4417 = vmul.f32 %v4354, %v4409
      %v4418 = vmul.f32 %v4379, %v4405
      %v4419 = vmul.f32 %v4355, %v4409
      %v4420 = vmul.f32 %v4380, %v4405
      %v4421 = vmul.f32 %v4356, %v4409
      %v4422 = vmul.f32 %v4381, %v4405
      %v4423 = vmul.f32 %v4357, %v4409
      %v4424 = vmul.f32 %v4382, %v4405
      %v4425 = vmul.f32 %v4358, %v4409
      %v4426 = vmul.f32 %v4383, %v4405
      %v4427 = vmul.f32 %v4359, %v4409
      %v4428 = vmul.f32 %v4384, %v4405
      %v4429 = vmul.f32 %v4360, %v4409
      %v4430 = vmul.f32 %v4385, %v4405
      %v4431 = vmul.f32 %v4361, %v4409
      %v4432 = vmul.f32 %v4386, %v4405
      %v4433 = vmul.f32 %v4362, %v4409
      %v4434 = vmul.f32 %v4387, %v4405
      %v4435 = vmul.f32 %v4363, %v4409
      %v4436 = vmul.f32 %v4388, %v4405
      %v4437 = vmul.f32 %v4364, %v4409
      %v4438 = vmul.f32 %v4389, %v4405
      %v4439 = vmul.f32 %v4365, %v4409
      %v4440 = vmul.f32 %v4390, %v4405
      %v4441 = vmul.f32 %v4366, %v4409
      %v4442 = vmul.f32 %v4391, %v4405
      %v4443 = vmul.f32 %v4367, %v4409
      %v4444 = vmul.f32 %v4392, %v4405
      %v4445 = vmul.f32 %v4368, %v4409
      %v4446 = vmul.f32 %v4393, %v4405
      %v4447 = vmul.f32 %v4369, %v4409
      %v4448 = vmul.f32 %v4394, %v4405
      %v4449 = vmul.f32 %v4370, %v4409
      %v4450 = vmul.f32 %v4395, %v4405
      %v4451 = vmul.f32 %v4371, %v4409
      %v4452 = vmul.f32 %v4396, %v4405
      %v4453 = vmul.f32 %v4372, %v4409
      %v4454 = vmul.f32 %v4397, %v4405
      %v4455 = vmul.f32 %v4373, %v4409
      %v4456 = vmul.f32 %v4398, %v4405
      %v4457 = vmul.f32 %v4374, %v4409
      %v4458 = vmul.f32 %v4399, %v4405
      %v4459 = vmul.f32 %v4375, %v4409
      %v4461 = vsel %vm3555, %v3319, 0
      %v4464 = vsel %vm3555, %v3324, 0
      %v4467 = vsel %vm3555, %v3329, 0
      %v4470 = vsel %vm3555, %v3334, 0
      %v4473 = vsel %vm3555, %v3339, 0
      %v4476 = vsel %vm3555, %v3344, 0
      %v4479 = vsel %vm3555, %v3349, 0
      %v4482 = vsel %vm3555, %v3354, 0
      %v4485 = vsel %vm3555, %v3359, 0
      %v4488 = vsel %vm3555, %v3364, 0
      %v4491 = vsel %vm3555, %v3369, 0
      %v4494 = vsel %vm3555, %v3374, 0
      %v4497 = vsel %vm3555, %v3379, 0
      %v4500 = vsel %vm3555, %v3384, 0
      %v4503 = vsel %vm3555, %v3389, 0
      %v4506 = vsel %vm3555, %v3394, 0
      %v4509 = vsel %vm3555, %v3399, 0
      %v4512 = vsel %vm3555, %v3404, 0
      %v4515 = vsel %vm3555, %v3409, 0
      %v4518 = vsel %vm3555, %v3414, 0
      %v4521 = vsel %vm3555, %v3419, 0
      %v4524 = vsel %vm3555, %v3424, 0
      %v4527 = vsel %vm3555, %v3429, 0
      %v4530 = vsel %vm3555, %v3434, 0
      %4532 = vmatprep.subr.mxu0 %v3091
      %4533 = vmatpush1.msra.mxu0 %v3090
      %4534 = vmatprep.subr.mxu0 %v3089
      %4535 = vmatpush1.msra.mxu0 %v3088
      %4536 = vmatprep.subr.mxu0 %v3087
      %4537 = vmatpush1.msra.mxu0 %v3086
      %4538 = vmatprep.subr.mxu0 %v3085
      %4539 = vmatpush1.msra.mxu0 %v3084
      %4540 = vmatprep.subr.mxu0 %v3083
      %4541 = vmatpush1.msra.mxu0 %v3082
      %4542 = vmatprep.subr.mxu0 %v3081
      %4543 = vmatpush1.msra.mxu0 %v3080
      %4544 = vmatprep.subr.mxu0 %v3079
      %4545 = vmatpush1.msra.mxu0 %v3078
      %4546 = vmatprep.subr.mxu0 %v3077
      %4547 = vmatpush1.msra.mxu0 %v3076
      %4548 = vmatprep.subr.mxu0 %v3075
      %4549 = vmatpush1.msra.mxu0 %v3074
      %4550 = vmatprep.subr.mxu0 %v3073
      %4551 = vmatpush1.msra.mxu0 %v3072
      %4552 = vmatprep.subr.mxu0 %v3071
      %4553 = vmatpush1.msra.mxu0 %v3070
      %4554 = vmatprep.subr.mxu0 %v3069
      %4555 = vmatpush1.msra.mxu0 %v3068
      %4556 = vmatprep.subr.mxu0 %v3067
      %4557 = vmatpush1.msra.mxu0 %v3066
      %4558 = vmatprep.subr.mxu0 %v3065
      %4559 = vmatpush1.msra.mxu0 %v3064
      %4560 = vmatprep.subr.mxu0 %v3063
      %4561 = vmatpush1.msra.mxu0 %v3062
      %4562 = vmatprep.subr.mxu0 %v3061
      %4563 = vmatpush1.msra.mxu0 %v3060
      %4564 = vmatprep.subr.mxu0 %v2868
      %4565 = vmatpush2.msra.mxu0 %v2867
      %4566 = vmatprep.subr.mxu0 %v2866
      %4567 = vmatpush2.msra.mxu0 %v2865
      %4568 = vmatprep.subr.mxu0 %v2864
      %4569 = vmatpush2.msra.mxu0 %v2863
      %4570 = vmatprep.subr.mxu0 %v2862
      %4571 = vmatpush2.msra.mxu0 %v2861
      %4572 = vmatprep.subr.mxu0 %v2860
      %4573 = vmatpush2.msra.mxu0 %v2859
      %4574 = vmatprep.subr.mxu0 %v2858
      %4575 = vmatpush2.msra.mxu0 %v2857
      %4576 = vmatprep.subr.mxu0 %v2856
      %4577 = vmatpush2.msra.mxu0 %v2855
      %4578 = vmatprep.subr.mxu0 %v2854
      %4579 = vmatpush2.msra.mxu0 %v2853
      %4580 = vmatprep.subr.mxu0 %v3107
      %4581 = vmatpush2.msra.mxu0 %v3106
      %4582 = vmatprep.subr.mxu0 %v3105
      %4583 = vmatpush2.msra.mxu0 %v3104
      %4584 = vmatprep.subr.mxu0 %v3103
      %4585 = vmatpush2.msra.mxu0 %v3102
      %4586 = vmatprep.subr.mxu0 %v3101
      %4587 = vmatpush2.msra.mxu0 %v3100
      %4588 = vmatprep.subr.mxu0 %v3099
      %4589 = vmatpush2.msra.mxu0 %v3098
      %4590 = vmatprep.subr.mxu0 %v3097
      %4591 = vmatpush2.msra.mxu0 %v3096
      %4592 = vmatprep.subr.mxu0 %v3095
      %4593 = vmatpush2.msra.mxu0 %v3094
      %4594 = vmatprep.subr.mxu0 %v3093
      %4595 = vmatpush2.msra.mxu0 %v3092
      %4596 = vmatprep.mubr.f32.mxu0 %v3316
      %4597 = vmatmul.mubr.f32.gmra.mxu0 %v3315
      %v4598 = vpop.f32.mrf.mxu0
      %v4599 = vadd.f32 %v4412, %v4598
      %v4600 = vpop.f32.mrf.mxu0
      %v4601 = vadd.f32 %v4413, %v4600
      %4602 = vmatprep.mubr.f32.mxu0 %v3321
      %4603 = vmatmul.mubr.f32.gmra.mxu0 %v3320
      %v4604 = vpop.f32.mrf.mxu0
      %v4605 = vadd.f32 %v4414, %v4604
      %v4606 = vpop.f32.mrf.mxu0
      %v4607 = vadd.f32 %v4415, %v4606
      %4608 = vmatprep.mubr.f32.mxu0 %v3326
      %4609 = vmatmul.mubr.f32.gmra.mxu0 %v3325
      %v4610 = vpop.f32.mrf.mxu0
      %v4611 = vadd.f32 %v4416, %v4610
      %v4612 = vpop.f32.mrf.mxu0
      %v4613 = vadd.f32 %v4417, %v4612
      %4614 = vmatprep.mubr.f32.mxu0 %v3331
      %4615 = vmatmul.mubr.f32.gmra.mxu0 %v3330
      %v4616 = vpop.f32.mrf.mxu0
      %v4617 = vadd.f32 %v4418, %v4616
      %v4618 = vpop.f32.mrf.mxu0
      %v4619 = vadd.f32 %v4419, %v4618
      %4620 = vmatprep.mubr.f32.mxu0 %v3336
      %4621 = vmatmul.mubr.f32.gmra.mxu0 %v3335
      %v4622 = vpop.f32.mrf.mxu0
      %v4623 = vadd.f32 %v4420, %v4622
      %v4624 = vpop.f32.mrf.mxu0
      %v4625 = vadd.f32 %v4421, %v4624
      %4626 = vmatprep.mubr.f32.mxu0 %v3341
      %4627 = vmatmul.mubr.f32.gmra.mxu0 %v3340
      %v4628 = vpop.f32.mrf.mxu0
      %v4629 = vadd.f32 %v4422, %v4628
      %v4630 = vpop.f32.mrf.mxu0
      %v4631 = vadd.f32 %v4423, %v4630
      %4632 = vmatprep.mubr.f32.mxu0 %v3346
      %4633 = vmatmul.mubr.f32.gmra.mxu0 %v3345
      %v4634 = vpop.f32.mrf.mxu0
      %v4635 = vadd.f32 %v4424, %v4634
      %v4636 = vpop.f32.mrf.mxu0
      %v4637 = vadd.f32 %v4425, %v4636
      %4638 = vmatprep.mubr.f32.mxu0 %v3351
      %4639 = vmatmul.mubr.f32.gmra.mxu0 %v3350
      %v4640 = vpop.f32.mrf.mxu0
      %v4641 = vadd.f32 %v4426, %v4640
      %v4642 = vpop.f32.mrf.mxu0
      %v4643 = vadd.f32 %v4427, %v4642
      %4644 = vmatprep.mubr.f32.mxu0 %v3356
      %4645 = vmatmul.mubr.f32.gmra.mxu0 %v3355
      %v4646 = vpop.f32.mrf.mxu0
      %v4647 = vadd.f32 %v4428, %v4646
      %v4648 = vpop.f32.mrf.mxu0
      %v4649 = vadd.f32 %v4429, %v4648
      %4650 = vmatprep.mubr.f32.mxu0 %v3361
      %4651 = vmatmul.mubr.f32.gmra.mxu0 %v3360
      %v4652 = vpop.f32.mrf.mxu0
      %v4653 = vadd.f32 %v4430, %v4652
      %v4654 = vpop.f32.mrf.mxu0
      %v4655 = vadd.f32 %v4431, %v4654
      %4656 = vmatprep.mubr.f32.mxu0 %v3366
      %4657 = vmatmul.mubr.f32.gmra.mxu0 %v3365
      %v4658 = vpop.f32.mrf.mxu0
      %v4659 = vadd.f32 %v4432, %v4658
      %v4660 = vpop.f32.mrf.mxu0
      %v4661 = vadd.f32 %v4433, %v4660
      %4662 = vmatprep.mubr.f32.mxu0 %v3371
      %4663 = vmatmul.mubr.f32.gmra.mxu0 %v3370
      %v4664 = vpop.f32.mrf.mxu0
      %v4665 = vadd.f32 %v4434, %v4664
      %v4666 = vpop.f32.mrf.mxu0
      %v4667 = vadd.f32 %v4435, %v4666
      %4668 = vmatprep.mubr.f32.mxu0 %v3376
      %4669 = vmatmul.mubr.f32.gmra.mxu0 %v3375
      %v4670 = vpop.f32.mrf.mxu0
      %v4671 = vadd.f32 %v4436, %v4670
      %v4672 = vpop.f32.mrf.mxu0
      %v4673 = vadd.f32 %v4437, %v4672
      %4674 = vmatprep.mubr.f32.mxu0 %v3381
      %4675 = vmatmul.mubr.f32.gmra.mxu0 %v3380
      %v4676 = vpop.f32.mrf.mxu0
      %v4677 = vadd.f32 %v4438, %v4676
      %v4678 = vpop.f32.mrf.mxu0
      %v4679 = vadd.f32 %v4439, %v4678
      %4680 = vmatprep.mubr.f32.mxu0 %v3386
      %4681 = vmatmul.mubr.f32.gmra.mxu0 %v3385
      %v4682 = vpop.f32.mrf.mxu0
      %v4683 = vadd.f32 %v4440, %v4682
      %v4684 = vpop.f32.mrf.mxu0
      %v4685 = vadd.f32 %v4441, %v4684
      %4686 = vmatprep.mubr.f32.mxu0 %v3391
      %4687 = vmatmul.mubr.f32.gmra.mxu0 %v3390
      %v4688 = vpop.f32.mrf.mxu0
      %v4689 = vadd.f32 %v4442, %v4688
      %v4690 = vpop.f32.mrf.mxu0
      %v4691 = vadd.f32 %v4443, %v4690
      %4692 = vmatprep.mubr.f32.mxu0 %v3396
      %4693 = vmatmul.mubr.f32.gmra.mxu0 %v3395
      %v4694 = vpop.f32.mrf.mxu0
      %v4695 = vadd.f32 %v4444, %v4694
      %v4696 = vpop.f32.mrf.mxu0
      %v4697 = vadd.f32 %v4445, %v4696
      %4698 = vmatprep.mubr.f32.mxu0 %v3401
      %4699 = vmatmul.mubr.f32.gmra.mxu0 %v3400
      %v4700 = vpop.f32.mrf.mxu0
      %v4701 = vadd.f32 %v4446, %v4700
      %v4702 = vpop.f32.mrf.mxu0
      %v4703 = vadd.f32 %v4447, %v4702
      %4704 = vmatprep.mubr.f32.mxu0 %v3406
      %4705 = vmatmul.mubr.f32.gmra.mxu0 %v3405
      %v4706 = vpop.f32.mrf.mxu0
      %v4707 = vadd.f32 %v4448, %v4706
      %v4708 = vpop.f32.mrf.mxu0
      %v4709 = vadd.f32 %v4449, %v4708
      %4710 = vmatprep.mubr.f32.mxu0 %v3411
      %4711 = vmatmul.mubr.f32.gmra.mxu0 %v3410
      %v4712 = vpop.f32.mrf.mxu0
      %v4713 = vadd.f32 %v4450, %v4712
      %v4714 = vpop.f32.mrf.mxu0
      %v4715 = vadd.f32 %v4451, %v4714
      %4716 = vmatprep.mubr.f32.mxu0 %v3416
      %4717 = vmatmul.mubr.f32.gmra.mxu0 %v3415
      %v4718 = vpop.f32.mrf.mxu0
      %v4719 = vadd.f32 %v4452, %v4718
      %v4720 = vpop.f32.mrf.mxu0
      %v4721 = vadd.f32 %v4453, %v4720
      %4722 = vmatprep.mubr.f32.mxu0 %v3421
      %4723 = vmatmul.mubr.f32.gmra.mxu0 %v3420
      %v4724 = vpop.f32.mrf.mxu0
      %v4725 = vadd.f32 %v4454, %v4724
      %v4726 = vpop.f32.mrf.mxu0
      %v4727 = vadd.f32 %v4455, %v4726
      %4728 = vmatprep.mubr.f32.mxu0 %v3426
      %4729 = vmatmul.mubr.f32.gmra.mxu0 %v3425
      %v4730 = vpop.f32.mrf.mxu0
      %v4731 = vadd.f32 %v4456, %v4730
      %v4732 = vpop.f32.mrf.mxu0
      %v4733 = vadd.f32 %v4457, %v4732
      %4734 = vmatprep.mubr.f32.mxu0 %v3431
      %4735 = vmatmul.mubr.f32.gmra.mxu0 %v3430
      %v4736 = vpop.f32.mrf.mxu0
      %v4737 = vadd.f32 %v4458, %v4736
      %v4738 = vpop.f32.mrf.mxu0
      %v4739 = vadd.f32 %v4459, %v4738
      %4740 = vdwg.mxu0
      %4741 = vmatprep.subr.mxu0 %v2900
      %4742 = vmatpush1.msra.mxu0 %v2899
      %4743 = vmatprep.subr.mxu0 %v2898
      %4744 = vmatpush1.msra.mxu0 %v2897
      %4745 = vmatprep.subr.mxu0 %v2896
      %4746 = vmatpush1.msra.mxu0 %v2895
      %4747 = vmatprep.subr.mxu0 %v2894
      %4748 = vmatpush1.msra.mxu0 %v2893
      %4749 = vmatprep.subr.mxu0 %v2892
      %4750 = vmatpush1.msra.mxu0 %v2891
      %4751 = vmatprep.subr.mxu0 %v2890
      %4752 = vmatpush1.msra.mxu0 %v2889
      %4753 = vmatprep.subr.mxu0 %v2888
      %4754 = vmatpush1.msra.mxu0 %v2887
      %4755 = vmatprep.subr.mxu0 %v2886
      %4756 = vmatpush1.msra.mxu0 %v2885
      %4757 = vmatprep.subr.mxu0 %v2884
      %4758 = vmatpush1.msra.mxu0 %v2883
      %4759 = vmatprep.subr.mxu0 %v2882
      %4760 = vmatpush1.msra.mxu0 %v2881
      %4761 = vmatprep.subr.mxu0 %v2880
      %4762 = vmatpush1.msra.mxu0 %v2879
      %4763 = vmatprep.subr.mxu0 %v2878
      %4764 = vmatpush1.msra.mxu0 %v2877
      %4765 = vmatprep.subr.mxu0 %v2876
      %4766 = vmatpush1.msra.mxu0 %v2875
      %4767 = vmatprep.subr.mxu0 %v2874
      %4768 = vmatpush1.msra.mxu0 %v2873
      %4769 = vmatprep.subr.mxu0 %v2872
      %4770 = vmatpush1.msra.mxu0 %v2871
      %4771 = vmatprep.subr.mxu0 %v2870
      %4772 = vmatpush1.msra.mxu0 %v2869
      %4773 = vmatprep.subr.mxu0 %v3297
      %4774 = vmatpush2.msra.mxu0 %v3296
      %4775 = vmatprep.subr.mxu0 %v3295
      %4776 = vmatpush2.msra.mxu0 %v3294
      %4777 = vmatprep.subr.mxu0 %v3293
      %4778 = vmatpush2.msra.mxu0 %v3292
      %4779 = vmatprep.subr.mxu0 %v3291
      %4780 = vmatpush2.msra.mxu0 %v3290
      %4781 = vmatprep.subr.mxu0 %v3289
      %4782 = vmatpush2.msra.mxu0 %v3288
      %4783 = vmatprep.subr.mxu0 %v3287
      %4784 = vmatpush2.msra.mxu0 %v3286
      %4785 = vmatprep.subr.mxu0 %v3285
      %4786 = vmatpush2.msra.mxu0 %v3284
      %4787 = vmatprep.subr.mxu0 %v3283
      %4788 = vmatpush2.msra.mxu0 %v3282
      %4789 = vmatprep.subr.mxu0 %v3281
      %4790 = vmatpush2.msra.mxu0 %v3280
      %4791 = vmatprep.subr.mxu0 %v3279
      %4792 = vmatpush2.msra.mxu0 %v3278
      %4793 = vmatprep.subr.mxu0 %v3277
      %4794 = vmatpush2.msra.mxu0 %v3276
      %4795 = vmatprep.subr.mxu0 %v3275
      %4796 = vmatpush2.msra.mxu0 %v3274
      %4797 = vmatprep.subr.mxu0 %v3273
      %4798 = vmatpush2.msra.mxu0 %v3272
      %4799 = vmatprep.subr.mxu0 %v3271
      %4800 = vmatpush2.msra.mxu0 %v3270
      %4801 = vmatprep.subr.mxu0 %v3269
      %4802 = vmatpush2.msra.mxu0 %v3268
      %4803 = vmatprep.subr.mxu0 %v3267
      %4804 = vmatpush2.msra.mxu0 %v3266
      %4805 = vmatprep.mubr.f32.mxu0 %v3318
      %4806 = vmatmul.mubr.f32.gmra.mxu0 %v3317
      %v4807 = vpop.f32.mrf.mxu0
      %v4808 = vadd.f32 %v4599, %v4807
      %v4809 = vpop.f32.mrf.mxu0
      %v4810 = vadd.f32 %v4601, %v4809
      %4811 = vmatprep.mubr.f32.mxu0 %v3323
      %4812 = vmatmul.mubr.f32.gmra.mxu0 %v3322
      %v4813 = vpop.f32.mrf.mxu0
      %v4814 = vadd.f32 %v4605, %v4813
      %v4815 = vpop.f32.mrf.mxu0
      %v4816 = vadd.f32 %v4607, %v4815
      %4817 = vmatprep.mubr.f32.mxu0 %v3328
      %4818 = vmatmul.mubr.f32.gmra.mxu0 %v3327
      %v4819 = vpop.f32.mrf.mxu0
      %v4820 = vadd.f32 %v4611, %v4819
      %v4821 = vpop.f32.mrf.mxu0
      %v4822 = vadd.f32 %v4613, %v4821
      %4823 = vmatprep.mubr.f32.mxu0 %v3333
      %4824 = vmatmul.mubr.f32.gmra.mxu0 %v3332
      %v4825 = vpop.f32.mrf.mxu0
      %v4826 = vadd.f32 %v4617, %v4825
      %v4827 = vpop.f32.mrf.mxu0
      %v4828 = vadd.f32 %v4619, %v4827
      %4829 = vmatprep.mubr.f32.mxu0 %v3338
      %4830 = vmatmul.mubr.f32.gmra.mxu0 %v3337
      %v4831 = vpop.f32.mrf.mxu0
      %v4832 = vadd.f32 %v4623, %v4831
      %v4833 = vpop.f32.mrf.mxu0
      %v4834 = vadd.f32 %v4625, %v4833
      %4835 = vmatprep.mubr.f32.mxu0 %v3343
      %4836 = vmatmul.mubr.f32.gmra.mxu0 %v3342
      %v4837 = vpop.f32.mrf.mxu0
      %v4838 = vadd.f32 %v4629, %v4837
      %v4839 = vpop.f32.mrf.mxu0
      %v4840 = vadd.f32 %v4631, %v4839
      %4841 = vmatprep.mubr.f32.mxu0 %v3348
      %4842 = vmatmul.mubr.f32.gmra.mxu0 %v3347
      %v4843 = vpop.f32.mrf.mxu0
      %v4844 = vadd.f32 %v4635, %v4843
      %v4845 = vpop.f32.mrf.mxu0
      %v4846 = vadd.f32 %v4637, %v4845
      %4847 = vmatprep.mubr.f32.mxu0 %v3353
      %4848 = vmatmul.mubr.f32.gmra.mxu0 %v3352
      %v4849 = vpop.f32.mrf.mxu0
      %v4850 = vadd.f32 %v4641, %v4849
      %v4851 = vpop.f32.mrf.mxu0
      %v4852 = vadd.f32 %v4643, %v4851
      %4853 = vmatprep.mubr.f32.mxu0 %v3358
      %4854 = vmatmul.mubr.f32.gmra.mxu0 %v3357
      %v4855 = vpop.f32.mrf.mxu0
      %v4856 = vadd.f32 %v4647, %v4855
      %v4857 = vpop.f32.mrf.mxu0
      %v4858 = vadd.f32 %v4649, %v4857
      %4859 = vmatprep.mubr.f32.mxu0 %v3363
      %4860 = vmatmul.mubr.f32.gmra.mxu0 %v3362
      %v4861 = vpop.f32.mrf.mxu0
      %v4862 = vadd.f32 %v4653, %v4861
      %v4863 = vpop.f32.mrf.mxu0
      %v4864 = vadd.f32 %v4655, %v4863
      %4865 = vmatprep.mubr.f32.mxu0 %v3368
      %4866 = vmatmul.mubr.f32.gmra.mxu0 %v3367
      %v4867 = vpop.f32.mrf.mxu0
      %v4868 = vadd.f32 %v4659, %v4867
      %v4869 = vpop.f32.mrf.mxu0
      %v4870 = vadd.f32 %v4661, %v4869
      %4871 = vmatprep.mubr.f32.mxu0 %v3373
      %4872 = vmatmul.mubr.f32.gmra.mxu0 %v3372
      %v4873 = vpop.f32.mrf.mxu0
      %v4874 = vadd.f32 %v4665, %v4873
      %v4875 = vpop.f32.mrf.mxu0
      %v4876 = vadd.f32 %v4667, %v4875
      %4877 = vmatprep.mubr.f32.mxu0 %v3378
      %4878 = vmatmul.mubr.f32.gmra.mxu0 %v3377
      %v4879 = vpop.f32.mrf.mxu0
      %v4880 = vadd.f32 %v4671, %v4879
      %v4881 = vpop.f32.mrf.mxu0
      %v4882 = vadd.f32 %v4673, %v4881
      %4883 = vmatprep.mubr.f32.mxu0 %v3383
      %4884 = vmatmul.mubr.f32.gmra.mxu0 %v3382
      %v4885 = vpop.f32.mrf.mxu0
      %v4886 = vadd.f32 %v4677, %v4885
      %v4887 = vpop.f32.mrf.mxu0
      %v4888 = vadd.f32 %v4679, %v4887
      %4889 = vmatprep.mubr.f32.mxu0 %v3388
      %4890 = vmatmul.mubr.f32.gmra.mxu0 %v3387
      %v4891 = vpop.f32.mrf.mxu0
      %v4892 = vadd.f32 %v4683, %v4891
      %v4893 = vpop.f32.mrf.mxu0
      %v4894 = vadd.f32 %v4685, %v4893
      %4895 = vmatprep.mubr.f32.mxu0 %v3393
      %4896 = vmatmul.mubr.f32.gmra.mxu0 %v3392
      %v4897 = vpop.f32.mrf.mxu0
      %v4898 = vadd.f32 %v4689, %v4897
      %v4899 = vpop.f32.mrf.mxu0
      %v4900 = vadd.f32 %v4691, %v4899
      %4901 = vmatprep.mubr.f32.mxu0 %v3398
      %4902 = vmatmul.mubr.f32.gmra.mxu0 %v3397
      %v4903 = vpop.f32.mrf.mxu0
      %v4904 = vadd.f32 %v4695, %v4903
      %v4905 = vpop.f32.mrf.mxu0
      %v4906 = vadd.f32 %v4697, %v4905
      %4907 = vmatprep.mubr.f32.mxu0 %v3403
      %4908 = vmatmul.mubr.f32.gmra.mxu0 %v3402
      %v4909 = vpop.f32.mrf.mxu0
      %v4910 = vadd.f32 %v4701, %v4909
      %v4911 = vpop.f32.mrf.mxu0
      %v4912 = vadd.f32 %v4703, %v4911
      %4913 = vmatprep.mubr.f32.mxu0 %v3408
      %4914 = vmatmul.mubr.f32.gmra.mxu0 %v3407
      %v4915 = vpop.f32.mrf.mxu0
      %v4916 = vadd.f32 %v4707, %v4915
      %v4917 = vpop.f32.mrf.mxu0
      %v4918 = vadd.f32 %v4709, %v4917
      %4919 = vmatprep.mubr.f32.mxu0 %v3413
      %4920 = vmatmul.mubr.f32.gmra.mxu0 %v3412
      %v4921 = vpop.f32.mrf.mxu0
      %v4922 = vadd.f32 %v4713, %v4921
      %v4923 = vpop.f32.mrf.mxu0
      %v4924 = vadd.f32 %v4715, %v4923
      %4925 = vmatprep.mubr.f32.mxu0 %v3418
      %4926 = vmatmul.mubr.f32.gmra.mxu0 %v3417
      %v4927 = vpop.f32.mrf.mxu0
      %v4928 = vadd.f32 %v4719, %v4927
      %v4929 = vpop.f32.mrf.mxu0
      %v4930 = vadd.f32 %v4721, %v4929
      %4931 = vmatprep.mubr.f32.mxu0 %v3423
      %4932 = vmatmul.mubr.f32.gmra.mxu0 %v3422
      %v4933 = vpop.f32.mrf.mxu0
      %v4934 = vadd.f32 %v4725, %v4933
      %v4935 = vpop.f32.mrf.mxu0
      %v4936 = vadd.f32 %v4727, %v4935
      %4937 = vmatprep.mubr.f32.mxu0 %v3428
      %4938 = vmatmul.mubr.f32.gmra.mxu0 %v3427
      %v4939 = vpop.f32.mrf.mxu0
      %v4940 = vadd.f32 %v4731, %v4939
      %v4941 = vpop.f32.mrf.mxu0
      %v4942 = vadd.f32 %v4733, %v4941
      %4943 = vmatprep.mubr.f32.mxu0 %v3433
      %4944 = vmatmul.mubr.f32.gmra.mxu0 %v3432
      %v4945 = vpop.f32.mrf.mxu0
      %v4946 = vadd.f32 %v4737, %v4945
      %v4947 = vpop.f32.mrf.mxu0
      %v4948 = vadd.f32 %v4739, %v4947
      %4949 = vdwg.mxu0
      %4950 = vmatprep.subr.mxu0 0.0
      %4951 = vmatpush1.msra.mxu0 0.0
      %4952 = vmatprep.subr.mxu0 0.0
      %4953 = vmatpush1.msra.mxu0 0.0
      %4954 = vmatprep.subr.mxu0 0.0
      %4955 = vmatpush1.msra.mxu0 0.0
      %4956 = vmatprep.subr.mxu0 0.0
      %4957 = vmatpush1.msra.mxu0 0.0
      %4958 = vmatprep.subr.mxu0 0.0
      %4959 = vmatpush1.msra.mxu0 0.0
      %4960 = vmatprep.subr.mxu0 0.0
      %4961 = vmatpush1.msra.mxu0 0.0
      %4962 = vmatprep.subr.mxu0 0.0
      %4963 = vmatpush1.msra.mxu0 0.0
      %4964 = vmatprep.subr.mxu0 0.0
      %4965 = vmatpush1.msra.mxu0 0.0
      %4966 = vmatprep.subr.mxu0 %v3313
      %4967 = vmatpush1.msra.mxu0 %v3312
      %4968 = vmatprep.subr.mxu0 %v3311
      %4969 = vmatpush1.msra.mxu0 %v3310
      %4970 = vmatprep.subr.mxu0 %v3309
      %4971 = vmatpush1.msra.mxu0 %v3308
      %4972 = vmatprep.subr.mxu0 %v3307
      %4973 = vmatpush1.msra.mxu0 %v3306
      %4974 = vmatprep.subr.mxu0 %v3305
      %4975 = vmatpush1.msra.mxu0 %v3304
      %4976 = vmatprep.subr.mxu0 %v3303
      %4977 = vmatpush1.msra.mxu0 %v3302
      %4978 = vmatprep.subr.mxu0 %v3301
      %4979 = vmatpush1.msra.mxu0 %v3300
      %4980 = vmatprep.subr.mxu0 %v3299
      %4981 = vmatpush1.msra.mxu0 %v3298
      %4982 = vmatprep.subr.mxu0 0.0
      %4983 = vmatpush2.msra.mxu0 0.0
      %4984 = vmatprep.subr.mxu0 0.0
      %4985 = vmatpush2.msra.mxu0 0.0
      %4986 = vmatprep.subr.mxu0 0.0
      %4987 = vmatpush2.msra.mxu0 0.0
      %4988 = vmatprep.subr.mxu0 0.0
      %4989 = vmatpush2.msra.mxu0 0.0
      %4990 = vmatprep.subr.mxu0 0.0
      %4991 = vmatpush2.msra.mxu0 0.0
      %4992 = vmatprep.subr.mxu0 0.0
      %4993 = vmatpush2.msra.mxu0 0.0
      %4994 = vmatprep.subr.mxu0 0.0
      %4995 = vmatpush2.msra.mxu0 0.0
      %4996 = vmatprep.subr.mxu0 0.0
      %4997 = vmatpush2.msra.mxu0 0.0
      %4998 = vmatprep.subr.mxu0 0.0
      %4999 = vmatpush2.msra.mxu0 0.0
      %5000 = vmatprep.subr.mxu0 0.0
      %5001 = vmatpush2.msra.mxu0 0.0
      %5002 = vmatprep.subr.mxu0 0.0
      %5003 = vmatpush2.msra.mxu0 0.0
      %5004 = vmatprep.subr.mxu0 0.0
      %5005 = vmatpush2.msra.mxu0 0.0
      %5006 = vmatprep.subr.mxu0 0.0
      %5007 = vmatpush2.msra.mxu0 0.0
      %5008 = vmatprep.subr.mxu0 0.0
      %5009 = vmatpush2.msra.mxu0 0.0
      %5010 = vmatprep.subr.mxu0 0.0
      %5011 = vmatpush2.msra.mxu0 0.0
      %5012 = vmatprep.subr.mxu0 0.0
      %5013 = vmatpush2.msra.mxu0 0.0
      %5014 = vmatprep.mubr.f32.mxu0 0.0
      %5015 = vmatmul.mubr.f32.gmra.mxu0 %v4461
      %v5016 = vpop.f32.mrf.mxu0
      %v5017 = vadd.f32 %v4808, %v5016
      %v5018 = vpop.f32.mrf.mxu0
      %v5019 = vadd.f32 %v4810, %v5018
      %5020 = vmatprep.mubr.f32.mxu0 0.0
      %5021 = vmatmul.mubr.f32.gmra.mxu0 %v4464
      %v5022 = vpop.f32.mrf.mxu0
      %v5023 = vadd.f32 %v4814, %v5022
      %v5024 = vpop.f32.mrf.mxu0
      %v5025 = vadd.f32 %v4816, %v5024
      %5026 = vmatprep.mubr.f32.mxu0 0.0
      %5027 = vmatmul.mubr.f32.gmra.mxu0 %v4467
      %v5028 = vpop.f32.mrf.mxu0
      %v5029 = vadd.f32 %v4820, %v5028
      %v5030 = vpop.f32.mrf.mxu0
      %v5031 = vadd.f32 %v4822, %v5030
      %5032 = vmatprep.mubr.f32.mxu0 0.0
      %5033 = vmatmul.mubr.f32.gmra.mxu0 %v4470
      %v5034 = vpop.f32.mrf.mxu0
      %v5035 = vadd.f32 %v4826, %v5034
      %v5036 = vpop.f32.mrf.mxu0
      %v5037 = vadd.f32 %v4828, %v5036
      %5038 = vmatprep.mubr.f32.mxu0 0.0
      %5039 = vmatmul.mubr.f32.gmra.mxu0 %v4473
      %v5040 = vpop.f32.mrf.mxu0
      %v5041 = vadd.f32 %v4832, %v5040
      %v5042 = vpop.f32.mrf.mxu0
      %v5043 = vadd.f32 %v4834, %v5042
      %5044 = vmatprep.mubr.f32.mxu0 0.0
      %5045 = vmatmul.mubr.f32.gmra.mxu0 %v4476
      %v5046 = vpop.f32.mrf.mxu0
      %v5047 = vadd.f32 %v4838, %v5046
      %v5048 = vpop.f32.mrf.mxu0
      %v5049 = vadd.f32 %v4840, %v5048
      %5050 = vmatprep.mubr.f32.mxu0 0.0
      %5051 = vmatmul.mubr.f32.gmra.mxu0 %v4479
      %v5052 = vpop.f32.mrf.mxu0
      %v5053 = vadd.f32 %v4844, %v5052
      %v5054 = vpop.f32.mrf.mxu0
      %v5055 = vadd.f32 %v4846, %v5054
      %5056 = vmatprep.mubr.f32.mxu0 0.0
      %5057 = vmatmul.mubr.f32.gmra.mxu0 %v4482
      %v5058 = vpop.f32.mrf.mxu0
      %v5059 = vadd.f32 %v4850, %v5058
      %v5060 = vpop.f32.mrf.mxu0
      %v5061 = vadd.f32 %v4852, %v5060
      %5062 = vmatprep.mubr.f32.mxu0 0.0
      %5063 = vmatmul.mubr.f32.gmra.mxu0 %v4485
      %v5064 = vpop.f32.mrf.mxu0
      %v5065 = vadd.f32 %v4856, %v5064
      %v5066 = vpop.f32.mrf.mxu0
      %v5067 = vadd.f32 %v4858, %v5066
      %5068 = vmatprep.mubr.f32.mxu0 0.0
      %5069 = vmatmul.mubr.f32.gmra.mxu0 %v4488
      %v5070 = vpop.f32.mrf.mxu0
      %v5071 = vadd.f32 %v4862, %v5070
      %v5072 = vpop.f32.mrf.mxu0
      %v5073 = vadd.f32 %v4864, %v5072
      %5074 = vmatprep.mubr.f32.mxu0 0.0
      %5075 = vmatmul.mubr.f32.gmra.mxu0 %v4491
      %v5076 = vpop.f32.mrf.mxu0
      %v5077 = vadd.f32 %v4868, %v5076
      %v5078 = vpop.f32.mrf.mxu0
      %v5079 = vadd.f32 %v4870, %v5078
      %5080 = vmatprep.mubr.f32.mxu0 0.0
      %5081 = vmatmul.mubr.f32.gmra.mxu0 %v4494
      %v5082 = vpop.f32.mrf.mxu0
      %v5083 = vadd.f32 %v4874, %v5082
      %v5084 = vpop.f32.mrf.mxu0
      %v5085 = vadd.f32 %v4876, %v5084
      %5086 = vmatprep.mubr.f32.mxu0 0.0
      %5087 = vmatmul.mubr.f32.gmra.mxu0 %v4497
      %v5088 = vpop.f32.mrf.mxu0
      %v5089 = vadd.f32 %v4880, %v5088
      %v5090 = vpop.f32.mrf.mxu0
      %v5091 = vadd.f32 %v4882, %v5090
      %5092 = vmatprep.mubr.f32.mxu0 0.0
      %5093 = vmatmul.mubr.f32.gmra.mxu0 %v4500
      %v5094 = vpop.f32.mrf.mxu0
      %v5095 = vadd.f32 %v4886, %v5094
      %v5096 = vpop.f32.mrf.mxu0
      %v5097 = vadd.f32 %v4888, %v5096
      %5098 = vmatprep.mubr.f32.mxu0 0.0
      %5099 = vmatmul.mubr.f32.gmra.mxu0 %v4503
      %v5100 = vpop.f32.mrf.mxu0
      %v5101 = vadd.f32 %v4892, %v5100
      %v5102 = vpop.f32.mrf.mxu0
      %v5103 = vadd.f32 %v4894, %v5102
      %5104 = vmatprep.mubr.f32.mxu0 0.0
      %5105 = vmatmul.mubr.f32.gmra.mxu0 %v4506
      %v5106 = vpop.f32.mrf.mxu0
      %v5107 = vadd.f32 %v4898, %v5106
      %v5108 = vpop.f32.mrf.mxu0
      %v5109 = vadd.f32 %v4900, %v5108
      %5110 = vmatprep.mubr.f32.mxu0 0.0
      %5111 = vmatmul.mubr.f32.gmra.mxu0 %v4509
      %v5112 = vpop.f32.mrf.mxu0
      %v5113 = vadd.f32 %v4904, %v5112
      %v5114 = vpop.f32.mrf.mxu0
      %v5115 = vadd.f32 %v4906, %v5114
      %5116 = vmatprep.mubr.f32.mxu0 0.0
      %5117 = vmatmul.mubr.f32.gmra.mxu0 %v4512
      %v5118 = vpop.f32.mrf.mxu0
      %v5119 = vadd.f32 %v4910, %v5118
      %v5120 = vpop.f32.mrf.mxu0
      %v5121 = vadd.f32 %v4912, %v5120
      %5122 = vmatprep.mubr.f32.mxu0 0.0
      %5123 = vmatmul.mubr.f32.gmra.mxu0 %v4515
      %v5124 = vpop.f32.mrf.mxu0
      %v5125 = vadd.f32 %v4916, %v5124
      %v5126 = vpop.f32.mrf.mxu0
      %v5127 = vadd.f32 %v4918, %v5126
      %5128 = vmatprep.mubr.f32.mxu0 0.0
      %5129 = vmatmul.mubr.f32.gmra.mxu0 %v4518
      %v5130 = vpop.f32.mrf.mxu0
      %v5131 = vadd.f32 %v4922, %v5130
      %v5132 = vpop.f32.mrf.mxu0
      %v5133 = vadd.f32 %v4924, %v5132
      %5134 = vmatprep.mubr.f32.mxu0 0.0
      %5135 = vmatmul.mubr.f32.gmra.mxu0 %v4521
      %v5136 = vpop.f32.mrf.mxu0
      %v5137 = vadd.f32 %v4928, %v5136
      %v5138 = vpop.f32.mrf.mxu0
      %v5139 = vadd.f32 %v4930, %v5138
      %5140 = vmatprep.mubr.f32.mxu0 0.0
      %5141 = vmatmul.mubr.f32.gmra.mxu0 %v4524
      %v5142 = vpop.f32.mrf.mxu0
      %v5143 = vadd.f32 %v4934, %v5142
      %v5144 = vpop.f32.mrf.mxu0
      %v5145 = vadd.f32 %v4936, %v5144
      %5146 = vmatprep.mubr.f32.mxu0 0.0
      %5147 = vmatmul.mubr.f32.gmra.mxu0 %v4527
      %v5148 = vpop.f32.mrf.mxu0
      %v5149 = vadd.f32 %v4940, %v5148
      %v5150 = vpop.f32.mrf.mxu0
      %v5151 = vadd.f32 %v4942, %v5150
      %5152 = vmatprep.mubr.f32.mxu0 0.0
      %5153 = vmatmul.mubr.f32.gmra.mxu0 %v4530
      %v5154 = vpop.f32.mrf.mxu0
      %v5155 = vadd.f32 %v4946, %v5154
      %v5156 = vpop.f32.mrf.mxu0
      %v5157 = vadd.f32 %v4948, %v5156
      %5158 = vdwg.mxu0
      %s5159 = scalar_lea.vmem %s6, 1920
      %v5160 = vld [vmem:[%s5159] sm:$0xff]
      %v5161 = vld [vmem:[%s5159 + $0x8] sm:$0xff]
      %v5162 = vld [vmem:[%s5159 + $0x10] sm:$0xff]
      %v5163 = vld [vmem:[%s5159 + $0x18] sm:$0xff]
      %v5164 = vld [vmem:[%s5159 + $0x20] sm:$0xff]
      %v5165 = vld [vmem:[%s5159 + $0x28] sm:$0xff]
      %v5166 = vld [vmem:[%s5159 + $0x30] sm:$0xff]
      %v5167 = vld [vmem:[%s5159 + $0x38] sm:$0xff]
      %v5168 = vld [vmem:[%s5159 + $0x40] sm:$0xff]
      %v5169 = vld [vmem:[%s5159 + $0x48] sm:$0xff]
      %v5170 = vld [vmem:[%s5159 + $0x50] sm:$0xff]
      %v5171 = vld [vmem:[%s5159 + $0x58] sm:$0xff]
      %v5172 = vld [vmem:[%s5159 + $0x60] sm:$0xff]
      %v5173 = vld [vmem:[%s5159 + $0x68] sm:$0xff]
      %v5174 = vld [vmem:[%s5159 + $0x70] sm:$0xff]
      %v5175 = vld [vmem:[%s5159 + $0x78] sm:$0xff]
      %v5176 = vld [vmem:[%s5159 + $0x80] sm:$0xff]
      %v5177 = vld [vmem:[%s5159 + $0x88] sm:$0xff]
      %v5178 = vld [vmem:[%s5159 + $0x90] sm:$0xff]
      %v5179 = vld [vmem:[%s5159 + $0x98] sm:$0xff]
      %v5180 = vld [vmem:[%s5159 + $0xa0] sm:$0xff]
      %v5181 = vld [vmem:[%s5159 + $0xa8] sm:$0xff]
      %v5182 = vld [vmem:[%s5159 + $0xb0] sm:$0xff]
      %v5183 = vld [vmem:[%s5159 + $0xb8] sm:$0xff]
      %v5184 = vld [vmem:[%s5159 + $0xc0] sm:$0xff]
      %v5185 = vld [vmem:[%s5159 + $0xc8] sm:$0xff]
      %v5186 = vld [vmem:[%s5159 + $0xd0] sm:$0xff]
      %v5187 = vld [vmem:[%s5159 + $0xd8] sm:$0xff]
      %v5188 = vld [vmem:[%s5159 + $0xe0] sm:$0xff]
      %v5189 = vld [vmem:[%s5159 + $0xe8] sm:$0xff]
      %v5190 = vld [vmem:[%s5159 + $0xf0] sm:$0xff]
      %v5191 = vld [vmem:[%s5159 + $0xf8] sm:$0xff]
      %v5192 = vld [vmem:[%s5159 + $0x100] sm:$0xff]
      %v5193 = vld [vmem:[%s5159 + $0x108] sm:$0xff]
      %v5194 = vld [vmem:[%s5159 + $0x110] sm:$0xff]
      %v5195 = vld [vmem:[%s5159 + $0x118] sm:$0xff]
      %v5196 = vld [vmem:[%s5159 + $0x120] sm:$0xff]
      %v5197 = vld [vmem:[%s5159 + $0x128] sm:$0xff]
      %v5198 = vld [vmem:[%s5159 + $0x130] sm:$0xff]
      %v5199 = vld [vmem:[%s5159 + $0x138] sm:$0xff]
      %v5200 = vld [vmem:[%s5159 + $0x140] sm:$0xff]
      %v5201 = vld [vmem:[%s5159 + $0x148] sm:$0xff]
      %v5202 = vld [vmem:[%s5159 + $0x150] sm:$0xff]
      %v5203 = vld [vmem:[%s5159 + $0x158] sm:$0xff]
      %v5204 = vld [vmem:[%s5159 + $0x160] sm:$0xff]
      %v5205 = vld [vmem:[%s5159 + $0x168] sm:$0xff]
      %v5206 = vld [vmem:[%s5159 + $0x170] sm:$0xff]
      %v5207 = vld [vmem:[%s5159 + $0x178] sm:$0xff]
      %v5208 = vld [vmem:[%s5159 + $0x180] sm:$0xff]
      %v5209 = vld [vmem:[%s5159 + $0x188] sm:$0xff]
      %v5210 = vld [vmem:[%s5159 + $0x190] sm:$0xff]
      %v5211 = vld [vmem:[%s5159 + $0x198] sm:$0xff]
      %v5212 = vld [vmem:[%s5159 + $0x1a0] sm:$0xff]
      %v5213 = vld [vmem:[%s5159 + $0x1a8] sm:$0xff]
      %v5214 = vld [vmem:[%s5159 + $0x1b0] sm:$0xff]
      %v5215 = vld [vmem:[%s5159 + $0x1b8] sm:$0xff]
      %v5216 = vld [vmem:[%s5159 + $0x1c0] sm:$0xff]
      %v5217 = vld [vmem:[%s5159 + $0x1c8] sm:$0xff]
      %v5218 = vld [vmem:[%s5159 + $0x1d0] sm:$0xff]
      %v5219 = vld [vmem:[%s5159 + $0x1d8] sm:$0xff]
      %v5220 = vld [vmem:[%s5159 + $0x1e0] sm:$0xff]
      %v5221 = vld [vmem:[%s5159 + $0x1e8] sm:$0xff]
      %v5222 = vld [vmem:[%s5159 + $0x1f0] sm:$0xff]
      %v5223 = vld [vmem:[%s5159 + $0x1f8] sm:$0xff]
      %v5224 = vld [vmem:[%s5159 + $0x200] sm:$0xff]
      %v5225 = vld [vmem:[%s5159 + $0x208] sm:$0xff]
      %v5226 = vld [vmem:[%s5159 + $0x210] sm:$0xff]
      %v5227 = vld [vmem:[%s5159 + $0x218] sm:$0xff]
      %v5228 = vld [vmem:[%s5159 + $0x220] sm:$0xff]
      %v5229 = vld [vmem:[%s5159 + $0x228] sm:$0xff]
      %v5230 = vld [vmem:[%s5159 + $0x230] sm:$0xff]
      %v5231 = vld [vmem:[%s5159 + $0x238] sm:$0xff]
      %v5232 = vld [vmem:[%s5159 + $0x240] sm:$0xff]
      %v5233 = vld [vmem:[%s5159 + $0x248] sm:$0xff]
      %v5234 = vld [vmem:[%s5159 + $0x250] sm:$0xff]
      %v5235 = vld [vmem:[%s5159 + $0x258] sm:$0xff]
      %v5236 = vld [vmem:[%s5159 + $0x260] sm:$0xff]
      %v5237 = vld [vmem:[%s5159 + $0x268] sm:$0xff]
      %v5238 = vld [vmem:[%s5159 + $0x270] sm:$0xff]
      %v5239 = vld [vmem:[%s5159 + $0x278] sm:$0xff]
      %v5240 = vld [vmem:[%s5159 + $0x280] sm:$0xff]
      %v5241 = vld [vmem:[%s5159 + $0x288] sm:$0xff]
      %v5242 = vld [vmem:[%s5159 + $0x290] sm:$0xff]
      %v5243 = vld [vmem:[%s5159 + $0x298] sm:$0xff]
      %v5244 = vld [vmem:[%s5159 + $0x2a0] sm:$0xff]
      %v5245 = vld [vmem:[%s5159 + $0x2a8] sm:$0xff]
      %v5246 = vld [vmem:[%s5159 + $0x2b0] sm:$0xff]
      %v5247 = vld [vmem:[%s5159 + $0x2b8] sm:$0xff]
      %v5248 = vld [vmem:[%s5159 + $0x2c0] sm:$0xff]
      %v5249 = vld [vmem:[%s5159 + $0x2c8] sm:$0xff]
      %v5250 = vld [vmem:[%s5159 + $0x2d0] sm:$0xff]
      %v5251 = vld [vmem:[%s5159 + $0x2d8] sm:$0xff]
      %v5252 = vld [vmem:[%s5159 + $0x2e0] sm:$0xff]
      %v5253 = vld [vmem:[%s5159 + $0x2e8] sm:$0xff]
      %v5254 = vld [vmem:[%s5159 + $0x2f0] sm:$0xff]
      %v5255 = vld [vmem:[%s5159 + $0x2f8] sm:$0xff]
      %v5256 = vld [vmem:[%s5159 + $0x300] sm:$0xff]
      %v5257 = vld [vmem:[%s5159 + $0x308] sm:$0xff]
      %v5258 = vld [vmem:[%s5159 + $0x310] sm:$0xff]
      %v5259 = vld [vmem:[%s5159 + $0x318] sm:$0xff]
      %v5260 = vld [vmem:[%s5159 + $0x320] sm:$0xff]
      %v5261 = vld [vmem:[%s5159 + $0x328] sm:$0xff]
      %v5262 = vld [vmem:[%s5159 + $0x330] sm:$0xff]
      %v5263 = vld [vmem:[%s5159 + $0x338] sm:$0xff]
      %v5264 = vld [vmem:[%s5159 + $0x340] sm:$0xff]
      %v5265 = vld [vmem:[%s5159 + $0x348] sm:$0xff]
      %v5266 = vld [vmem:[%s5159 + $0x350] sm:$0xff]
      %v5267 = vld [vmem:[%s5159 + $0x358] sm:$0xff]
      %v5268 = vld [vmem:[%s5159 + $0x360] sm:$0xff]
      %v5269 = vld [vmem:[%s5159 + $0x368] sm:$0xff]
      %v5270 = vld [vmem:[%s5159 + $0x370] sm:$0xff]
      %v5271 = vld [vmem:[%s5159 + $0x378] sm:$0xff]
      %v5272 = vld [vmem:[%s5159 + $0x380] sm:$0xff]
      %v5273 = vld [vmem:[%s5159 + $0x388] sm:$0xff]
      %v5274 = vld [vmem:[%s5159 + $0x390] sm:$0xff]
      %v5275 = vld [vmem:[%s5159 + $0x398] sm:$0xff]
      %v5276 = vld [vmem:[%s5159 + $0x3a0] sm:$0xff]
      %v5277 = vld [vmem:[%s5159 + $0x3a8] sm:$0xff]
      %v5278 = vld [vmem:[%s5159 + $0x3b0] sm:$0xff]
      %v5279 = vld [vmem:[%s5159 + $0x3b8] sm:$0xff]
      %v5281 = vsel %vm3555, %v5164, 0
      %v5284 = vsel %vm3555, %v5169, 0
      %v5287 = vsel %vm3555, %v5174, 0
      %v5290 = vsel %vm3555, %v5179, 0
      %v5293 = vsel %vm3555, %v5184, 0
      %v5296 = vsel %vm3555, %v5189, 0
      %v5299 = vsel %vm3555, %v5194, 0
      %v5302 = vsel %vm3555, %v5199, 0
      %v5305 = vsel %vm3555, %v5204, 0
      %v5308 = vsel %vm3555, %v5209, 0
      %v5311 = vsel %vm3555, %v5214, 0
      %v5314 = vsel %vm3555, %v5219, 0
      %v5317 = vsel %vm3555, %v5224, 0
      %v5320 = vsel %vm3555, %v5229, 0
      %v5323 = vsel %vm3555, %v5234, 0
      %v5326 = vsel %vm3555, %v5239, 0
      %v5329 = vsel %vm3555, %v5244, 0
      %v5332 = vsel %vm3555, %v5249, 0
      %v5335 = vsel %vm3555, %v5254, 0
      %v5338 = vsel %vm3555, %v5259, 0
      %v5341 = vsel %vm3555, %v5264, 0
      %v5344 = vsel %vm3555, %v5269, 0
      %v5347 = vsel %vm3555, %v5274, 0
      %v5350 = vsel %vm3555, %v5279, 0
      %5352 = vmatprep.subr.mxu0 %v3091
      %5353 = vmatpush1.msra.mxu0 %v3090
      %5354 = vmatprep.subr.mxu0 %v3089
      %5355 = vmatpush1.msra.mxu0 %v3088
      %5356 = vmatprep.subr.mxu0 %v3087
      %5357 = vmatpush1.msra.mxu0 %v3086
      %5358 = vmatprep.subr.mxu0 %v3085
      %5359 = vmatpush1.msra.mxu0 %v3084
      %5360 = vmatprep.subr.mxu0 %v3083
      %5361 = vmatpush1.msra.mxu0 %v3082
      %5362 = vmatprep.subr.mxu0 %v3081
      %5363 = vmatpush1.msra.mxu0 %v3080
      %5364 = vmatprep.subr.mxu0 %v3079
      %5365 = vmatpush1.msra.mxu0 %v3078
      %5366 = vmatprep.subr.mxu0 %v3077
      %5367 = vmatpush1.msra.mxu0 %v3076
      %5368 = vmatprep.subr.mxu0 %v3075
      %5369 = vmatpush1.msra.mxu0 %v3074
      %5370 = vmatprep.subr.mxu0 %v3073
      %5371 = vmatpush1.msra.mxu0 %v3072
      %5372 = vmatprep.subr.mxu0 %v3071
      %5373 = vmatpush1.msra.mxu0 %v3070
      %5374 = vmatprep.subr.mxu0 %v3069
      %5375 = vmatpush1.msra.mxu0 %v3068
      %5376 = vmatprep.subr.mxu0 %v3067
      %5377 = vmatpush1.msra.mxu0 %v3066
      %5378 = vmatprep.subr.mxu0 %v3065
      %5379 = vmatpush1.msra.mxu0 %v3064
      %5380 = vmatprep.subr.mxu0 %v3063
      %5381 = vmatpush1.msra.mxu0 %v3062
      %5382 = vmatprep.subr.mxu0 %v3061
      %5383 = vmatpush1.msra.mxu0 %v3060
      %5384 = vmatprep.subr.mxu0 %v2868
      %5385 = vmatpush2.msra.mxu0 %v2867
      %5386 = vmatprep.subr.mxu0 %v2866
      %5387 = vmatpush2.msra.mxu0 %v2865
      %5388 = vmatprep.subr.mxu0 %v2864
      %5389 = vmatpush2.msra.mxu0 %v2863
      %5390 = vmatprep.subr.mxu0 %v2862
      %5391 = vmatpush2.msra.mxu0 %v2861
      %5392 = vmatprep.subr.mxu0 %v2860
      %5393 = vmatpush2.msra.mxu0 %v2859
      %5394 = vmatprep.subr.mxu0 %v2858
      %5395 = vmatpush2.msra.mxu0 %v2857
      %5396 = vmatprep.subr.mxu0 %v2856
      %5397 = vmatpush2.msra.mxu0 %v2855
      %5398 = vmatprep.subr.mxu0 %v2854
      %5399 = vmatpush2.msra.mxu0 %v2853
      %5400 = vmatprep.subr.mxu0 %v3107
      %5401 = vmatpush2.msra.mxu0 %v3106
      %5402 = vmatprep.subr.mxu0 %v3105
      %5403 = vmatpush2.msra.mxu0 %v3104
      %5404 = vmatprep.subr.mxu0 %v3103
      %5405 = vmatpush2.msra.mxu0 %v3102
      %5406 = vmatprep.subr.mxu0 %v3101
      %5407 = vmatpush2.msra.mxu0 %v3100
      %5408 = vmatprep.subr.mxu0 %v3099
      %5409 = vmatpush2.msra.mxu0 %v3098
      %5410 = vmatprep.subr.mxu0 %v3097
      %5411 = vmatpush2.msra.mxu0 %v3096
      %5412 = vmatprep.subr.mxu0 %v3095
      %5413 = vmatpush2.msra.mxu0 %v3094
      %5414 = vmatprep.subr.mxu0 %v3093
      %5415 = vmatpush2.msra.mxu0 %v3092
      %5416 = vmatprep.mubr.f32.mxu0 %v5161
      %5417 = vmatmul.mubr.f32.gmra.mxu0 %v5160
      %v5418 = vpop.f32.mrf.mxu0
      %v5419 = vadd.f32 0.0, %v5418
      %v5420 = vpop.f32.mrf.mxu0
      %v5421 = vadd.f32 0.0, %v5420
      %5422 = vmatprep.mubr.f32.mxu0 %v5166
      %5423 = vmatmul.mubr.f32.gmra.mxu0 %v5165
      %v5424 = vpop.f32.mrf.mxu0
      %v5425 = vadd.f32 0.0, %v5424
      %v5426 = vpop.f32.mrf.mxu0
      %v5427 = vadd.f32 0.0, %v5426
      %5428 = vmatprep.mubr.f32.mxu0 %v5171
      %5429 = vmatmul.mubr.f32.gmra.mxu0 %v5170
      %v5430 = vpop.f32.mrf.mxu0
      %v5431 = vadd.f32 0.0, %v5430
      %v5432 = vpop.f32.mrf.mxu0
      %v5433 = vadd.f32 0.0, %v5432
      %5434 = vmatprep.mubr.f32.mxu0 %v5176
      %5435 = vmatmul.mubr.f32.gmra.mxu0 %v5175
      %v5436 = vpop.f32.mrf.mxu0
      %v5437 = vadd.f32 0.0, %v5436
      %v5438 = vpop.f32.mrf.mxu0
      %v5439 = vadd.f32 0.0, %v5438
      %5440 = vmatprep.mubr.f32.mxu0 %v5181
      %5441 = vmatmul.mubr.f32.gmra.mxu0 %v5180
      %v5442 = vpop.f32.mrf.mxu0
      %v5443 = vadd.f32 0.0, %v5442
      %v5444 = vpop.f32.mrf.mxu0
      %v5445 = vadd.f32 0.0, %v5444
      %5446 = vmatprep.mubr.f32.mxu0 %v5186
      %5447 = vmatmul.mubr.f32.gmra.mxu0 %v5185
      %v5448 = vpop.f32.mrf.mxu0
      %v5449 = vadd.f32 0.0, %v5448
      %v5450 = vpop.f32.mrf.mxu0
      %v5451 = vadd.f32 0.0, %v5450
      %5452 = vmatprep.mubr.f32.mxu0 %v5191
      %5453 = vmatmul.mubr.f32.gmra.mxu0 %v5190
      %v5454 = vpop.f32.mrf.mxu0
      %v5455 = vadd.f32 0.0, %v5454
      %v5456 = vpop.f32.mrf.mxu0
      %v5457 = vadd.f32 0.0, %v5456
      %5458 = vmatprep.mubr.f32.mxu0 %v5196
      %5459 = vmatmul.mubr.f32.gmra.mxu0 %v5195
      %v5460 = vpop.f32.mrf.mxu0
      %v5461 = vadd.f32 0.0, %v5460
      %v5462 = vpop.f32.mrf.mxu0
      %v5463 = vadd.f32 0.0, %v5462
      %5464 = vmatprep.mubr.f32.mxu0 %v5201
      %5465 = vmatmul.mubr.f32.gmra.mxu0 %v5200
      %v5466 = vpop.f32.mrf.mxu0
      %v5467 = vadd.f32 0.0, %v5466
      %v5468 = vpop.f32.mrf.mxu0
      %v5469 = vadd.f32 0.0, %v5468
      %5470 = vmatprep.mubr.f32.mxu0 %v5206
      %5471 = vmatmul.mubr.f32.gmra.mxu0 %v5205
      %v5472 = vpop.f32.mrf.mxu0
      %v5473 = vadd.f32 0.0, %v5472
      %v5474 = vpop.f32.mrf.mxu0
      %v5475 = vadd.f32 0.0, %v5474
      %5476 = vmatprep.mubr.f32.mxu0 %v5211
      %5477 = vmatmul.mubr.f32.gmra.mxu0 %v5210
      %v5478 = vpop.f32.mrf.mxu0
      %v5479 = vadd.f32 0.0, %v5478
      %v5480 = vpop.f32.mrf.mxu0
      %v5481 = vadd.f32 0.0, %v5480
      %5482 = vmatprep.mubr.f32.mxu0 %v5216
      %5483 = vmatmul.mubr.f32.gmra.mxu0 %v5215
      %v5484 = vpop.f32.mrf.mxu0
      %v5485 = vadd.f32 0.0, %v5484
      %v5486 = vpop.f32.mrf.mxu0
      %v5487 = vadd.f32 0.0, %v5486
      %5488 = vmatprep.mubr.f32.mxu0 %v5221
      %5489 = vmatmul.mubr.f32.gmra.mxu0 %v5220
      %v5490 = vpop.f32.mrf.mxu0
      %v5491 = vadd.f32 0.0, %v5490
      %v5492 = vpop.f32.mrf.mxu0
      %v5493 = vadd.f32 0.0, %v5492
      %5494 = vmatprep.mubr.f32.mxu0 %v5226
      %5495 = vmatmul.mubr.f32.gmra.mxu0 %v5225
      %v5496 = vpop.f32.mrf.mxu0
      %v5497 = vadd.f32 0.0, %v5496
      %v5498 = vpop.f32.mrf.mxu0
      %v5499 = vadd.f32 0.0, %v5498
      %5500 = vmatprep.mubr.f32.mxu0 %v5231
      %5501 = vmatmul.mubr.f32.gmra.mxu0 %v5230
      %v5502 = vpop.f32.mrf.mxu0
      %v5503 = vadd.f32 0.0, %v5502
      %v5504 = vpop.f32.mrf.mxu0
      %v5505 = vadd.f32 0.0, %v5504
      %5506 = vmatprep.mubr.f32.mxu0 %v5236
      %5507 = vmatmul.mubr.f32.gmra.mxu0 %v5235
      %v5508 = vpop.f32.mrf.mxu0
      %v5509 = vadd.f32 0.0, %v5508
      %v5510 = vpop.f32.mrf.mxu0
      %v5511 = vadd.f32 0.0, %v5510
      %5512 = vmatprep.mubr.f32.mxu0 %v5241
      %5513 = vmatmul.mubr.f32.gmra.mxu0 %v5240
      %v5514 = vpop.f32.mrf.mxu0
      %v5515 = vadd.f32 0.0, %v5514
      %v5516 = vpop.f32.mrf.mxu0
      %v5517 = vadd.f32 0.0, %v5516
      %5518 = vmatprep.mubr.f32.mxu0 %v5246
      %5519 = vmatmul.mubr.f32.gmra.mxu0 %v5245
      %v5520 = vpop.f32.mrf.mxu0
      %v5521 = vadd.f32 0.0, %v5520
      %v5522 = vpop.f32.mrf.mxu0
      %v5523 = vadd.f32 0.0, %v5522
      %5524 = vmatprep.mubr.f32.mxu0 %v5251
      %5525 = vmatmul.mubr.f32.gmra.mxu0 %v5250
      %v5526 = vpop.f32.mrf.mxu0
      %v5527 = vadd.f32 0.0, %v5526
      %v5528 = vpop.f32.mrf.mxu0
      %v5529 = vadd.f32 0.0, %v5528
      %5530 = vmatprep.mubr.f32.mxu0 %v5256
      %5531 = vmatmul.mubr.f32.gmra.mxu0 %v5255
      %v5532 = vpop.f32.mrf.mxu0
      %v5533 = vadd.f32 0.0, %v5532
      %v5534 = vpop.f32.mrf.mxu0
      %v5535 = vadd.f32 0.0, %v5534
      %5536 = vmatprep.mubr.f32.mxu0 %v5261
      %5537 = vmatmul.mubr.f32.gmra.mxu0 %v5260
      %v5538 = vpop.f32.mrf.mxu0
      %v5539 = vadd.f32 0.0, %v5538
      %v5540 = vpop.f32.mrf.mxu0
      %v5541 = vadd.f32 0.0, %v5540
      %5542 = vmatprep.mubr.f32.mxu0 %v5266
      %5543 = vmatmul.mubr.f32.gmra.mxu0 %v5265
      %v5544 = vpop.f32.mrf.mxu0
      %v5545 = vadd.f32 0.0, %v5544
      %v5546 = vpop.f32.mrf.mxu0
      %v5547 = vadd.f32 0.0, %v5546
      %5548 = vmatprep.mubr.f32.mxu0 %v5271
      %5549 = vmatmul.mubr.f32.gmra.mxu0 %v5270
      %v5550 = vpop.f32.mrf.mxu0
      %v5551 = vadd.f32 0.0, %v5550
      %v5552 = vpop.f32.mrf.mxu0
      %v5553 = vadd.f32 0.0, %v5552
      %5554 = vmatprep.mubr.f32.mxu0 %v5276
      %5555 = vmatmul.mubr.f32.gmra.mxu0 %v5275
      %v5556 = vpop.f32.mrf.mxu0
      %v5557 = vadd.f32 0.0, %v5556
      %v5558 = vpop.f32.mrf.mxu0
      %v5559 = vadd.f32 0.0, %v5558
      %5560 = vdwg.mxu0
      %5561 = vmatprep.subr.mxu0 %v2900
      %5562 = vmatpush1.msra.mxu0 %v2899
      %5563 = vmatprep.subr.mxu0 %v2898
      %5564 = vmatpush1.msra.mxu0 %v2897
      %5565 = vmatprep.subr.mxu0 %v2896
      %5566 = vmatpush1.msra.mxu0 %v2895
      %5567 = vmatprep.subr.mxu0 %v2894
      %5568 = vmatpush1.msra.mxu0 %v2893
      %5569 = vmatprep.subr.mxu0 %v2892
      %5570 = vmatpush1.msra.mxu0 %v2891
      %5571 = vmatprep.subr.mxu0 %v2890
      %5572 = vmatpush1.msra.mxu0 %v2889
      %5573 = vmatprep.subr.mxu0 %v2888
      %5574 = vmatpush1.msra.mxu0 %v2887
      %5575 = vmatprep.subr.mxu0 %v2886
      %5576 = vmatpush1.msra.mxu0 %v2885
      %5577 = vmatprep.subr.mxu0 %v2884
      %5578 = vmatpush1.msra.mxu0 %v2883
      %5579 = vmatprep.subr.mxu0 %v2882
      %5580 = vmatpush1.msra.mxu0 %v2881
      %5581 = vmatprep.subr.mxu0 %v2880
      %5582 = vmatpush1.msra.mxu0 %v2879
      %5583 = vmatprep.subr.mxu0 %v2878
      %5584 = vmatpush1.msra.mxu0 %v2877
      %5585 = vmatprep.subr.mxu0 %v2876
      %5586 = vmatpush1.msra.mxu0 %v2875
      %5587 = vmatprep.subr.mxu0 %v2874
      %5588 = vmatpush1.msra.mxu0 %v2873
      %5589 = vmatprep.subr.mxu0 %v2872
      %5590 = vmatpush1.msra.mxu0 %v2871
      %5591 = vmatprep.subr.mxu0 %v2870
      %5592 = vmatpush1.msra.mxu0 %v2869
      %5593 = vmatprep.subr.mxu0 %v3297
      %5594 = vmatpush2.msra.mxu0 %v3296
      %5595 = vmatprep.subr.mxu0 %v3295
      %5596 = vmatpush2.msra.mxu0 %v3294
      %5597 = vmatprep.subr.mxu0 %v3293
      %5598 = vmatpush2.msra.mxu0 %v3292
      %5599 = vmatprep.subr.mxu0 %v3291
      %5600 = vmatpush2.msra.mxu0 %v3290
      %5601 = vmatprep.subr.mxu0 %v3289
      %5602 = vmatpush2.msra.mxu0 %v3288
      %5603 = vmatprep.subr.mxu0 %v3287
      %5604 = vmatpush2.msra.mxu0 %v3286
      %5605 = vmatprep.subr.mxu0 %v3285
      %5606 = vmatpush2.msra.mxu0 %v3284
      %5607 = vmatprep.subr.mxu0 %v3283
      %5608 = vmatpush2.msra.mxu0 %v3282
      %5609 = vmatprep.subr.mxu0 %v3281
      %5610 = vmatpush2.msra.mxu0 %v3280
      %5611 = vmatprep.subr.mxu0 %v3279
      %5612 = vmatpush2.msra.mxu0 %v3278
      %5613 = vmatprep.subr.mxu0 %v3277
      %5614 = vmatpush2.msra.mxu0 %v3276
      %5615 = vmatprep.subr.mxu0 %v3275
      %5616 = vmatpush2.msra.mxu0 %v3274
      %5617 = vmatprep.subr.mxu0 %v3273
      %5618 = vmatpush2.msra.mxu0 %v3272
      %5619 = vmatprep.subr.mxu0 %v3271
      %5620 = vmatpush2.msra.mxu0 %v3270
      %5621 = vmatprep.subr.mxu0 %v3269
      %5622 = vmatpush2.msra.mxu0 %v3268
      %5623 = vmatprep.subr.mxu0 %v3267
      %5624 = vmatpush2.msra.mxu0 %v3266
      %5625 = vmatprep.mubr.f32.mxu0 %v5163
      %5626 = vmatmul.mubr.f32.gmra.mxu0 %v5162
      %v5627 = vpop.f32.mrf.mxu0
      %v5628 = vadd.f32 %v5419, %v5627
      %v5629 = vpop.f32.mrf.mxu0
      %v5630 = vadd.f32 %v5421, %v5629
      %5631 = vmatprep.mubr.f32.mxu0 %v5168
      %5632 = vmatmul.mubr.f32.gmra.mxu0 %v5167
      %v5633 = vpop.f32.mrf.mxu0
      %v5634 = vadd.f32 %v5425, %v5633
      %v5635 = vpop.f32.mrf.mxu0
      %v5636 = vadd.f32 %v5427, %v5635
      %5637 = vmatprep.mubr.f32.mxu0 %v5173
      %5638 = vmatmul.mubr.f32.gmra.mxu0 %v5172
      %v5639 = vpop.f32.mrf.mxu0
      %v5640 = vadd.f32 %v5431, %v5639
      %v5641 = vpop.f32.mrf.mxu0
      %v5642 = vadd.f32 %v5433, %v5641
      %5643 = vmatprep.mubr.f32.mxu0 %v5178
      %5644 = vmatmul.mubr.f32.gmra.mxu0 %v5177
      %v5645 = vpop.f32.mrf.mxu0
      %v5646 = vadd.f32 %v5437, %v5645
      %v5647 = vpop.f32.mrf.mxu0
      %v5648 = vadd.f32 %v5439, %v5647
      %5649 = vmatprep.mubr.f32.mxu0 %v5183
      %5650 = vmatmul.mubr.f32.gmra.mxu0 %v5182
      %v5651 = vpop.f32.mrf.mxu0
      %v5652 = vadd.f32 %v5443, %v5651
      %v5653 = vpop.f32.mrf.mxu0
      %v5654 = vadd.f32 %v5445, %v5653
      %5655 = vmatprep.mubr.f32.mxu0 %v5188
      %5656 = vmatmul.mubr.f32.gmra.mxu0 %v5187
      %v5657 = vpop.f32.mrf.mxu0
      %v5658 = vadd.f32 %v5449, %v5657
      %v5659 = vpop.f32.mrf.mxu0
      %v5660 = vadd.f32 %v5451, %v5659
      %5661 = vmatprep.mubr.f32.mxu0 %v5193
      %5662 = vmatmul.mubr.f32.gmra.mxu0 %v5192
      %v5663 = vpop.f32.mrf.mxu0
      %v5664 = vadd.f32 %v5455, %v5663
      %v5665 = vpop.f32.mrf.mxu0
      %v5666 = vadd.f32 %v5457, %v5665
      %5667 = vmatprep.mubr.f32.mxu0 %v5198
      %5668 = vmatmul.mubr.f32.gmra.mxu0 %v5197
      %v5669 = vpop.f32.mrf.mxu0
      %v5670 = vadd.f32 %v5461, %v5669
      %v5671 = vpop.f32.mrf.mxu0
      %v5672 = vadd.f32 %v5463, %v5671
      %5673 = vmatprep.mubr.f32.mxu0 %v5203
      %5674 = vmatmul.mubr.f32.gmra.mxu0 %v5202
      %v5675 = vpop.f32.mrf.mxu0
      %v5676 = vadd.f32 %v5467, %v5675
      %v5677 = vpop.f32.mrf.mxu0
      %v5678 = vadd.f32 %v5469, %v5677
      %5679 = vmatprep.mubr.f32.mxu0 %v5208
      %5680 = vmatmul.mubr.f32.gmra.mxu0 %v5207
      %v5681 = vpop.f32.mrf.mxu0
      %v5682 = vadd.f32 %v5473, %v5681
      %v5683 = vpop.f32.mrf.mxu0
      %v5684 = vadd.f32 %v5475, %v5683
      %5685 = vmatprep.mubr.f32.mxu0 %v5213
      %5686 = vmatmul.mubr.f32.gmra.mxu0 %v5212
      %v5687 = vpop.f32.mrf.mxu0
      %v5688 = vadd.f32 %v5479, %v5687
      %v5689 = vpop.f32.mrf.mxu0
      %v5690 = vadd.f32 %v5481, %v5689
      %5691 = vmatprep.mubr.f32.mxu0 %v5218
      %5692 = vmatmul.mubr.f32.gmra.mxu0 %v5217
      %v5693 = vpop.f32.mrf.mxu0
      %v5694 = vadd.f32 %v5485, %v5693
      %v5695 = vpop.f32.mrf.mxu0
      %v5696 = vadd.f32 %v5487, %v5695
      %5697 = vmatprep.mubr.f32.mxu0 %v5223
      %5698 = vmatmul.mubr.f32.gmra.mxu0 %v5222
      %v5699 = vpop.f32.mrf.mxu0
      %v5700 = vadd.f32 %v5491, %v5699
      %v5701 = vpop.f32.mrf.mxu0
      %v5702 = vadd.f32 %v5493, %v5701
      %5703 = vmatprep.mubr.f32.mxu0 %v5228
      %5704 = vmatmul.mubr.f32.gmra.mxu0 %v5227
      %v5705 = vpop.f32.mrf.mxu0
      %v5706 = vadd.f32 %v5497, %v5705
      %v5707 = vpop.f32.mrf.mxu0
      %v5708 = vadd.f32 %v5499, %v5707
      %5709 = vmatprep.mubr.f32.mxu0 %v5233
      %5710 = vmatmul.mubr.f32.gmra.mxu0 %v5232
      %v5711 = vpop.f32.mrf.mxu0
      %v5712 = vadd.f32 %v5503, %v5711
      %v5713 = vpop.f32.mrf.mxu0
      %v5714 = vadd.f32 %v5505, %v5713
      %5715 = vmatprep.mubr.f32.mxu0 %v5238
      %5716 = vmatmul.mubr.f32.gmra.mxu0 %v5237
      %v5717 = vpop.f32.mrf.mxu0
      %v5718 = vadd.f32 %v5509, %v5717
      %v5719 = vpop.f32.mrf.mxu0
      %v5720 = vadd.f32 %v5511, %v5719
      %5721 = vmatprep.mubr.f32.mxu0 %v5243
      %5722 = vmatmul.mubr.f32.gmra.mxu0 %v5242
      %v5723 = vpop.f32.mrf.mxu0
      %v5724 = vadd.f32 %v5515, %v5723
      %v5725 = vpop.f32.mrf.mxu0
      %v5726 = vadd.f32 %v5517, %v5725
      %5727 = vmatprep.mubr.f32.mxu0 %v5248
      %5728 = vmatmul.mubr.f32.gmra.mxu0 %v5247
      %v5729 = vpop.f32.mrf.mxu0
      %v5730 = vadd.f32 %v5521, %v5729
      %v5731 = vpop.f32.mrf.mxu0
      %v5732 = vadd.f32 %v5523, %v5731
      %5733 = vmatprep.mubr.f32.mxu0 %v5253
      %5734 = vmatmul.mubr.f32.gmra.mxu0 %v5252
      %v5735 = vpop.f32.mrf.mxu0
      %v5736 = vadd.f32 %v5527, %v5735
      %v5737 = vpop.f32.mrf.mxu0
      %v5738 = vadd.f32 %v5529, %v5737
      %5739 = vmatprep.mubr.f32.mxu0 %v5258
      %5740 = vmatmul.mubr.f32.gmra.mxu0 %v5257
      %v5741 = vpop.f32.mrf.mxu0
      %v5742 = vadd.f32 %v5533, %v5741
      %v5743 = vpop.f32.mrf.mxu0
      %v5744 = vadd.f32 %v5535, %v5743
      %5745 = vmatprep.mubr.f32.mxu0 %v5263
      %5746 = vmatmul.mubr.f32.gmra.mxu0 %v5262
      %v5747 = vpop.f32.mrf.mxu0
      %v5748 = vadd.f32 %v5539, %v5747
      %v5749 = vpop.f32.mrf.mxu0
      %v5750 = vadd.f32 %v5541, %v5749
      %5751 = vmatprep.mubr.f32.mxu0 %v5268
      %5752 = vmatmul.mubr.f32.gmra.mxu0 %v5267
      %v5753 = vpop.f32.mrf.mxu0
      %v5754 = vadd.f32 %v5545, %v5753
      %v5755 = vpop.f32.mrf.mxu0
      %v5756 = vadd.f32 %v5547, %v5755
      %5757 = vmatprep.mubr.f32.mxu0 %v5273
      %5758 = vmatmul.mubr.f32.gmra.mxu0 %v5272
      %v5759 = vpop.f32.mrf.mxu0
      %v5760 = vadd.f32 %v5551, %v5759
      %v5761 = vpop.f32.mrf.mxu0
      %v5762 = vadd.f32 %v5553, %v5761
      %5763 = vmatprep.mubr.f32.mxu0 %v5278
      %5764 = vmatmul.mubr.f32.gmra.mxu0 %v5277
      %v5765 = vpop.f32.mrf.mxu0
      %v5766 = vadd.f32 %v5557, %v5765
      %v5767 = vpop.f32.mrf.mxu0
      %v5768 = vadd.f32 %v5559, %v5767
      %5769 = vdwg.mxu0
      %5770 = vmatprep.subr.mxu0 0.0
      %5771 = vmatpush1.msra.mxu0 0.0
      %5772 = vmatprep.subr.mxu0 0.0
      %5773 = vmatpush1.msra.mxu0 0.0
      %5774 = vmatprep.subr.mxu0 0.0
      %5775 = vmatpush1.msra.mxu0 0.0
      %5776 = vmatprep.subr.mxu0 0.0
      %5777 = vmatpush1.msra.mxu0 0.0
      %5778 = vmatprep.subr.mxu0 0.0
      %5779 = vmatpush1.msra.mxu0 0.0
      %5780 = vmatprep.subr.mxu0 0.0
      %5781 = vmatpush1.msra.mxu0 0.0
      %5782 = vmatprep.subr.mxu0 0.0
      %5783 = vmatpush1.msra.mxu0 0.0
      %5784 = vmatprep.subr.mxu0 0.0
      %5785 = vmatpush1.msra.mxu0 0.0
      %5786 = vmatprep.subr.mxu0 %v3313
      %5787 = vmatpush1.msra.mxu0 %v3312
      %5788 = vmatprep.subr.mxu0 %v3311
      %5789 = vmatpush1.msra.mxu0 %v3310
      %5790 = vmatprep.subr.mxu0 %v3309
      %5791 = vmatpush1.msra.mxu0 %v3308
      %5792 = vmatprep.subr.mxu0 %v3307
      %5793 = vmatpush1.msra.mxu0 %v3306
      %5794 = vmatprep.subr.mxu0 %v3305
      %5795 = vmatpush1.msra.mxu0 %v3304
      %5796 = vmatprep.subr.mxu0 %v3303
      %5797 = vmatpush1.msra.mxu0 %v3302
      %5798 = vmatprep.subr.mxu0 %v3301
      %5799 = vmatpush1.msra.mxu0 %v3300
      %5800 = vmatprep.subr.mxu0 %v3299
      %5801 = vmatpush1.msra.mxu0 %v3298
      %5802 = vmatprep.subr.mxu0 0.0
      %5803 = vmatpush2.msra.mxu0 0.0
      %5804 = vmatprep.subr.mxu0 0.0
      %5805 = vmatpush2.msra.mxu0 0.0
      %5806 = vmatprep.subr.mxu0 0.0
      %5807 = vmatpush2.msra.mxu0 0.0
      %5808 = vmatprep.subr.mxu0 0.0
      %5809 = vmatpush2.msra.mxu0 0.0
      %5810 = vmatprep.subr.mxu0 0.0
      %5811 = vmatpush2.msra.mxu0 0.0
      %5812 = vmatprep.subr.mxu0 0.0
      %5813 = vmatpush2.msra.mxu0 0.0
      %5814 = vmatprep.subr.mxu0 0.0
      %5815 = vmatpush2.msra.mxu0 0.0
      %5816 = vmatprep.subr.mxu0 0.0
      %5817 = vmatpush2.msra.mxu0 0.0
      %5818 = vmatprep.subr.mxu0 0.0
      %5819 = vmatpush2.msra.mxu0 0.0
      %5820 = vmatprep.subr.mxu0 0.0
      %5821 = vmatpush2.msra.mxu0 0.0
      %5822 = vmatprep.subr.mxu0 0.0
      %5823 = vmatpush2.msra.mxu0 0.0
      %5824 = vmatprep.subr.mxu0 0.0
      %5825 = vmatpush2.msra.mxu0 0.0
      %5826 = vmatprep.subr.mxu0 0.0
      %5827 = vmatpush2.msra.mxu0 0.0
      %5828 = vmatprep.subr.mxu0 0.0
      %5829 = vmatpush2.msra.mxu0 0.0
      %5830 = vmatprep.subr.mxu0 0.0
      %5831 = vmatpush2.msra.mxu0 0.0
      %5832 = vmatprep.subr.mxu0 0.0
      %5833 = vmatpush2.msra.mxu0 0.0
      %5834 = vmatprep.mubr.f32.mxu0 0.0
      %5835 = vmatmul.mubr.f32.gmra.mxu0 %v5281
      %v5836 = vpop.f32.mrf.mxu0
      %v5837 = vadd.f32 %v5628, %v5836
      %v5838 = vpop.f32.mrf.mxu0
      %v5839 = vadd.f32 %v5630, %v5838
      %5840 = vmatprep.mubr.f32.mxu0 0.0
      %5841 = vmatmul.mubr.f32.gmra.mxu0 %v5284
      %v5842 = vpop.f32.mrf.mxu0
      %v5843 = vadd.f32 %v5634, %v5842
      %v5844 = vpop.f32.mrf.mxu0
      %v5845 = vadd.f32 %v5636, %v5844
      %5846 = vmatprep.mubr.f32.mxu0 0.0
      %5847 = vmatmul.mubr.f32.gmra.mxu0 %v5287
      %v5848 = vpop.f32.mrf.mxu0
      %v5849 = vadd.f32 %v5640, %v5848
      %v5850 = vpop.f32.mrf.mxu0
      %v5851 = vadd.f32 %v5642, %v5850
      %5852 = vmatprep.mubr.f32.mxu0 0.0
      %5853 = vmatmul.mubr.f32.gmra.mxu0 %v5290
      %v5854 = vpop.f32.mrf.mxu0
      %v5855 = vadd.f32 %v5646, %v5854
      %v5856 = vpop.f32.mrf.mxu0
      %v5857 = vadd.f32 %v5648, %v5856
      %5858 = vmatprep.mubr.f32.mxu0 0.0
      %5859 = vmatmul.mubr.f32.gmra.mxu0 %v5293
      %v5860 = vpop.f32.mrf.mxu0
      %v5861 = vadd.f32 %v5652, %v5860
      %v5862 = vpop.f32.mrf.mxu0
      %v5863 = vadd.f32 %v5654, %v5862
      %5864 = vmatprep.mubr.f32.mxu0 0.0
      %5865 = vmatmul.mubr.f32.gmra.mxu0 %v5296
      %v5866 = vpop.f32.mrf.mxu0
      %v5867 = vadd.f32 %v5658, %v5866
      %v5868 = vpop.f32.mrf.mxu0
      %v5869 = vadd.f32 %v5660, %v5868
      %5870 = vmatprep.mubr.f32.mxu0 0.0
      %5871 = vmatmul.mubr.f32.gmra.mxu0 %v5299
      %v5872 = vpop.f32.mrf.mxu0
      %v5873 = vadd.f32 %v5664, %v5872
      %v5874 = vpop.f32.mrf.mxu0
      %v5875 = vadd.f32 %v5666, %v5874
      %5876 = vmatprep.mubr.f32.mxu0 0.0
      %5877 = vmatmul.mubr.f32.gmra.mxu0 %v5302
      %v5878 = vpop.f32.mrf.mxu0
      %v5879 = vadd.f32 %v5670, %v5878
      %v5880 = vpop.f32.mrf.mxu0
      %v5881 = vadd.f32 %v5672, %v5880
      %5882 = vmatprep.mubr.f32.mxu0 0.0
      %5883 = vmatmul.mubr.f32.gmra.mxu0 %v5305
      %v5884 = vpop.f32.mrf.mxu0
      %v5885 = vadd.f32 %v5676, %v5884
      %v5886 = vpop.f32.mrf.mxu0
      %v5887 = vadd.f32 %v5678, %v5886
      %5888 = vmatprep.mubr.f32.mxu0 0.0
      %5889 = vmatmul.mubr.f32.gmra.mxu0 %v5308
      %v5890 = vpop.f32.mrf.mxu0
      %v5891 = vadd.f32 %v5682, %v5890
      %v5892 = vpop.f32.mrf.mxu0
      %v5893 = vadd.f32 %v5684, %v5892
      %5894 = vmatprep.mubr.f32.mxu0 0.0
      %5895 = vmatmul.mubr.f32.gmra.mxu0 %v5311
      %v5896 = vpop.f32.mrf.mxu0
      %v5897 = vadd.f32 %v5688, %v5896
      %v5898 = vpop.f32.mrf.mxu0
      %v5899 = vadd.f32 %v5690, %v5898
      %5900 = vmatprep.mubr.f32.mxu0 0.0
      %5901 = vmatmul.mubr.f32.gmra.mxu0 %v5314
      %v5902 = vpop.f32.mrf.mxu0
      %v5903 = vadd.f32 %v5694, %v5902
      %v5904 = vpop.f32.mrf.mxu0
      %v5905 = vadd.f32 %v5696, %v5904
      %5906 = vmatprep.mubr.f32.mxu0 0.0
      %5907 = vmatmul.mubr.f32.gmra.mxu0 %v5317
      %v5908 = vpop.f32.mrf.mxu0
      %v5909 = vadd.f32 %v5700, %v5908
      %v5910 = vpop.f32.mrf.mxu0
      %v5911 = vadd.f32 %v5702, %v5910
      %5912 = vmatprep.mubr.f32.mxu0 0.0
      %5913 = vmatmul.mubr.f32.gmra.mxu0 %v5320
      %v5914 = vpop.f32.mrf.mxu0
      %v5915 = vadd.f32 %v5706, %v5914
      %v5916 = vpop.f32.mrf.mxu0
      %v5917 = vadd.f32 %v5708, %v5916
      %5918 = vmatprep.mubr.f32.mxu0 0.0
      %5919 = vmatmul.mubr.f32.gmra.mxu0 %v5323
      %v5920 = vpop.f32.mrf.mxu0
      %v5921 = vadd.f32 %v5712, %v5920
      %v5922 = vpop.f32.mrf.mxu0
      %v5923 = vadd.f32 %v5714, %v5922
      %5924 = vmatprep.mubr.f32.mxu0 0.0
      %5925 = vmatmul.mubr.f32.gmra.mxu0 %v5326
      %v5926 = vpop.f32.mrf.mxu0
      %v5927 = vadd.f32 %v5718, %v5926
      %v5928 = vpop.f32.mrf.mxu0
      %v5929 = vadd.f32 %v5720, %v5928
      %5930 = vmatprep.mubr.f32.mxu0 0.0
      %5931 = vmatmul.mubr.f32.gmra.mxu0 %v5329
      %v5932 = vpop.f32.mrf.mxu0
      %v5933 = vadd.f32 %v5724, %v5932
      %v5934 = vpop.f32.mrf.mxu0
      %v5935 = vadd.f32 %v5726, %v5934
      %5936 = vmatprep.mubr.f32.mxu0 0.0
      %5937 = vmatmul.mubr.f32.gmra.mxu0 %v5332
      %v5938 = vpop.f32.mrf.mxu0
      %v5939 = vadd.f32 %v5730, %v5938
      %v5940 = vpop.f32.mrf.mxu0
      %v5941 = vadd.f32 %v5732, %v5940
      %5942 = vmatprep.mubr.f32.mxu0 0.0
      %5943 = vmatmul.mubr.f32.gmra.mxu0 %v5335
      %v5944 = vpop.f32.mrf.mxu0
      %v5945 = vadd.f32 %v5736, %v5944
      %v5946 = vpop.f32.mrf.mxu0
      %v5947 = vadd.f32 %v5738, %v5946
      %5948 = vmatprep.mubr.f32.mxu0 0.0
      %5949 = vmatmul.mubr.f32.gmra.mxu0 %v5338
      %v5950 = vpop.f32.mrf.mxu0
      %v5951 = vadd.f32 %v5742, %v5950
      %v5952 = vpop.f32.mrf.mxu0
      %v5953 = vadd.f32 %v5744, %v5952
      %5954 = vmatprep.mubr.f32.mxu0 0.0
      %5955 = vmatmul.mubr.f32.gmra.mxu0 %v5341
      %v5956 = vpop.f32.mrf.mxu0
      %v5957 = vadd.f32 %v5748, %v5956
      %v5958 = vpop.f32.mrf.mxu0
      %v5959 = vadd.f32 %v5750, %v5958
      %5960 = vmatprep.mubr.f32.mxu0 0.0
      %5961 = vmatmul.mubr.f32.gmra.mxu0 %v5344
      %v5962 = vpop.f32.mrf.mxu0
      %v5963 = vadd.f32 %v5754, %v5962
      %v5964 = vpop.f32.mrf.mxu0
      %v5965 = vadd.f32 %v5756, %v5964
      %5966 = vmatprep.mubr.f32.mxu0 0.0
      %5967 = vmatmul.mubr.f32.gmra.mxu0 %v5347
      %v5968 = vpop.f32.mrf.mxu0
      %v5969 = vadd.f32 %v5760, %v5968
      %v5970 = vpop.f32.mrf.mxu0
      %v5971 = vadd.f32 %v5762, %v5970
      %5972 = vmatprep.mubr.f32.mxu0 0.0
      %5973 = vmatmul.mubr.f32.gmra.mxu0 %v5350
      %v5974 = vpop.f32.mrf.mxu0
      %v5975 = vadd.f32 %v5766, %v5974
      %v5976 = vpop.f32.mrf.mxu0
      %v5977 = vadd.f32 %v5768, %v5976
      %5978 = vdwg.mxu0
      %5979 = vrot.lane.b32.xlu0 %v5837, 112
      %v5980 = vpop.permute.xlu0 %5979
      %5981 = vrot.lane.b32.xlu0 %v5843, 112
      %v5982 = vpop.permute.xlu0 %5981
      %5983 = vrot.lane.b32.xlu0 %v5849, 112
      %v5984 = vpop.permute.xlu0 %5983
      %5985 = vrot.lane.b32.xlu0 %v5855, 112
      %v5986 = vpop.permute.xlu0 %5985
      %5987 = vrot.lane.b32.xlu0 %v5861, 112
      %v5988 = vpop.permute.xlu0 %5987
      %5989 = vrot.lane.b32.xlu0 %v5867, 112
      %v5990 = vpop.permute.xlu0 %5989
      %5991 = vrot.lane.b32.xlu0 %v5873, 112
      %v5992 = vpop.permute.xlu0 %5991
      %5993 = vrot.lane.b32.xlu0 %v5879, 112
      %v5994 = vpop.permute.xlu0 %5993
      %5995 = vrot.lane.b32.xlu0 %v5885, 112
      %v5996 = vpop.permute.xlu0 %5995
      %5997 = vrot.lane.b32.xlu0 %v5891, 112
      %v5998 = vpop.permute.xlu0 %5997
      %5999 = vrot.lane.b32.xlu0 %v5897, 112
      %v6000 = vpop.permute.xlu0 %5999
      %6001 = vrot.lane.b32.xlu0 %v5903, 112
      %v6002 = vpop.permute.xlu0 %6001
      %6003 = vrot.lane.b32.xlu0 %v5909, 112
      %v6004 = vpop.permute.xlu0 %6003
      %6005 = vrot.lane.b32.xlu0 %v5915, 112
      %v6006 = vpop.permute.xlu0 %6005
      %6007 = vrot.lane.b32.xlu0 %v5921, 112
      %v6008 = vpop.permute.xlu0 %6007
      %6009 = vrot.lane.b32.xlu0 %v5927, 112
      %v6010 = vpop.permute.xlu0 %6009
      %6011 = vrot.lane.b32.xlu0 %v5933, 112
      %v6012 = vpop.permute.xlu0 %6011
      %6013 = vrot.lane.b32.xlu0 %v5939, 112
      %v6014 = vpop.permute.xlu0 %6013
      %6015 = vrot.lane.b32.xlu0 %v5945, 112
      %v6016 = vpop.permute.xlu0 %6015
      %6017 = vrot.lane.b32.xlu0 %v5951, 112
      %v6018 = vpop.permute.xlu0 %6017
      %6019 = vrot.lane.b32.xlu0 %v5957, 112
      %v6020 = vpop.permute.xlu0 %6019
      %6021 = vrot.lane.b32.xlu0 %v5963, 112
      %v6022 = vpop.permute.xlu0 %6021
      %6023 = vrot.lane.b32.xlu0 %v5969, 112
      %v6024 = vpop.permute.xlu0 %6023
      %6025 = vrot.lane.b32.xlu0 %v5975, 112
      %v6026 = vpop.permute.xlu0 %6025
      %6027 = vrot.lane.b32.xlu0 %v5839, 112
      %v6028 = vpop.permute.xlu0 %6027
      %6029 = vrot.lane.b32.xlu0 %v5845, 112
      %v6030 = vpop.permute.xlu0 %6029
      %6031 = vrot.lane.b32.xlu0 %v5851, 112
      %v6032 = vpop.permute.xlu0 %6031
      %6033 = vrot.lane.b32.xlu0 %v5857, 112
      %v6034 = vpop.permute.xlu0 %6033
      %6035 = vrot.lane.b32.xlu0 %v5863, 112
      %v6036 = vpop.permute.xlu0 %6035
      %6037 = vrot.lane.b32.xlu0 %v5869, 112
      %v6038 = vpop.permute.xlu0 %6037
      %6039 = vrot.lane.b32.xlu0 %v5875, 112
      %v6040 = vpop.permute.xlu0 %6039
      %6041 = vrot.lane.b32.xlu0 %v5881, 112
      %v6042 = vpop.permute.xlu0 %6041
      %6043 = vrot.lane.b32.xlu0 %v5887, 112
      %v6044 = vpop.permute.xlu0 %6043
      %6045 = vrot.lane.b32.xlu0 %v5893, 112
      %v6046 = vpop.permute.xlu0 %6045
      %6047 = vrot.lane.b32.xlu0 %v5899, 112
      %v6048 = vpop.permute.xlu0 %6047
      %6049 = vrot.lane.b32.xlu0 %v5905, 112
      %v6050 = vpop.permute.xlu0 %6049
      %6051 = vrot.lane.b32.xlu0 %v5911, 112
      %v6052 = vpop.permute.xlu0 %6051
      %6053 = vrot.lane.b32.xlu0 %v5917, 112
      %v6054 = vpop.permute.xlu0 %6053
      %6055 = vrot.lane.b32.xlu0 %v5923, 112
      %v6056 = vpop.permute.xlu0 %6055
      %6057 = vrot.lane.b32.xlu0 %v5929, 112
      %v6058 = vpop.permute.xlu0 %6057
      %6059 = vrot.lane.b32.xlu0 %v5935, 112
      %v6060 = vpop.permute.xlu0 %6059
      %6061 = vrot.lane.b32.xlu0 %v5941, 112
      %v6062 = vpop.permute.xlu0 %6061
      %6063 = vrot.lane.b32.xlu0 %v5947, 112
      %v6064 = vpop.permute.xlu0 %6063
      %6065 = vrot.lane.b32.xlu0 %v5953, 112
      %v6066 = vpop.permute.xlu0 %6065
      %6067 = vrot.lane.b32.xlu0 %v5959, 112
      %v6068 = vpop.permute.xlu0 %6067
      %6069 = vrot.lane.b32.xlu0 %v5965, 112
      %v6070 = vpop.permute.xlu0 %6069
      %6071 = vrot.lane.b32.xlu0 %v5971, 112
      %v6072 = vpop.permute.xlu0 %6071
      %6073 = vrot.lane.b32.xlu0 %v5977, 112
      %v6074 = vpop.permute.xlu0 %6073
      %vm6075 = vcmp.lt.s32.totalorder %v2998, 112
      %v6076 = vsel %vm6075, %v5980, %v6028
      %v6077 = vsel %vm6075, %v5982, %v6030
      %v6078 = vsel %vm6075, %v5984, %v6032
      %v6079 = vsel %vm6075, %v5986, %v6034
      %v6080 = vsel %vm6075, %v5988, %v6036
      %v6081 = vsel %vm6075, %v5990, %v6038
      %v6082 = vsel %vm6075, %v5992, %v6040
      %v6083 = vsel %vm6075, %v5994, %v6042
      %v6084 = vsel %vm6075, %v5996, %v6044
      %v6085 = vsel %vm6075, %v5998, %v6046
      %v6086 = vsel %vm6075, %v6000, %v6048
      %v6087 = vsel %vm6075, %v6002, %v6050
      %v6088 = vsel %vm6075, %v6004, %v6052
      %v6089 = vsel %vm6075, %v6006, %v6054
      %v6090 = vsel %vm6075, %v6008, %v6056
      %v6091 = vsel %vm6075, %v6010, %v6058
      %v6092 = vsel %vm6075, %v6012, %v6060
      %v6093 = vsel %vm6075, %v6014, %v6062
      %v6094 = vsel %vm6075, %v6016, %v6064
      %v6095 = vsel %vm6075, %v6018, %v6066
      %v6096 = vsel %vm6075, %v6020, %v6068
      %v6097 = vsel %vm6075, %v6022, %v6070
      %v6098 = vsel %vm6075, %v6024, %v6072
      %v6099 = vsel %vm6075, %v6026, %v6074
      %v6100 = vsel %vm6075, %v6028, %v5980
      %v6101 = vsel %vm6075, %v6030, %v5982
      %v6102 = vsel %vm6075, %v6032, %v5984
      %v6103 = vsel %vm6075, %v6034, %v5986
      %v6104 = vsel %vm6075, %v6036, %v5988
      %v6105 = vsel %vm6075, %v6038, %v5990
      %v6106 = vsel %vm6075, %v6040, %v5992
      %v6107 = vsel %vm6075, %v6042, %v5994
      %v6108 = vsel %vm6075, %v6044, %v5996
      %v6109 = vsel %vm6075, %v6046, %v5998
      %v6110 = vsel %vm6075, %v6048, %v6000
      %v6111 = vsel %vm6075, %v6050, %v6002
      %v6112 = vsel %vm6075, %v6052, %v6004
      %v6113 = vsel %vm6075, %v6054, %v6006
      %v6114 = vsel %vm6075, %v6056, %v6008
      %v6115 = vsel %vm6075, %v6058, %v6010
      %v6116 = vsel %vm6075, %v6060, %v6012
      %v6117 = vsel %vm6075, %v6062, %v6014
      %v6118 = vsel %vm6075, %v6064, %v6016
      %v6119 = vsel %vm6075, %v6066, %v6018
      %v6120 = vsel %vm6075, %v6068, %v6020
      %v6121 = vsel %vm6075, %v6070, %v6022
      %v6122 = vsel %vm6075, %v6072, %v6024
      %v6123 = vsel %vm6075, %v6074, %v6026
      %s6124 = scalar_lea.vmem %s2, 1
      %v6125 = vld [vmem:[%s6124] ss:$2 sm:$0x3]
      %v6127 = vlaneseq
      %v6128 = vshrl.u32 %v6127, 7
      %v6129 = vsub.s32 0, %v6128
      %v6130 = vrot.slane %v6125, %v6129
      %v6131 = vlaneseq
      %v6132 = vshrl.u32 %v6131, 7
      %v6133 = vsub.s32 1, %v6132
      %v6134 = vrot.slane %v6125, %v6133
      %v6137 = vmul.f32 %v6076, %v6130
      %v6138 = vmul.f32 %v6100, %v6134
      %v6139 = vmul.f32 %v6077, %v6130
      %v6140 = vmul.f32 %v6101, %v6134
      %v6141 = vmul.f32 %v6078, %v6130
      %v6142 = vmul.f32 %v6102, %v6134
      %v6143 = vmul.f32 %v6079, %v6130
      %v6144 = vmul.f32 %v6103, %v6134
      %v6145 = vmul.f32 %v6080, %v6130
      %v6146 = vmul.f32 %v6104, %v6134
      %v6147 = vmul.f32 %v6081, %v6130
      %v6148 = vmul.f32 %v6105, %v6134
      %v6149 = vmul.f32 %v6082, %v6130
      %v6150 = vmul.f32 %v6106, %v6134
      %v6151 = vmul.f32 %v6083, %v6130
      %v6152 = vmul.f32 %v6107, %v6134
      %v6153 = vmul.f32 %v6084, %v6130
      %v6154 = vmul.f32 %v6108, %v6134
      %v6155 = vmul.f32 %v6085, %v6130
      %v6156 = vmul.f32 %v6109, %v6134
      %v6157 = vmul.f32 %v6086, %v6130
      %v6158 = vmul.f32 %v6110, %v6134
      %v6159 = vmul.f32 %v6087, %v6130
      %v6160 = vmul.f32 %v6111, %v6134
      %v6161 = vmul.f32 %v6088, %v6130
      %v6162 = vmul.f32 %v6112, %v6134
      %v6163 = vmul.f32 %v6089, %v6130
      %v6164 = vmul.f32 %v6113, %v6134
      %v6165 = vmul.f32 %v6090, %v6130
      %v6166 = vmul.f32 %v6114, %v6134
      %v6167 = vmul.f32 %v6091, %v6130
      %v6168 = vmul.f32 %v6115, %v6134
      %v6169 = vmul.f32 %v6092, %v6130
      %v6170 = vmul.f32 %v6116, %v6134
      %v6171 = vmul.f32 %v6093, %v6130
      %v6172 = vmul.f32 %v6117, %v6134
      %v6173 = vmul.f32 %v6094, %v6130
      %v6174 = vmul.f32 %v6118, %v6134
      %v6175 = vmul.f32 %v6095, %v6130
      %v6176 = vmul.f32 %v6119, %v6134
      %v6177 = vmul.f32 %v6096, %v6130
      %v6178 = vmul.f32 %v6120, %v6134
      %v6179 = vmul.f32 %v6097, %v6130
      %v6180 = vmul.f32 %v6121, %v6134
      %v6181 = vmul.f32 %v6098, %v6130
      %v6182 = vmul.f32 %v6122, %v6134
      %v6183 = vmul.f32 %v6099, %v6130
      %v6184 = vmul.f32 %v6123, %v6134
      %v6185 = vadd.f32 %v5017, %v6137
      %v6186 = vadd.f32 %v5019, %v6138
      %v6187 = vadd.f32 %v5023, %v6139
      %v6188 = vadd.f32 %v5025, %v6140
      %v6189 = vadd.f32 %v5029, %v6141
      %v6190 = vadd.f32 %v5031, %v6142
      %v6191 = vadd.f32 %v5035, %v6143
      %v6192 = vadd.f32 %v5037, %v6144
      %v6193 = vadd.f32 %v5041, %v6145
      %v6194 = vadd.f32 %v5043, %v6146
      %v6195 = vadd.f32 %v5047, %v6147
      %v6196 = vadd.f32 %v5049, %v6148
      %v6197 = vadd.f32 %v5053, %v6149
      %v6198 = vadd.f32 %v5055, %v6150
      %v6199 = vadd.f32 %v5059, %v6151
      %v6200 = vadd.f32 %v5061, %v6152
      %v6201 = vadd.f32 %v5065, %v6153
      %v6202 = vadd.f32 %v5067, %v6154
      %v6203 = vadd.f32 %v5071, %v6155
      %v6204 = vadd.f32 %v5073, %v6156
      %v6205 = vadd.f32 %v5077, %v6157
      %v6206 = vadd.f32 %v5079, %v6158
      %v6207 = vadd.f32 %v5083, %v6159
      %v6208 = vadd.f32 %v5085, %v6160
      %v6209 = vadd.f32 %v5089, %v6161
      %v6210 = vadd.f32 %v5091, %v6162
      %v6211 = vadd.f32 %v5095, %v6163
      %v6212 = vadd.f32 %v5097, %v6164
      %v6213 = vadd.f32 %v5101, %v6165
      %v6214 = vadd.f32 %v5103, %v6166
      %v6215 = vadd.f32 %v5107, %v6167
      %v6216 = vadd.f32 %v5109, %v6168
      %v6217 = vadd.f32 %v5113, %v6169
      %v6218 = vadd.f32 %v5115, %v6170
      %v6219 = vadd.f32 %v5119, %v6171
      %v6220 = vadd.f32 %v5121, %v6172
      %v6221 = vadd.f32 %v5125, %v6173
      %v6222 = vadd.f32 %v5127, %v6174
      %v6223 = vadd.f32 %v5131, %v6175
      %v6224 = vadd.f32 %v5133, %v6176
      %v6225 = vadd.f32 %v5137, %v6177
      %v6226 = vadd.f32 %v5139, %v6178
      %v6227 = vadd.f32 %v5143, %v6179
      %v6228 = vadd.f32 %v5145, %v6180
      %v6229 = vadd.f32 %v5149, %v6181
      %v6230 = vadd.f32 %v5151, %v6182
      %v6231 = vadd.f32 %v5155, %v6183
      %v6232 = vadd.f32 %v5157, %v6184
      %v6233 = vld [vmem:[%s7] sm:$0xff]
      %v6234 = vld [vmem:[%s7 + $0x8] sm:$0xff]
      %v6235 = vld [vmem:[%s7 + $0x10] sm:$0xff]
      %v6236 = vld [vmem:[%s7 + $0x18] sm:$0xff]
      %v6237 = vld [vmem:[%s7 + $0x20] sm:$0xff]
      %v6238 = vld [vmem:[%s7 + $0x28] sm:$0xff]
      %v6239 = vld [vmem:[%s7 + $0x30] sm:$0xff]
      %v6240 = vld [vmem:[%s7 + $0x38] sm:$0xff]
      %v6241 = vld [vmem:[%s7 + $0x40] sm:$0xff]
      %v6242 = vld [vmem:[%s7 + $0x48] sm:$0xff]
      %v6243 = vld [vmem:[%s7 + $0x50] sm:$0xff]
      %v6244 = vld [vmem:[%s7 + $0x58] sm:$0xff]
      %v6245 = vld [vmem:[%s7 + $0x60] sm:$0xff]
      %v6246 = vld [vmem:[%s7 + $0x68] sm:$0xff]
      %v6247 = vld [vmem:[%s7 + $0x70] sm:$0xff]
      %v6248 = vld [vmem:[%s7 + $0x78] sm:$0xff]
      %v6249 = vld [vmem:[%s7 + $0x80] sm:$0xff]
      %v6250 = vld [vmem:[%s7 + $0x88] sm:$0xff]
      %v6251 = vld [vmem:[%s7 + $0x90] sm:$0xff]
      %v6252 = vld [vmem:[%s7 + $0x98] sm:$0xff]
      %v6253 = vld [vmem:[%s7 + $0xa0] sm:$0xff]
      %v6254 = vld [vmem:[%s7 + $0xa8] sm:$0xff]
      %v6255 = vld [vmem:[%s7 + $0xb0] sm:$0xff]
      %v6256 = vld [vmem:[%s7 + $0xb8] sm:$0xff]
      %v6257 = vld [vmem:[%s8] sm:$0xff]
      %v6258 = vld [vmem:[%s8 + $0x8] sm:$0xff]
      %v6259 = vld [vmem:[%s8 + $0x10] sm:$0xff]
      %v6260 = vld [vmem:[%s8 + $0x18] sm:$0xff]
      %v6261 = vld [vmem:[%s8 + $0x20] sm:$0xff]
      %v6262 = vld [vmem:[%s8 + $0x28] sm:$0xff]
      %v6263 = vld [vmem:[%s8 + $0x30] sm:$0xff]
      %v6264 = vld [vmem:[%s8 + $0x38] sm:$0xff]
      %v6265 = vld [vmem:[%s8 + $0x40] sm:$0xff]
      %v6266 = vld [vmem:[%s8 + $0x48] sm:$0xff]
      %v6267 = vld [vmem:[%s8 + $0x50] sm:$0xff]
      %v6268 = vld [vmem:[%s8 + $0x58] sm:$0xff]
      %v6269 = vld [vmem:[%s8 + $0x60] sm:$0xff]
      %v6270 = vld [vmem:[%s8 + $0x68] sm:$0xff]
      %v6271 = vld [vmem:[%s8 + $0x70] sm:$0xff]
      %v6272 = vld [vmem:[%s8 + $0x78] sm:$0xff]
      %v6273 = vld [vmem:[%s8 + $0x80] sm:$0xff]
      %v6274 = vld [vmem:[%s8 + $0x88] sm:$0xff]
      %v6275 = vld [vmem:[%s8 + $0x90] sm:$0xff]
      %v6276 = vld [vmem:[%s8 + $0x98] sm:$0xff]
      %v6277 = vld [vmem:[%s8 + $0xa0] sm:$0xff]
      %v6278 = vld [vmem:[%s8 + $0xa8] sm:$0xff]
      %v6279 = vld [vmem:[%s8 + $0xb0] sm:$0xff]
      %v6280 = vld [vmem:[%s8 + $0xb8] sm:$0xff]
      %v6281 = vadd.f32 %v6185, %v6187
      %v6282 = vadd.f32 %v6281, %v6189
      %v6283 = vadd.f32 %v6282, %v6191
      %v6284 = vadd.f32 %v6283, %v6193
      %v6285 = vadd.f32 %v6284, %v6195
      %v6286 = vadd.f32 %v6285, %v6197
      %v6287 = vadd.f32 %v6286, %v6199
      %v6288 = vadd.f32 %v6287, %v6201
      %v6289 = vadd.f32 %v6288, %v6203
      %v6290 = vadd.f32 %v6289, %v6205
      %v6291 = vadd.f32 %v6290, %v6207
      %v6292 = vadd.f32 %v6291, %v6209
      %v6293 = vadd.f32 %v6292, %v6211
      %v6294 = vadd.f32 %v6293, %v6213
      %v6295 = vadd.f32 %v6294, %v6215
      %v6296 = vadd.f32 %v6295, %v6217
      %v6297 = vadd.f32 %v6296, %v6219
      %v6298 = vadd.f32 %v6297, %v6221
      %v6299 = vadd.f32 %v6298, %v6223
      %v6300 = vadd.f32 %v6299, %v6225
      %v6301 = vadd.f32 %v6300, %v6227
      %v6302 = vadd.f32 %v6301, %v6229
      %v6303 = vadd.f32 %v6302, %v6231
      %v6304 = vrot.slane %v6303, 4
      %v6305 = vadd.f32 %v6303, %v6304
      %v6306 = vrot.slane %v6305, 2
      %v6307 = vadd.f32 %v6305, %v6306
      %v6308 = vrot.slane %v6307, 1
      %v6309 = vadd.f32 %v6307, %v6308
      %v6310 = vadd.f32 %v6186, %v6188
      %v6311 = vadd.f32 %v6310, %v6190
      %v6312 = vadd.f32 %v6311, %v6192
      %v6313 = vadd.f32 %v6312, %v6194
      %v6314 = vadd.f32 %v6313, %v6196
      %v6315 = vadd.f32 %v6314, %v6198
      %v6316 = vadd.f32 %v6315, %v6200
      %v6317 = vadd.f32 %v6316, %v6202
      %v6318 = vadd.f32 %v6317, %v6204
      %v6319 = vadd.f32 %v6318, %v6206
      %v6320 = vadd.f32 %v6319, %v6208
      %v6321 = vadd.f32 %v6320, %v6210
      %v6322 = vadd.f32 %v6321, %v6212
      %v6323 = vadd.f32 %v6322, %v6214
      %v6324 = vadd.f32 %v6323, %v6216
      %v6325 = vadd.f32 %v6324, %v6218
      %v6326 = vadd.f32 %v6325, %v6220
      %v6327 = vadd.f32 %v6326, %v6222
      %v6328 = vadd.f32 %v6327, %v6224
      %v6329 = vadd.f32 %v6328, %v6226
      %v6330 = vadd.f32 %v6329, %v6228
      %v6331 = vadd.f32 %v6330, %v6230
      %v6332 = vadd.f32 %v6331, %v6232
      %v6333 = vrot.slane %v6332, 4
      %v6334 = vadd.f32 %v6332, %v6333
      %v6335 = vrot.slane %v6334, 2
      %v6336 = vadd.f32 %v6334, %v6335
      %v6337 = vrot.slane %v6336, 1
      %v6338 = vadd.f32 %v6336, %v6337
      %v6339 = vmul.f32 %v6309, %v1106
      %v6340 = vmul.f32 %v6338, %v1106
      %v6341 = vsub.f32 %v6185, %v6339
      %v6342 = vsub.f32 %v6186, %v6340
      %v6343 = vsub.f32 %v6187, %v6339
      %v6344 = vsub.f32 %v6188, %v6340
      %v6345 = vsub.f32 %v6189, %v6339
      %v6346 = vsub.f32 %v6190, %v6340
      %v6347 = vsub.f32 %v6191, %v6339
      %v6348 = vsub.f32 %v6192, %v6340
      %v6349 = vsub.f32 %v6193, %v6339
      %v6350 = vsub.f32 %v6194, %v6340
      %v6351 = vsub.f32 %v6195, %v6339
      %v6352 = vsub.f32 %v6196, %v6340
      %v6353 = vsub.f32 %v6197, %v6339
      %v6354 = vsub.f32 %v6198, %v6340
      %v6355 = vsub.f32 %v6199, %v6339
      %v6356 = vsub.f32 %v6200, %v6340
      %v6357 = vsub.f32 %v6201, %v6339
      %v6358 = vsub.f32 %v6202, %v6340
      %v6359 = vsub.f32 %v6203, %v6339
      %v6360 = vsub.f32 %v6204, %v6340
      %v6361 = vsub.f32 %v6205, %v6339
      %v6362 = vsub.f32 %v6206, %v6340
      %v6363 = vsub.f32 %v6207, %v6339
      %v6364 = vsub.f32 %v6208, %v6340
      %v6365 = vsub.f32 %v6209, %v6339
      %v6366 = vsub.f32 %v6210, %v6340
      %v6367 = vsub.f32 %v6211, %v6339
      %v6368 = vsub.f32 %v6212, %v6340
      %v6369 = vsub.f32 %v6213, %v6339
      %v6370 = vsub.f32 %v6214, %v6340
      %v6371 = vsub.f32 %v6215, %v6339
      %v6372 = vsub.f32 %v6216, %v6340
      %v6373 = vsub.f32 %v6217, %v6339
      %v6374 = vsub.f32 %v6218, %v6340
      %v6375 = vsub.f32 %v6219, %v6339
      %v6376 = vsub.f32 %v6220, %v6340
      %v6377 = vsub.f32 %v6221, %v6339
      %v6378 = vsub.f32 %v6222, %v6340
      %v6379 = vsub.f32 %v6223, %v6339
      %v6380 = vsub.f32 %v6224, %v6340
      %v6381 = vsub.f32 %v6225, %v6339
      %v6382 = vsub.f32 %v6226, %v6340
      %v6383 = vsub.f32 %v6227, %v6339
      %v6384 = vsub.f32 %v6228, %v6340
      %v6385 = vsub.f32 %v6229, %v6339
      %v6386 = vsub.f32 %v6230, %v6340
      %v6387 = vsub.f32 %v6231, %v6339
      %v6388 = vsub.f32 %v6232, %v6340
      %v6389 = vmul.f32 %v6341, %v6341
      %v6390 = vmul.f32 %v6342, %v6342
      %v6391 = vmul.f32 %v6343, %v6343
      %v6392 = vmul.f32 %v6344, %v6344
      %v6393 = vmul.f32 %v6345, %v6345
      %v6394 = vmul.f32 %v6346, %v6346
      %v6395 = vmul.f32 %v6347, %v6347
      %v6396 = vmul.f32 %v6348, %v6348
      %v6397 = vmul.f32 %v6349, %v6349
      %v6398 = vmul.f32 %v6350, %v6350
      %v6399 = vmul.f32 %v6351, %v6351
      %v6400 = vmul.f32 %v6352, %v6352
      %v6401 = vmul.f32 %v6353, %v6353
      %v6402 = vmul.f32 %v6354, %v6354
      %v6403 = vmul.f32 %v6355, %v6355
      %v6404 = vmul.f32 %v6356, %v6356
      %v6405 = vmul.f32 %v6357, %v6357
      %v6406 = vmul.f32 %v6358, %v6358
      %v6407 = vmul.f32 %v6359, %v6359
      %v6408 = vmul.f32 %v6360, %v6360
      %v6409 = vmul.f32 %v6361, %v6361
      %v6410 = vmul.f32 %v6362, %v6362
      %v6411 = vmul.f32 %v6363, %v6363
      %v6412 = vmul.f32 %v6364, %v6364
      %v6413 = vmul.f32 %v6365, %v6365
      %v6414 = vmul.f32 %v6366, %v6366
      %v6415 = vmul.f32 %v6367, %v6367
      %v6416 = vmul.f32 %v6368, %v6368
      %v6417 = vmul.f32 %v6369, %v6369
      %v6418 = vmul.f32 %v6370, %v6370
      %v6419 = vmul.f32 %v6371, %v6371
      %v6420 = vmul.f32 %v6372, %v6372
      %v6421 = vmul.f32 %v6373, %v6373
      %v6422 = vmul.f32 %v6374, %v6374
      %v6423 = vmul.f32 %v6375, %v6375
      %v6424 = vmul.f32 %v6376, %v6376
      %v6425 = vmul.f32 %v6377, %v6377
      %v6426 = vmul.f32 %v6378, %v6378
      %v6427 = vmul.f32 %v6379, %v6379
      %v6428 = vmul.f32 %v6380, %v6380
      %v6429 = vmul.f32 %v6381, %v6381
      %v6430 = vmul.f32 %v6382, %v6382
      %v6431 = vmul.f32 %v6383, %v6383
      %v6432 = vmul.f32 %v6384, %v6384
      %v6433 = vmul.f32 %v6385, %v6385
      %v6434 = vmul.f32 %v6386, %v6386
      %v6435 = vmul.f32 %v6387, %v6387
      %v6436 = vmul.f32 %v6388, %v6388
      %v6437 = vadd.f32 %v6389, %v6391
      %v6438 = vadd.f32 %v6437, %v6393
      %v6439 = vadd.f32 %v6438, %v6395
      %v6440 = vadd.f32 %v6439, %v6397
      %v6441 = vadd.f32 %v6440, %v6399
      %v6442 = vadd.f32 %v6441, %v6401
      %v6443 = vadd.f32 %v6442, %v6403
      %v6444 = vadd.f32 %v6443, %v6405
      %v6445 = vadd.f32 %v6444, %v6407
      %v6446 = vadd.f32 %v6445, %v6409
      %v6447 = vadd.f32 %v6446, %v6411
      %v6448 = vadd.f32 %v6447, %v6413
      %v6449 = vadd.f32 %v6448, %v6415
      %v6450 = vadd.f32 %v6449, %v6417
      %v6451 = vadd.f32 %v6450, %v6419
      %v6452 = vadd.f32 %v6451, %v6421
      %v6453 = vadd.f32 %v6452, %v6423
      %v6454 = vadd.f32 %v6453, %v6425
      %v6455 = vadd.f32 %v6454, %v6427
      %v6456 = vadd.f32 %v6455, %v6429
      %v6457 = vadd.f32 %v6456, %v6431
      %v6458 = vadd.f32 %v6457, %v6433
      %v6459 = vadd.f32 %v6458, %v6435
      %v6460 = vrot.slane %v6459, 4
      %v6461 = vadd.f32 %v6459, %v6460
      %v6462 = vrot.slane %v6461, 2
      %v6463 = vadd.f32 %v6461, %v6462
      %v6464 = vrot.slane %v6463, 1
      %v6465 = vadd.f32 %v6463, %v6464
      %v6466 = vadd.f32 %v6390, %v6392
      %v6467 = vadd.f32 %v6466, %v6394
      %v6468 = vadd.f32 %v6467, %v6396
      %v6469 = vadd.f32 %v6468, %v6398
      %v6470 = vadd.f32 %v6469, %v6400
      %v6471 = vadd.f32 %v6470, %v6402
      %v6472 = vadd.f32 %v6471, %v6404
      %v6473 = vadd.f32 %v6472, %v6406
      %v6474 = vadd.f32 %v6473, %v6408
      %v6475 = vadd.f32 %v6474, %v6410
      %v6476 = vadd.f32 %v6475, %v6412
      %v6477 = vadd.f32 %v6476, %v6414
      %v6478 = vadd.f32 %v6477, %v6416
      %v6479 = vadd.f32 %v6478, %v6418
      %v6480 = vadd.f32 %v6479, %v6420
      %v6481 = vadd.f32 %v6480, %v6422
      %v6482 = vadd.f32 %v6481, %v6424
      %v6483 = vadd.f32 %v6482, %v6426
      %v6484 = vadd.f32 %v6483, %v6428
      %v6485 = vadd.f32 %v6484, %v6430
      %v6486 = vadd.f32 %v6485, %v6432
      %v6487 = vadd.f32 %v6486, %v6434
      %v6488 = vadd.f32 %v6487, %v6436
      %v6489 = vrot.slane %v6488, 4
      %v6490 = vadd.f32 %v6488, %v6489
      %v6491 = vrot.slane %v6490, 2
      %v6492 = vadd.f32 %v6490, %v6491
      %v6493 = vrot.slane %v6492, 1
      %v6494 = vadd.f32 %v6492, %v6493
      %v6495 = vmul.f32 %v6465, %v1106
      %v6496 = vmul.f32 %v6494, %v1106
      %v6497 = vadd.f32 %v6495, 1e-06
      %v6498 = vadd.f32 %v6496, 1e-06
      %v6499 = vrsqrt.pop %v6497
      %v6500 = vrsqrt.pop %v6498
      %v6501 = vmul.f32 %v6341, %v6499
      %v6502 = vmul.f32 %v6342, %v6500
      %v6503 = vmul.f32 %v6343, %v6499
      %v6504 = vmul.f32 %v6344, %v6500
      %v6505 = vmul.f32 %v6345, %v6499
      %v6506 = vmul.f32 %v6346, %v6500
      %v6507 = vmul.f32 %v6347, %v6499
      %v6508 = vmul.f32 %v6348, %v6500
      %v6509 = vmul.f32 %v6349, %v6499
      %v6510 = vmul.f32 %v6350, %v6500
      %v6511 = vmul.f32 %v6351, %v6499
      %v6512 = vmul.f32 %v6352, %v6500
      %v6513 = vmul.f32 %v6353, %v6499
      %v6514 = vmul.f32 %v6354, %v6500
      %v6515 = vmul.f32 %v6355, %v6499
      %v6516 = vmul.f32 %v6356, %v6500
      %v6517 = vmul.f32 %v6357, %v6499
      %v6518 = vmul.f32 %v6358, %v6500
      %v6519 = vmul.f32 %v6359, %v6499
      %v6520 = vmul.f32 %v6360, %v6500
      %v6521 = vmul.f32 %v6361, %v6499
      %v6522 = vmul.f32 %v6362, %v6500
      %v6523 = vmul.f32 %v6363, %v6499
      %v6524 = vmul.f32 %v6364, %v6500
      %v6525 = vmul.f32 %v6365, %v6499
      %v6526 = vmul.f32 %v6366, %v6500
      %v6527 = vmul.f32 %v6367, %v6499
      %v6528 = vmul.f32 %v6368, %v6500
      %v6529 = vmul.f32 %v6369, %v6499
      %v6530 = vmul.f32 %v6370, %v6500
      %v6531 = vmul.f32 %v6371, %v6499
      %v6532 = vmul.f32 %v6372, %v6500
      %v6533 = vmul.f32 %v6373, %v6499
      %v6534 = vmul.f32 %v6374, %v6500
      %v6535 = vmul.f32 %v6375, %v6499
      %v6536 = vmul.f32 %v6376, %v6500
      %v6537 = vmul.f32 %v6377, %v6499
      %v6538 = vmul.f32 %v6378, %v6500
      %v6539 = vmul.f32 %v6379, %v6499
      %v6540 = vmul.f32 %v6380, %v6500
      %v6541 = vmul.f32 %v6381, %v6499
      %v6542 = vmul.f32 %v6382, %v6500
      %v6543 = vmul.f32 %v6383, %v6499
      %v6544 = vmul.f32 %v6384, %v6500
      %v6545 = vmul.f32 %v6385, %v6499
      %v6546 = vmul.f32 %v6386, %v6500
      %v6547 = vmul.f32 %v6387, %v6499
      %v6548 = vmul.f32 %v6388, %v6500
      %6550 = vset.pattern.permute.xlu0 0
      %6551 = vperm.xlu0 %6550, %v6233
      %v6552 = vpop.permute.xlu0 %6551
      %6555 = vset.pattern.permute.xlu0 0
      %6556 = vperm.xlu0 %6555, %v6234
      %v6557 = vpop.permute.xlu0 %6556
      %6560 = vset.pattern.permute.xlu0 0
      %6561 = vperm.xlu0 %6560, %v6235
      %v6562 = vpop.permute.xlu0 %6561
      %6565 = vset.pattern.permute.xlu0 0
      %6566 = vperm.xlu0 %6565, %v6236
      %v6567 = vpop.permute.xlu0 %6566
      %6570 = vset.pattern.permute.xlu0 0
      %6571 = vperm.xlu0 %6570, %v6237
      %v6572 = vpop.permute.xlu0 %6571
      %6575 = vset.pattern.permute.xlu0 0
      %6576 = vperm.xlu0 %6575, %v6238
      %v6577 = vpop.permute.xlu0 %6576
      %6580 = vset.pattern.permute.xlu0 0
      %6581 = vperm.xlu0 %6580, %v6239
      %v6582 = vpop.permute.xlu0 %6581
      %6585 = vset.pattern.permute.xlu0 0
      %6586 = vperm.xlu0 %6585, %v6240
      %v6587 = vpop.permute.xlu0 %6586
      %6590 = vset.pattern.permute.xlu0 0
      %6591 = vperm.xlu0 %6590, %v6241
      %v6592 = vpop.permute.xlu0 %6591
      %6595 = vset.pattern.permute.xlu0 0
      %6596 = vperm.xlu0 %6595, %v6242
      %v6597 = vpop.permute.xlu0 %6596
      %6600 = vset.pattern.permute.xlu0 0
      %6601 = vperm.xlu0 %6600, %v6243
      %v6602 = vpop.permute.xlu0 %6601
      %6605 = vset.pattern.permute.xlu0 0
      %6606 = vperm.xlu0 %6605, %v6244
      %v6607 = vpop.permute.xlu0 %6606
      %6610 = vset.pattern.permute.xlu0 0
      %6611 = vperm.xlu0 %6610, %v6245
      %v6612 = vpop.permute.xlu0 %6611
      %6615 = vset.pattern.permute.xlu0 0
      %6616 = vperm.xlu0 %6615, %v6246
      %v6617 = vpop.permute.xlu0 %6616
      %6620 = vset.pattern.permute.xlu0 0
      %6621 = vperm.xlu0 %6620, %v6247
      %v6622 = vpop.permute.xlu0 %6621
      %6625 = vset.pattern.permute.xlu0 0
      %6626 = vperm.xlu0 %6625, %v6248
      %v6627 = vpop.permute.xlu0 %6626
      %6630 = vset.pattern.permute.xlu0 0
      %6631 = vperm.xlu0 %6630, %v6249
      %v6632 = vpop.permute.xlu0 %6631
      %6635 = vset.pattern.permute.xlu0 0
      %6636 = vperm.xlu0 %6635, %v6250
      %v6637 = vpop.permute.xlu0 %6636
      %6640 = vset.pattern.permute.xlu0 0
      %6641 = vperm.xlu0 %6640, %v6251
      %v6642 = vpop.permute.xlu0 %6641
      %6645 = vset.pattern.permute.xlu0 0
      %6646 = vperm.xlu0 %6645, %v6252
      %v6647 = vpop.permute.xlu0 %6646
      %6650 = vset.pattern.permute.xlu0 0
      %6651 = vperm.xlu0 %6650, %v6253
      %v6652 = vpop.permute.xlu0 %6651
      %6655 = vset.pattern.permute.xlu0 0
      %6656 = vperm.xlu0 %6655, %v6254
      %v6657 = vpop.permute.xlu0 %6656
      %6660 = vset.pattern.permute.xlu0 0
      %6661 = vperm.xlu0 %6660, %v6255
      %v6662 = vpop.permute.xlu0 %6661
      %6665 = vset.pattern.permute.xlu0 0
      %6666 = vperm.xlu0 %6665, %v6256
      %v6667 = vpop.permute.xlu0 %6666
      %v6669 = vmul.f32 %v6501, %v6552
      %v6670 = vmul.f32 %v6502, %v6552
      %v6671 = vmul.f32 %v6503, %v6557
      %v6672 = vmul.f32 %v6504, %v6557
      %v6673 = vmul.f32 %v6505, %v6562
      %v6674 = vmul.f32 %v6506, %v6562
      %v6675 = vmul.f32 %v6507, %v6567
      %v6676 = vmul.f32 %v6508, %v6567
      %v6677 = vmul.f32 %v6509, %v6572
      %v6678 = vmul.f32 %v6510, %v6572
      %v6679 = vmul.f32 %v6511, %v6577
      %v6680 = vmul.f32 %v6512, %v6577
      %v6681 = vmul.f32 %v6513, %v6582
      %v6682 = vmul.f32 %v6514, %v6582
      %v6683 = vmul.f32 %v6515, %v6587
      %v6684 = vmul.f32 %v6516, %v6587
      %v6685 = vmul.f32 %v6517, %v6592
      %v6686 = vmul.f32 %v6518, %v6592
      %v6687 = vmul.f32 %v6519, %v6597
      %v6688 = vmul.f32 %v6520, %v6597
      %v6689 = vmul.f32 %v6521, %v6602
      %v6690 = vmul.f32 %v6522, %v6602
      %v6691 = vmul.f32 %v6523, %v6607
      %v6692 = vmul.f32 %v6524, %v6607
      %v6693 = vmul.f32 %v6525, %v6612
      %v6694 = vmul.f32 %v6526, %v6612
      %v6695 = vmul.f32 %v6527, %v6617
      %v6696 = vmul.f32 %v6528, %v6617
      %v6697 = vmul.f32 %v6529, %v6622
      %v6698 = vmul.f32 %v6530, %v6622
      %v6699 = vmul.f32 %v6531, %v6627
      %v6700 = vmul.f32 %v6532, %v6627
      %v6701 = vmul.f32 %v6533, %v6632
      %v6702 = vmul.f32 %v6534, %v6632
      %v6703 = vmul.f32 %v6535, %v6637
      %v6704 = vmul.f32 %v6536, %v6637
      %v6705 = vmul.f32 %v6537, %v6642
      %v6706 = vmul.f32 %v6538, %v6642
      %v6707 = vmul.f32 %v6539, %v6647
      %v6708 = vmul.f32 %v6540, %v6647
      %v6709 = vmul.f32 %v6541, %v6652
      %v6710 = vmul.f32 %v6542, %v6652
      %v6711 = vmul.f32 %v6543, %v6657
      %v6712 = vmul.f32 %v6544, %v6657
      %v6713 = vmul.f32 %v6545, %v6662
      %v6714 = vmul.f32 %v6546, %v6662
      %v6715 = vmul.f32 %v6547, %v6667
      %v6716 = vmul.f32 %v6548, %v6667
      %6718 = vset.pattern.permute.xlu0 0
      %6719 = vperm.xlu0 %6718, %v6257
      %v6720 = vpop.permute.xlu0 %6719
      %6723 = vset.pattern.permute.xlu0 0
      %6724 = vperm.xlu0 %6723, %v6258
      %v6725 = vpop.permute.xlu0 %6724
      %6728 = vset.pattern.permute.xlu0 0
      %6729 = vperm.xlu0 %6728, %v6259
      %v6730 = vpop.permute.xlu0 %6729
      %6733 = vset.pattern.permute.xlu0 0
      %6734 = vperm.xlu0 %6733, %v6260
      %v6735 = vpop.permute.xlu0 %6734
      %6738 = vset.pattern.permute.xlu0 0
      %6739 = vperm.xlu0 %6738, %v6261
      %v6740 = vpop.permute.xlu0 %6739
      %6743 = vset.pattern.permute.xlu0 0
      %6744 = vperm.xlu0 %6743, %v6262
      %v6745 = vpop.permute.xlu0 %6744
      %6748 = vset.pattern.permute.xlu0 0
      %6749 = vperm.xlu0 %6748, %v6263
      %v6750 = vpop.permute.xlu0 %6749
      %6753 = vset.pattern.permute.xlu0 0
      %6754 = vperm.xlu0 %6753, %v6264
      %v6755 = vpop.permute.xlu0 %6754
      %6758 = vset.pattern.permute.xlu0 0
      %6759 = vperm.xlu0 %6758, %v6265
      %v6760 = vpop.permute.xlu0 %6759
      %6763 = vset.pattern.permute.xlu0 0
      %6764 = vperm.xlu0 %6763, %v6266
      %v6765 = vpop.permute.xlu0 %6764
      %6768 = vset.pattern.permute.xlu0 0
      %6769 = vperm.xlu0 %6768, %v6267
      %v6770 = vpop.permute.xlu0 %6769
      %6773 = vset.pattern.permute.xlu0 0
      %6774 = vperm.xlu0 %6773, %v6268
      %v6775 = vpop.permute.xlu0 %6774
      %6778 = vset.pattern.permute.xlu0 0
      %6779 = vperm.xlu0 %6778, %v6269
      %v6780 = vpop.permute.xlu0 %6779
      %6783 = vset.pattern.permute.xlu0 0
      %6784 = vperm.xlu0 %6783, %v6270
      %v6785 = vpop.permute.xlu0 %6784
      %6788 = vset.pattern.permute.xlu0 0
      %6789 = vperm.xlu0 %6788, %v6271
      %v6790 = vpop.permute.xlu0 %6789
      %6793 = vset.pattern.permute.xlu0 0
      %6794 = vperm.xlu0 %6793, %v6272
      %v6795 = vpop.permute.xlu0 %6794
      %6798 = vset.pattern.permute.xlu0 0
      %6799 = vperm.xlu0 %6798, %v6273
      %v6800 = vpop.permute.xlu0 %6799
      %6803 = vset.pattern.permute.xlu0 0
      %6804 = vperm.xlu0 %6803, %v6274
      %v6805 = vpop.permute.xlu0 %6804
      %6808 = vset.pattern.permute.xlu0 0
      %6809 = vperm.xlu0 %6808, %v6275
      %v6810 = vpop.permute.xlu0 %6809
      %6813 = vset.pattern.permute.xlu0 0
      %6814 = vperm.xlu0 %6813, %v6276
      %v6815 = vpop.permute.xlu0 %6814
      %6818 = vset.pattern.permute.xlu0 0
      %6819 = vperm.xlu0 %6818, %v6277
      %v6820 = vpop.permute.xlu0 %6819
      %6823 = vset.pattern.permute.xlu0 0
      %6824 = vperm.xlu0 %6823, %v6278
      %v6825 = vpop.permute.xlu0 %6824
      %6828 = vset.pattern.permute.xlu0 0
      %6829 = vperm.xlu0 %6828, %v6279
      %v6830 = vpop.permute.xlu0 %6829
      %6833 = vset.pattern.permute.xlu0 0
      %6834 = vperm.xlu0 %6833, %v6280
      %v6835 = vpop.permute.xlu0 %6834
      %v6837 = vadd.f32 %v6669, %v6720
      %v6838 = vadd.f32 %v6670, %v6720
      %v6839 = vadd.f32 %v6671, %v6725
      %v6840 = vadd.f32 %v6672, %v6725
      %v6841 = vadd.f32 %v6673, %v6730
      %v6842 = vadd.f32 %v6674, %v6730
      %v6843 = vadd.f32 %v6675, %v6735
      %v6844 = vadd.f32 %v6676, %v6735
      %v6845 = vadd.f32 %v6677, %v6740
      %v6846 = vadd.f32 %v6678, %v6740
      %v6847 = vadd.f32 %v6679, %v6745
      %v6848 = vadd.f32 %v6680, %v6745
      %v6849 = vadd.f32 %v6681, %v6750
      %v6850 = vadd.f32 %v6682, %v6750
      %v6851 = vadd.f32 %v6683, %v6755
      %v6852 = vadd.f32 %v6684, %v6755
      %v6853 = vadd.f32 %v6685, %v6760
      %v6854 = vadd.f32 %v6686, %v6760
      %v6855 = vadd.f32 %v6687, %v6765
      %v6856 = vadd.f32 %v6688, %v6765
      %v6857 = vadd.f32 %v6689, %v6770
      %v6858 = vadd.f32 %v6690, %v6770
      %v6859 = vadd.f32 %v6691, %v6775
      %v6860 = vadd.f32 %v6692, %v6775
      %v6861 = vadd.f32 %v6693, %v6780
      %v6862 = vadd.f32 %v6694, %v6780
      %v6863 = vadd.f32 %v6695, %v6785
      %v6864 = vadd.f32 %v6696, %v6785
      %v6865 = vadd.f32 %v6697, %v6790
      %v6866 = vadd.f32 %v6698, %v6790
      %v6867 = vadd.f32 %v6699, %v6795
      %v6868 = vadd.f32 %v6700, %v6795
      %v6869 = vadd.f32 %v6701, %v6800
      %v6870 = vadd.f32 %v6702, %v6800
      %v6871 = vadd.f32 %v6703, %v6805
      %v6872 = vadd.f32 %v6704, %v6805
      %v6873 = vadd.f32 %v6705, %v6810
      %v6874 = vadd.f32 %v6706, %v6810
      %v6875 = vadd.f32 %v6707, %v6815
      %v6876 = vadd.f32 %v6708, %v6815
      %v6877 = vadd.f32 %v6709, %v6820
      %v6878 = vadd.f32 %v6710, %v6820
      %v6879 = vadd.f32 %v6711, %v6825
      %v6880 = vadd.f32 %v6712, %v6825
      %v6881 = vadd.f32 %v6713, %v6830
      %v6882 = vadd.f32 %v6714, %v6830
      %v6883 = vadd.f32 %v6715, %v6835
      %v6884 = vadd.f32 %v6716, %v6835
      %v6885 = vmul.f32 %v6837, 0.5
      %v6886 = vmul.f32 %v6838, 0.5
      %v6887 = vmul.f32 %v6839, 0.5
      %v6888 = vmul.f32 %v6840, 0.5
      %v6889 = vmul.f32 %v6841, 0.5
      %v6890 = vmul.f32 %v6842, 0.5
      %v6891 = vmul.f32 %v6843, 0.5
      %v6892 = vmul.f32 %v6844, 0.5
      %v6893 = vmul.f32 %v6845, 0.5
      %v6894 = vmul.f32 %v6846, 0.5
      %v6895 = vmul.f32 %v6847, 0.5
      %v6896 = vmul.f32 %v6848, 0.5
      %v6897 = vmul.f32 %v6849, 0.5
      %v6898 = vmul.f32 %v6850, 0.5
      %v6899 = vmul.f32 %v6851, 0.5
      %v6900 = vmul.f32 %v6852, 0.5
      %v6901 = vmul.f32 %v6853, 0.5
      %v6902 = vmul.f32 %v6854, 0.5
      %v6903 = vmul.f32 %v6855, 0.5
      %v6904 = vmul.f32 %v6856, 0.5
      %v6905 = vmul.f32 %v6857, 0.5
      %v6906 = vmul.f32 %v6858, 0.5
      %v6907 = vmul.f32 %v6859, 0.5
      %v6908 = vmul.f32 %v6860, 0.5
      %v6909 = vmul.f32 %v6861, 0.5
      %v6910 = vmul.f32 %v6862, 0.5
      %v6911 = vmul.f32 %v6863, 0.5
      %v6912 = vmul.f32 %v6864, 0.5
      %v6913 = vmul.f32 %v6865, 0.5
      %v6914 = vmul.f32 %v6866, 0.5
      %v6915 = vmul.f32 %v6867, 0.5
      %v6916 = vmul.f32 %v6868, 0.5
      %v6917 = vmul.f32 %v6869, 0.5
      %v6918 = vmul.f32 %v6870, 0.5
      %v6919 = vmul.f32 %v6871, 0.5
      %v6920 = vmul.f32 %v6872, 0.5
      %v6921 = vmul.f32 %v6873, 0.5
      %v6922 = vmul.f32 %v6874, 0.5
      %v6923 = vmul.f32 %v6875, 0.5
      %v6924 = vmul.f32 %v6876, 0.5
      %v6925 = vmul.f32 %v6877, 0.5
      %v6926 = vmul.f32 %v6878, 0.5
      %v6927 = vmul.f32 %v6879, 0.5
      %v6928 = vmul.f32 %v6880, 0.5
      %v6929 = vmul.f32 %v6881, 0.5
      %v6930 = vmul.f32 %v6882, 0.5
      %v6931 = vmul.f32 %v6883, 0.5
      %v6932 = vmul.f32 %v6884, 0.5
      %v6933 = vmul.f32 %v6837, 0.70710677
      %v6934 = vmul.f32 %v6838, 0.70710677
      %v6935 = vmul.f32 %v6839, 0.70710677
      %v6936 = vmul.f32 %v6840, 0.70710677
      %v6937 = vmul.f32 %v6841, 0.70710677
      %v6938 = vmul.f32 %v6842, 0.70710677
      %v6939 = vmul.f32 %v6843, 0.70710677
      %v6940 = vmul.f32 %v6844, 0.70710677
      %v6941 = vmul.f32 %v6845, 0.70710677
      %v6942 = vmul.f32 %v6846, 0.70710677
      %v6943 = vmul.f32 %v6847, 0.70710677
      %v6944 = vmul.f32 %v6848, 0.70710677
      %v6945 = vmul.f32 %v6849, 0.70710677
      %v6946 = vmul.f32 %v6850, 0.70710677
      %v6947 = vmul.f32 %v6851, 0.70710677
      %v6948 = vmul.f32 %v6852, 0.70710677
      %v6949 = vmul.f32 %v6853, 0.70710677
      %v6950 = vmul.f32 %v6854, 0.70710677
      %v6951 = vmul.f32 %v6855, 0.70710677
      %v6952 = vmul.f32 %v6856, 0.70710677
      %v6953 = vmul.f32 %v6857, 0.70710677
      %v6954 = vmul.f32 %v6858, 0.70710677
      %v6955 = vmul.f32 %v6859, 0.70710677
      %v6956 = vmul.f32 %v6860, 0.70710677
      %v6957 = vmul.f32 %v6861, 0.70710677
      %v6958 = vmul.f32 %v6862, 0.70710677
      %v6959 = vmul.f32 %v6863, 0.70710677
      %v6960 = vmul.f32 %v6864, 0.70710677
      %v6961 = vmul.f32 %v6865, 0.70710677
      %v6962 = vmul.f32 %v6866, 0.70710677
      %v6963 = vmul.f32 %v6867, 0.70710677
      %v6964 = vmul.f32 %v6868, 0.70710677
      %v6965 = vmul.f32 %v6869, 0.70710677
      %v6966 = vmul.f32 %v6870, 0.70710677
      %v6967 = vmul.f32 %v6871, 0.70710677
      %v6968 = vmul.f32 %v6872, 0.70710677
      %v6969 = vmul.f32 %v6873, 0.70710677
      %v6970 = vmul.f32 %v6874, 0.70710677
      %v6971 = vmul.f32 %v6875, 0.70710677
      %v6972 = vmul.f32 %v6876, 0.70710677
      %v6973 = vmul.f32 %v6877, 0.70710677
      %v6974 = vmul.f32 %v6878, 0.70710677
      %v6975 = vmul.f32 %v6879, 0.70710677
      %v6976 = vmul.f32 %v6880, 0.70710677
      %v6977 = vmul.f32 %v6881, 0.70710677
      %v6978 = vmul.f32 %v6882, 0.70710677
      %v6979 = vmul.f32 %v6883, 0.70710677
      %v6980 = vmul.f32 %v6884, 0.70710677
      %v6981 = vand.u32 2147483647, %v6933
      %v6982 = vand.u32 2147483647, %v6934
      %v6983 = vand.u32 2147483647, %v6935
      %v6984 = vand.u32 2147483647, %v6936
      %v6985 = vand.u32 2147483647, %v6937
      %v6986 = vand.u32 2147483647, %v6938
      %v6987 = vand.u32 2147483647, %v6939
      %v6988 = vand.u32 2147483647, %v6940
      %v6989 = vand.u32 2147483647, %v6941
      %v6990 = vand.u32 2147483647, %v6942
      %v6991 = vand.u32 2147483647, %v6943
      %v6992 = vand.u32 2147483647, %v6944
      %v6993 = vand.u32 2147483647, %v6945
      %v6994 = vand.u32 2147483647, %v6946
      %v6995 = vand.u32 2147483647, %v6947
      %v6996 = vand.u32 2147483647, %v6948
      %v6997 = vand.u32 2147483647, %v6949
      %v6998 = vand.u32 2147483647, %v6950
      %v6999 = vand.u32 2147483647, %v6951
      %v7000 = vand.u32 2147483647, %v6952
      %v7001 = vand.u32 2147483647, %v6953
      %v7002 = vand.u32 2147483647, %v6954
      %v7003 = vand.u32 2147483647, %v6955
      %v7004 = vand.u32 2147483647, %v6956
      %v7005 = vand.u32 2147483647, %v6957
      %v7006 = vand.u32 2147483647, %v6958
      %v7007 = vand.u32 2147483647, %v6959
      %v7008 = vand.u32 2147483647, %v6960
      %v7009 = vand.u32 2147483647, %v6961
      %v7010 = vand.u32 2147483647, %v6962
      %v7011 = vand.u32 2147483647, %v6963
      %v7012 = vand.u32 2147483647, %v6964
      %v7013 = vand.u32 2147483647, %v6965
      %v7014 = vand.u32 2147483647, %v6966
      %v7015 = vand.u32 2147483647, %v6967
      %v7016 = vand.u32 2147483647, %v6968
      %v7017 = vand.u32 2147483647, %v6969
      %v7018 = vand.u32 2147483647, %v6970
      %v7019 = vand.u32 2147483647, %v6971
      %v7020 = vand.u32 2147483647, %v6972
      %v7021 = vand.u32 2147483647, %v6973
      %v7022 = vand.u32 2147483647, %v6974
      %v7023 = vand.u32 2147483647, %v6975
      %v7024 = vand.u32 2147483647, %v6976
      %v7025 = vand.u32 2147483647, %v6977
      %v7026 = vand.u32 2147483647, %v6978
      %v7027 = vand.u32 2147483647, %v6979
      %v7028 = vand.u32 2147483647, %v6980
      %v7029 = vmul.f32 %v6981, 0.3275911
      %v7030 = vmul.f32 %v6982, 0.3275911
      %v7031 = vmul.f32 %v6983, 0.3275911
      %v7032 = vmul.f32 %v6984, 0.3275911
      %v7033 = vmul.f32 %v6985, 0.3275911
      %v7034 = vmul.f32 %v6986, 0.3275911
      %v7035 = vmul.f32 %v6987, 0.3275911
      %v7036 = vmul.f32 %v6988, 0.3275911
      %v7037 = vmul.f32 %v6989, 0.3275911
      %v7038 = vmul.f32 %v6990, 0.3275911
      %v7039 = vmul.f32 %v6991, 0.3275911
      %v7040 = vmul.f32 %v6992, 0.3275911
      %v7041 = vmul.f32 %v6993, 0.3275911
      %v7042 = vmul.f32 %v6994, 0.3275911
      %v7043 = vmul.f32 %v6995, 0.3275911
      %v7044 = vmul.f32 %v6996, 0.3275911
      %v7045 = vmul.f32 %v6997, 0.3275911
      %v7046 = vmul.f32 %v6998, 0.3275911
      %v7047 = vmul.f32 %v6999, 0.3275911
      %v7048 = vmul.f32 %v7000, 0.3275911
      %v7049 = vmul.f32 %v7001, 0.3275911
      %v7050 = vmul.f32 %v7002, 0.3275911
      %v7051 = vmul.f32 %v7003, 0.3275911
      %v7052 = vmul.f32 %v7004, 0.3275911
      %v7053 = vmul.f32 %v7005, 0.3275911
      %v7054 = vmul.f32 %v7006, 0.3275911
      %v7055 = vmul.f32 %v7007, 0.3275911
      %v7056 = vmul.f32 %v7008, 0.3275911
      %v7057 = vmul.f32 %v7009, 0.3275911
      %v7058 = vmul.f32 %v7010, 0.3275911
      %v7059 = vmul.f32 %v7011, 0.3275911
      %v7060 = vmul.f32 %v7012, 0.3275911
      %v7061 = vmul.f32 %v7013, 0.3275911
      %v7062 = vmul.f32 %v7014, 0.3275911
      %v7063 = vmul.f32 %v7015, 0.3275911
      %v7064 = vmul.f32 %v7016, 0.3275911
      %v7065 = vmul.f32 %v7017, 0.3275911
      %v7066 = vmul.f32 %v7018, 0.3275911
      %v7067 = vmul.f32 %v7019, 0.3275911
      %v7068 = vmul.f32 %v7020, 0.3275911
      %v7069 = vmul.f32 %v7021, 0.3275911
      %v7070 = vmul.f32 %v7022, 0.3275911
      %v7071 = vmul.f32 %v7023, 0.3275911
      %v7072 = vmul.f32 %v7024, 0.3275911
      %v7073 = vmul.f32 %v7025, 0.3275911
      %v7074 = vmul.f32 %v7026, 0.3275911
      %v7075 = vmul.f32 %v7027, 0.3275911
      %v7076 = vmul.f32 %v7028, 0.3275911
      %v7077 = vadd.f32 %v7029, 1.0
      %v7078 = vadd.f32 %v7030, 1.0
      %v7079 = vadd.f32 %v7031, 1.0
      %v7080 = vadd.f32 %v7032, 1.0
      %v7081 = vadd.f32 %v7033, 1.0
      %v7082 = vadd.f32 %v7034, 1.0
      %v7083 = vadd.f32 %v7035, 1.0
      %v7084 = vadd.f32 %v7036, 1.0
      %v7085 = vadd.f32 %v7037, 1.0
      %v7086 = vadd.f32 %v7038, 1.0
      %v7087 = vadd.f32 %v7039, 1.0
      %v7088 = vadd.f32 %v7040, 1.0
      %v7089 = vadd.f32 %v7041, 1.0
      %v7090 = vadd.f32 %v7042, 1.0
      %v7091 = vadd.f32 %v7043, 1.0
      %v7092 = vadd.f32 %v7044, 1.0
      %v7093 = vadd.f32 %v7045, 1.0
      %v7094 = vadd.f32 %v7046, 1.0
      %v7095 = vadd.f32 %v7047, 1.0
      %v7096 = vadd.f32 %v7048, 1.0
      %v7097 = vadd.f32 %v7049, 1.0
      %v7098 = vadd.f32 %v7050, 1.0
      %v7099 = vadd.f32 %v7051, 1.0
      %v7100 = vadd.f32 %v7052, 1.0
      %v7101 = vadd.f32 %v7053, 1.0
      %v7102 = vadd.f32 %v7054, 1.0
      %v7103 = vadd.f32 %v7055, 1.0
      %v7104 = vadd.f32 %v7056, 1.0
      %v7105 = vadd.f32 %v7057, 1.0
      %v7106 = vadd.f32 %v7058, 1.0
      %v7107 = vadd.f32 %v7059, 1.0
      %v7108 = vadd.f32 %v7060, 1.0
      %v7109 = vadd.f32 %v7061, 1.0
      %v7110 = vadd.f32 %v7062, 1.0
      %v7111 = vadd.f32 %v7063, 1.0
      %v7112 = vadd.f32 %v7064, 1.0
      %v7113 = vadd.f32 %v7065, 1.0
      %v7114 = vadd.f32 %v7066, 1.0
      %v7115 = vadd.f32 %v7067, 1.0
      %v7116 = vadd.f32 %v7068, 1.0
      %v7117 = vadd.f32 %v7069, 1.0
      %v7118 = vadd.f32 %v7070, 1.0
      %v7119 = vadd.f32 %v7071, 1.0
      %v7120 = vadd.f32 %v7072, 1.0
      %v7121 = vadd.f32 %v7073, 1.0
      %v7122 = vadd.f32 %v7074, 1.0
      %v7123 = vadd.f32 %v7075, 1.0
      %v7124 = vadd.f32 %v7076, 1.0
      %v7125 = vrcp.pop %v7077
      %v7126 = vrcp.pop %v7078
      %v7127 = vrcp.pop %v7079
      %v7128 = vrcp.pop %v7080
      %v7129 = vrcp.pop %v7081
      %v7130 = vrcp.pop %v7082
      %v7131 = vrcp.pop %v7083
      %v7132 = vrcp.pop %v7084
      %v7133 = vrcp.pop %v7085
      %v7134 = vrcp.pop %v7086
      %v7135 = vrcp.pop %v7087
      %v7136 = vrcp.pop %v7088
      %v7137 = vrcp.pop %v7089
      %v7138 = vrcp.pop %v7090
      %v7139 = vrcp.pop %v7091
      %v7140 = vrcp.pop %v7092
      %v7141 = vrcp.pop %v7093
      %v7142 = vrcp.pop %v7094
      %v7143 = vrcp.pop %v7095
      %v7144 = vrcp.pop %v7096
      %v7145 = vrcp.pop %v7097
      %v7146 = vrcp.pop %v7098
      %v7147 = vrcp.pop %v7099
      %v7148 = vrcp.pop %v7100
      %v7149 = vrcp.pop %v7101
      %v7150 = vrcp.pop %v7102
      %v7151 = vrcp.pop %v7103
      %v7152 = vrcp.pop %v7104
      %v7153 = vrcp.pop %v7105
      %v7154 = vrcp.pop %v7106
      %v7155 = vrcp.pop %v7107
      %v7156 = vrcp.pop %v7108
      %v7157 = vrcp.pop %v7109
      %v7158 = vrcp.pop %v7110
      %v7159 = vrcp.pop %v7111
      %v7160 = vrcp.pop %v7112
      %v7161 = vrcp.pop %v7113
      %v7162 = vrcp.pop %v7114
      %v7163 = vrcp.pop %v7115
      %v7164 = vrcp.pop %v7116
      %v7165 = vrcp.pop %v7117
      %v7166 = vrcp.pop %v7118
      %v7167 = vrcp.pop %v7119
      %v7168 = vrcp.pop %v7120
      %v7169 = vrcp.pop %v7121
      %v7170 = vrcp.pop %v7122
      %v7171 = vrcp.pop %v7123
      %v7172 = vrcp.pop %v7124
      %v7173 = vmul.f32 %v7125, 1.0614054
      %v7174 = vmul.f32 %v7126, 1.0614054
      %v7175 = vmul.f32 %v7127, 1.0614054
      %v7176 = vmul.f32 %v7128, 1.0614054
      %v7177 = vmul.f32 %v7129, 1.0614054
      %v7178 = vmul.f32 %v7130, 1.0614054
      %v7179 = vmul.f32 %v7131, 1.0614054
      %v7180 = vmul.f32 %v7132, 1.0614054
      %v7181 = vmul.f32 %v7133, 1.0614054
      %v7182 = vmul.f32 %v7134, 1.0614054
      %v7183 = vmul.f32 %v7135, 1.0614054
      %v7184 = vmul.f32 %v7136, 1.0614054
      %v7185 = vmul.f32 %v7137, 1.0614054
      %v7186 = vmul.f32 %v7138, 1.0614054
      %v7187 = vmul.f32 %v7139, 1.0614054
      %v7188 = vmul.f32 %v7140, 1.0614054
      %v7189 = vmul.f32 %v7141, 1.0614054
      %v7190 = vmul.f32 %v7142, 1.0614054
      %v7191 = vmul.f32 %v7143, 1.0614054
      %v7192 = vmul.f32 %v7144, 1.0614054
      %v7193 = vmul.f32 %v7145, 1.0614054
      %v7194 = vmul.f32 %v7146, 1.0614054
      %v7195 = vmul.f32 %v7147, 1.0614054
      %v7196 = vmul.f32 %v7148, 1.0614054
      %v7197 = vmul.f32 %v7149, 1.0614054
      %v7198 = vmul.f32 %v7150, 1.0614054
      %v7199 = vmul.f32 %v7151, 1.0614054
      %v7200 = vmul.f32 %v7152, 1.0614054
      %v7201 = vmul.f32 %v7153, 1.0614054
      %v7202 = vmul.f32 %v7154, 1.0614054
      %v7203 = vmul.f32 %v7155, 1.0614054
      %v7204 = vmul.f32 %v7156, 1.0614054
      %v7205 = vmul.f32 %v7157, 1.0614054
      %v7206 = vmul.f32 %v7158, 1.0614054
      %v7207 = vmul.f32 %v7159, 1.0614054
      %v7208 = vmul.f32 %v7160, 1.0614054
      %v7209 = vmul.f32 %v7161, 1.0614054
      %v7210 = vmul.f32 %v7162, 1.0614054
      %v7211 = vmul.f32 %v7163, 1.0614054
      %v7212 = vmul.f32 %v7164, 1.0614054
      %v7213 = vmul.f32 %v7165, 1.0614054
      %v7214 = vmul.f32 %v7166, 1.0614054
      %v7215 = vmul.f32 %v7167, 1.0614054
      %v7216 = vmul.f32 %v7168, 1.0614054
      %v7217 = vmul.f32 %v7169, 1.0614054
      %v7218 = vmul.f32 %v7170, 1.0614054
      %v7219 = vmul.f32 %v7171, 1.0614054
      %v7220 = vmul.f32 %v7172, 1.0614054
      %v7221 = vadd.f32 %v7173, -1.4531521
      %v7222 = vadd.f32 %v7174, -1.4531521
      %v7223 = vadd.f32 %v7175, -1.4531521
      %v7224 = vadd.f32 %v7176, -1.4531521
      %v7225 = vadd.f32 %v7177, -1.4531521
      %v7226 = vadd.f32 %v7178, -1.4531521
      %v7227 = vadd.f32 %v7179, -1.4531521
      %v7228 = vadd.f32 %v7180, -1.4531521
      %v7229 = vadd.f32 %v7181, -1.4531521
      %v7230 = vadd.f32 %v7182, -1.4531521
      %v7231 = vadd.f32 %v7183, -1.4531521
      %v7232 = vadd.f32 %v7184, -1.4531521
      %v7233 = vadd.f32 %v7185, -1.4531521
      %v7234 = vadd.f32 %v7186, -1.4531521
      %v7235 = vadd.f32 %v7187, -1.4531521
      %v7236 = vadd.f32 %v7188, -1.4531521
      %v7237 = vadd.f32 %v7189, -1.4531521
      %v7238 = vadd.f32 %v7190, -1.4531521
      %v7239 = vadd.f32 %v7191, -1.4531521
      %v7240 = vadd.f32 %v7192, -1.4531521
      %v7241 = vadd.f32 %v7193, -1.4531521
      %v7242 = vadd.f32 %v7194, -1.4531521
      %v7243 = vadd.f32 %v7195, -1.4531521
      %v7244 = vadd.f32 %v7196, -1.4531521
      %v7245 = vadd.f32 %v7197, -1.4531521
      %v7246 = vadd.f32 %v7198, -1.4531521
      %v7247 = vadd.f32 %v7199, -1.4531521
      %v7248 = vadd.f32 %v7200, -1.4531521
      %v7249 = vadd.f32 %v7201, -1.4531521
      %v7250 = vadd.f32 %v7202, -1.4531521
      %v7251 = vadd.f32 %v7203, -1.4531521
      %v7252 = vadd.f32 %v7204, -1.4531521
      %v7253 = vadd.f32 %v7205, -1.4531521
      %v7254 = vadd.f32 %v7206, -1.4531521
      %v7255 = vadd.f32 %v7207, -1.4531521
      %v7256 = vadd.f32 %v7208, -1.4531521
      %v7257 = vadd.f32 %v7209, -1.4531521
      %v7258 = vadd.f32 %v7210, -1.4531521
      %v7259 = vadd.f32 %v7211, -1.4531521
      %v7260 = vadd.f32 %v7212, -1.4531521
      %v7261 = vadd.f32 %v7213, -1.4531521
      %v7262 = vadd.f32 %v7214, -1.4531521
      %v7263 = vadd.f32 %v7215, -1.4531521
      %v7264 = vadd.f32 %v7216, -1.4531521
      %v7265 = vadd.f32 %v7217, -1.4531521
      %v7266 = vadd.f32 %v7218, -1.4531521
      %v7267 = vadd.f32 %v7219, -1.4531521
      %v7268 = vadd.f32 %v7220, -1.4531521
      %v7269 = vmul.f32 %v7221, %v7125
      %v7270 = vmul.f32 %v7222, %v7126
      %v7271 = vmul.f32 %v7223, %v7127
      %v7272 = vmul.f32 %v7224, %v7128
      %v7273 = vmul.f32 %v7225, %v7129
      %v7274 = vmul.f32 %v7226, %v7130
      %v7275 = vmul.f32 %v7227, %v7131
      %v7276 = vmul.f32 %v7228, %v7132
      %v7277 = vmul.f32 %v7229, %v7133
      %v7278 = vmul.f32 %v7230, %v7134
      %v7279 = vmul.f32 %v7231, %v7135
      %v7280 = vmul.f32 %v7232, %v7136
      %v7281 = vmul.f32 %v7233, %v7137
      %v7282 = vmul.f32 %v7234, %v7138
      %v7283 = vmul.f32 %v7235, %v7139
      %v7284 = vmul.f32 %v7236, %v7140
      %v7285 = vmul.f32 %v7237, %v7141
      %v7286 = vmul.f32 %v7238, %v7142
      %v7287 = vmul.f32 %v7239, %v7143
      %v7288 = vmul.f32 %v7240, %v7144
      %v7289 = vmul.f32 %v7241, %v7145
      %v7290 = vmul.f32 %v7242, %v7146
      %v7291 = vmul.f32 %v7243, %v7147
      %v7292 = vmul.f32 %v7244, %v7148
      %v7293 = vmul.f32 %v7245, %v7149
      %v7294 = vmul.f32 %v7246, %v7150
      %v7295 = vmul.f32 %v7247, %v7151
      %v7296 = vmul.f32 %v7248, %v7152
      %v7297 = vmul.f32 %v7249, %v7153
      %v7298 = vmul.f32 %v7250, %v7154
      %v7299 = vmul.f32 %v7251, %v7155
      %v7300 = vmul.f32 %v7252, %v7156
      %v7301 = vmul.f32 %v7253, %v7157
      %v7302 = vmul.f32 %v7254, %v7158
      %v7303 = vmul.f32 %v7255, %v7159
      %v7304 = vmul.f32 %v7256, %v7160
      %v7305 = vmul.f32 %v7257, %v7161
      %v7306 = vmul.f32 %v7258, %v7162
      %v7307 = vmul.f32 %v7259, %v7163
      %v7308 = vmul.f32 %v7260, %v7164
      %v7309 = vmul.f32 %v7261, %v7165
      %v7310 = vmul.f32 %v7262, %v7166
      %v7311 = vmul.f32 %v7263, %v7167
      %v7312 = vmul.f32 %v7264, %v7168
      %v7313 = vmul.f32 %v7265, %v7169
      %v7314 = vmul.f32 %v7266, %v7170
      %v7315 = vmul.f32 %v7267, %v7171
      %v7316 = vmul.f32 %v7268, %v7172
      %v7317 = vadd.f32 %v7269, 1.4214138
      %v7318 = vadd.f32 %v7270, 1.4214138
      %v7319 = vadd.f32 %v7271, 1.4214138
      %v7320 = vadd.f32 %v7272, 1.4214138
      %v7321 = vadd.f32 %v7273, 1.4214138
      %v7322 = vadd.f32 %v7274, 1.4214138
      %v7323 = vadd.f32 %v7275, 1.4214138
      %v7324 = vadd.f32 %v7276, 1.4214138
      %v7325 = vadd.f32 %v7277, 1.4214138
      %v7326 = vadd.f32 %v7278, 1.4214138
      %v7327 = vadd.f32 %v7279, 1.4214138
      %v7328 = vadd.f32 %v7280, 1.4214138
      %v7329 = vadd.f32 %v7281, 1.4214138
      %v7330 = vadd.f32 %v7282, 1.4214138
      %v7331 = vadd.f32 %v7283, 1.4214138
      %v7332 = vadd.f32 %v7284, 1.4214138
      %v7333 = vadd.f32 %v7285, 1.4214138
      %v7334 = vadd.f32 %v7286, 1.4214138
      %v7335 = vadd.f32 %v7287, 1.4214138
      %v7336 = vadd.f32 %v7288, 1.4214138
      %v7337 = vadd.f32 %v7289, 1.4214138
      %v7338 = vadd.f32 %v7290, 1.4214138
      %v7339 = vadd.f32 %v7291, 1.4214138
      %v7340 = vadd.f32 %v7292, 1.4214138
      %v7341 = vadd.f32 %v7293, 1.4214138
      %v7342 = vadd.f32 %v7294, 1.4214138
      %v7343 = vadd.f32 %v7295, 1.4214138
      %v7344 = vadd.f32 %v7296, 1.4214138
      %v7345 = vadd.f32 %v7297, 1.4214138
      %v7346 = vadd.f32 %v7298, 1.4214138
      %v7347 = vadd.f32 %v7299, 1.4214138
      %v7348 = vadd.f32 %v7300, 1.4214138
      %v7349 = vadd.f32 %v7301, 1.4214138
      %v7350 = vadd.f32 %v7302, 1.4214138
      %v7351 = vadd.f32 %v7303, 1.4214138
      %v7352 = vadd.f32 %v7304, 1.4214138
      %v7353 = vadd.f32 %v7305, 1.4214138
      %v7354 = vadd.f32 %v7306, 1.4214138
      %v7355 = vadd.f32 %v7307, 1.4214138
      %v7356 = vadd.f32 %v7308, 1.4214138
      %v7357 = vadd.f32 %v7309, 1.4214138
      %v7358 = vadd.f32 %v7310, 1.4214138
      %v7359 = vadd.f32 %v7311, 1.4214138
      %v7360 = vadd.f32 %v7312, 1.4214138
      %v7361 = vadd.f32 %v7313, 1.4214138
      %v7362 = vadd.f32 %v7314, 1.4214138
      %v7363 = vadd.f32 %v7315, 1.4214138
      %v7364 = vadd.f32 %v7316, 1.4214138
      %v7365 = vmul.f32 %v7317, %v7125
      %v7366 = vmul.f32 %v7318, %v7126
      %v7367 = vmul.f32 %v7319, %v7127
      %v7368 = vmul.f32 %v7320, %v7128
      %v7369 = vmul.f32 %v7321, %v7129
      %v7370 = vmul.f32 %v7322, %v7130
      %v7371 = vmul.f32 %v7323, %v7131
      %v7372 = vmul.f32 %v7324, %v7132
      %v7373 = vmul.f32 %v7325, %v7133
      %v7374 = vmul.f32 %v7326, %v7134
      %v7375 = vmul.f32 %v7327, %v7135
      %v7376 = vmul.f32 %v7328, %v7136
      %v7377 = vmul.f32 %v7329, %v7137
      %v7378 = vmul.f32 %v7330, %v7138
      %v7379 = vmul.f32 %v7331, %v7139
      %v7380 = vmul.f32 %v7332, %v7140
      %v7381 = vmul.f32 %v7333, %v7141
      %v7382 = vmul.f32 %v7334, %v7142
      %v7383 = vmul.f32 %v7335, %v7143
      %v7384 = vmul.f32 %v7336, %v7144
      %v7385 = vmul.f32 %v7337, %v7145
      %v7386 = vmul.f32 %v7338, %v7146
      %v7387 = vmul.f32 %v7339, %v7147
      %v7388 = vmul.f32 %v7340, %v7148
      %v7389 = vmul.f32 %v7341, %v7149
      %v7390 = vmul.f32 %v7342, %v7150
      %v7391 = vmul.f32 %v7343, %v7151
      %v7392 = vmul.f32 %v7344, %v7152
      %v7393 = vmul.f32 %v7345, %v7153
      %v7394 = vmul.f32 %v7346, %v7154
      %v7395 = vmul.f32 %v7347, %v7155
      %v7396 = vmul.f32 %v7348, %v7156
      %v7397 = vmul.f32 %v7349, %v7157
      %v7398 = vmul.f32 %v7350, %v7158
      %v7399 = vmul.f32 %v7351, %v7159
      %v7400 = vmul.f32 %v7352, %v7160
      %v7401 = vmul.f32 %v7353, %v7161
      %v7402 = vmul.f32 %v7354, %v7162
      %v7403 = vmul.f32 %v7355, %v7163
      %v7404 = vmul.f32 %v7356, %v7164
      %v7405 = vmul.f32 %v7357, %v7165
      %v7406 = vmul.f32 %v7358, %v7166
      %v7407 = vmul.f32 %v7359, %v7167
      %v7408 = vmul.f32 %v7360, %v7168
      %v7409 = vmul.f32 %v7361, %v7169
      %v7410 = vmul.f32 %v7362, %v7170
      %v7411 = vmul.f32 %v7363, %v7171
      %v7412 = vmul.f32 %v7364, %v7172
      %v7413 = vadd.f32 %v7365, -0.28449672
      %v7414 = vadd.f32 %v7366, -0.28449672
      %v7415 = vadd.f32 %v7367, -0.28449672
      %v7416 = vadd.f32 %v7368, -0.28449672
      %v7417 = vadd.f32 %v7369, -0.28449672
      %v7418 = vadd.f32 %v7370, -0.28449672
      %v7419 = vadd.f32 %v7371, -0.28449672
      %v7420 = vadd.f32 %v7372, -0.28449672
      %v7421 = vadd.f32 %v7373, -0.28449672
      %v7422 = vadd.f32 %v7374, -0.28449672
      %v7423 = vadd.f32 %v7375, -0.28449672
      %v7424 = vadd.f32 %v7376, -0.28449672
      %v7425 = vadd.f32 %v7377, -0.28449672
      %v7426 = vadd.f32 %v7378, -0.28449672
      %v7427 = vadd.f32 %v7379, -0.28449672
      %v7428 = vadd.f32 %v7380, -0.28449672
      %v7429 = vadd.f32 %v7381, -0.28449672
      %v7430 = vadd.f32 %v7382, -0.28449672
      %v7431 = vadd.f32 %v7383, -0.28449672
      %v7432 = vadd.f32 %v7384, -0.28449672
      %v7433 = vadd.f32 %v7385, -0.28449672
      %v7434 = vadd.f32 %v7386, -0.28449672
      %v7435 = vadd.f32 %v7387, -0.28449672
      %v7436 = vadd.f32 %v7388, -0.28449672
      %v7437 = vadd.f32 %v7389, -0.28449672
      %v7438 = vadd.f32 %v7390, -0.28449672
      %v7439 = vadd.f32 %v7391, -0.28449672
      %v7440 = vadd.f32 %v7392, -0.28449672
      %v7441 = vadd.f32 %v7393, -0.28449672
      %v7442 = vadd.f32 %v7394, -0.28449672
      %v7443 = vadd.f32 %v7395, -0.28449672
      %v7444 = vadd.f32 %v7396, -0.28449672
      %v7445 = vadd.f32 %v7397, -0.28449672
      %v7446 = vadd.f32 %v7398, -0.28449672
      %v7447 = vadd.f32 %v7399, -0.28449672
      %v7448 = vadd.f32 %v7400, -0.28449672
      %v7449 = vadd.f32 %v7401, -0.28449672
      %v7450 = vadd.f32 %v7402, -0.28449672
      %v7451 = vadd.f32 %v7403, -0.28449672
      %v7452 = vadd.f32 %v7404, -0.28449672
      %v7453 = vadd.f32 %v7405, -0.28449672
      %v7454 = vadd.f32 %v7406, -0.28449672
      %v7455 = vadd.f32 %v7407, -0.28449672
      %v7456 = vadd.f32 %v7408, -0.28449672
      %v7457 = vadd.f32 %v7409, -0.28449672
      %v7458 = vadd.f32 %v7410, -0.28449672
      %v7459 = vadd.f32 %v7411, -0.28449672
      %v7460 = vadd.f32 %v7412, -0.28449672
      %v7461 = vmul.f32 %v7413, %v7125
      %v7462 = vmul.f32 %v7414, %v7126
      %v7463 = vmul.f32 %v7415, %v7127
      %v7464 = vmul.f32 %v7416, %v7128
      %v7465 = vmul.f32 %v7417, %v7129
      %v7466 = vmul.f32 %v7418, %v7130
      %v7467 = vmul.f32 %v7419, %v7131
      %v7468 = vmul.f32 %v7420, %v7132
      %v7469 = vmul.f32 %v7421, %v7133
      %v7470 = vmul.f32 %v7422, %v7134
      %v7471 = vmul.f32 %v7423, %v7135
      %v7472 = vmul.f32 %v7424, %v7136
      %v7473 = vmul.f32 %v7425, %v7137
      %v7474 = vmul.f32 %v7426, %v7138
      %v7475 = vmul.f32 %v7427, %v7139
      %v7476 = vmul.f32 %v7428, %v7140
      %v7477 = vmul.f32 %v7429, %v7141
      %v7478 = vmul.f32 %v7430, %v7142
      %v7479 = vmul.f32 %v7431, %v7143
      %v7480 = vmul.f32 %v7432, %v7144
      %v7481 = vmul.f32 %v7433, %v7145
      %v7482 = vmul.f32 %v7434, %v7146
      %v7483 = vmul.f32 %v7435, %v7147
      %v7484 = vmul.f32 %v7436, %v7148
      %v7485 = vmul.f32 %v7437, %v7149
      %v7486 = vmul.f32 %v7438, %v7150
      %v7487 = vmul.f32 %v7439, %v7151
      %v7488 = vmul.f32 %v7440, %v7152
      %v7489 = vmul.f32 %v7441, %v7153
      %v7490 = vmul.f32 %v7442, %v7154
      %v7491 = vmul.f32 %v7443, %v7155
      %v7492 = vmul.f32 %v7444, %v7156
      %v7493 = vmul.f32 %v7445, %v7157
      %v7494 = vmul.f32 %v7446, %v7158
      %v7495 = vmul.f32 %v7447, %v7159
      %v7496 = vmul.f32 %v7448, %v7160
      %v7497 = vmul.f32 %v7449, %v7161
      %v7498 = vmul.f32 %v7450, %v7162
      %v7499 = vmul.f32 %v7451, %v7163
      %v7500 = vmul.f32 %v7452, %v7164
      %v7501 = vmul.f32 %v7453, %v7165
      %v7502 = vmul.f32 %v7454, %v7166
      %v7503 = vmul.f32 %v7455, %v7167
      %v7504 = vmul.f32 %v7456, %v7168
      %v7505 = vmul.f32 %v7457, %v7169
      %v7506 = vmul.f32 %v7458, %v7170
      %v7507 = vmul.f32 %v7459, %v7171
      %v7508 = vmul.f32 %v7460, %v7172
      %v7509 = vadd.f32 %v7461, 0.2548296
      %v7510 = vadd.f32 %v7462, 0.2548296
      %v7511 = vadd.f32 %v7463, 0.2548296
      %v7512 = vadd.f32 %v7464, 0.2548296
      %v7513 = vadd.f32 %v7465, 0.2548296
      %v7514 = vadd.f32 %v7466, 0.2548296
      %v7515 = vadd.f32 %v7467, 0.2548296
      %v7516 = vadd.f32 %v7468, 0.2548296
      %v7517 = vadd.f32 %v7469, 0.2548296
      %v7518 = vadd.f32 %v7470, 0.2548296
      %v7519 = vadd.f32 %v7471, 0.2548296
      %v7520 = vadd.f32 %v7472, 0.2548296
      %v7521 = vadd.f32 %v7473, 0.2548296
      %v7522 = vadd.f32 %v7474, 0.2548296
      %v7523 = vadd.f32 %v7475, 0.2548296
      %v7524 = vadd.f32 %v7476, 0.2548296
      %v7525 = vadd.f32 %v7477, 0.2548296
      %v7526 = vadd.f32 %v7478, 0.2548296
      %v7527 = vadd.f32 %v7479, 0.2548296
      %v7528 = vadd.f32 %v7480, 0.2548296
      %v7529 = vadd.f32 %v7481, 0.2548296
      %v7530 = vadd.f32 %v7482, 0.2548296
      %v7531 = vadd.f32 %v7483, 0.2548296
      %v7532 = vadd.f32 %v7484, 0.2548296
      %v7533 = vadd.f32 %v7485, 0.2548296
      %v7534 = vadd.f32 %v7486, 0.2548296
      %v7535 = vadd.f32 %v7487, 0.2548296
      %v7536 = vadd.f32 %v7488, 0.2548296
      %v7537 = vadd.f32 %v7489, 0.2548296
      %v7538 = vadd.f32 %v7490, 0.2548296
      %v7539 = vadd.f32 %v7491, 0.2548296
      %v7540 = vadd.f32 %v7492, 0.2548296
      %v7541 = vadd.f32 %v7493, 0.2548296
      %v7542 = vadd.f32 %v7494, 0.2548296
      %v7543 = vadd.f32 %v7495, 0.2548296
      %v7544 = vadd.f32 %v7496, 0.2548296
      %v7545 = vadd.f32 %v7497, 0.2548296
      %v7546 = vadd.f32 %v7498, 0.2548296
      %v7547 = vadd.f32 %v7499, 0.2548296
      %v7548 = vadd.f32 %v7500, 0.2548296
      %v7549 = vadd.f32 %v7501, 0.2548296
      %v7550 = vadd.f32 %v7502, 0.2548296
      %v7551 = vadd.f32 %v7503, 0.2548296
      %v7552 = vadd.f32 %v7504, 0.2548296
      %v7553 = vadd.f32 %v7505, 0.2548296
      %v7554 = vadd.f32 %v7506, 0.2548296
      %v7555 = vadd.f32 %v7507, 0.2548296
      %v7556 = vadd.f32 %v7508, 0.2548296
      %v7557 = vmul.f32 %v7509, %v7125
      %v7558 = vmul.f32 %v7510, %v7126
      %v7559 = vmul.f32 %v7511, %v7127
      %v7560 = vmul.f32 %v7512, %v7128
      %v7561 = vmul.f32 %v7513, %v7129
      %v7562 = vmul.f32 %v7514, %v7130
      %v7563 = vmul.f32 %v7515, %v7131
      %v7564 = vmul.f32 %v7516, %v7132
      %v7565 = vmul.f32 %v7517, %v7133
      %v7566 = vmul.f32 %v7518, %v7134
      %v7567 = vmul.f32 %v7519, %v7135
      %v7568 = vmul.f32 %v7520, %v7136
      %v7569 = vmul.f32 %v7521, %v7137
      %v7570 = vmul.f32 %v7522, %v7138
      %v7571 = vmul.f32 %v7523, %v7139
      %v7572 = vmul.f32 %v7524, %v7140
      %v7573 = vmul.f32 %v7525, %v7141
      %v7574 = vmul.f32 %v7526, %v7142
      %v7575 = vmul.f32 %v7527, %v7143
      %v7576 = vmul.f32 %v7528, %v7144
      %v7577 = vmul.f32 %v7529, %v7145
      %v7578 = vmul.f32 %v7530, %v7146
      %v7579 = vmul.f32 %v7531, %v7147
      %v7580 = vmul.f32 %v7532, %v7148
      %v7581 = vmul.f32 %v7533, %v7149
      %v7582 = vmul.f32 %v7534, %v7150
      %v7583 = vmul.f32 %v7535, %v7151
      %v7584 = vmul.f32 %v7536, %v7152
      %v7585 = vmul.f32 %v7537, %v7153
      %v7586 = vmul.f32 %v7538, %v7154
      %v7587 = vmul.f32 %v7539, %v7155
      %v7588 = vmul.f32 %v7540, %v7156
      %v7589 = vmul.f32 %v7541, %v7157
      %v7590 = vmul.f32 %v7542, %v7158
      %v7591 = vmul.f32 %v7543, %v7159
      %v7592 = vmul.f32 %v7544, %v7160
      %v7593 = vmul.f32 %v7545, %v7161
      %v7594 = vmul.f32 %v7546, %v7162
      %v7595 = vmul.f32 %v7547, %v7163
      %v7596 = vmul.f32 %v7548, %v7164
      %v7597 = vmul.f32 %v7549, %v7165
      %v7598 = vmul.f32 %v7550, %v7166
      %v7599 = vmul.f32 %v7551, %v7167
      %v7600 = vmul.f32 %v7552, %v7168
      %v7601 = vmul.f32 %v7553, %v7169
      %v7602 = vmul.f32 %v7554, %v7170
      %v7603 = vmul.f32 %v7555, %v7171
      %v7604 = vmul.f32 %v7556, %v7172
      %v7605 = vsub.f32 0.0, %v6981
      %v7606 = vsub.f32 0.0, %v6982
      %v7607 = vsub.f32 0.0, %v6983
      %v7608 = vsub.f32 0.0, %v6984
      %v7609 = vsub.f32 0.0, %v6985
      %v7610 = vsub.f32 0.0, %v6986
      %v7611 = vsub.f32 0.0, %v6987
      %v7612 = vsub.f32 0.0, %v6988
      %v7613 = vsub.f32 0.0, %v6989
      %v7614 = vsub.f32 0.0, %v6990
      %v7615 = vsub.f32 0.0, %v6991
      %v7616 = vsub.f32 0.0, %v6992
      %v7617 = vsub.f32 0.0, %v6993
      %v7618 = vsub.f32 0.0, %v6994
      %v7619 = vsub.f32 0.0, %v6995
      %v7620 = vsub.f32 0.0, %v6996
      %v7621 = vsub.f32 0.0, %v6997
      %v7622 = vsub.f32 0.0, %v6998
      %v7623 = vsub.f32 0.0, %v6999
      %v7624 = vsub.f32 0.0, %v7000
      %v7625 = vsub.f32 0.0, %v7001
      %v7626 = vsub.f32 0.0, %v7002
      %v7627 = vsub.f32 0.0, %v7003
      %v7628 = vsub.f32 0.0, %v7004
      %v7629 = vsub.f32 0.0, %v7005
      %v7630 = vsub.f32 0.0, %v7006
      %v7631 = vsub.f32 0.0, %v7007
      %v7632 = vsub.f32 0.0, %v7008
      %v7633 = vsub.f32 0.0, %v7009
      %v7634 = vsub.f32 0.0, %v7010
      %v7635 = vsub.f32 0.0, %v7011
      %v7636 = vsub.f32 0.0, %v7012
      %v7637 = vsub.f32 0.0, %v7013
      %v7638 = vsub.f32 0.0, %v7014
      %v7639 = vsub.f32 0.0, %v7015
      %v7640 = vsub.f32 0.0, %v7016
      %v7641 = vsub.f32 0.0, %v7017
      %v7642 = vsub.f32 0.0, %v7018
      %v7643 = vsub.f32 0.0, %v7019
      %v7644 = vsub.f32 0.0, %v7020
      %v7645 = vsub.f32 0.0, %v7021
      %v7646 = vsub.f32 0.0, %v7022
      %v7647 = vsub.f32 0.0, %v7023
      %v7648 = vsub.f32 0.0, %v7024
      %v7649 = vsub.f32 0.0, %v7025
      %v7650 = vsub.f32 0.0, %v7026
      %v7651 = vsub.f32 0.0, %v7027
      %v7652 = vsub.f32 0.0, %v7028
      %v7653 = vmul.f32 %v7605, %v6981
      %v7654 = vmul.f32 %v7606, %v6982
      %v7655 = vmul.f32 %v7607, %v6983
      %v7656 = vmul.f32 %v7608, %v6984
      %v7657 = vmul.f32 %v7609, %v6985
      %v7658 = vmul.f32 %v7610, %v6986
      %v7659 = vmul.f32 %v7611, %v6987
      %v7660 = vmul.f32 %v7612, %v6988
      %v7661 = vmul.f32 %v7613, %v6989
      %v7662 = vmul.f32 %v7614, %v6990
      %v7663 = vmul.f32 %v7615, %v6991
      %v7664 = vmul.f32 %v7616, %v6992
      %v7665 = vmul.f32 %v7617, %v6993
      %v7666 = vmul.f32 %v7618, %v6994
      %v7667 = vmul.f32 %v7619, %v6995
      %v7668 = vmul.f32 %v7620, %v6996
      %v7669 = vmul.f32 %v7621, %v6997
      %v7670 = vmul.f32 %v7622, %v6998
      %v7671 = vmul.f32 %v7623, %v6999
      %v7672 = vmul.f32 %v7624, %v7000
      %v7673 = vmul.f32 %v7625, %v7001
      %v7674 = vmul.f32 %v7626, %v7002
      %v7675 = vmul.f32 %v7627, %v7003
      %v7676 = vmul.f32 %v7628, %v7004
      %v7677 = vmul.f32 %v7629, %v7005
      %v7678 = vmul.f32 %v7630, %v7006
      %v7679 = vmul.f32 %v7631, %v7007
      %v7680 = vmul.f32 %v7632, %v7008
      %v7681 = vmul.f32 %v7633, %v7009
      %v7682 = vmul.f32 %v7634, %v7010
      %v7683 = vmul.f32 %v7635, %v7011
      %v7684 = vmul.f32 %v7636, %v7012
      %v7685 = vmul.f32 %v7637, %v7013
      %v7686 = vmul.f32 %v7638, %v7014
      %v7687 = vmul.f32 %v7639, %v7015
      %v7688 = vmul.f32 %v7640, %v7016
      %v7689 = vmul.f32 %v7641, %v7017
      %v7690 = vmul.f32 %v7642, %v7018
      %v7691 = vmul.f32 %v7643, %v7019
      %v7692 = vmul.f32 %v7644, %v7020
      %v7693 = vmul.f32 %v7645, %v7021
      %v7694 = vmul.f32 %v7646, %v7022
      %v7695 = vmul.f32 %v7647, %v7023
      %v7696 = vmul.f32 %v7648, %v7024
      %v7697 = vmul.f32 %v7649, %v7025
      %v7698 = vmul.f32 %v7650, %v7026
      %v7699 = vmul.f32 %v7651, %v7027
      %v7700 = vmul.f32 %v7652, %v7028
      %v7701 = vmul.f32 %v7653, 1.442695
      %v7702 = vpow.pop %v7701
      %v7703 = vmul.f32 %v7654, 1.442695
      %v7704 = vpow.pop %v7703
      %v7705 = vmul.f32 %v7655, 1.442695
      %v7706 = vpow.pop %v7705
      %v7707 = vmul.f32 %v7656, 1.442695
      %v7708 = vpow.pop %v7707
      %v7709 = vmul.f32 %v7657, 1.442695
      %v7710 = vpow.pop %v7709
      %v7711 = vmul.f32 %v7658, 1.442695
      %v7712 = vpow.pop %v7711
      %v7713 = vmul.f32 %v7659, 1.442695
      %v7714 = vpow.pop %v7713
      %v7715 = vmul.f32 %v7660, 1.442695
      %v7716 = vpow.pop %v7715
      %v7717 = vmul.f32 %v7661, 1.442695
      %v7718 = vpow.pop %v7717
      %v7719 = vmul.f32 %v7662, 1.442695
      %v7720 = vpow.pop %v7719
      %v7721 = vmul.f32 %v7663, 1.442695
      %v7722 = vpow.pop %v7721
      %v7723 = vmul.f32 %v7664, 1.442695
      %v7724 = vpow.pop %v7723
      %v7725 = vmul.f32 %v7665, 1.442695
      %v7726 = vpow.pop %v7725
      %v7727 = vmul.f32 %v7666, 1.442695
      %v7728 = vpow.pop %v7727
      %v7729 = vmul.f32 %v7667, 1.442695
      %v7730 = vpow.pop %v7729
      %v7731 = vmul.f32 %v7668, 1.442695
      %v7732 = vpow.pop %v7731
      %v7733 = vmul.f32 %v7669, 1.442695
      %v7734 = vpow.pop %v7733
      %v7735 = vmul.f32 %v7670, 1.442695
      %v7736 = vpow.pop %v7735
      %v7737 = vmul.f32 %v7671, 1.442695
      %v7738 = vpow.pop %v7737
      %v7739 = vmul.f32 %v7672, 1.442695
      %v7740 = vpow.pop %v7739
      %v7741 = vmul.f32 %v7673, 1.442695
      %v7742 = vpow.pop %v7741
      %v7743 = vmul.f32 %v7674, 1.442695
      %v7744 = vpow.pop %v7743
      %v7745 = vmul.f32 %v7675, 1.442695
      %v7746 = vpow.pop %v7745
      %v7747 = vmul.f32 %v7676, 1.442695
      %v7748 = vpow.pop %v7747
      %v7749 = vmul.f32 %v7677, 1.442695
      %v7750 = vpow.pop %v7749
      %v7751 = vmul.f32 %v7678, 1.442695
      %v7752 = vpow.pop %v7751
      %v7753 = vmul.f32 %v7679, 1.442695
      %v7754 = vpow.pop %v7753
      %v7755 = vmul.f32 %v7680, 1.442695
      %v7756 = vpow.pop %v7755
      %v7757 = vmul.f32 %v7681, 1.442695
      %v7758 = vpow.pop %v7757
      %v7759 = vmul.f32 %v7682, 1.442695
      %v7760 = vpow.pop %v7759
      %v7761 = vmul.f32 %v7683, 1.442695
      %v7762 = vpow.pop %v7761
      %v7763 = vmul.f32 %v7684, 1.442695
      %v7764 = vpow.pop %v7763
      %v7765 = vmul.f32 %v7685, 1.442695
      %v7766 = vpow.pop %v7765
      %v7767 = vmul.f32 %v7686, 1.442695
      %v7768 = vpow.pop %v7767
      %v7769 = vmul.f32 %v7687, 1.442695
      %v7770 = vpow.pop %v7769
      %v7771 = vmul.f32 %v7688, 1.442695
      %v7772 = vpow.pop %v7771
      %v7773 = vmul.f32 %v7689, 1.442695
      %v7774 = vpow.pop %v7773
      %v7775 = vmul.f32 %v7690, 1.442695
      %v7776 = vpow.pop %v7775
      %v7777 = vmul.f32 %v7691, 1.442695
      %v7778 = vpow.pop %v7777
      %v7779 = vmul.f32 %v7692, 1.442695
      %v7780 = vpow.pop %v7779
      %v7781 = vmul.f32 %v7693, 1.442695
      %v7782 = vpow.pop %v7781
      %v7783 = vmul.f32 %v7694, 1.442695
      %v7784 = vpow.pop %v7783
      %v7785 = vmul.f32 %v7695, 1.442695
      %v7786 = vpow.pop %v7785
      %v7787 = vmul.f32 %v7696, 1.442695
      %v7788 = vpow.pop %v7787
      %v7789 = vmul.f32 %v7697, 1.442695
      %v7790 = vpow.pop %v7789
      %v7791 = vmul.f32 %v7698, 1.442695
      %v7792 = vpow.pop %v7791
      %v7793 = vmul.f32 %v7699, 1.442695
      %v7794 = vpow.pop %v7793
      %v7795 = vmul.f32 %v7700, 1.442695
      %v7796 = vpow.pop %v7795
      %v7797 = vmul.f32 %v7557, %v7702
      %v7798 = vmul.f32 %v7558, %v7704
      %v7799 = vmul.f32 %v7559, %v7706
      %v7800 = vmul.f32 %v7560, %v7708
      %v7801 = vmul.f32 %v7561, %v7710
      %v7802 = vmul.f32 %v7562, %v7712
      %v7803 = vmul.f32 %v7563, %v7714
      %v7804 = vmul.f32 %v7564, %v7716
      %v7805 = vmul.f32 %v7565, %v7718
      %v7806 = vmul.f32 %v7566, %v7720
      %v7807 = vmul.f32 %v7567, %v7722
      %v7808 = vmul.f32 %v7568, %v7724
      %v7809 = vmul.f32 %v7569, %v7726
      %v7810 = vmul.f32 %v7570, %v7728
      %v7811 = vmul.f32 %v7571, %v7730
      %v7812 = vmul.f32 %v7572, %v7732
      %v7813 = vmul.f32 %v7573, %v7734
      %v7814 = vmul.f32 %v7574, %v7736
      %v7815 = vmul.f32 %v7575, %v7738
      %v7816 = vmul.f32 %v7576, %v7740
      %v7817 = vmul.f32 %v7577, %v7742
      %v7818 = vmul.f32 %v7578, %v7744
      %v7819 = vmul.f32 %v7579, %v7746
      %v7820 = vmul.f32 %v7580, %v7748
      %v7821 = vmul.f32 %v7581, %v7750
      %v7822 = vmul.f32 %v7582, %v7752
      %v7823 = vmul.f32 %v7583, %v7754
      %v7824 = vmul.f32 %v7584, %v7756
      %v7825 = vmul.f32 %v7585, %v7758
      %v7826 = vmul.f32 %v7586, %v7760
      %v7827 = vmul.f32 %v7587, %v7762
      %v7828 = vmul.f32 %v7588, %v7764
      %v7829 = vmul.f32 %v7589, %v7766
      %v7830 = vmul.f32 %v7590, %v7768
      %v7831 = vmul.f32 %v7591, %v7770
      %v7832 = vmul.f32 %v7592, %v7772
      %v7833 = vmul.f32 %v7593, %v7774
      %v7834 = vmul.f32 %v7594, %v7776
      %v7835 = vmul.f32 %v7595, %v7778
      %v7836 = vmul.f32 %v7596, %v7780
      %v7837 = vmul.f32 %v7597, %v7782
      %v7838 = vmul.f32 %v7598, %v7784
      %v7839 = vmul.f32 %v7599, %v7786
      %v7840 = vmul.f32 %v7600, %v7788
      %v7841 = vmul.f32 %v7601, %v7790
      %v7842 = vmul.f32 %v7602, %v7792
      %v7843 = vmul.f32 %v7603, %v7794
      %v7844 = vmul.f32 %v7604, %v7796
      %v7845 = vsub.f32 1.0, %v7797
      %v7846 = vsub.f32 1.0, %v7798
      %v7847 = vsub.f32 1.0, %v7799
      %v7848 = vsub.f32 1.0, %v7800
      %v7849 = vsub.f32 1.0, %v7801
      %v7850 = vsub.f32 1.0, %v7802
      %v7851 = vsub.f32 1.0, %v7803
      %v7852 = vsub.f32 1.0, %v7804
      %v7853 = vsub.f32 1.0, %v7805
      %v7854 = vsub.f32 1.0, %v7806
      %v7855 = vsub.f32 1.0, %v7807
      %v7856 = vsub.f32 1.0, %v7808
      %v7857 = vsub.f32 1.0, %v7809
      %v7858 = vsub.f32 1.0, %v7810
      %v7859 = vsub.f32 1.0, %v7811
      %v7860 = vsub.f32 1.0, %v7812
      %v7861 = vsub.f32 1.0, %v7813
      %v7862 = vsub.f32 1.0, %v7814
      %v7863 = vsub.f32 1.0, %v7815
      %v7864 = vsub.f32 1.0, %v7816
      %v7865 = vsub.f32 1.0, %v7817
      %v7866 = vsub.f32 1.0, %v7818
      %v7867 = vsub.f32 1.0, %v7819
      %v7868 = vsub.f32 1.0, %v7820
      %v7869 = vsub.f32 1.0, %v7821
      %v7870 = vsub.f32 1.0, %v7822
      %v7871 = vsub.f32 1.0, %v7823
      %v7872 = vsub.f32 1.0, %v7824
      %v7873 = vsub.f32 1.0, %v7825
      %v7874 = vsub.f32 1.0, %v7826
      %v7875 = vsub.f32 1.0, %v7827
      %v7876 = vsub.f32 1.0, %v7828
      %v7877 = vsub.f32 1.0, %v7829
      %v7878 = vsub.f32 1.0, %v7830
      %v7879 = vsub.f32 1.0, %v7831
      %v7880 = vsub.f32 1.0, %v7832
      %v7881 = vsub.f32 1.0, %v7833
      %v7882 = vsub.f32 1.0, %v7834
      %v7883 = vsub.f32 1.0, %v7835
      %v7884 = vsub.f32 1.0, %v7836
      %v7885 = vsub.f32 1.0, %v7837
      %v7886 = vsub.f32 1.0, %v7838
      %v7887 = vsub.f32 1.0, %v7839
      %v7888 = vsub.f32 1.0, %v7840
      %v7889 = vsub.f32 1.0, %v7841
      %v7890 = vsub.f32 1.0, %v7842
      %v7891 = vsub.f32 1.0, %v7843
      %v7892 = vsub.f32 1.0, %v7844
      %vm7893 = vcmp.lt.f32.partialorder %v6933, 0.0
      %vm7894 = vcmp.lt.f32.partialorder %v6934, 0.0
      %vm7895 = vcmp.lt.f32.partialorder %v6935, 0.0
      %vm7896 = vcmp.lt.f32.partialorder %v6936, 0.0
      %vm7897 = vcmp.lt.f32.partialorder %v6937, 0.0
      %vm7898 = vcmp.lt.f32.partialorder %v6938, 0.0
      %vm7899 = vcmp.lt.f32.partialorder %v6939, 0.0
      %vm7900 = vcmp.lt.f32.partialorder %v6940, 0.0
      %vm7901 = vcmp.lt.f32.partialorder %v6941, 0.0
      %vm7902 = vcmp.lt.f32.partialorder %v6942, 0.0
      %vm7903 = vcmp.lt.f32.partialorder %v6943, 0.0
      %vm7904 = vcmp.lt.f32.partialorder %v6944, 0.0
      %vm7905 = vcmp.lt.f32.partialorder %v6945, 0.0
      %vm7906 = vcmp.lt.f32.partialorder %v6946, 0.0
      %vm7907 = vcmp.lt.f32.partialorder %v6947, 0.0
      %vm7908 = vcmp.lt.f32.partialorder %v6948, 0.0
      %vm7909 = vcmp.lt.f32.partialorder %v6949, 0.0
      %vm7910 = vcmp.lt.f32.partialorder %v6950, 0.0
      %vm7911 = vcmp.lt.f32.partialorder %v6951, 0.0
      %vm7912 = vcmp.lt.f32.partialorder %v6952, 0.0
      %vm7913 = vcmp.lt.f32.partialorder %v6953, 0.0
      %vm7914 = vcmp.lt.f32.partialorder %v6954, 0.0
      %vm7915 = vcmp.lt.f32.partialorder %v6955, 0.0
      %vm7916 = vcmp.lt.f32.partialorder %v6956, 0.0
      %vm7917 = vcmp.lt.f32.partialorder %v6957, 0.0
      %vm7918 = vcmp.lt.f32.partialorder %v6958, 0.0
      %vm7919 = vcmp.lt.f32.partialorder %v6959, 0.0
      %vm7920 = vcmp.lt.f32.partialorder %v6960, 0.0
      %vm7921 = vcmp.lt.f32.partialorder %v6961, 0.0
      %vm7922 = vcmp.lt.f32.partialorder %v6962, 0.0
      %vm7923 = vcmp.lt.f32.partialorder %v6963, 0.0
      %vm7924 = vcmp.lt.f32.partialorder %v6964, 0.0
      %vm7925 = vcmp.lt.f32.partialorder %v6965, 0.0
      %vm7926 = vcmp.lt.f32.partialorder %v6966, 0.0
      %vm7927 = vcmp.lt.f32.partialorder %v6967, 0.0
      %vm7928 = vcmp.lt.f32.partialorder %v6968, 0.0
      %vm7929 = vcmp.lt.f32.partialorder %v6969, 0.0
      %vm7930 = vcmp.lt.f32.partialorder %v6970, 0.0
      %vm7931 = vcmp.lt.f32.partialorder %v6971, 0.0
      %vm7932 = vcmp.lt.f32.partialorder %v6972, 0.0
      %vm7933 = vcmp.lt.f32.partialorder %v6973, 0.0
      %vm7934 = vcmp.lt.f32.partialorder %v6974, 0.0
      %vm7935 = vcmp.lt.f32.partialorder %v6975, 0.0
      %vm7936 = vcmp.lt.f32.partialorder %v6976, 0.0
      %vm7937 = vcmp.lt.f32.partialorder %v6977, 0.0
      %vm7938 = vcmp.lt.f32.partialorder %v6978, 0.0
      %vm7939 = vcmp.lt.f32.partialorder %v6979, 0.0
      %vm7940 = vcmp.lt.f32.partialorder %v6980, 0.0
      %v7941 = vsub.f32 0.0, %v7845
      %v7942 = vsub.f32 0.0, %v7846
      %v7943 = vsub.f32 0.0, %v7847
      %v7944 = vsub.f32 0.0, %v7848
      %v7945 = vsub.f32 0.0, %v7849
      %v7946 = vsub.f32 0.0, %v7850
      %v7947 = vsub.f32 0.0, %v7851
      %v7948 = vsub.f32 0.0, %v7852
      %v7949 = vsub.f32 0.0, %v7853
      %v7950 = vsub.f32 0.0, %v7854
      %v7951 = vsub.f32 0.0, %v7855
      %v7952 = vsub.f32 0.0, %v7856
      %v7953 = vsub.f32 0.0, %v7857
      %v7954 = vsub.f32 0.0, %v7858
      %v7955 = vsub.f32 0.0, %v7859
      %v7956 = vsub.f32 0.0, %v7860
      %v7957 = vsub.f32 0.0, %v7861
      %v7958 = vsub.f32 0.0, %v7862
      %v7959 = vsub.f32 0.0, %v7863
      %v7960 = vsub.f32 0.0, %v7864
      %v7961 = vsub.f32 0.0, %v7865
      %v7962 = vsub.f32 0.0, %v7866
      %v7963 = vsub.f32 0.0, %v7867
      %v7964 = vsub.f32 0.0, %v7868
      %v7965 = vsub.f32 0.0, %v7869
      %v7966 = vsub.f32 0.0, %v7870
      %v7967 = vsub.f32 0.0, %v7871
      %v7968 = vsub.f32 0.0, %v7872
      %v7969 = vsub.f32 0.0, %v7873
      %v7970 = vsub.f32 0.0, %v7874
      %v7971 = vsub.f32 0.0, %v7875
      %v7972 = vsub.f32 0.0, %v7876
      %v7973 = vsub.f32 0.0, %v7877
      %v7974 = vsub.f32 0.0, %v7878
      %v7975 = vsub.f32 0.0, %v7879
      %v7976 = vsub.f32 0.0, %v7880
      %v7977 = vsub.f32 0.0, %v7881
      %v7978 = vsub.f32 0.0, %v7882
      %v7979 = vsub.f32 0.0, %v7883
      %v7980 = vsub.f32 0.0, %v7884
      %v7981 = vsub.f32 0.0, %v7885
      %v7982 = vsub.f32 0.0, %v7886
      %v7983 = vsub.f32 0.0, %v7887
      %v7984 = vsub.f32 0.0, %v7888
      %v7985 = vsub.f32 0.0, %v7889
      %v7986 = vsub.f32 0.0, %v7890
      %v7987 = vsub.f32 0.0, %v7891
      %v7988 = vsub.f32 0.0, %v7892
      %v7989 = vsel %vm7893, %v7941, %v7845
      %v7990 = vsel %vm7894, %v7942, %v7846
      %v7991 = vsel %vm7895, %v7943, %v7847
      %v7992 = vsel %vm7896, %v7944, %v7848
      %v7993 = vsel %vm7897, %v7945, %v7849
      %v7994 = vsel %vm7898, %v7946, %v7850
      %v7995 = vsel %vm7899, %v7947, %v7851
      %v7996 = vsel %vm7900, %v7948, %v7852
      %v7997 = vsel %vm7901, %v7949, %v7853
      %v7998 = vsel %vm7902, %v7950, %v7854
      %v7999 = vsel %vm7903, %v7951, %v7855
      %v8000 = vsel %vm7904, %v7952, %v7856
      %v8001 = vsel %vm7905, %v7953, %v7857
      %v8002 = vsel %vm7906, %v7954, %v7858
      %v8003 = vsel %vm7907, %v7955, %v7859
      %v8004 = vsel %vm7908, %v7956, %v7860
      %v8005 = vsel %vm7909, %v7957, %v7861
      %v8006 = vsel %vm7910, %v7958, %v7862
      %v8007 = vsel %vm7911, %v7959, %v7863
      %v8008 = vsel %vm7912, %v7960, %v7864
      %v8009 = vsel %vm7913, %v7961, %v7865
      %v8010 = vsel %vm7914, %v7962, %v7866
      %v8011 = vsel %vm7915, %v7963, %v7867
      %v8012 = vsel %vm7916, %v7964, %v7868
      %v8013 = vsel %vm7917, %v7965, %v7869
      %v8014 = vsel %vm7918, %v7966, %v7870
      %v8015 = vsel %vm7919, %v7967, %v7871
      %v8016 = vsel %vm7920, %v7968, %v7872
      %v8017 = vsel %vm7921, %v7969, %v7873
      %v8018 = vsel %vm7922, %v7970, %v7874
      %v8019 = vsel %vm7923, %v7971, %v7875
      %v8020 = vsel %vm7924, %v7972, %v7876
      %v8021 = vsel %vm7925, %v7973, %v7877
      %v8022 = vsel %vm7926, %v7974, %v7878
      %v8023 = vsel %vm7927, %v7975, %v7879
      %v8024 = vsel %vm7928, %v7976, %v7880
      %v8025 = vsel %vm7929, %v7977, %v7881
      %v8026 = vsel %vm7930, %v7978, %v7882
      %v8027 = vsel %vm7931, %v7979, %v7883
      %v8028 = vsel %vm7932, %v7980, %v7884
      %v8029 = vsel %vm7933, %v7981, %v7885
      %v8030 = vsel %vm7934, %v7982, %v7886
      %v8031 = vsel %vm7935, %v7983, %v7887
      %v8032 = vsel %vm7936, %v7984, %v7888
      %v8033 = vsel %vm7937, %v7985, %v7889
      %v8034 = vsel %vm7938, %v7986, %v7890
      %v8035 = vsel %vm7939, %v7987, %v7891
      %v8036 = vsel %vm7940, %v7988, %v7892
      %v8037 = vadd.f32 %v7989, 1.0
      %v8038 = vadd.f32 %v7990, 1.0
      %v8039 = vadd.f32 %v7991, 1.0
      %v8040 = vadd.f32 %v7992, 1.0
      %v8041 = vadd.f32 %v7993, 1.0
      %v8042 = vadd.f32 %v7994, 1.0
      %v8043 = vadd.f32 %v7995, 1.0
      %v8044 = vadd.f32 %v7996, 1.0
      %v8045 = vadd.f32 %v7997, 1.0
      %v8046 = vadd.f32 %v7998, 1.0
      %v8047 = vadd.f32 %v7999, 1.0
      %v8048 = vadd.f32 %v8000, 1.0
      %v8049 = vadd.f32 %v8001, 1.0
      %v8050 = vadd.f32 %v8002, 1.0
      %v8051 = vadd.f32 %v8003, 1.0
      %v8052 = vadd.f32 %v8004, 1.0
      %v8053 = vadd.f32 %v8005, 1.0
      %v8054 = vadd.f32 %v8006, 1.0
      %v8055 = vadd.f32 %v8007, 1.0
      %v8056 = vadd.f32 %v8008, 1.0
      %v8057 = vadd.f32 %v8009, 1.0
      %v8058 = vadd.f32 %v8010, 1.0
      %v8059 = vadd.f32 %v8011, 1.0
      %v8060 = vadd.f32 %v8012, 1.0
      %v8061 = vadd.f32 %v8013, 1.0
      %v8062 = vadd.f32 %v8014, 1.0
      %v8063 = vadd.f32 %v8015, 1.0
      %v8064 = vadd.f32 %v8016, 1.0
      %v8065 = vadd.f32 %v8017, 1.0
      %v8066 = vadd.f32 %v8018, 1.0
      %v8067 = vadd.f32 %v8019, 1.0
      %v8068 = vadd.f32 %v8020, 1.0
      %v8069 = vadd.f32 %v8021, 1.0
      %v8070 = vadd.f32 %v8022, 1.0
      %v8071 = vadd.f32 %v8023, 1.0
      %v8072 = vadd.f32 %v8024, 1.0
      %v8073 = vadd.f32 %v8025, 1.0
      %v8074 = vadd.f32 %v8026, 1.0
      %v8075 = vadd.f32 %v8027, 1.0
      %v8076 = vadd.f32 %v8028, 1.0
      %v8077 = vadd.f32 %v8029, 1.0
      %v8078 = vadd.f32 %v8030, 1.0
      %v8079 = vadd.f32 %v8031, 1.0
      %v8080 = vadd.f32 %v8032, 1.0
      %v8081 = vadd.f32 %v8033, 1.0
      %v8082 = vadd.f32 %v8034, 1.0
      %v8083 = vadd.f32 %v8035, 1.0
      %v8084 = vadd.f32 %v8036, 1.0
      %v8085 = vmul.f32 %v6885, %v8037
      %v8086 = vmul.f32 %v6886, %v8038
      %v8087 = vmul.f32 %v6887, %v8039
      %v8088 = vmul.f32 %v6888, %v8040
      %v8089 = vmul.f32 %v6889, %v8041
      %v8090 = vmul.f32 %v6890, %v8042
      %v8091 = vmul.f32 %v6891, %v8043
      %v8092 = vmul.f32 %v6892, %v8044
      %v8093 = vmul.f32 %v6893, %v8045
      %v8094 = vmul.f32 %v6894, %v8046
      %v8095 = vmul.f32 %v6895, %v8047
      %v8096 = vmul.f32 %v6896, %v8048
      %v8097 = vmul.f32 %v6897, %v8049
      %v8098 = vmul.f32 %v6898, %v8050
      %v8099 = vmul.f32 %v6899, %v8051
      %v8100 = vmul.f32 %v6900, %v8052
      %v8101 = vmul.f32 %v6901, %v8053
      %v8102 = vmul.f32 %v6902, %v8054
      %v8103 = vmul.f32 %v6903, %v8055
      %v8104 = vmul.f32 %v6904, %v8056
      %v8105 = vmul.f32 %v6905, %v8057
      %v8106 = vmul.f32 %v6906, %v8058
      %v8107 = vmul.f32 %v6907, %v8059
      %v8108 = vmul.f32 %v6908, %v8060
      %v8109 = vmul.f32 %v6909, %v8061
      %v8110 = vmul.f32 %v6910, %v8062
      %v8111 = vmul.f32 %v6911, %v8063
      %v8112 = vmul.f32 %v6912, %v8064
      %v8113 = vmul.f32 %v6913, %v8065
      %v8114 = vmul.f32 %v6914, %v8066
      %v8115 = vmul.f32 %v6915, %v8067
      %v8116 = vmul.f32 %v6916, %v8068
      %v8117 = vmul.f32 %v6917, %v8069
      %v8118 = vmul.f32 %v6918, %v8070
      %v8119 = vmul.f32 %v6919, %v8071
      %v8120 = vmul.f32 %v6920, %v8072
      %v8121 = vmul.f32 %v6921, %v8073
      %v8122 = vmul.f32 %v6922, %v8074
      %v8123 = vmul.f32 %v6923, %v8075
      %v8124 = vmul.f32 %v6924, %v8076
      %v8125 = vmul.f32 %v6925, %v8077
      %v8126 = vmul.f32 %v6926, %v8078
      %v8127 = vmul.f32 %v6927, %v8079
      %v8128 = vmul.f32 %v6928, %v8080
      %v8129 = vmul.f32 %v6929, %v8081
      %v8130 = vmul.f32 %v6930, %v8082
      %v8131 = vmul.f32 %v6931, %v8083
      %v8132 = vmul.f32 %v6932, %v8084
      %v8133 = vld [vmem:[%s9] sm:$0xff]
      %v8134 = vld [vmem:[%s9 + $0x8] sm:$0xff]
      %v8135 = vld [vmem:[%s9 + $0x10] sm:$0xff]
      %v8136 = vld [vmem:[%s9 + $0x18] sm:$0xff]
      %v8137 = vld [vmem:[%s9 + $0x20] sm:$0xff]
      %v8138 = vld [vmem:[%s9 + $0x28] sm:$0xff]
      %v8139 = vld [vmem:[%s9 + $0x30] sm:$0xff]
      %v8140 = vld [vmem:[%s9 + $0x38] sm:$0xff]
      %v8141 = vld [vmem:[%s9 + $0x40] sm:$0xff]
      %v8142 = vld [vmem:[%s9 + $0x48] sm:$0xff]
      %v8143 = vld [vmem:[%s9 + $0x50] sm:$0xff]
      %v8144 = vld [vmem:[%s9 + $0x58] sm:$0xff]
      %v8145 = vld [vmem:[%s9 + $0x60] sm:$0xff]
      %v8146 = vld [vmem:[%s9 + $0x68] sm:$0xff]
      %v8147 = vld [vmem:[%s9 + $0x70] sm:$0xff]
      %v8148 = vld [vmem:[%s9 + $0x78] sm:$0xff]
      %v8149 = vld [vmem:[%s9 + $0x80] sm:$0xff]
      %v8150 = vld [vmem:[%s9 + $0x88] sm:$0xff]
      %v8151 = vld [vmem:[%s9 + $0x90] sm:$0xff]
      %v8152 = vld [vmem:[%s9 + $0x98] sm:$0xff]
      %v8153 = vld [vmem:[%s9 + $0xa0] sm:$0xff]
      %v8154 = vld [vmem:[%s9 + $0xa8] sm:$0xff]
      %v8155 = vld [vmem:[%s9 + $0xb0] sm:$0xff]
      %v8156 = vld [vmem:[%s9 + $0xb8] sm:$0xff]
      %v8157 = vld [vmem:[%s9 + $0xc0] sm:$0xff]
      %v8158 = vld [vmem:[%s9 + $0xc8] sm:$0xff]
      %v8159 = vld [vmem:[%s9 + $0xd0] sm:$0xff]
      %v8160 = vld [vmem:[%s9 + $0xd8] sm:$0xff]
      %v8161 = vld [vmem:[%s9 + $0xe0] sm:$0xff]
      %v8162 = vld [vmem:[%s9 + $0xe8] sm:$0xff]
      %v8163 = vld [vmem:[%s9 + $0xf0] sm:$0xff]
      %v8164 = vld [vmem:[%s9 + $0xf8] sm:$0xff]
      %v8165 = vld [vmem:[%s9 + $0x100] sm:$0xff]
      %v8166 = vld [vmem:[%s9 + $0x108] sm:$0xff]
      %v8167 = vld [vmem:[%s9 + $0x110] sm:$0xff]
      %v8168 = vld [vmem:[%s9 + $0x118] sm:$0xff]
      %v8169 = vld [vmem:[%s9 + $0x120] sm:$0xff]
      %v8170 = vld [vmem:[%s9 + $0x128] sm:$0xff]
      %v8171 = vld [vmem:[%s9 + $0x130] sm:$0xff]
      %v8172 = vld [vmem:[%s9 + $0x138] sm:$0xff]
      %v8173 = vld [vmem:[%s9 + $0x140] sm:$0xff]
      %v8174 = vld [vmem:[%s9 + $0x148] sm:$0xff]
      %v8175 = vld [vmem:[%s9 + $0x150] sm:$0xff]
      %v8176 = vld [vmem:[%s9 + $0x158] sm:$0xff]
      %v8177 = vld [vmem:[%s9 + $0x160] sm:$0xff]
      %v8178 = vld [vmem:[%s9 + $0x168] sm:$0xff]
      %v8179 = vld [vmem:[%s9 + $0x170] sm:$0xff]
      %v8180 = vld [vmem:[%s9 + $0x178] sm:$0xff]
      %v8181 = vld [vmem:[%s9 + $0x180] sm:$0xff]
      %v8182 = vld [vmem:[%s9 + $0x188] sm:$0xff]
      %v8183 = vld [vmem:[%s9 + $0x190] sm:$0xff]
      %v8184 = vld [vmem:[%s9 + $0x198] sm:$0xff]
      %v8185 = vld [vmem:[%s9 + $0x1a0] sm:$0xff]
      %v8186 = vld [vmem:[%s9 + $0x1a8] sm:$0xff]
      %v8187 = vld [vmem:[%s9 + $0x1b0] sm:$0xff]
      %v8188 = vld [vmem:[%s9 + $0x1b8] sm:$0xff]
      %v8189 = vld [vmem:[%s9 + $0x1c0] sm:$0xff]
      %v8190 = vld [vmem:[%s9 + $0x1c8] sm:$0xff]
      %v8191 = vld [vmem:[%s9 + $0x1d0] sm:$0xff]
      %v8192 = vld [vmem:[%s9 + $0x1d8] sm:$0xff]
      %v8193 = vld [vmem:[%s9 + $0x1e0] sm:$0xff]
      %v8194 = vld [vmem:[%s9 + $0x1e8] sm:$0xff]
      %v8195 = vld [vmem:[%s9 + $0x1f0] sm:$0xff]
      %v8196 = vld [vmem:[%s9 + $0x1f8] sm:$0xff]
      %v8197 = vld [vmem:[%s9 + $0x200] sm:$0xff]
      %v8198 = vld [vmem:[%s9 + $0x208] sm:$0xff]
      %v8199 = vld [vmem:[%s9 + $0x210] sm:$0xff]
      %v8200 = vld [vmem:[%s9 + $0x218] sm:$0xff]
      %v8201 = vld [vmem:[%s9 + $0x220] sm:$0xff]
      %v8202 = vld [vmem:[%s9 + $0x228] sm:$0xff]
      %v8203 = vld [vmem:[%s9 + $0x230] sm:$0xff]
      %v8204 = vld [vmem:[%s9 + $0x238] sm:$0xff]
      %v8205 = vld [vmem:[%s9 + $0x240] sm:$0xff]
      %v8206 = vld [vmem:[%s9 + $0x248] sm:$0xff]
      %v8207 = vld [vmem:[%s9 + $0x250] sm:$0xff]
      %v8208 = vld [vmem:[%s9 + $0x258] sm:$0xff]
      %v8209 = vld [vmem:[%s9 + $0x260] sm:$0xff]
      %v8210 = vld [vmem:[%s9 + $0x268] sm:$0xff]
      %v8211 = vld [vmem:[%s9 + $0x270] sm:$0xff]
      %v8212 = vld [vmem:[%s9 + $0x278] sm:$0xff]
      %v8213 = vld [vmem:[%s9 + $0x280] sm:$0xff]
      %v8214 = vld [vmem:[%s9 + $0x288] sm:$0xff]
      %v8215 = vld [vmem:[%s9 + $0x290] sm:$0xff]
      %v8216 = vld [vmem:[%s9 + $0x298] sm:$0xff]
      %v8217 = vld [vmem:[%s9 + $0x2a0] sm:$0xff]
      %v8218 = vld [vmem:[%s9 + $0x2a8] sm:$0xff]
      %v8219 = vld [vmem:[%s9 + $0x2b0] sm:$0xff]
      %v8220 = vld [vmem:[%s9 + $0x2b8] sm:$0xff]
      %v8221 = vld [vmem:[%s9 + $0x2c0] sm:$0xff]
      %v8222 = vld [vmem:[%s9 + $0x2c8] sm:$0xff]
      %v8223 = vld [vmem:[%s9 + $0x2d0] sm:$0xff]
      %v8224 = vld [vmem:[%s9 + $0x2d8] sm:$0xff]
      %v8225 = vld [vmem:[%s9 + $0x2e0] sm:$0xff]
      %v8226 = vld [vmem:[%s9 + $0x2e8] sm:$0xff]
      %v8227 = vld [vmem:[%s9 + $0x2f0] sm:$0xff]
      %v8228 = vld [vmem:[%s9 + $0x2f8] sm:$0xff]
      %v8230 = vsel %vm3555, %v8134, 0
      %v8233 = vsel %vm3555, %v8136, 0
      %v8236 = vsel %vm3555, %v8138, 0
      %v8239 = vsel %vm3555, %v8140, 0
      %v8242 = vsel %vm3555, %v8142, 0
      %v8245 = vsel %vm3555, %v8144, 0
      %v8248 = vsel %vm3555, %v8146, 0
      %v8251 = vsel %vm3555, %v8148, 0
      %v8254 = vsel %vm3555, %v8150, 0
      %v8257 = vsel %vm3555, %v8152, 0
      %v8260 = vsel %vm3555, %v8154, 0
      %v8263 = vsel %vm3555, %v8156, 0
      %v8266 = vsel %vm3555, %v8158, 0
      %v8269 = vsel %vm3555, %v8160, 0
      %v8272 = vsel %vm3555, %v8162, 0
      %v8275 = vsel %vm3555, %v8164, 0
      %v8278 = vsel %vm3555, %v8166, 0
      %v8281 = vsel %vm3555, %v8168, 0
      %v8284 = vsel %vm3555, %v8170, 0
      %v8287 = vsel %vm3555, %v8172, 0
      %v8290 = vsel %vm3555, %v8174, 0
      %v8293 = vsel %vm3555, %v8176, 0
      %v8296 = vsel %vm3555, %v8178, 0
      %v8299 = vsel %vm3555, %v8180, 0
      %v8302 = vsel %vm3555, %v8182, 0
      %v8305 = vsel %vm3555, %v8184, 0
      %v8308 = vsel %vm3555, %v8186, 0
      %v8311 = vsel %vm3555, %v8188, 0
      %v8314 = vsel %vm3555, %v8190, 0
      %v8317 = vsel %vm3555, %v8192, 0
      %v8320 = vsel %vm3555, %v8194, 0
      %v8323 = vsel %vm3555, %v8196, 0
      %v8326 = vsel %vm3555, %v8198, 0
      %v8329 = vsel %vm3555, %v8200, 0
      %v8332 = vsel %vm3555, %v8202, 0
      %v8335 = vsel %vm3555, %v8204, 0
      %v8338 = vsel %vm3555, %v8206, 0
      %v8341 = vsel %vm3555, %v8208, 0
      %v8344 = vsel %vm3555, %v8210, 0
      %v8347 = vsel %vm3555, %v8212, 0
      %v8350 = vsel %vm3555, %v8214, 0
      %v8353 = vsel %vm3555, %v8216, 0
      %v8356 = vsel %vm3555, %v8218, 0
      %v8359 = vsel %vm3555, %v8220, 0
      %v8362 = vsel %vm3555, %v8222, 0
      %v8365 = vsel %vm3555, %v8224, 0
      %v8368 = vsel %vm3555, %v8226, 0
      %v8371 = vsel %vm3555, %v8228, 0
      %8373 = vmatprep.subr.mxu0 %v8116
      %8374 = vmatpush1.msra.mxu0 %v8115
      %8375 = vmatprep.subr.mxu0 %v8114
      %8376 = vmatpush1.msra.mxu0 %v8113
      %8377 = vmatprep.subr.mxu0 %v8112
      %8378 = vmatpush1.msra.mxu0 %v8111
      %8379 = vmatprep.subr.mxu0 %v8110
      %8380 = vmatpush1.msra.mxu0 %v8109
      %8381 = vmatprep.subr.mxu0 %v8108
      %8382 = vmatpush1.msra.mxu0 %v8107
      %8383 = vmatprep.subr.mxu0 %v8106
      %8384 = vmatpush1.msra.mxu0 %v8105
      %8385 = vmatprep.subr.mxu0 %v8104
      %8386 = vmatpush1.msra.mxu0 %v8103
      %8387 = vmatprep.subr.mxu0 %v8102
      %8388 = vmatpush1.msra.mxu0 %v8101
      %8389 = vmatprep.subr.mxu0 %v8100
      %8390 = vmatpush1.msra.mxu0 %v8099
      %8391 = vmatprep.subr.mxu0 %v8098
      %8392 = vmatpush1.msra.mxu0 %v8097
      %8393 = vmatprep.subr.mxu0 %v8096
      %8394 = vmatpush1.msra.mxu0 %v8095
      %8395 = vmatprep.subr.mxu0 %v8094
      %8396 = vmatpush1.msra.mxu0 %v8093
      %8397 = vmatprep.subr.mxu0 %v8092
      %8398 = vmatpush1.msra.mxu0 %v8091
      %8399 = vmatprep.subr.mxu0 %v8090
      %8400 = vmatpush1.msra.mxu0 %v8089
      %8401 = vmatprep.subr.mxu0 %v8088
      %8402 = vmatpush1.msra.mxu0 %v8087
      %8403 = vmatprep.subr.mxu0 %v8086
      %8404 = vmatpush1.msra.mxu0 %v8085
      %8405 = vmatprep.subr.mxu0 0.0
      %8406 = vmatpush2.msra.mxu0 0.0
      %8407 = vmatprep.subr.mxu0 0.0
      %8408 = vmatpush2.msra.mxu0 0.0
      %8409 = vmatprep.subr.mxu0 0.0
      %8410 = vmatpush2.msra.mxu0 0.0
      %8411 = vmatprep.subr.mxu0 0.0
      %8412 = vmatpush2.msra.mxu0 0.0
      %8413 = vmatprep.subr.mxu0 0.0
      %8414 = vmatpush2.msra.mxu0 0.0
      %8415 = vmatprep.subr.mxu0 0.0
      %8416 = vmatpush2.msra.mxu0 0.0
      %8417 = vmatprep.subr.mxu0 0.0
      %8418 = vmatpush2.msra.mxu0 0.0
      %8419 = vmatprep.subr.mxu0 0.0
      %8420 = vmatpush2.msra.mxu0 0.0
      %8421 = vmatprep.subr.mxu0 %v8132
      %8422 = vmatpush2.msra.mxu0 %v8131
      %8423 = vmatprep.subr.mxu0 %v8130
      %8424 = vmatpush2.msra.mxu0 %v8129
      %8425 = vmatprep.subr.mxu0 %v8128
      %8426 = vmatpush2.msra.mxu0 %v8127
      %8427 = vmatprep.subr.mxu0 %v8126
      %8428 = vmatpush2.msra.mxu0 %v8125
      %8429 = vmatprep.subr.mxu0 %v8124
      %8430 = vmatpush2.msra.mxu0 %v8123
      %8431 = vmatprep.subr.mxu0 %v8122
      %8432 = vmatpush2.msra.mxu0 %v8121
      %8433 = vmatprep.subr.mxu0 %v8120
      %8434 = vmatpush2.msra.mxu0 %v8119
      %8435 = vmatprep.subr.mxu0 %v8118
      %8436 = vmatpush2.msra.mxu0 %v8117
      %8437 = vmatprep.mubr.f32.mxu0 %v8230
      %8438 = vmatmul.mubr.f32.gmra.mxu0 %v8133
      %v8439 = vpop.f32.mrf.mxu0
      %v8440 = vadd.f32 0.0, %v8439
      %v8441 = vpop.f32.mrf.mxu0
      %v8442 = vadd.f32 0.0, %v8441
      %8443 = vmatprep.mubr.f32.mxu0 %v8233
      %8444 = vmatmul.mubr.f32.gmra.mxu0 %v8135
      %v8445 = vpop.f32.mrf.mxu0
      %v8446 = vadd.f32 0.0, %v8445
      %v8447 = vpop.f32.mrf.mxu0
      %v8448 = vadd.f32 0.0, %v8447
      %8449 = vmatprep.mubr.f32.mxu0 %v8236
      %8450 = vmatmul.mubr.f32.gmra.mxu0 %v8137
      %v8451 = vpop.f32.mrf.mxu0
      %v8452 = vadd.f32 0.0, %v8451
      %v8453 = vpop.f32.mrf.mxu0
      %v8454 = vadd.f32 0.0, %v8453
      %8455 = vmatprep.mubr.f32.mxu0 %v8239
      %8456 = vmatmul.mubr.f32.gmra.mxu0 %v8139
      %v8457 = vpop.f32.mrf.mxu0
      %v8458 = vadd.f32 0.0, %v8457
      %v8459 = vpop.f32.mrf.mxu0
      %v8460 = vadd.f32 0.0, %v8459
      %8461 = vmatprep.mubr.f32.mxu0 %v8242
      %8462 = vmatmul.mubr.f32.gmra.mxu0 %v8141
      %v8463 = vpop.f32.mrf.mxu0
      %v8464 = vadd.f32 0.0, %v8463
      %v8465 = vpop.f32.mrf.mxu0
      %v8466 = vadd.f32 0.0, %v8465
      %8467 = vmatprep.mubr.f32.mxu0 %v8245
      %8468 = vmatmul.mubr.f32.gmra.mxu0 %v8143
      %v8469 = vpop.f32.mrf.mxu0
      %v8470 = vadd.f32 0.0, %v8469
      %v8471 = vpop.f32.mrf.mxu0
      %v8472 = vadd.f32 0.0, %v8471
      %8473 = vmatprep.mubr.f32.mxu0 %v8248
      %8474 = vmatmul.mubr.f32.gmra.mxu0 %v8145
      %v8475 = vpop.f32.mrf.mxu0
      %v8476 = vadd.f32 0.0, %v8475
      %v8477 = vpop.f32.mrf.mxu0
      %v8478 = vadd.f32 0.0, %v8477
      %8479 = vmatprep.mubr.f32.mxu0 %v8251
      %8480 = vmatmul.mubr.f32.gmra.mxu0 %v8147
      %v8481 = vpop.f32.mrf.mxu0
      %v8482 = vadd.f32 0.0, %v8481
      %v8483 = vpop.f32.mrf.mxu0
      %v8484 = vadd.f32 0.0, %v8483
      %8485 = vmatprep.mubr.f32.mxu0 %v8254
      %8486 = vmatmul.mubr.f32.gmra.mxu0 %v8149
      %v8487 = vpop.f32.mrf.mxu0
      %v8488 = vadd.f32 0.0, %v8487
      %v8489 = vpop.f32.mrf.mxu0
      %v8490 = vadd.f32 0.0, %v8489
      %8491 = vmatprep.mubr.f32.mxu0 %v8257
      %8492 = vmatmul.mubr.f32.gmra.mxu0 %v8151
      %v8493 = vpop.f32.mrf.mxu0
      %v8494 = vadd.f32 0.0, %v8493
      %v8495 = vpop.f32.mrf.mxu0
      %v8496 = vadd.f32 0.0, %v8495
      %8497 = vmatprep.mubr.f32.mxu0 %v8260
      %8498 = vmatmul.mubr.f32.gmra.mxu0 %v8153
      %v8499 = vpop.f32.mrf.mxu0
      %v8500 = vadd.f32 0.0, %v8499
      %v8501 = vpop.f32.mrf.mxu0
      %v8502 = vadd.f32 0.0, %v8501
      %8503 = vmatprep.mubr.f32.mxu0 %v8263
      %8504 = vmatmul.mubr.f32.gmra.mxu0 %v8155
      %v8505 = vpop.f32.mrf.mxu0
      %v8506 = vadd.f32 0.0, %v8505
      %v8507 = vpop.f32.mrf.mxu0
      %v8508 = vadd.f32 0.0, %v8507
      %8509 = vmatprep.mubr.f32.mxu0 %v8266
      %8510 = vmatmul.mubr.f32.gmra.mxu0 %v8157
      %v8511 = vpop.f32.mrf.mxu0
      %v8512 = vadd.f32 0.0, %v8511
      %v8513 = vpop.f32.mrf.mxu0
      %v8514 = vadd.f32 0.0, %v8513
      %8515 = vmatprep.mubr.f32.mxu0 %v8269
      %8516 = vmatmul.mubr.f32.gmra.mxu0 %v8159
      %v8517 = vpop.f32.mrf.mxu0
      %v8518 = vadd.f32 0.0, %v8517
      %v8519 = vpop.f32.mrf.mxu0
      %v8520 = vadd.f32 0.0, %v8519
      %8521 = vmatprep.mubr.f32.mxu0 %v8272
      %8522 = vmatmul.mubr.f32.gmra.mxu0 %v8161
      %v8523 = vpop.f32.mrf.mxu0
      %v8524 = vadd.f32 0.0, %v8523
      %v8525 = vpop.f32.mrf.mxu0
      %v8526 = vadd.f32 0.0, %v8525
      %8527 = vmatprep.mubr.f32.mxu0 %v8275
      %8528 = vmatmul.mubr.f32.gmra.mxu0 %v8163
      %v8529 = vpop.f32.mrf.mxu0
      %v8530 = vadd.f32 0.0, %v8529
      %v8531 = vpop.f32.mrf.mxu0
      %v8532 = vadd.f32 0.0, %v8531
      %8533 = vmatprep.mubr.f32.mxu0 %v8278
      %8534 = vmatmul.mubr.f32.gmra.mxu0 %v8165
      %v8535 = vpop.f32.mrf.mxu0
      %v8536 = vadd.f32 0.0, %v8535
      %v8537 = vpop.f32.mrf.mxu0
      %v8538 = vadd.f32 0.0, %v8537
      %8539 = vmatprep.mubr.f32.mxu0 %v8281
      %8540 = vmatmul.mubr.f32.gmra.mxu0 %v8167
      %v8541 = vpop.f32.mrf.mxu0
      %v8542 = vadd.f32 0.0, %v8541
      %v8543 = vpop.f32.mrf.mxu0
      %v8544 = vadd.f32 0.0, %v8543
      %8545 = vmatprep.mubr.f32.mxu0 %v8284
      %8546 = vmatmul.mubr.f32.gmra.mxu0 %v8169
      %v8547 = vpop.f32.mrf.mxu0
      %v8548 = vadd.f32 0.0, %v8547
      %v8549 = vpop.f32.mrf.mxu0
      %v8550 = vadd.f32 0.0, %v8549
      %8551 = vmatprep.mubr.f32.mxu0 %v8287
      %8552 = vmatmul.mubr.f32.gmra.mxu0 %v8171
      %v8553 = vpop.f32.mrf.mxu0
      %v8554 = vadd.f32 0.0, %v8553
      %v8555 = vpop.f32.mrf.mxu0
      %v8556 = vadd.f32 0.0, %v8555
      %8557 = vmatprep.mubr.f32.mxu0 %v8290
      %8558 = vmatmul.mubr.f32.gmra.mxu0 %v8173
      %v8559 = vpop.f32.mrf.mxu0
      %v8560 = vadd.f32 0.0, %v8559
      %v8561 = vpop.f32.mrf.mxu0
      %v8562 = vadd.f32 0.0, %v8561
      %8563 = vmatprep.mubr.f32.mxu0 %v8293
      %8564 = vmatmul.mubr.f32.gmra.mxu0 %v8175
      %v8565 = vpop.f32.mrf.mxu0
      %v8566 = vadd.f32 0.0, %v8565
      %v8567 = vpop.f32.mrf.mxu0
      %v8568 = vadd.f32 0.0, %v8567
      %8569 = vmatprep.mubr.f32.mxu0 %v8296
      %8570 = vmatmul.mubr.f32.gmra.mxu0 %v8177
      %v8571 = vpop.f32.mrf.mxu0
      %v8572 = vadd.f32 0.0, %v8571
      %v8573 = vpop.f32.mrf.mxu0
      %v8574 = vadd.f32 0.0, %v8573
      %8575 = vmatprep.mubr.f32.mxu0 %v8299
      %8576 = vmatmul.mubr.f32.gmra.mxu0 %v8179
      %v8577 = vpop.f32.mrf.mxu0
      %v8578 = vadd.f32 0.0, %v8577
      %v8579 = vpop.f32.mrf.mxu0
      %v8580 = vadd.f32 0.0, %v8579
      %8581 = vmatprep.mubr.f32.mxu0 %v8302
      %8582 = vmatmul.mubr.f32.gmra.mxu0 %v8181
      %v8583 = vpop.f32.mrf.mxu0
      %v8584 = vadd.f32 0.0, %v8583
      %v8585 = vpop.f32.mrf.mxu0
      %v8586 = vadd.f32 0.0, %v8585
      %8587 = vmatprep.mubr.f32.mxu0 %v8305
      %8588 = vmatmul.mubr.f32.gmra.mxu0 %v8183
      %v8589 = vpop.f32.mrf.mxu0
      %v8590 = vadd.f32 0.0, %v8589
      %v8591 = vpop.f32.mrf.mxu0
      %v8592 = vadd.f32 0.0, %v8591
      %8593 = vmatprep.mubr.f32.mxu0 %v8308
      %8594 = vmatmul.mubr.f32.gmra.mxu0 %v8185
      %v8595 = vpop.f32.mrf.mxu0
      %v8596 = vadd.f32 0.0, %v8595
      %v8597 = vpop.f32.mrf.mxu0
      %v8598 = vadd.f32 0.0, %v8597
      %8599 = vmatprep.mubr.f32.mxu0 %v8311
      %8600 = vmatmul.mubr.f32.gmra.mxu0 %v8187
      %v8601 = vpop.f32.mrf.mxu0
      %v8602 = vadd.f32 0.0, %v8601
      %v8603 = vpop.f32.mrf.mxu0
      %v8604 = vadd.f32 0.0, %v8603
      %8605 = vmatprep.mubr.f32.mxu0 %v8314
      %8606 = vmatmul.mubr.f32.gmra.mxu0 %v8189
      %v8607 = vpop.f32.mrf.mxu0
      %v8608 = vadd.f32 0.0, %v8607
      %v8609 = vpop.f32.mrf.mxu0
      %v8610 = vadd.f32 0.0, %v8609
      %8611 = vmatprep.mubr.f32.mxu0 %v8317
      %8612 = vmatmul.mubr.f32.gmra.mxu0 %v8191
      %v8613 = vpop.f32.mrf.mxu0
      %v8614 = vadd.f32 0.0, %v8613
      %v8615 = vpop.f32.mrf.mxu0
      %v8616 = vadd.f32 0.0, %v8615
      %8617 = vmatprep.mubr.f32.mxu0 %v8320
      %8618 = vmatmul.mubr.f32.gmra.mxu0 %v8193
      %v8619 = vpop.f32.mrf.mxu0
      %v8620 = vadd.f32 0.0, %v8619
      %v8621 = vpop.f32.mrf.mxu0
      %v8622 = vadd.f32 0.0, %v8621
      %8623 = vmatprep.mubr.f32.mxu0 %v8323
      %8624 = vmatmul.mubr.f32.gmra.mxu0 %v8195
      %v8625 = vpop.f32.mrf.mxu0
      %v8626 = vadd.f32 0.0, %v8625
      %v8627 = vpop.f32.mrf.mxu0
      %v8628 = vadd.f32 0.0, %v8627
      %8629 = vmatprep.mubr.f32.mxu0 %v8326
      %8630 = vmatmul.mubr.f32.gmra.mxu0 %v8197
      %v8631 = vpop.f32.mrf.mxu0
      %v8632 = vadd.f32 0.0, %v8631
      %v8633 = vpop.f32.mrf.mxu0
      %v8634 = vadd.f32 0.0, %v8633
      %8635 = vmatprep.mubr.f32.mxu0 %v8329
      %8636 = vmatmul.mubr.f32.gmra.mxu0 %v8199
      %v8637 = vpop.f32.mrf.mxu0
      %v8638 = vadd.f32 0.0, %v8637
      %v8639 = vpop.f32.mrf.mxu0
      %v8640 = vadd.f32 0.0, %v8639
      %8641 = vmatprep.mubr.f32.mxu0 %v8332
      %8642 = vmatmul.mubr.f32.gmra.mxu0 %v8201
      %v8643 = vpop.f32.mrf.mxu0
      %v8644 = vadd.f32 0.0, %v8643
      %v8645 = vpop.f32.mrf.mxu0
      %v8646 = vadd.f32 0.0, %v8645
      %8647 = vmatprep.mubr.f32.mxu0 %v8335
      %8648 = vmatmul.mubr.f32.gmra.mxu0 %v8203
      %v8649 = vpop.f32.mrf.mxu0
      %v8650 = vadd.f32 0.0, %v8649
      %v8651 = vpop.f32.mrf.mxu0
      %v8652 = vadd.f32 0.0, %v8651
      %8653 = vmatprep.mubr.f32.mxu0 %v8338
      %8654 = vmatmul.mubr.f32.gmra.mxu0 %v8205
      %v8655 = vpop.f32.mrf.mxu0
      %v8656 = vadd.f32 0.0, %v8655
      %v8657 = vpop.f32.mrf.mxu0
      %v8658 = vadd.f32 0.0, %v8657
      %8659 = vmatprep.mubr.f32.mxu0 %v8341
      %8660 = vmatmul.mubr.f32.gmra.mxu0 %v8207
      %v8661 = vpop.f32.mrf.mxu0
      %v8662 = vadd.f32 0.0, %v8661
      %v8663 = vpop.f32.mrf.mxu0
      %v8664 = vadd.f32 0.0, %v8663
      %8665 = vmatprep.mubr.f32.mxu0 %v8344
      %8666 = vmatmul.mubr.f32.gmra.mxu0 %v8209
      %v8667 = vpop.f32.mrf.mxu0
      %v8668 = vadd.f32 0.0, %v8667
      %v8669 = vpop.f32.mrf.mxu0
      %v8670 = vadd.f32 0.0, %v8669
      %8671 = vmatprep.mubr.f32.mxu0 %v8347
      %8672 = vmatmul.mubr.f32.gmra.mxu0 %v8211
      %v8673 = vpop.f32.mrf.mxu0
      %v8674 = vadd.f32 0.0, %v8673
      %v8675 = vpop.f32.mrf.mxu0
      %v8676 = vadd.f32 0.0, %v8675
      %8677 = vmatprep.mubr.f32.mxu0 %v8350
      %8678 = vmatmul.mubr.f32.gmra.mxu0 %v8213
      %v8679 = vpop.f32.mrf.mxu0
      %v8680 = vadd.f32 0.0, %v8679
      %v8681 = vpop.f32.mrf.mxu0
      %v8682 = vadd.f32 0.0, %v8681
      %8683 = vmatprep.mubr.f32.mxu0 %v8353
      %8684 = vmatmul.mubr.f32.gmra.mxu0 %v8215
      %v8685 = vpop.f32.mrf.mxu0
      %v8686 = vadd.f32 0.0, %v8685
      %v8687 = vpop.f32.mrf.mxu0
      %v8688 = vadd.f32 0.0, %v8687
      %8689 = vmatprep.mubr.f32.mxu0 %v8356
      %8690 = vmatmul.mubr.f32.gmra.mxu0 %v8217
      %v8691 = vpop.f32.mrf.mxu0
      %v8692 = vadd.f32 0.0, %v8691
      %v8693 = vpop.f32.mrf.mxu0
      %v8694 = vadd.f32 0.0, %v8693
      %8695 = vmatprep.mubr.f32.mxu0 %v8359
      %8696 = vmatmul.mubr.f32.gmra.mxu0 %v8219
      %v8697 = vpop.f32.mrf.mxu0
      %v8698 = vadd.f32 0.0, %v8697
      %v8699 = vpop.f32.mrf.mxu0
      %v8700 = vadd.f32 0.0, %v8699
      %8701 = vmatprep.mubr.f32.mxu0 %v8362
      %8702 = vmatmul.mubr.f32.gmra.mxu0 %v8221
      %v8703 = vpop.f32.mrf.mxu0
      %v8704 = vadd.f32 0.0, %v8703
      %v8705 = vpop.f32.mrf.mxu0
      %v8706 = vadd.f32 0.0, %v8705
      %8707 = vmatprep.mubr.f32.mxu0 %v8365
      %8708 = vmatmul.mubr.f32.gmra.mxu0 %v8223
      %v8709 = vpop.f32.mrf.mxu0
      %v8710 = vadd.f32 0.0, %v8709
      %v8711 = vpop.f32.mrf.mxu0
      %v8712 = vadd.f32 0.0, %v8711
      %8713 = vmatprep.mubr.f32.mxu0 %v8368
      %8714 = vmatmul.mubr.f32.gmra.mxu0 %v8225
      %v8715 = vpop.f32.mrf.mxu0
      %v8716 = vadd.f32 0.0, %v8715
      %v8717 = vpop.f32.mrf.mxu0
      %v8718 = vadd.f32 0.0, %v8717
      %8719 = vmatprep.mubr.f32.mxu0 %v8371
      %8720 = vmatmul.mubr.f32.gmra.mxu0 %v8227
      %v8721 = vpop.f32.mrf.mxu0
      %v8722 = vadd.f32 0.0, %v8721
      %v8723 = vpop.f32.mrf.mxu0
      %v8724 = vadd.f32 0.0, %v8723
      %8725 = vdwg.mxu0
      %v8726 = vld [vmem:[%s10] sm:$0xff]
      %v8727 = vld [vmem:[%s10 + $0x8] sm:$0xff]
      %v8728 = vld [vmem:[%s10 + $0x10] sm:$0xff]
      %v8729 = vld [vmem:[%s10 + $0x18] sm:$0xff]
      %v8730 = vld [vmem:[%s10 + $0x20] sm:$0xff]
      %v8731 = vld [vmem:[%s10 + $0x28] sm:$0xff]
      %v8732 = vld [vmem:[%s10 + $0x30] sm:$0xff]
      %v8733 = vld [vmem:[%s10 + $0x38] sm:$0xff]
      %v8734 = vld [vmem:[%s10 + $0x40] sm:$0xff]
      %v8735 = vld [vmem:[%s10 + $0x48] sm:$0xff]
      %v8736 = vld [vmem:[%s10 + $0x50] sm:$0xff]
      %v8737 = vld [vmem:[%s10 + $0x58] sm:$0xff]
      %v8738 = vld [vmem:[%s10 + $0x60] sm:$0xff]
      %v8739 = vld [vmem:[%s10 + $0x68] sm:$0xff]
      %v8740 = vld [vmem:[%s10 + $0x70] sm:$0xff]
      %v8741 = vld [vmem:[%s10 + $0x78] sm:$0xff]
      %v8742 = vld [vmem:[%s10 + $0x80] sm:$0xff]
      %v8743 = vld [vmem:[%s10 + $0x88] sm:$0xff]
      %v8744 = vld [vmem:[%s10 + $0x90] sm:$0xff]
      %v8745 = vld [vmem:[%s10 + $0x98] sm:$0xff]
      %v8746 = vld [vmem:[%s10 + $0xa0] sm:$0xff]
      %v8747 = vld [vmem:[%s10 + $0xa8] sm:$0xff]
      %v8748 = vld [vmem:[%s10 + $0xb0] sm:$0xff]
      %v8749 = vld [vmem:[%s10 + $0xb8] sm:$0xff]
      %v8750 = vld [vmem:[%s10 + $0xc0] sm:$0xff]
      %v8751 = vld [vmem:[%s10 + $0xc8] sm:$0xff]
      %v8752 = vld [vmem:[%s10 + $0xd0] sm:$0xff]
      %v8753 = vld [vmem:[%s10 + $0xd8] sm:$0xff]
      %v8754 = vld [vmem:[%s10 + $0xe0] sm:$0xff]
      %v8755 = vld [vmem:[%s10 + $0xe8] sm:$0xff]
      %v8756 = vld [vmem:[%s10 + $0xf0] sm:$0xff]
      %v8757 = vld [vmem:[%s10 + $0xf8] sm:$0xff]
      %v8758 = vld [vmem:[%s10 + $0x100] sm:$0xff]
      %v8759 = vld [vmem:[%s10 + $0x108] sm:$0xff]
      %v8760 = vld [vmem:[%s10 + $0x110] sm:$0xff]
      %v8761 = vld [vmem:[%s10 + $0x118] sm:$0xff]
      %v8762 = vld [vmem:[%s10 + $0x120] sm:$0xff]
      %v8763 = vld [vmem:[%s10 + $0x128] sm:$0xff]
      %v8764 = vld [vmem:[%s10 + $0x130] sm:$0xff]
      %v8765 = vld [vmem:[%s10 + $0x138] sm:$0xff]
      %v8766 = vld [vmem:[%s10 + $0x140] sm:$0xff]
      %v8767 = vld [vmem:[%s10 + $0x148] sm:$0xff]
      %v8768 = vld [vmem:[%s10 + $0x150] sm:$0xff]
      %v8769 = vld [vmem:[%s10 + $0x158] sm:$0xff]
      %v8770 = vld [vmem:[%s10 + $0x160] sm:$0xff]
      %v8771 = vld [vmem:[%s10 + $0x168] sm:$0xff]
      %v8772 = vld [vmem:[%s10 + $0x170] sm:$0xff]
      %v8773 = vld [vmem:[%s10 + $0x178] sm:$0xff]
      %v8774 = vld [vmem:[%s11] sm:$0xff]
      %v8775 = vld [vmem:[%s11 + $0x8] sm:$0xff]
      %v8776 = vld [vmem:[%s11 + $0x10] sm:$0xff]
      %v8777 = vld [vmem:[%s11 + $0x18] sm:$0xff]
      %v8778 = vld [vmem:[%s11 + $0x20] sm:$0xff]
      %v8779 = vld [vmem:[%s11 + $0x28] sm:$0xff]
      %v8780 = vld [vmem:[%s11 + $0x30] sm:$0xff]
      %v8781 = vld [vmem:[%s11 + $0x38] sm:$0xff]
      %v8782 = vld [vmem:[%s11 + $0x40] sm:$0xff]
      %v8783 = vld [vmem:[%s11 + $0x48] sm:$0xff]
      %v8784 = vld [vmem:[%s11 + $0x50] sm:$0xff]
      %v8785 = vld [vmem:[%s11 + $0x58] sm:$0xff]
      %v8786 = vld [vmem:[%s11 + $0x60] sm:$0xff]
      %v8787 = vld [vmem:[%s11 + $0x68] sm:$0xff]
      %v8788 = vld [vmem:[%s11 + $0x70] sm:$0xff]
      %v8789 = vld [vmem:[%s11 + $0x78] sm:$0xff]
      %v8790 = vld [vmem:[%s11 + $0x80] sm:$0xff]
      %v8791 = vld [vmem:[%s11 + $0x88] sm:$0xff]
      %v8792 = vld [vmem:[%s11 + $0x90] sm:$0xff]
      %v8793 = vld [vmem:[%s11 + $0x98] sm:$0xff]
      %v8794 = vld [vmem:[%s11 + $0xa0] sm:$0xff]
      %v8795 = vld [vmem:[%s11 + $0xa8] sm:$0xff]
      %v8796 = vld [vmem:[%s11 + $0xb0] sm:$0xff]
      %v8797 = vld [vmem:[%s11 + $0xb8] sm:$0xff]
      %v8798 = vld [vmem:[%s11 + $0xc0] sm:$0xff]
      %v8799 = vld [vmem:[%s11 + $0xc8] sm:$0xff]
      %v8800 = vld [vmem:[%s11 + $0xd0] sm:$0xff]
      %v8801 = vld [vmem:[%s11 + $0xd8] sm:$0xff]
      %v8802 = vld [vmem:[%s11 + $0xe0] sm:$0xff]
      %v8803 = vld [vmem:[%s11 + $0xe8] sm:$0xff]
      %v8804 = vld [vmem:[%s11 + $0xf0] sm:$0xff]
      %v8805 = vld [vmem:[%s11 + $0xf8] sm:$0xff]
      %v8806 = vld [vmem:[%s11 + $0x100] sm:$0xff]
      %v8807 = vld [vmem:[%s11 + $0x108] sm:$0xff]
      %v8808 = vld [vmem:[%s11 + $0x110] sm:$0xff]
      %v8809 = vld [vmem:[%s11 + $0x118] sm:$0xff]
      %v8810 = vld [vmem:[%s11 + $0x120] sm:$0xff]
      %v8811 = vld [vmem:[%s11 + $0x128] sm:$0xff]
      %v8812 = vld [vmem:[%s11 + $0x130] sm:$0xff]
      %v8813 = vld [vmem:[%s11 + $0x138] sm:$0xff]
      %v8814 = vld [vmem:[%s11 + $0x140] sm:$0xff]
      %v8815 = vld [vmem:[%s11 + $0x148] sm:$0xff]
      %v8816 = vld [vmem:[%s11 + $0x150] sm:$0xff]
      %v8817 = vld [vmem:[%s11 + $0x158] sm:$0xff]
      %v8818 = vld [vmem:[%s11 + $0x160] sm:$0xff]
      %v8819 = vld [vmem:[%s11 + $0x168] sm:$0xff]
      %v8820 = vld [vmem:[%s11 + $0x170] sm:$0xff]
      %v8821 = vld [vmem:[%s11 + $0x178] sm:$0xff]
      %v8822 = vadd.f32 %v8440, %v8446
      %v8823 = vadd.f32 %v8822, %v8452
      %v8824 = vadd.f32 %v8823, %v8458
      %v8825 = vadd.f32 %v8824, %v8464
      %v8826 = vadd.f32 %v8825, %v8470
      %v8827 = vadd.f32 %v8826, %v8476
      %v8828 = vadd.f32 %v8827, %v8482
      %v8829 = vadd.f32 %v8828, %v8488
      %v8830 = vadd.f32 %v8829, %v8494
      %v8831 = vadd.f32 %v8830, %v8500
      %v8832 = vadd.f32 %v8831, %v8506
      %v8833 = vadd.f32 %v8832, %v8512
      %v8834 = vadd.f32 %v8833, %v8518
      %v8835 = vadd.f32 %v8834, %v8524
      %v8836 = vadd.f32 %v8835, %v8530
      %v8837 = vadd.f32 %v8836, %v8536
      %v8838 = vadd.f32 %v8837, %v8542
      %v8839 = vadd.f32 %v8838, %v8548
      %v8840 = vadd.f32 %v8839, %v8554
      %v8841 = vadd.f32 %v8840, %v8560
      %v8842 = vadd.f32 %v8841, %v8566
      %v8843 = vadd.f32 %v8842, %v8572
      %v8844 = vadd.f32 %v8843, %v8578
      %v8845 = vadd.f32 %v8844, %v8584
      %v8846 = vadd.f32 %v8845, %v8590
      %v8847 = vadd.f32 %v8846, %v8596
      %v8848 = vadd.f32 %v8847, %v8602
      %v8849 = vadd.f32 %v8848, %v8608
      %v8850 = vadd.f32 %v8849, %v8614
      %v8851 = vadd.f32 %v8850, %v8620
      %v8852 = vadd.f32 %v8851, %v8626
      %v8853 = vadd.f32 %v8852, %v8632
      %v8854 = vadd.f32 %v8853, %v8638
      %v8855 = vadd.f32 %v8854, %v8644
      %v8856 = vadd.f32 %v8855, %v8650
      %v8857 = vadd.f32 %v8856, %v8656
      %v8858 = vadd.f32 %v8857, %v8662
      %v8859 = vadd.f32 %v8858, %v8668
      %v8860 = vadd.f32 %v8859, %v8674
      %v8861 = vadd.f32 %v8860, %v8680
      %v8862 = vadd.f32 %v8861, %v8686
      %v8863 = vadd.f32 %v8862, %v8692
      %v8864 = vadd.f32 %v8863, %v8698
      %v8865 = vadd.f32 %v8864, %v8704
      %v8866 = vadd.f32 %v8865, %v8710
      %v8867 = vadd.f32 %v8866, %v8716
      %v8868 = vadd.f32 %v8867, %v8722
      %v8869 = vrot.slane %v8868, 4
      %v8870 = vadd.f32 %v8868, %v8869
      %v8871 = vrot.slane %v8870, 2
      %v8872 = vadd.f32 %v8870, %v8871
      %v8873 = vrot.slane %v8872, 1
      %v8874 = vadd.f32 %v8872, %v8873
      %v8875 = vadd.f32 %v8442, %v8448
      %v8876 = vadd.f32 %v8875, %v8454
      %v8877 = vadd.f32 %v8876, %v8460
      %v8878 = vadd.f32 %v8877, %v8466
      %v8879 = vadd.f32 %v8878, %v8472
      %v8880 = vadd.f32 %v8879, %v8478
      %v8881 = vadd.f32 %v8880, %v8484
      %v8882 = vadd.f32 %v8881, %v8490
      %v8883 = vadd.f32 %v8882, %v8496
      %v8884 = vadd.f32 %v8883, %v8502
      %v8885 = vadd.f32 %v8884, %v8508
      %v8886 = vadd.f32 %v8885, %v8514
      %v8887 = vadd.f32 %v8886, %v8520
      %v8888 = vadd.f32 %v8887, %v8526
      %v8889 = vadd.f32 %v8888, %v8532
      %v8890 = vadd.f32 %v8889, %v8538
      %v8891 = vadd.f32 %v8890, %v8544
      %v8892 = vadd.f32 %v8891, %v8550
      %v8893 = vadd.f32 %v8892, %v8556
      %v8894 = vadd.f32 %v8893, %v8562
      %v8895 = vadd.f32 %v8894, %v8568
      %v8896 = vadd.f32 %v8895, %v8574
      %v8897 = vadd.f32 %v8896, %v8580
      %v8898 = vadd.f32 %v8897, %v8586
      %v8899 = vadd.f32 %v8898, %v8592
      %v8900 = vadd.f32 %v8899, %v8598
      %v8901 = vadd.f32 %v8900, %v8604
      %v8902 = vadd.f32 %v8901, %v8610
      %v8903 = vadd.f32 %v8902, %v8616
      %v8904 = vadd.f32 %v8903, %v8622
      %v8905 = vadd.f32 %v8904, %v8628
      %v8906 = vadd.f32 %v8905, %v8634
      %v8907 = vadd.f32 %v8906, %v8640
      %v8908 = vadd.f32 %v8907, %v8646
      %v8909 = vadd.f32 %v8908, %v8652
      %v8910 = vadd.f32 %v8909, %v8658
      %v8911 = vadd.f32 %v8910, %v8664
      %v8912 = vadd.f32 %v8911, %v8670
      %v8913 = vadd.f32 %v8912, %v8676
      %v8914 = vadd.f32 %v8913, %v8682
      %v8915 = vadd.f32 %v8914, %v8688
      %v8916 = vadd.f32 %v8915, %v8694
      %v8917 = vadd.f32 %v8916, %v8700
      %v8918 = vadd.f32 %v8917, %v8706
      %v8919 = vadd.f32 %v8918, %v8712
      %v8920 = vadd.f32 %v8919, %v8718
      %v8921 = vadd.f32 %v8920, %v8724
      %v8922 = vrot.slane %v8921, 4
      %v8923 = vadd.f32 %v8921, %v8922
      %v8924 = vrot.slane %v8923, 2
      %v8925 = vadd.f32 %v8923, %v8924
      %v8926 = vrot.slane %v8925, 1
      %v8927 = vadd.f32 %v8925, %v8926
      %v8928 = vrcp.pop 384.0
      %v8929 = vmul.f32 %v8874, %v8928
      %v8930 = vmul.f32 %v8927, %v8928
      %v8931 = vsub.f32 %v8440, %v8929
      %v8932 = vsub.f32 %v8442, %v8930
      %v8933 = vsub.f32 %v8446, %v8929
      %v8934 = vsub.f32 %v8448, %v8930
      %v8935 = vsub.f32 %v8452, %v8929
      %v8936 = vsub.f32 %v8454, %v8930
      %v8937 = vsub.f32 %v8458, %v8929
      %v8938 = vsub.f32 %v8460, %v8930
      %v8939 = vsub.f32 %v8464, %v8929
      %v8940 = vsub.f32 %v8466, %v8930
      %v8941 = vsub.f32 %v8470, %v8929
      %v8942 = vsub.f32 %v8472, %v8930
      %v8943 = vsub.f32 %v8476, %v8929
      %v8944 = vsub.f32 %v8478, %v8930
      %v8945 = vsub.f32 %v8482, %v8929
      %v8946 = vsub.f32 %v8484, %v8930
      %v8947 = vsub.f32 %v8488, %v8929
      %v8948 = vsub.f32 %v8490, %v8930
      %v8949 = vsub.f32 %v8494, %v8929
      %v8950 = vsub.f32 %v8496, %v8930
      %v8951 = vsub.f32 %v8500, %v8929
      %v8952 = vsub.f32 %v8502, %v8930
      %v8953 = vsub.f32 %v8506, %v8929
      %v8954 = vsub.f32 %v8508, %v8930
      %v8955 = vsub.f32 %v8512, %v8929
      %v8956 = vsub.f32 %v8514, %v8930
      %v8957 = vsub.f32 %v8518, %v8929
      %v8958 = vsub.f32 %v8520, %v8930
      %v8959 = vsub.f32 %v8524, %v8929
      %v8960 = vsub.f32 %v8526, %v8930
      %v8961 = vsub.f32 %v8530, %v8929
      %v8962 = vsub.f32 %v8532, %v8930
      %v8963 = vsub.f32 %v8536, %v8929
      %v8964 = vsub.f32 %v8538, %v8930
      %v8965 = vsub.f32 %v8542, %v8929
      %v8966 = vsub.f32 %v8544, %v8930
      %v8967 = vsub.f32 %v8548, %v8929
      %v8968 = vsub.f32 %v8550, %v8930
      %v8969 = vsub.f32 %v8554, %v8929
      %v8970 = vsub.f32 %v8556, %v8930
      %v8971 = vsub.f32 %v8560, %v8929
      %v8972 = vsub.f32 %v8562, %v8930
      %v8973 = vsub.f32 %v8566, %v8929
      %v8974 = vsub.f32 %v8568, %v8930
      %v8975 = vsub.f32 %v8572, %v8929
      %v8976 = vsub.f32 %v8574, %v8930
      %v8977 = vsub.f32 %v8578, %v8929
      %v8978 = vsub.f32 %v8580, %v8930
      %v8979 = vsub.f32 %v8584, %v8929
      %v8980 = vsub.f32 %v8586, %v8930
      %v8981 = vsub.f32 %v8590, %v8929
      %v8982 = vsub.f32 %v8592, %v8930
      %v8983 = vsub.f32 %v8596, %v8929
      %v8984 = vsub.f32 %v8598, %v8930
      %v8985 = vsub.f32 %v8602, %v8929
      %v8986 = vsub.f32 %v8604, %v8930
      %v8987 = vsub.f32 %v8608, %v8929
      %v8988 = vsub.f32 %v8610, %v8930
      %v8989 = vsub.f32 %v8614, %v8929
      %v8990 = vsub.f32 %v8616, %v8930
      %v8991 = vsub.f32 %v8620, %v8929
      %v8992 = vsub.f32 %v8622, %v8930
      %v8993 = vsub.f32 %v8626, %v8929
      %v8994 = vsub.f32 %v8628, %v8930
      %v8995 = vsub.f32 %v8632, %v8929
      %v8996 = vsub.f32 %v8634, %v8930
      %v8997 = vsub.f32 %v8638, %v8929
      %v8998 = vsub.f32 %v8640, %v8930
      %v8999 = vsub.f32 %v8644, %v8929
      %v9000 = vsub.f32 %v8646, %v8930
      %v9001 = vsub.f32 %v8650, %v8929
      %v9002 = vsub.f32 %v8652, %v8930
      %v9003 = vsub.f32 %v8656, %v8929
      %v9004 = vsub.f32 %v8658, %v8930
      %v9005 = vsub.f32 %v8662, %v8929
      %v9006 = vsub.f32 %v8664, %v8930
      %v9007 = vsub.f32 %v8668, %v8929
      %v9008 = vsub.f32 %v8670, %v8930
      %v9009 = vsub.f32 %v8674, %v8929
      %v9010 = vsub.f32 %v8676, %v8930
      %v9011 = vsub.f32 %v8680, %v8929
      %v9012 = vsub.f32 %v8682, %v8930
      %v9013 = vsub.f32 %v8686, %v8929
      %v9014 = vsub.f32 %v8688, %v8930
      %v9015 = vsub.f32 %v8692, %v8929
      %v9016 = vsub.f32 %v8694, %v8930
      %v9017 = vsub.f32 %v8698, %v8929
      %v9018 = vsub.f32 %v8700, %v8930
      %v9019 = vsub.f32 %v8704, %v8929
      %v9020 = vsub.f32 %v8706, %v8930
      %v9021 = vsub.f32 %v8710, %v8929
      %v9022 = vsub.f32 %v8712, %v8930
      %v9023 = vsub.f32 %v8716, %v8929
      %v9024 = vsub.f32 %v8718, %v8930
      %v9025 = vsub.f32 %v8722, %v8929
      %v9026 = vsub.f32 %v8724, %v8930
      %v9027 = vmul.f32 %v8931, %v8931
      %v9028 = vmul.f32 %v8932, %v8932
      %v9029 = vmul.f32 %v8933, %v8933
      %v9030 = vmul.f32 %v8934, %v8934
      %v9031 = vmul.f32 %v8935, %v8935
      %v9032 = vmul.f32 %v8936, %v8936
      %v9033 = vmul.f32 %v8937, %v8937
      %v9034 = vmul.f32 %v8938, %v8938
      %v9035 = vmul.f32 %v8939, %v8939
      %v9036 = vmul.f32 %v8940, %v8940
      %v9037 = vmul.f32 %v8941, %v8941
      %v9038 = vmul.f32 %v8942, %v8942
      %v9039 = vmul.f32 %v8943, %v8943
      %v9040 = vmul.f32 %v8944, %v8944
      %v9041 = vmul.f32 %v8945, %v8945
      %v9042 = vmul.f32 %v8946, %v8946
      %v9043 = vmul.f32 %v8947, %v8947
      %v9044 = vmul.f32 %v8948, %v8948
      %v9045 = vmul.f32 %v8949, %v8949
      %v9046 = vmul.f32 %v8950, %v8950
      %v9047 = vmul.f32 %v8951, %v8951
      %v9048 = vmul.f32 %v8952, %v8952
      %v9049 = vmul.f32 %v8953, %v8953
      %v9050 = vmul.f32 %v8954, %v8954
      %v9051 = vmul.f32 %v8955, %v8955
      %v9052 = vmul.f32 %v8956, %v8956
      %v9053 = vmul.f32 %v8957, %v8957
      %v9054 = vmul.f32 %v8958, %v8958
      %v9055 = vmul.f32 %v8959, %v8959
      %v9056 = vmul.f32 %v8960, %v8960
      %v9057 = vmul.f32 %v8961, %v8961
      %v9058 = vmul.f32 %v8962, %v8962
      %v9059 = vmul.f32 %v8963, %v8963
      %v9060 = vmul.f32 %v8964, %v8964
      %v9061 = vmul.f32 %v8965, %v8965
      %v9062 = vmul.f32 %v8966, %v8966
      %v9063 = vmul.f32 %v8967, %v8967
      %v9064 = vmul.f32 %v8968, %v8968
      %v9065 = vmul.f32 %v8969, %v8969
      %v9066 = vmul.f32 %v8970, %v8970
      %v9067 = vmul.f32 %v8971, %v8971
      %v9068 = vmul.f32 %v8972, %v8972
      %v9069 = vmul.f32 %v8973, %v8973
      %v9070 = vmul.f32 %v8974, %v8974
      %v9071 = vmul.f32 %v8975, %v8975
      %v9072 = vmul.f32 %v8976, %v8976
      %v9073 = vmul.f32 %v8977, %v8977
      %v9074 = vmul.f32 %v8978, %v8978
      %v9075 = vmul.f32 %v8979, %v8979
      %v9076 = vmul.f32 %v8980, %v8980
      %v9077 = vmul.f32 %v8981, %v8981
      %v9078 = vmul.f32 %v8982, %v8982
      %v9079 = vmul.f32 %v8983, %v8983
      %v9080 = vmul.f32 %v8984, %v8984
      %v9081 = vmul.f32 %v8985, %v8985
      %v9082 = vmul.f32 %v8986, %v8986
      %v9083 = vmul.f32 %v8987, %v8987
      %v9084 = vmul.f32 %v8988, %v8988
      %v9085 = vmul.f32 %v8989, %v8989
      %v9086 = vmul.f32 %v8990, %v8990
      %v9087 = vmul.f32 %v8991, %v8991
      %v9088 = vmul.f32 %v8992, %v8992
      %v9089 = vmul.f32 %v8993, %v8993
      %v9090 = vmul.f32 %v8994, %v8994
      %v9091 = vmul.f32 %v8995, %v8995
      %v9092 = vmul.f32 %v8996, %v8996
      %v9093 = vmul.f32 %v8997, %v8997
      %v9094 = vmul.f32 %v8998, %v8998
      %v9095 = vmul.f32 %v8999, %v8999
      %v9096 = vmul.f32 %v9000, %v9000
      %v9097 = vmul.f32 %v9001, %v9001
      %v9098 = vmul.f32 %v9002, %v9002
      %v9099 = vmul.f32 %v9003, %v9003
      %v9100 = vmul.f32 %v9004, %v9004
      %v9101 = vmul.f32 %v9005, %v9005
      %v9102 = vmul.f32 %v9006, %v9006
      %v9103 = vmul.f32 %v9007, %v9007
      %v9104 = vmul.f32 %v9008, %v9008
      %v9105 = vmul.f32 %v9009, %v9009
      %v9106 = vmul.f32 %v9010, %v9010
      %v9107 = vmul.f32 %v9011, %v9011
      %v9108 = vmul.f32 %v9012, %v9012
      %v9109 = vmul.f32 %v9013, %v9013
      %v9110 = vmul.f32 %v9014, %v9014
      %v9111 = vmul.f32 %v9015, %v9015
      %v9112 = vmul.f32 %v9016, %v9016
      %v9113 = vmul.f32 %v9017, %v9017
      %v9114 = vmul.f32 %v9018, %v9018
      %v9115 = vmul.f32 %v9019, %v9019
      %v9116 = vmul.f32 %v9020, %v9020
      %v9117 = vmul.f32 %v9021, %v9021
      %v9118 = vmul.f32 %v9022, %v9022
      %v9119 = vmul.f32 %v9023, %v9023
      %v9120 = vmul.f32 %v9024, %v9024
      %v9121 = vmul.f32 %v9025, %v9025
      %v9122 = vmul.f32 %v9026, %v9026
      %v9123 = vadd.f32 %v9027, %v9029
      %v9124 = vadd.f32 %v9123, %v9031
      %v9125 = vadd.f32 %v9124, %v9033
      %v9126 = vadd.f32 %v9125, %v9035
      %v9127 = vadd.f32 %v9126, %v9037
      %v9128 = vadd.f32 %v9127, %v9039
      %v9129 = vadd.f32 %v9128, %v9041
      %v9130 = vadd.f32 %v9129, %v9043
      %v9131 = vadd.f32 %v9130, %v9045
      %v9132 = vadd.f32 %v9131, %v9047
      %v9133 = vadd.f32 %v9132, %v9049
      %v9134 = vadd.f32 %v9133, %v9051
      %v9135 = vadd.f32 %v9134, %v9053
      %v9136 = vadd.f32 %v9135, %v9055
      %v9137 = vadd.f32 %v9136, %v9057
      %v9138 = vadd.f32 %v9137, %v9059
      %v9139 = vadd.f32 %v9138, %v9061
      %v9140 = vadd.f32 %v9139, %v9063
      %v9141 = vadd.f32 %v9140, %v9065
      %v9142 = vadd.f32 %v9141, %v9067
      %v9143 = vadd.f32 %v9142, %v9069
      %v9144 = vadd.f32 %v9143, %v9071
      %v9145 = vadd.f32 %v9144, %v9073
      %v9146 = vadd.f32 %v9145, %v9075
      %v9147 = vadd.f32 %v9146, %v9077
      %v9148 = vadd.f32 %v9147, %v9079
      %v9149 = vadd.f32 %v9148, %v9081
      %v9150 = vadd.f32 %v9149, %v9083
      %v9151 = vadd.f32 %v9150, %v9085
      %v9152 = vadd.f32 %v9151, %v9087
      %v9153 = vadd.f32 %v9152, %v9089
      %v9154 = vadd.f32 %v9153, %v9091
      %v9155 = vadd.f32 %v9154, %v9093
      %v9156 = vadd.f32 %v9155, %v9095
      %v9157 = vadd.f32 %v9156, %v9097
      %v9158 = vadd.f32 %v9157, %v9099
      %v9159 = vadd.f32 %v9158, %v9101
      %v9160 = vadd.f32 %v9159, %v9103
      %v9161 = vadd.f32 %v9160, %v9105
      %v9162 = vadd.f32 %v9161, %v9107
      %v9163 = vadd.f32 %v9162, %v9109
      %v9164 = vadd.f32 %v9163, %v9111
      %v9165 = vadd.f32 %v9164, %v9113
      %v9166 = vadd.f32 %v9165, %v9115
      %v9167 = vadd.f32 %v9166, %v9117
      %v9168 = vadd.f32 %v9167, %v9119
      %v9169 = vadd.f32 %v9168, %v9121
      %v9170 = vrot.slane %v9169, 4
      %v9171 = vadd.f32 %v9169, %v9170
      %v9172 = vrot.slane %v9171, 2
      %v9173 = vadd.f32 %v9171, %v9172
      %v9174 = vrot.slane %v9173, 1
      %v9175 = vadd.f32 %v9173, %v9174
      %v9176 = vadd.f32 %v9028, %v9030
      %v9177 = vadd.f32 %v9176, %v9032
      %v9178 = vadd.f32 %v9177, %v9034
      %v9179 = vadd.f32 %v9178, %v9036
      %v9180 = vadd.f32 %v9179, %v9038
      %v9181 = vadd.f32 %v9180, %v9040
      %v9182 = vadd.f32 %v9181, %v9042
      %v9183 = vadd.f32 %v9182, %v9044
      %v9184 = vadd.f32 %v9183, %v9046
      %v9185 = vadd.f32 %v9184, %v9048
      %v9186 = vadd.f32 %v9185, %v9050
      %v9187 = vadd.f32 %v9186, %v9052
      %v9188 = vadd.f32 %v9187, %v9054
      %v9189 = vadd.f32 %v9188, %v9056
      %v9190 = vadd.f32 %v9189, %v9058
      %v9191 = vadd.f32 %v9190, %v9060
      %v9192 = vadd.f32 %v9191, %v9062
      %v9193 = vadd.f32 %v9192, %v9064
      %v9194 = vadd.f32 %v9193, %v9066
      %v9195 = vadd.f32 %v9194, %v9068
      %v9196 = vadd.f32 %v9195, %v9070
      %v9197 = vadd.f32 %v9196, %v9072
      %v9198 = vadd.f32 %v9197, %v9074
      %v9199 = vadd.f32 %v9198, %v9076
      %v9200 = vadd.f32 %v9199, %v9078
      %v9201 = vadd.f32 %v9200, %v9080
      %v9202 = vadd.f32 %v9201, %v9082
      %v9203 = vadd.f32 %v9202, %v9084
      %v9204 = vadd.f32 %v9203, %v9086
      %v9205 = vadd.f32 %v9204, %v9088
      %v9206 = vadd.f32 %v9205, %v9090
      %v9207 = vadd.f32 %v9206, %v9092
      %v9208 = vadd.f32 %v9207, %v9094
      %v9209 = vadd.f32 %v9208, %v9096
      %v9210 = vadd.f32 %v9209, %v9098
      %v9211 = vadd.f32 %v9210, %v9100
      %v9212 = vadd.f32 %v9211, %v9102
      %v9213 = vadd.f32 %v9212, %v9104
      %v9214 = vadd.f32 %v9213, %v9106
      %v9215 = vadd.f32 %v9214, %v9108
      %v9216 = vadd.f32 %v9215, %v9110
      %v9217 = vadd.f32 %v9216, %v9112
      %v9218 = vadd.f32 %v9217, %v9114
      %v9219 = vadd.f32 %v9218, %v9116
      %v9220 = vadd.f32 %v9219, %v9118
      %v9221 = vadd.f32 %v9220, %v9120
      %v9222 = vadd.f32 %v9221, %v9122
      %v9223 = vrot.slane %v9222, 4
      %v9224 = vadd.f32 %v9222, %v9223
      %v9225 = vrot.slane %v9224, 2
      %v9226 = vadd.f32 %v9224, %v9225
      %v9227 = vrot.slane %v9226, 1
      %v9228 = vadd.f32 %v9226, %v9227
      %v9229 = vmul.f32 %v9175, %v8928
      %v9230 = vmul.f32 %v9228, %v8928
      %v9231 = vadd.f32 %v9229, 1e-06
      %v9232 = vadd.f32 %v9230, 1e-06
      %v9233 = vrsqrt.pop %v9231
      %v9234 = vrsqrt.pop %v9232
      %v9235 = vmul.f32 %v8931, %v9233
      %v9236 = vmul.f32 %v8932, %v9234
      %v9237 = vmul.f32 %v8933, %v9233
      %v9238 = vmul.f32 %v8934, %v9234
      %v9239 = vmul.f32 %v8935, %v9233
      %v9240 = vmul.f32 %v8936, %v9234
      %v9241 = vmul.f32 %v8937, %v9233
      %v9242 = vmul.f32 %v8938, %v9234
      %v9243 = vmul.f32 %v8939, %v9233
      %v9244 = vmul.f32 %v8940, %v9234
      %v9245 = vmul.f32 %v8941, %v9233
      %v9246 = vmul.f32 %v8942, %v9234
      %v9247 = vmul.f32 %v8943, %v9233
      %v9248 = vmul.f32 %v8944, %v9234
      %v9249 = vmul.f32 %v8945, %v9233
      %v9250 = vmul.f32 %v8946, %v9234
      %v9251 = vmul.f32 %v8947, %v9233
      %v9252 = vmul.f32 %v8948, %v9234
      %v9253 = vmul.f32 %v8949, %v9233
      %v9254 = vmul.f32 %v8950, %v9234
      %v9255 = vmul.f32 %v8951, %v9233
      %v9256 = vmul.f32 %v8952, %v9234
      %v9257 = vmul.f32 %v8953, %v9233
      %v9258 = vmul.f32 %v8954, %v9234
      %v9259 = vmul.f32 %v8955, %v9233
      %v9260 = vmul.f32 %v8956, %v9234
      %v9261 = vmul.f32 %v8957, %v9233
      %v9262 = vmul.f32 %v8958, %v9234
      %v9263 = vmul.f32 %v8959, %v9233
      %v9264 = vmul.f32 %v8960, %v9234
      %v9265 = vmul.f32 %v8961, %v9233
      %v9266 = vmul.f32 %v8962, %v9234
      %v9267 = vmul.f32 %v8963, %v9233
      %v9268 = vmul.f32 %v8964, %v9234
      %v9269 = vmul.f32 %v8965, %v9233
      %v9270 = vmul.f32 %v8966, %v9234
      %v9271 = vmul.f32 %v8967, %v9233
      %v9272 = vmul.f32 %v8968, %v9234
      %v9273 = vmul.f32 %v8969, %v9233
      %v9274 = vmul.f32 %v8970, %v9234
      %v9275 = vmul.f32 %v8971, %v9233
      %v9276 = vmul.f32 %v8972, %v9234
      %v9277 = vmul.f32 %v8973, %v9233
      %v9278 = vmul.f32 %v8974, %v9234
      %v9279 = vmul.f32 %v8975, %v9233
      %v9280 = vmul.f32 %v8976, %v9234
      %v9281 = vmul.f32 %v8977, %v9233
      %v9282 = vmul.f32 %v8978, %v9234
      %v9283 = vmul.f32 %v8979, %v9233
      %v9284 = vmul.f32 %v8980, %v9234
      %v9285 = vmul.f32 %v8981, %v9233
      %v9286 = vmul.f32 %v8982, %v9234
      %v9287 = vmul.f32 %v8983, %v9233
      %v9288 = vmul.f32 %v8984, %v9234
      %v9289 = vmul.f32 %v8985, %v9233
      %v9290 = vmul.f32 %v8986, %v9234
      %v9291 = vmul.f32 %v8987, %v9233
      %v9292 = vmul.f32 %v8988, %v9234
      %v9293 = vmul.f32 %v8989, %v9233
      %v9294 = vmul.f32 %v8990, %v9234
      %v9295 = vmul.f32 %v8991, %v9233
      %v9296 = vmul.f32 %v8992, %v9234
      %v9297 = vmul.f32 %v8993, %v9233
      %v9298 = vmul.f32 %v8994, %v9234
      %v9299 = vmul.f32 %v8995, %v9233
      %v9300 = vmul.f32 %v8996, %v9234
      %v9301 = vmul.f32 %v8997, %v9233
      %v9302 = vmul.f32 %v8998, %v9234
      %v9303 = vmul.f32 %v8999, %v9233
      %v9304 = vmul.f32 %v9000, %v9234
      %v9305 = vmul.f32 %v9001, %v9233
      %v9306 = vmul.f32 %v9002, %v9234
      %v9307 = vmul.f32 %v9003, %v9233
      %v9308 = vmul.f32 %v9004, %v9234
      %v9309 = vmul.f32 %v9005, %v9233
      %v9310 = vmul.f32 %v9006, %v9234
      %v9311 = vmul.f32 %v9007, %v9233
      %v9312 = vmul.f32 %v9008, %v9234
      %v9313 = vmul.f32 %v9009, %v9233
      %v9314 = vmul.f32 %v9010, %v9234
      %v9315 = vmul.f32 %v9011, %v9233
      %v9316 = vmul.f32 %v9012, %v9234
      %v9317 = vmul.f32 %v9013, %v9233
      %v9318 = vmul.f32 %v9014, %v9234
      %v9319 = vmul.f32 %v9015, %v9233
      %v9320 = vmul.f32 %v9016, %v9234
      %v9321 = vmul.f32 %v9017, %v9233
      %v9322 = vmul.f32 %v9018, %v9234
      %v9323 = vmul.f32 %v9019, %v9233
      %v9324 = vmul.f32 %v9020, %v9234
      %v9325 = vmul.f32 %v9021, %v9233
      %v9326 = vmul.f32 %v9022, %v9234
      %v9327 = vmul.f32 %v9023, %v9233
      %v9328 = vmul.f32 %v9024, %v9234
      %v9329 = vmul.f32 %v9025, %v9233
      %v9330 = vmul.f32 %v9026, %v9234
      %9332 = vset.pattern.permute.xlu0 0
      %9333 = vperm.xlu0 %9332, %v8726
      %v9334 = vpop.permute.xlu0 %9333
      %9337 = vset.pattern.permute.xlu0 0
      %9338 = vperm.xlu0 %9337, %v8727
      %v9339 = vpop.permute.xlu0 %9338
      %9342 = vset.pattern.permute.xlu0 0
      %9343 = vperm.xlu0 %9342, %v8728
      %v9344 = vpop.permute.xlu0 %9343
      %9347 = vset.pattern.permute.xlu0 0
      %9348 = vperm.xlu0 %9347, %v8729
      %v9349 = vpop.permute.xlu0 %9348
      %9352 = vset.pattern.permute.xlu0 0
      %9353 = vperm.xlu0 %9352, %v8730
      %v9354 = vpop.permute.xlu0 %9353
      %9357 = vset.pattern.permute.xlu0 0
      %9358 = vperm.xlu0 %9357, %v8731
      %v9359 = vpop.permute.xlu0 %9358
      %9362 = vset.pattern.permute.xlu0 0
      %9363 = vperm.xlu0 %9362, %v8732
      %v9364 = vpop.permute.xlu0 %9363
      %9367 = vset.pattern.permute.xlu0 0
      %9368 = vperm.xlu0 %9367, %v8733
      %v9369 = vpop.permute.xlu0 %9368
      %9372 = vset.pattern.permute.xlu0 0
      %9373 = vperm.xlu0 %9372, %v8734
      %v9374 = vpop.permute.xlu0 %9373
      %9377 = vset.pattern.permute.xlu0 0
      %9378 = vperm.xlu0 %9377, %v8735
      %v9379 = vpop.permute.xlu0 %9378
      %9382 = vset.pattern.permute.xlu0 0
      %9383 = vperm.xlu0 %9382, %v8736
      %v9384 = vpop.permute.xlu0 %9383
      %9387 = vset.pattern.permute.xlu0 0
      %9388 = vperm.xlu0 %9387, %v8737
      %v9389 = vpop.permute.xlu0 %9388
      %9392 = vset.pattern.permute.xlu0 0
      %9393 = vperm.xlu0 %9392, %v8738
      %v9394 = vpop.permute.xlu0 %9393
      %9397 = vset.pattern.permute.xlu0 0
      %9398 = vperm.xlu0 %9397, %v8739
      %v9399 = vpop.permute.xlu0 %9398
      %9402 = vset.pattern.permute.xlu0 0
      %9403 = vperm.xlu0 %9402, %v8740
      %v9404 = vpop.permute.xlu0 %9403
      %9407 = vset.pattern.permute.xlu0 0
      %9408 = vperm.xlu0 %9407, %v8741
      %v9409 = vpop.permute.xlu0 %9408
      %9412 = vset.pattern.permute.xlu0 0
      %9413 = vperm.xlu0 %9412, %v8742
      %v9414 = vpop.permute.xlu0 %9413
      %9417 = vset.pattern.permute.xlu0 0
      %9418 = vperm.xlu0 %9417, %v8743
      %v9419 = vpop.permute.xlu0 %9418
      %9422 = vset.pattern.permute.xlu0 0
      %9423 = vperm.xlu0 %9422, %v8744
      %v9424 = vpop.permute.xlu0 %9423
      %9427 = vset.pattern.permute.xlu0 0
      %9428 = vperm.xlu0 %9427, %v8745
      %v9429 = vpop.permute.xlu0 %9428
      %9432 = vset.pattern.permute.xlu0 0
      %9433 = vperm.xlu0 %9432, %v8746
      %v9434 = vpop.permute.xlu0 %9433
      %9437 = vset.pattern.permute.xlu0 0
      %9438 = vperm.xlu0 %9437, %v8747
      %v9439 = vpop.permute.xlu0 %9438
      %9442 = vset.pattern.permute.xlu0 0
      %9443 = vperm.xlu0 %9442, %v8748
      %v9444 = vpop.permute.xlu0 %9443
      %9447 = vset.pattern.permute.xlu0 0
      %9448 = vperm.xlu0 %9447, %v8749
      %v9449 = vpop.permute.xlu0 %9448
      %9452 = vset.pattern.permute.xlu0 0
      %9453 = vperm.xlu0 %9452, %v8750
      %v9454 = vpop.permute.xlu0 %9453
      %9457 = vset.pattern.permute.xlu0 0
      %9458 = vperm.xlu0 %9457, %v8751
      %v9459 = vpop.permute.xlu0 %9458
      %9462 = vset.pattern.permute.xlu0 0
      %9463 = vperm.xlu0 %9462, %v8752
      %v9464 = vpop.permute.xlu0 %9463
      %9467 = vset.pattern.permute.xlu0 0
      %9468 = vperm.xlu0 %9467, %v8753
      %v9469 = vpop.permute.xlu0 %9468
      %9472 = vset.pattern.permute.xlu0 0
      %9473 = vperm.xlu0 %9472, %v8754
      %v9474 = vpop.permute.xlu0 %9473
      %9477 = vset.pattern.permute.xlu0 0
      %9478 = vperm.xlu0 %9477, %v8755
      %v9479 = vpop.permute.xlu0 %9478
      %9482 = vset.pattern.permute.xlu0 0
      %9483 = vperm.xlu0 %9482, %v8756
      %v9484 = vpop.permute.xlu0 %9483
      %9487 = vset.pattern.permute.xlu0 0
      %9488 = vperm.xlu0 %9487, %v8757
      %v9489 = vpop.permute.xlu0 %9488
      %9492 = vset.pattern.permute.xlu0 0
      %9493 = vperm.xlu0 %9492, %v8758
      %v9494 = vpop.permute.xlu0 %9493
      %9497 = vset.pattern.permute.xlu0 0
      %9498 = vperm.xlu0 %9497, %v8759
      %v9499 = vpop.permute.xlu0 %9498
      %9502 = vset.pattern.permute.xlu0 0
      %9503 = vperm.xlu0 %9502, %v8760
      %v9504 = vpop.permute.xlu0 %9503
      %9507 = vset.pattern.permute.xlu0 0
      %9508 = vperm.xlu0 %9507, %v8761
      %v9509 = vpop.permute.xlu0 %9508
      %9512 = vset.pattern.permute.xlu0 0
      %9513 = vperm.xlu0 %9512, %v8762
      %v9514 = vpop.permute.xlu0 %9513
      %9517 = vset.pattern.permute.xlu0 0
      %9518 = vperm.xlu0 %9517, %v8763
      %v9519 = vpop.permute.xlu0 %9518
      %9522 = vset.pattern.permute.xlu0 0
      %9523 = vperm.xlu0 %9522, %v8764
      %v9524 = vpop.permute.xlu0 %9523
      %9527 = vset.pattern.permute.xlu0 0
      %9528 = vperm.xlu0 %9527, %v8765
      %v9529 = vpop.permute.xlu0 %9528
      %9532 = vset.pattern.permute.xlu0 0
      %9533 = vperm.xlu0 %9532, %v8766
      %v9534 = vpop.permute.xlu0 %9533
      %9537 = vset.pattern.permute.xlu0 0
      %9538 = vperm.xlu0 %9537, %v8767
      %v9539 = vpop.permute.xlu0 %9538
      %9542 = vset.pattern.permute.xlu0 0
      %9543 = vperm.xlu0 %9542, %v8768
      %v9544 = vpop.permute.xlu0 %9543
      %9547 = vset.pattern.permute.xlu0 0
      %9548 = vperm.xlu0 %9547, %v8769
      %v9549 = vpop.permute.xlu0 %9548
      %9552 = vset.pattern.permute.xlu0 0
      %9553 = vperm.xlu0 %9552, %v8770
      %v9554 = vpop.permute.xlu0 %9553
      %9557 = vset.pattern.permute.xlu0 0
      %9558 = vperm.xlu0 %9557, %v8771
      %v9559 = vpop.permute.xlu0 %9558
      %9562 = vset.pattern.permute.xlu0 0
      %9563 = vperm.xlu0 %9562, %v8772
      %v9564 = vpop.permute.xlu0 %9563
      %9567 = vset.pattern.permute.xlu0 0
      %9568 = vperm.xlu0 %9567, %v8773
      %v9569 = vpop.permute.xlu0 %9568
      %v9571 = vmul.f32 %v9235, %v9334
      %v9572 = vmul.f32 %v9236, %v9334
      %v9573 = vmul.f32 %v9237, %v9339
      %v9574 = vmul.f32 %v9238, %v9339
      %v9575 = vmul.f32 %v9239, %v9344
      %v9576 = vmul.f32 %v9240, %v9344
      %v9577 = vmul.f32 %v9241, %v9349
      %v9578 = vmul.f32 %v9242, %v9349
      %v9579 = vmul.f32 %v9243, %v9354
      %v9580 = vmul.f32 %v9244, %v9354
      %v9581 = vmul.f32 %v9245, %v9359
      %v9582 = vmul.f32 %v9246, %v9359
      %v9583 = vmul.f32 %v9247, %v9364
      %v9584 = vmul.f32 %v9248, %v9364
      %v9585 = vmul.f32 %v9249, %v9369
      %v9586 = vmul.f32 %v9250, %v9369
      %v9587 = vmul.f32 %v9251, %v9374
      %v9588 = vmul.f32 %v9252, %v9374
      %v9589 = vmul.f32 %v9253, %v9379
      %v9590 = vmul.f32 %v9254, %v9379
      %v9591 = vmul.f32 %v9255, %v9384
      %v9592 = vmul.f32 %v9256, %v9384
      %v9593 = vmul.f32 %v9257, %v9389
      %v9594 = vmul.f32 %v9258, %v9389
      %v9595 = vmul.f32 %v9259, %v9394
      %v9596 = vmul.f32 %v9260, %v9394
      %v9597 = vmul.f32 %v9261, %v9399
      %v9598 = vmul.f32 %v9262, %v9399
      %v9599 = vmul.f32 %v9263, %v9404
      %v9600 = vmul.f32 %v9264, %v9404
      %v9601 = vmul.f32 %v9265, %v9409
      %v9602 = vmul.f32 %v9266, %v9409
      %v9603 = vmul.f32 %v9267, %v9414
      %v9604 = vmul.f32 %v9268, %v9414
      %v9605 = vmul.f32 %v9269, %v9419
      %v9606 = vmul.f32 %v9270, %v9419
      %v9607 = vmul.f32 %v9271, %v9424
      %v9608 = vmul.f32 %v9272, %v9424
      %v9609 = vmul.f32 %v9273, %v9429
      %v9610 = vmul.f32 %v9274, %v9429
      %v9611 = vmul.f32 %v9275, %v9434
      %v9612 = vmul.f32 %v9276, %v9434
      %v9613 = vmul.f32 %v9277, %v9439
      %v9614 = vmul.f32 %v9278, %v9439
      %v9615 = vmul.f32 %v9279, %v9444
      %v9616 = vmul.f32 %v9280, %v9444
      %v9617 = vmul.f32 %v9281, %v9449
      %v9618 = vmul.f32 %v9282, %v9449
      %v9619 = vmul.f32 %v9283, %v9454
      %v9620 = vmul.f32 %v9284, %v9454
      %v9621 = vmul.f32 %v9285, %v9459
      %v9622 = vmul.f32 %v9286, %v9459
      %v9623 = vmul.f32 %v9287, %v9464
      %v9624 = vmul.f32 %v9288, %v9464
      %v9625 = vmul.f32 %v9289, %v9469
      %v9626 = vmul.f32 %v9290, %v9469
      %v9627 = vmul.f32 %v9291, %v9474
      %v9628 = vmul.f32 %v9292, %v9474
      %v9629 = vmul.f32 %v9293, %v9479
      %v9630 = vmul.f32 %v9294, %v9479
      %v9631 = vmul.f32 %v9295, %v9484
      %v9632 = vmul.f32 %v9296, %v9484
      %v9633 = vmul.f32 %v9297, %v9489
      %v9634 = vmul.f32 %v9298, %v9489
      %v9635 = vmul.f32 %v9299, %v9494
      %v9636 = vmul.f32 %v9300, %v9494
      %v9637 = vmul.f32 %v9301, %v9499
      %v9638 = vmul.f32 %v9302, %v9499
      %v9639 = vmul.f32 %v9303, %v9504
      %v9640 = vmul.f32 %v9304, %v9504
      %v9641 = vmul.f32 %v9305, %v9509
      %v9642 = vmul.f32 %v9306, %v9509
      %v9643 = vmul.f32 %v9307, %v9514
      %v9644 = vmul.f32 %v9308, %v9514
      %v9645 = vmul.f32 %v9309, %v9519
      %v9646 = vmul.f32 %v9310, %v9519
      %v9647 = vmul.f32 %v9311, %v9524
      %v9648 = vmul.f32 %v9312, %v9524
      %v9649 = vmul.f32 %v9313, %v9529
      %v9650 = vmul.f32 %v9314, %v9529
      %v9651 = vmul.f32 %v9315, %v9534
      %v9652 = vmul.f32 %v9316, %v9534
      %v9653 = vmul.f32 %v9317, %v9539
      %v9654 = vmul.f32 %v9318, %v9539
      %v9655 = vmul.f32 %v9319, %v9544
      %v9656 = vmul.f32 %v9320, %v9544
      %v9657 = vmul.f32 %v9321, %v9549
      %v9658 = vmul.f32 %v9322, %v9549
      %v9659 = vmul.f32 %v9323, %v9554
      %v9660 = vmul.f32 %v9324, %v9554
      %v9661 = vmul.f32 %v9325, %v9559
      %v9662 = vmul.f32 %v9326, %v9559
      %v9663 = vmul.f32 %v9327, %v9564
      %v9664 = vmul.f32 %v9328, %v9564
      %v9665 = vmul.f32 %v9329, %v9569
      %v9666 = vmul.f32 %v9330, %v9569
      %9668 = vset.pattern.permute.xlu0 0
      %9669 = vperm.xlu0 %9668, %v8774
      %v9670 = vpop.permute.xlu0 %9669
      %9673 = vset.pattern.permute.xlu0 0
      %9674 = vperm.xlu0 %9673, %v8775
      %v9675 = vpop.permute.xlu0 %9674
      %9678 = vset.pattern.permute.xlu0 0
      %9679 = vperm.xlu0 %9678, %v8776
      %v9680 = vpop.permute.xlu0 %9679
      %9683 = vset.pattern.permute.xlu0 0
      %9684 = vperm.xlu0 %9683, %v8777
      %v9685 = vpop.permute.xlu0 %9684
      %9688 = vset.pattern.permute.xlu0 0
      %9689 = vperm.xlu0 %9688, %v8778
      %v9690 = vpop.permute.xlu0 %9689
      %9693 = vset.pattern.permute.xlu0 0
      %9694 = vperm.xlu0 %9693, %v8779
      %v9695 = vpop.permute.xlu0 %9694
      %9698 = vset.pattern.permute.xlu0 0
      %9699 = vperm.xlu0 %9698, %v8780
      %v9700 = vpop.permute.xlu0 %9699
      %9703 = vset.pattern.permute.xlu0 0
      %9704 = vperm.xlu0 %9703, %v8781
      %v9705 = vpop.permute.xlu0 %9704
      %9708 = vset.pattern.permute.xlu0 0
      %9709 = vperm.xlu0 %9708, %v8782
      %v9710 = vpop.permute.xlu0 %9709
      %9713 = vset.pattern.permute.xlu0 0
      %9714 = vperm.xlu0 %9713, %v8783
      %v9715 = vpop.permute.xlu0 %9714
      %9718 = vset.pattern.permute.xlu0 0
      %9719 = vperm.xlu0 %9718, %v8784
      %v9720 = vpop.permute.xlu0 %9719
      %9723 = vset.pattern.permute.xlu0 0
      %9724 = vperm.xlu0 %9723, %v8785
      %v9725 = vpop.permute.xlu0 %9724
      %9728 = vset.pattern.permute.xlu0 0
      %9729 = vperm.xlu0 %9728, %v8786
      %v9730 = vpop.permute.xlu0 %9729
      %9733 = vset.pattern.permute.xlu0 0
      %9734 = vperm.xlu0 %9733, %v8787
      %v9735 = vpop.permute.xlu0 %9734
      %9738 = vset.pattern.permute.xlu0 0
      %9739 = vperm.xlu0 %9738, %v8788
      %v9740 = vpop.permute.xlu0 %9739
      %9743 = vset.pattern.permute.xlu0 0
      %9744 = vperm.xlu0 %9743, %v8789
      %v9745 = vpop.permute.xlu0 %9744
      %9748 = vset.pattern.permute.xlu0 0
      %9749 = vperm.xlu0 %9748, %v8790
      %v9750 = vpop.permute.xlu0 %9749
      %9753 = vset.pattern.permute.xlu0 0
      %9754 = vperm.xlu0 %9753, %v8791
      %v9755 = vpop.permute.xlu0 %9754
      %9758 = vset.pattern.permute.xlu0 0
      %9759 = vperm.xlu0 %9758, %v8792
      %v9760 = vpop.permute.xlu0 %9759
      %9763 = vset.pattern.permute.xlu0 0
      %9764 = vperm.xlu0 %9763, %v8793
      %v9765 = vpop.permute.xlu0 %9764
      %9768 = vset.pattern.permute.xlu0 0
      %9769 = vperm.xlu0 %9768, %v8794
      %v9770 = vpop.permute.xlu0 %9769
      %9773 = vset.pattern.permute.xlu0 0
      %9774 = vperm.xlu0 %9773, %v8795
      %v9775 = vpop.permute.xlu0 %9774
      %9778 = vset.pattern.permute.xlu0 0
      %9779 = vperm.xlu0 %9778, %v8796
      %v9780 = vpop.permute.xlu0 %9779
      %9783 = vset.pattern.permute.xlu0 0
      %9784 = vperm.xlu0 %9783, %v8797
      %v9785 = vpop.permute.xlu0 %9784
      %9788 = vset.pattern.permute.xlu0 0
      %9789 = vperm.xlu0 %9788, %v8798
      %v9790 = vpop.permute.xlu0 %9789
      %9793 = vset.pattern.permute.xlu0 0
      %9794 = vperm.xlu0 %9793, %v8799
      %v9795 = vpop.permute.xlu0 %9794
      %9798 = vset.pattern.permute.xlu0 0
      %9799 = vperm.xlu0 %9798, %v8800
      %v9800 = vpop.permute.xlu0 %9799
      %9803 = vset.pattern.permute.xlu0 0
      %9804 = vperm.xlu0 %9803, %v8801
      %v9805 = vpop.permute.xlu0 %9804
      %9808 = vset.pattern.permute.xlu0 0
      %9809 = vperm.xlu0 %9808, %v8802
      %v9810 = vpop.permute.xlu0 %9809
      %9813 = vset.pattern.permute.xlu0 0
      %9814 = vperm.xlu0 %9813, %v8803
      %v9815 = vpop.permute.xlu0 %9814
      %9818 = vset.pattern.permute.xlu0 0
      %9819 = vperm.xlu0 %9818, %v8804
      %v9820 = vpop.permute.xlu0 %9819
      %9823 = vset.pattern.permute.xlu0 0
      %9824 = vperm.xlu0 %9823, %v8805
      %v9825 = vpop.permute.xlu0 %9824
      %9828 = vset.pattern.permute.xlu0 0
      %9829 = vperm.xlu0 %9828, %v8806
      %v9830 = vpop.permute.xlu0 %9829
      %9833 = vset.pattern.permute.xlu0 0
      %9834 = vperm.xlu0 %9833, %v8807
      %v9835 = vpop.permute.xlu0 %9834
      %9838 = vset.pattern.permute.xlu0 0
      %9839 = vperm.xlu0 %9838, %v8808
      %v9840 = vpop.permute.xlu0 %9839
      %9843 = vset.pattern.permute.xlu0 0
      %9844 = vperm.xlu0 %9843, %v8809
      %v9845 = vpop.permute.xlu0 %9844
      %9848 = vset.pattern.permute.xlu0 0
      %9849 = vperm.xlu0 %9848, %v8810
      %v9850 = vpop.permute.xlu0 %9849
      %9853 = vset.pattern.permute.xlu0 0
      %9854 = vperm.xlu0 %9853, %v8811
      %v9855 = vpop.permute.xlu0 %9854
      %9858 = vset.pattern.permute.xlu0 0
      %9859 = vperm.xlu0 %9858, %v8812
      %v9860 = vpop.permute.xlu0 %9859
      %9863 = vset.pattern.permute.xlu0 0
      %9864 = vperm.xlu0 %9863, %v8813
      %v9865 = vpop.permute.xlu0 %9864
      %9868 = vset.pattern.permute.xlu0 0
      %9869 = vperm.xlu0 %9868, %v8814
      %v9870 = vpop.permute.xlu0 %9869
      %9873 = vset.pattern.permute.xlu0 0
      %9874 = vperm.xlu0 %9873, %v8815
      %v9875 = vpop.permute.xlu0 %9874
      %9878 = vset.pattern.permute.xlu0 0
      %9879 = vperm.xlu0 %9878, %v8816
      %v9880 = vpop.permute.xlu0 %9879
      %9883 = vset.pattern.permute.xlu0 0
      %9884 = vperm.xlu0 %9883, %v8817
      %v9885 = vpop.permute.xlu0 %9884
      %9888 = vset.pattern.permute.xlu0 0
      %9889 = vperm.xlu0 %9888, %v8818
      %v9890 = vpop.permute.xlu0 %9889
      %9893 = vset.pattern.permute.xlu0 0
      %9894 = vperm.xlu0 %9893, %v8819
      %v9895 = vpop.permute.xlu0 %9894
      %9898 = vset.pattern.permute.xlu0 0
      %9899 = vperm.xlu0 %9898, %v8820
      %v9900 = vpop.permute.xlu0 %9899
      %9903 = vset.pattern.permute.xlu0 0
      %9904 = vperm.xlu0 %9903, %v8821
      %v9905 = vpop.permute.xlu0 %9904
      %v9907 = vadd.f32 %v9571, %v9670
      %v9908 = vadd.f32 %v9572, %v9670
      %v9909 = vadd.f32 %v9573, %v9675
      %v9910 = vadd.f32 %v9574, %v9675
      %v9911 = vadd.f32 %v9575, %v9680
      %v9912 = vadd.f32 %v9576, %v9680
      %v9913 = vadd.f32 %v9577, %v9685
      %v9914 = vadd.f32 %v9578, %v9685
      %v9915 = vadd.f32 %v9579, %v9690
      %v9916 = vadd.f32 %v9580, %v9690
      %v9917 = vadd.f32 %v9581, %v9695
      %v9918 = vadd.f32 %v9582, %v9695
      %v9919 = vadd.f32 %v9583, %v9700
      %v9920 = vadd.f32 %v9584, %v9700
      %v9921 = vadd.f32 %v9585, %v9705
      %v9922 = vadd.f32 %v9586, %v9705
      %v9923 = vadd.f32 %v9587, %v9710
      %v9924 = vadd.f32 %v9588, %v9710
      %v9925 = vadd.f32 %v9589, %v9715
      %v9926 = vadd.f32 %v9590, %v9715
      %v9927 = vadd.f32 %v9591, %v9720
      %v9928 = vadd.f32 %v9592, %v9720
      %v9929 = vadd.f32 %v9593, %v9725
      %v9930 = vadd.f32 %v9594, %v9725
      %v9931 = vadd.f32 %v9595, %v9730
      %v9932 = vadd.f32 %v9596, %v9730
      %v9933 = vadd.f32 %v9597, %v9735
      %v9934 = vadd.f32 %v9598, %v9735
      %v9935 = vadd.f32 %v9599, %v9740
      %v9936 = vadd.f32 %v9600, %v9740
      %v9937 = vadd.f32 %v9601, %v9745
      %v9938 = vadd.f32 %v9602, %v9745
      %v9939 = vadd.f32 %v9603, %v9750
      %v9940 = vadd.f32 %v9604, %v9750
      %v9941 = vadd.f32 %v9605, %v9755
      %v9942 = vadd.f32 %v9606, %v9755
      %v9943 = vadd.f32 %v9607, %v9760
      %v9944 = vadd.f32 %v9608, %v9760
      %v9945 = vadd.f32 %v9609, %v9765
      %v9946 = vadd.f32 %v9610, %v9765
      %v9947 = vadd.f32 %v9611, %v9770
      %v9948 = vadd.f32 %v9612, %v9770
      %v9949 = vadd.f32 %v9613, %v9775
      %v9950 = vadd.f32 %v9614, %v9775
      %v9951 = vadd.f32 %v9615, %v9780
      %v9952 = vadd.f32 %v9616, %v9780
      %v9953 = vadd.f32 %v9617, %v9785
      %v9954 = vadd.f32 %v9618, %v9785
      %v9955 = vadd.f32 %v9619, %v9790
      %v9956 = vadd.f32 %v9620, %v9790
      %v9957 = vadd.f32 %v9621, %v9795
      %v9958 = vadd.f32 %v9622, %v9795
      %v9959 = vadd.f32 %v9623, %v9800
      %v9960 = vadd.f32 %v9624, %v9800
      %v9961 = vadd.f32 %v9625, %v9805
      %v9962 = vadd.f32 %v9626, %v9805
      %v9963 = vadd.f32 %v9627, %v9810
      %v9964 = vadd.f32 %v9628, %v9810
      %v9965 = vadd.f32 %v9629, %v9815
      %v9966 = vadd.f32 %v9630, %v9815
      %v9967 = vadd.f32 %v9631, %v9820
      %v9968 = vadd.f32 %v9632, %v9820
      %v9969 = vadd.f32 %v9633, %v9825
      %v9970 = vadd.f32 %v9634, %v9825
      %v9971 = vadd.f32 %v9635, %v9830
      %v9972 = vadd.f32 %v9636, %v9830
      %v9973 = vadd.f32 %v9637, %v9835
      %v9974 = vadd.f32 %v9638, %v9835
      %v9975 = vadd.f32 %v9639, %v9840
      %v9976 = vadd.f32 %v9640, %v9840
      %v9977 = vadd.f32 %v9641, %v9845
      %v9978 = vadd.f32 %v9642, %v9845
      %v9979 = vadd.f32 %v9643, %v9850
      %v9980 = vadd.f32 %v9644, %v9850
      %v9981 = vadd.f32 %v9645, %v9855
      %v9982 = vadd.f32 %v9646, %v9855
      %v9983 = vadd.f32 %v9647, %v9860
      %v9984 = vadd.f32 %v9648, %v9860
      %v9985 = vadd.f32 %v9649, %v9865
      %v9986 = vadd.f32 %v9650, %v9865
      %v9987 = vadd.f32 %v9651, %v9870
      %v9988 = vadd.f32 %v9652, %v9870
      %v9989 = vadd.f32 %v9653, %v9875
      %v9990 = vadd.f32 %v9654, %v9875
      %v9991 = vadd.f32 %v9655, %v9880
      %v9992 = vadd.f32 %v9656, %v9880
      %v9993 = vadd.f32 %v9657, %v9885
      %v9994 = vadd.f32 %v9658, %v9885
      %v9995 = vadd.f32 %v9659, %v9890
      %v9996 = vadd.f32 %v9660, %v9890
      %v9997 = vadd.f32 %v9661, %v9895
      %v9998 = vadd.f32 %v9662, %v9895
      %v9999 = vadd.f32 %v9663, %v9900
      %v10000 = vadd.f32 %v9664, %v9900
      %v10001 = vadd.f32 %v9665, %v9905
      %v10002 = vadd.f32 %v9666, %v9905
      %v10003 = vadd.f32 %v486, %v9907
      %v10004 = vadd.f32 %v487, %v9908
      %v10005 = vadd.f32 %v488, %v9909
      %v10006 = vadd.f32 %v489, %v9910
      %v10007 = vadd.f32 %v490, %v9911
      %v10008 = vadd.f32 %v491, %v9912
      %v10009 = vadd.f32 %v492, %v9913
      %v10010 = vadd.f32 %v493, %v9914
      %v10011 = vadd.f32 %v494, %v9915
      %v10012 = vadd.f32 %v495, %v9916
      %v10013 = vadd.f32 %v496, %v9917
      %v10014 = vadd.f32 %v497, %v9918
      %v10015 = vadd.f32 %v498, %v9919
      %v10016 = vadd.f32 %v499, %v9920
      %v10017 = vadd.f32 %v500, %v9921
      %v10018 = vadd.f32 %v501, %v9922
      %v10019 = vadd.f32 %v502, %v9923
      %v10020 = vadd.f32 %v503, %v9924
      %v10021 = vadd.f32 %v504, %v9925
      %v10022 = vadd.f32 %v505, %v9926
      %v10023 = vadd.f32 %v506, %v9927
      %v10024 = vadd.f32 %v507, %v9928
      %v10025 = vadd.f32 %v508, %v9929
      %v10026 = vadd.f32 %v509, %v9930
      %v10027 = vadd.f32 %v510, %v9931
      %v10028 = vadd.f32 %v511, %v9932
      %v10029 = vadd.f32 %v512, %v9933
      %v10030 = vadd.f32 %v513, %v9934
      %v10031 = vadd.f32 %v514, %v9935
      %v10032 = vadd.f32 %v515, %v9936
      %v10033 = vadd.f32 %v516, %v9937
      %v10034 = vadd.f32 %v517, %v9938
      %v10035 = vadd.f32 %v518, %v9939
      %v10036 = vadd.f32 %v519, %v9940
      %v10037 = vadd.f32 %v520, %v9941
      %v10038 = vadd.f32 %v521, %v9942
      %v10039 = vadd.f32 %v522, %v9943
      %v10040 = vadd.f32 %v523, %v9944
      %v10041 = vadd.f32 %v524, %v9945
      %v10042 = vadd.f32 %v525, %v9946
      %v10043 = vadd.f32 %v526, %v9947
      %v10044 = vadd.f32 %v527, %v9948
      %v10045 = vadd.f32 %v528, %v9949
      %v10046 = vadd.f32 %v529, %v9950
      %v10047 = vadd.f32 %v530, %v9951
      %v10048 = vadd.f32 %v531, %v9952
      %v10049 = vadd.f32 %v532, %v9953
      %v10050 = vadd.f32 %v533, %v9954
      %v10051 = vadd.f32 %v534, %v9955
      %v10052 = vadd.f32 %v535, %v9956
      %v10053 = vadd.f32 %v536, %v9957
      %v10054 = vadd.f32 %v537, %v9958
      %v10055 = vadd.f32 %v538, %v9959
      %v10056 = vadd.f32 %v539, %v9960
      %v10057 = vadd.f32 %v540, %v9961
      %v10058 = vadd.f32 %v541, %v9962
      %v10059 = vadd.f32 %v542, %v9963
      %v10060 = vadd.f32 %v543, %v9964
      %v10061 = vadd.f32 %v544, %v9965
      %v10062 = vadd.f32 %v545, %v9966
      %v10063 = vadd.f32 %v546, %v9967
      %v10064 = vadd.f32 %v547, %v9968
      %v10065 = vadd.f32 %v548, %v9969
      %v10066 = vadd.f32 %v549, %v9970
      %v10067 = vadd.f32 %v550, %v9971
      %v10068 = vadd.f32 %v551, %v9972
      %v10069 = vadd.f32 %v552, %v9973
      %v10070 = vadd.f32 %v553, %v9974
      %v10071 = vadd.f32 %v554, %v9975
      %v10072 = vadd.f32 %v555, %v9976
      %v10073 = vadd.f32 %v556, %v9977
      %v10074 = vadd.f32 %v557, %v9978
      %v10075 = vadd.f32 %v558, %v9979
      %v10076 = vadd.f32 %v559, %v9980
      %v10077 = vadd.f32 %v560, %v9981
      %v10078 = vadd.f32 %v561, %v9982
      %v10079 = vadd.f32 %v562, %v9983
      %v10080 = vadd.f32 %v563, %v9984
      %v10081 = vadd.f32 %v564, %v9985
      %v10082 = vadd.f32 %v565, %v9986
      %v10083 = vadd.f32 %v566, %v9987
      %v10084 = vadd.f32 %v567, %v9988
      %v10085 = vadd.f32 %v568, %v9989
      %v10086 = vadd.f32 %v569, %v9990
      %v10087 = vadd.f32 %v570, %v9991
      %v10088 = vadd.f32 %v571, %v9992
      %v10089 = vadd.f32 %v572, %v9993
      %v10090 = vadd.f32 %v573, %v9994
      %v10091 = vadd.f32 %v574, %v9995
      %v10092 = vadd.f32 %v575, %v9996
      %v10093 = vadd.f32 %v576, %v9997
      %v10094 = vadd.f32 %v577, %v9998
      %v10095 = vadd.f32 %v578, %v9999
      %v10096 = vadd.f32 %v579, %v10000
      %v10097 = vadd.f32 %v580, %v10001
      %v10098 = vadd.f32 %v581, %v10002
      %10099 = vst [vmem:[%s413] sm:$0xff] %v10003
      %10100 = vst [vmem:[%s413 + $0x8] sm:$0xff] %v10004
      %10101 = vst [vmem:[%s413 + $0x10] sm:$0xff] %v10005
      %10102 = vst [vmem:[%s413 + $0x18] sm:$0xff] %v10006
      %10103 = vst [vmem:[%s413 + $0x20] sm:$0xff] %v10007
      %10104 = vst [vmem:[%s413 + $0x28] sm:$0xff] %v10008
      %10105 = vst [vmem:[%s413 + $0x30] sm:$0xff] %v10009
      %10106 = vst [vmem:[%s413 + $0x38] sm:$0xff] %v10010
      %10107 = vst [vmem:[%s413 + $0x40] sm:$0xff] %v10011
      %10108 = vst [vmem:[%s413 + $0x48] sm:$0xff] %v10012
      %10109 = vst [vmem:[%s413 + $0x50] sm:$0xff] %v10013
      %10110 = vst [vmem:[%s413 + $0x58] sm:$0xff] %v10014
      %10111 = vst [vmem:[%s413 + $0x60] sm:$0xff] %v10015
      %10112 = vst [vmem:[%s413 + $0x68] sm:$0xff] %v10016
      %10113 = vst [vmem:[%s413 + $0x70] sm:$0xff] %v10017
      %10114 = vst [vmem:[%s413 + $0x78] sm:$0xff] %v10018
      %10115 = vst [vmem:[%s413 + $0x80] sm:$0xff] %v10019
      %10116 = vst [vmem:[%s413 + $0x88] sm:$0xff] %v10020
      %10117 = vst [vmem:[%s413 + $0x90] sm:$0xff] %v10021
      %10118 = vst [vmem:[%s413 + $0x98] sm:$0xff] %v10022
      %10119 = vst [vmem:[%s413 + $0xa0] sm:$0xff] %v10023
      %10120 = vst [vmem:[%s413 + $0xa8] sm:$0xff] %v10024
      %10121 = vst [vmem:[%s413 + $0xb0] sm:$0xff] %v10025
      %10122 = vst [vmem:[%s413 + $0xb8] sm:$0xff] %v10026
      %10123 = vst [vmem:[%s413 + $0xc0] sm:$0xff] %v10027
      %10124 = vst [vmem:[%s413 + $0xc8] sm:$0xff] %v10028
      %10125 = vst [vmem:[%s413 + $0xd0] sm:$0xff] %v10029
      %10126 = vst [vmem:[%s413 + $0xd8] sm:$0xff] %v10030
      %10127 = vst [vmem:[%s413 + $0xe0] sm:$0xff] %v10031
      %10128 = vst [vmem:[%s413 + $0xe8] sm:$0xff] %v10032
      %10129 = vst [vmem:[%s413 + $0xf0] sm:$0xff] %v10033
      %10130 = vst [vmem:[%s413 + $0xf8] sm:$0xff] %v10034
      %10131 = vst [vmem:[%s413 + $0x100] sm:$0xff] %v10035
      %10132 = vst [vmem:[%s413 + $0x108] sm:$0xff] %v10036
      %10133 = vst [vmem:[%s413 + $0x110] sm:$0xff] %v10037
      %10134 = vst [vmem:[%s413 + $0x118] sm:$0xff] %v10038
      %10135 = vst [vmem:[%s413 + $0x120] sm:$0xff] %v10039
      %10136 = vst [vmem:[%s413 + $0x128] sm:$0xff] %v10040
      %10137 = vst [vmem:[%s413 + $0x130] sm:$0xff] %v10041
      %10138 = vst [vmem:[%s413 + $0x138] sm:$0xff] %v10042
      %10139 = vst [vmem:[%s413 + $0x140] sm:$0xff] %v10043
      %10140 = vst [vmem:[%s413 + $0x148] sm:$0xff] %v10044
      %10141 = vst [vmem:[%s413 + $0x150] sm:$0xff] %v10045
      %10142 = vst [vmem:[%s413 + $0x158] sm:$0xff] %v10046
      %10143 = vst [vmem:[%s413 + $0x160] sm:$0xff] %v10047
      %10144 = vst [vmem:[%s413 + $0x168] sm:$0xff] %v10048
      %10145 = vst [vmem:[%s413 + $0x170] sm:$0xff] %v10049
      %10146 = vst [vmem:[%s413 + $0x178] sm:$0xff] %v10050
      %10147 = vst [vmem:[%s413 + $0x180] sm:$0xff] %v10051
      %10148 = vst [vmem:[%s413 + $0x188] sm:$0xff] %v10052
      %10149 = vst [vmem:[%s413 + $0x190] sm:$0xff] %v10053
      %10150 = vst [vmem:[%s413 + $0x198] sm:$0xff] %v10054
      %10151 = vst [vmem:[%s413 + $0x1a0] sm:$0xff] %v10055
      %10152 = vst [vmem:[%s413 + $0x1a8] sm:$0xff] %v10056
      %10153 = vst [vmem:[%s413 + $0x1b0] sm:$0xff] %v10057
      %10154 = vst [vmem:[%s413 + $0x1b8] sm:$0xff] %v10058
      %10155 = vst [vmem:[%s413 + $0x1c0] sm:$0xff] %v10059
      %10156 = vst [vmem:[%s413 + $0x1c8] sm:$0xff] %v10060
      %10157 = vst [vmem:[%s413 + $0x1d0] sm:$0xff] %v10061
      %10158 = vst [vmem:[%s413 + $0x1d8] sm:$0xff] %v10062
      %10159 = vst [vmem:[%s413 + $0x1e0] sm:$0xff] %v10063
      %10160 = vst [vmem:[%s413 + $0x1e8] sm:$0xff] %v10064
      %10161 = vst [vmem:[%s413 + $0x1f0] sm:$0xff] %v10065
      %10162 = vst [vmem:[%s413 + $0x1f8] sm:$0xff] %v10066
      %10163 = vst [vmem:[%s413 + $0x200] sm:$0xff] %v10067
      %10164 = vst [vmem:[%s413 + $0x208] sm:$0xff] %v10068
      %10165 = vst [vmem:[%s413 + $0x210] sm:$0xff] %v10069
      %10166 = vst [vmem:[%s413 + $0x218] sm:$0xff] %v10070
      %10167 = vst [vmem:[%s413 + $0x220] sm:$0xff] %v10071
      %10168 = vst [vmem:[%s413 + $0x228] sm:$0xff] %v10072
      %10169 = vst [vmem:[%s413 + $0x230] sm:$0xff] %v10073
      %10170 = vst [vmem:[%s413 + $0x238] sm:$0xff] %v10074
      %10171 = vst [vmem:[%s413 + $0x240] sm:$0xff] %v10075
      %10172 = vst [vmem:[%s413 + $0x248] sm:$0xff] %v10076
      %10173 = vst [vmem:[%s413 + $0x250] sm:$0xff] %v10077
      %10174 = vst [vmem:[%s413 + $0x258] sm:$0xff] %v10078
      %10175 = vst [vmem:[%s413 + $0x260] sm:$0xff] %v10079
      %10176 = vst [vmem:[%s413 + $0x268] sm:$0xff] %v10080
      %10177 = vst [vmem:[%s413 + $0x270] sm:$0xff] %v10081
      %10178 = vst [vmem:[%s413 + $0x278] sm:$0xff] %v10082
      %10179 = vst [vmem:[%s413 + $0x280] sm:$0xff] %v10083
      %10180 = vst [vmem:[%s413 + $0x288] sm:$0xff] %v10084
      %10181 = vst [vmem:[%s413 + $0x290] sm:$0xff] %v10085
      %10182 = vst [vmem:[%s413 + $0x298] sm:$0xff] %v10086
      %10183 = vst [vmem:[%s413 + $0x2a0] sm:$0xff] %v10087
      %10184 = vst [vmem:[%s413 + $0x2a8] sm:$0xff] %v10088
      %10185 = vst [vmem:[%s413 + $0x2b0] sm:$0xff] %v10089
      %10186 = vst [vmem:[%s413 + $0x2b8] sm:$0xff] %v10090
      %10187 = vst [vmem:[%s413 + $0x2c0] sm:$0xff] %v10091
      %10188 = vst [vmem:[%s413 + $0x2c8] sm:$0xff] %v10092
      %10189 = vst [vmem:[%s413 + $0x2d0] sm:$0xff] %v10093
      %10190 = vst [vmem:[%s413 + $0x2d8] sm:$0xff] %v10094
      %10191 = vst [vmem:[%s413 + $0x2e0] sm:$0xff] %v10095
      %10192 = vst [vmem:[%s413 + $0x2e8] sm:$0xff] %v10096
      %10193 = vst [vmem:[%s413 + $0x2f0] sm:$0xff] %v10097
      %10194 = vst [vmem:[%s413 + $0x2f8] sm:$0xff] %v10098
      %p10195 = scmp.lt.s32.totalorder %s23, 1
      %s10196 = scalar_select %p10195, %s23, 1
      %s10197 = smul.addr %s10196, 96
      %s10198 = smul.addr %s10197, 8
      %s10199 = scalar_lea.vmem %s12, %s10198
      // Predicated region
      $region69: #{res_bottleneck_block_prepared.1} parent=67 // pred_check
        %p10200 = pneg %p298
      $region70: #{res_bottleneck_block_prepared.1} parent=67 // pred_check_branch
        %10202 = sbr.rel (%p10200) target = $region72
      $region71: #{res_bottleneck_block_prepared.1} parent=67 // pred_region
        _
      $region72: #{res_bottleneck_block_prepared.1} parent=67 // pred_fallthru
        _
    $region68: #{res_bottleneck_block_prepared.1} parent=5 // pred_fallthru
      _
    %p10203 = scmp.le.s32.totalorder 2, %s18
    // Predicated region
    $region73: #{res_bottleneck_block_prepared.1} parent=5 // pred_check
      %p10204 = pneg %p10203
    $region74: #{res_bottleneck_block_prepared.1} parent=5 // pred_check_branch
      %10206 = sbr.rel (%p10204) target = $region76
    $region75: #{res_bottleneck_block_prepared.1} parent=5 // pred_region
      %s10207 = ssub.s32 %s18, 2
      // Predicated region
      $region77: #{res_bottleneck_block_prepared.1} parent=75 // pred_check
        %p10208 = pneg %p304
      $region78: #{res_bottleneck_block_prepared.1} parent=75 // pred_check_branch
        %10210 = sbr.rel (%p10208) target = $region80
      $region79: #{res_bottleneck_block_prepared.1} parent=75 // pred_region
        %p10211 = scmp.lt.s32.totalorder %s24, 1
        %s10212 = scalar_select %p10211, %s24, 1
        %s10213 = smul.addr %s10212, 96
        %s10214 = smul.addr %s10213, 8
        %s10215 = scalar_lea.vmem %s12, %s10214
      $region80: #{res_bottleneck_block_prepared.1} parent=75 // pred_fallthru
        _
    $region76: #{res_bottleneck_block_prepared.1} parent=5 // pred_fallthru
      _
  $region6: #{res_bottleneck_block_prepared.1} parent=0 // loop_footer
    %s22 = sadd.s32 1, %s18
  $region7: #{res_bottleneck_block_prepared.1} parent=0 // loop_footer_branch
    %17 = sbr.rel target = $region3
  $region8: #{res_bottleneck_block_prepared.1} parent=0 // loop_exit
    _

</llo_original>
